<compile_context>
chip_gen: v6e
topology: v6e:2x2x1
jax: 0.10.0
libtpu: 0.0.40
codegen_flags: <defaults>
</compile_context>

<pallas_src>
import functools

import jax
import jax.numpy as jnp
from jax.experimental import pallas as pl
from jax.experimental.pallas import tpu as pltpu

_BN_EPS = 1e-5
_LRELU_SLOPE = 0.2
_K = 4        # conv kernel size (all layers)
_STRIDE = 2   # conv stride (layers 1-4)


def _leaky(y, slope):
    # max(y, slope*y) == LeakyReLU(slope) for 0 < slope < 1.
    return jnp.maximum(y, slope * y)


# ---------------------------------------------------------------------------
# Fused direct-conv kernels.
#
# Glue phase-splits the padded input: phase p = (kh%2, kw%2) image has shape
# (Cin, Hh, Wh) per batch element with Hh = Ho+1, Wh = Wo+1, flattened
# row-major to length S = Hh*Wh.  With the output held in the same row-padded
# flat layout (row stride Wh; only the first Wo lanes of each row and the
# first Ho rows are valid), tap (kh, kw) contributes
#     acc[:, j] += W[:, :, kh, kw] @ x_phase[:, j + off],
#     off = (kh//2)*Wh + (kw//2)   in {0, 1, Wh, Wh+1},
# i.e. a contiguous, statically-offset lane slice.  Invalid lanes are masked
# out of the BN statistics and dropped by the unpacking glue.
# ---------------------------------------------------------------------------
def _conv_leaky_kernel(xs_ref, w_ref, o_ref, *, taps, slope):
    """One batch element: 16 tap GEMMs -> LeakyReLU -> bf16.

    xs_ref: (1, 4, Cin, S)  bf16 phase-split input (this batch element)
    w_ref : (16, Cout, Cin) bf16 per-tap weights
    o_ref : (1, Cout, L)    bf16 row-padded flat output
    """
    L = o_ref.shape[2]
    acc = None
    for t, (p, off) in enumerate(taps):
        x = xs_ref[0, p, :, pl.ds(off, L)]                       # (Cin, L)
        c = jnp.dot(w_ref[t], x, preferred_element_type=jnp.float32)
        acc = c if acc is None else acc + c
    o_ref[0] = _leaky(acc, slope).astype(o_ref.dtype)


def _conv_bn_leaky_kernel(xs_ref, w_ref, mask_ref, o_ref, *, taps, count, eps,
                          slope):
    """Whole layer: 16 tap GEMMs -> train-mode BatchNorm -> LeakyReLU.

    xs_ref  : (4, Cin, B*S)   bf16 phase-split input (all batch elements)
    w_ref   : (16, Cout, Cin) bf16 per-tap weights
    mask_ref: (1, L)          f32 validity mask over the row-padded flat layout
    o_ref   : (Cout, L)       bf16
    """
    L = o_ref.shape[1]
    acc = None
    for t, (p, off) in enumerate(taps):
        x = xs_ref[p, :, pl.ds(off, L)]                          # (Cin, L)
        c = jnp.dot(w_ref[t], x, preferred_element_type=jnp.float32)
        acc = c if acc is None else acc + c

    m = mask_ref[...]                                            # (1, L) f32
    inv_n = 1.0 / count
    mean = jnp.sum(acc * m, axis=1, keepdims=True) * inv_n       # (Cout, 1)
    centered = acc - mean
    d = centered * m                                             # masked, centered
    var = jnp.sum(d * d, axis=1, keepdims=True) * inv_n          # (Cout, 1)
    y = centered * jax.lax.rsqrt(var + eps)
    o_ref[...] = _leaky(y, slope).astype(o_ref.dtype)


# ---------------------------------------------------------------------------
# XLA glue: phase-split, tap tables, per-layer wrappers.
# ---------------------------------------------------------------------------
def _phase_split(h_cm, pad):
    """(Cin, B, H, W) -> (4, Cin, B, Hh, Wh) stride-2 phase images."""
    xp = jnp.pad(h_cm, ((0, 0), (0, 0), (pad, pad), (pad, pad)))
    Hh = (h_cm.shape[2] + 2 * pad) // 2
    Wh = (h_cm.shape[3] + 2 * pad) // 2
    phases = [xp[:, :, ph::2, pw::2] for ph in (0, 1) for pw in (0, 1)]
    return jnp.stack(phases, axis=0), Hh, Wh


def _tap_table(Wh):
    """(phase index, flat lane offset) for each of the 16 (kh, kw) taps."""
    taps = []
    for kh in range(_K):
        for kw in range(_K):
            p = (kh % 2) * 2 + (kw % 2)
            off = (kh // 2) * Wh + (kw // 2)
            taps.append((p, off))
    return tuple(taps)


def _tap_weights(w):
    """(Cout, Cin, 4, 4) -> (16, Cout, Cin) bf16, same (kh, kw) order."""
    k = w.shape[2]
    taps = [w[:, :, kh, kw] for kh in range(k) for kw in range(k)]
    return jnp.stack(taps, axis=0).astype(jnp.bfloat16)


def _compiler_params(block_bytes, semantics):
    # Per-layer VMEM budget computed from the actual buffers; the 56 MiB cap
    # keeps the same code safe on v7x (64 MiB VMEM / TensorCore).
    limit = int(min(max(3 * block_bytes, 8 << 20), 56 << 20))
    return pltpu.CompilerParams(dimension_semantics=semantics,
                                vmem_limit_bytes=limit)


def conv_leaky_layer(h_cm, w):
    """Layer 1: fused 4x4/stride-2/pad-1 conv + LeakyReLU (no BN), grid over B."""
    Cout, Cin, _, _ = w.shape
    _, B, H, W = h_cm.shape
    Ho, Wo = H // 2, W // 2
    xs, Hh, Wh = _phase_split(h_cm, 1)                 # (4, Cin, B, Hh, Wh)
    S = Hh * Wh
    L = (Ho - 1) * Wh + Wo                             # row-padded flat length
    xs_b = xs.transpose(2, 0, 1, 3, 4).reshape(B, 4, Cin, S)
    wt = _tap_weights(w)                               # (16, Cout, Cin)
    taps = _tap_table(Wh)

    block_bytes = (4 * Cin * S * 2 + wt.size * 2 + Cout * L * 2
                   + Cout * L * 4)                     # + f32 accumulator
    y = pl.pallas_call(
        functools.partial(_conv_leaky_kernel, taps=taps, slope=_LRELU_SLOPE),
        out_shape=jax.ShapeDtypeStruct((B, Cout, L), jnp.bfloat16),
        grid=(B,),
        in_specs=[
            pl.BlockSpec((1, 4, Cin, S), lambda b: (b, 0, 0, 0)),
            pl.BlockSpec((16, Cout, Cin), lambda b: (0, 0, 0)),
        ],
        out_specs=pl.BlockSpec((1, Cout, L), lambda b: (b, 0, 0)),
        compiler_params=_compiler_params(block_bytes, ("parallel",)),
        cost_estimate=pl.CostEstimate(
            flops=2 * 16 * Cout * Cin * L * B,
            transcendentals=0,
            bytes_accessed=2 * (xs_b.size + wt.size + B * Cout * L)),
    )(xs_b, wt)

    # Unpack row-padded flat -> channel-major (Cout, B, Ho, Wo).
    y = jnp.pad(y, ((0, 0), (0, 0), (0, S - L)))
    y = y.reshape(B, Cout, Hh, Wh)[:, :, :Ho, :Wo]
    return y.transpose(1, 0, 2, 3)


def conv_bn_leaky_layer(h_cm, w):
    """Layers 2-4: fully fused conv + train-mode BatchNorm + LeakyReLU."""
    Cout, Cin, _, _ = w.shape
    _, B, H, W = h_cm.shape
    Ho, Wo = H // 2, W // 2
    xs, Hh, Wh = _phase_split(h_cm, 1)                 # (4, Cin, B, Hh, Wh)
    S = Hh * Wh
    L = (B - 1) * S + (Ho - 1) * Wh + Wo               # all batches, flat
    xs_f = xs.reshape(4, Cin, B * S)
    wt = _tap_weights(w)
    taps = _tap_table(Wh)

    # Validity mask over the row-padded flat layout (built in glue so the
    # kernel needs no integer div/mod).
    j = jnp.arange(L, dtype=jnp.int32)
    r = j % S
    mask = (((r % Wh) < Wo) & ((r // Wh) < Ho)).astype(jnp.float32)
    mask = mask.reshape(1, L)
    count = float(B * Ho * Wo)

    block_bytes = (xs_f.size * 2 + wt.size * 2 + L * 4 + Cout * L * 2
                   + Cout * L * 4)
    # TODO(synk): at production batch sizes, tile L across a grid with a
    # per-chunk stats carry (second sweep) so both v7x TensorCores get work;
    # one fused step is the right call at these sizes (single launch, no
    # intermediate HBM traffic).
    y = pl.pallas_call(
        functools.partial(_conv_bn_leaky_kernel, taps=taps, count=count,
                          eps=_BN_EPS, slope=_LRELU_SLOPE),
        out_shape=jax.ShapeDtypeStruct((Cout, L), jnp.bfloat16),
        grid=(1,),
        in_specs=[
            pl.BlockSpec((4, Cin, B * S), lambda i: (0, 0, 0)),
            pl.BlockSpec((16, Cout, Cin), lambda i: (0, 0, 0)),
            pl.BlockSpec((1, L), lambda i: (0, 0)),
        ],
        out_specs=pl.BlockSpec((Cout, L), lambda i: (0, 0)),
        compiler_params=_compiler_params(block_bytes, ("arbitrary",)),
        cost_estimate=pl.CostEstimate(
            flops=2 * 16 * Cout * Cin * L,
            transcendentals=int(Cout),
            bytes_accessed=2 * (xs_f.size + wt.size + Cout * L) + 4 * L),
    )(xs_f, wt, mask)

    y = jnp.pad(y, ((0, 0), (0, B * S - L)))
    y = y.reshape(Cout, B, Hh, Wh)[:, :, :Ho, :Wo]
    return y


# ---------------------------------------------------------------------------
# Full forward pass
# ---------------------------------------------------------------------------
def discriminator_forward(x, params):
    """x: (B, in_size, 64, 64) f32 NCHW -> (B, 1, 1, 1) f32."""
    w1, w2, w3, w4, w5 = params
    B = x.shape[0]
    h = x.astype(jnp.bfloat16).transpose(1, 0, 2, 3)   # channel-major (C,B,H,W)
    h = conv_leaky_layer(h, w1)
    h = conv_bn_leaky_layer(h, w2)
    h = conv_bn_leaky_layer(h, w3)
    h = conv_bn_leaky_layer(h, w4)
    # Final 4x4 valid conv (Cout=1, spatial 4x4 -> 1x1): a Pallas call here is
    # pure launch overhead, so it stays a plain dot + sigmoid.
    Cout, Cin, k, _ = w5.shape
    w5_2d = w5.reshape(Cout, Cin * k * k).astype(jnp.bfloat16)
    hm = h.transpose(0, 2, 3, 1).reshape(Cin * k * k, B)
    logits = jnp.dot(w5_2d, hm, preferred_element_type=jnp.float32)  # (1, B)
    out = jax.nn.sigmoid(logits)
    return out.T.reshape(B, 1, 1, 1)


def init_params(key, in_size=3, ndf=8):
    """Conv weights ~ N(0, 0.02), matching the PyTorch init. No biases."""
    shapes = [
        (ndf, in_size, 4, 4),
        (ndf * 2, ndf, 4, 4),
        (ndf * 4, ndf * 2, 4, 4),
        (ndf * 8, ndf * 4, 4, 4),
        (1, ndf * 8, 4, 4),
    ]
    keys = jax.random.split(key, len(shapes))
    return [0.02 * jax.random.normal(k, s, dtype=jnp.float32)
            for k, s in zip(keys, shapes)]


# ---------------------------------------------------------------------------
# Pure-JAX references
# ---------------------------------------------------------------------------
def _ref_conv(h, w, stride, pad, cast_dtype=None):
    if cast_dtype is not None:
        h = h.astype(cast_dtype)
        w = w.astype(cast_dtype)
    return jax.lax.conv_general_dilated(
        h, w, (stride, stride), [(pad, pad), (pad, pad)],
        dimension_numbers=("NCHW", "OIHW", "NCHW"),
        preferred_element_type=jnp.float32)


def _ref_bn(y):
    mean = jnp.mean(y, axis=(0, 2, 3), keepdims=True)
    var = jnp.mean(jnp.square(y - mean), axis=(0, 2, 3), keepdims=True)
    return (y - mean) * jax.lax.rsqrt(var + _BN_EPS)


def _ref_lrelu(y):
    return jnp.where(y >= 0, y, _LRELU_SLOPE * y)


def ref_forward_f32(x, params):
    """Full-f32 reference (original module semantics, train-mode BN)."""
    w1, w2, w3, w4, w5 = params
    h = _ref_lrelu(_ref_conv(x, w1, 2, 1))
    h = _ref_lrelu(_ref_bn(_ref_conv(h, w2, 2, 1)))
    h = _ref_lrelu(_ref_bn(_ref_conv(h, w3, 2, 1)))
    h = _ref_lrelu(_ref_bn(_ref_conv(h, w4, 2, 1)))
    return jax.nn.sigmoid(_ref_conv(h, w5, 1, 0))


def ref_forward_bf16(x, params):
    """Mirror of the Pallas path's mixed precision (bf16 MXU in, f32 math)."""
    bf16 = jnp.bfloat16
    w1, w2, w3, w4, w5 = params
    h = _ref_lrelu(_ref_conv(x, w1, 2, 1, bf16)).astype(bf16)
    h = _ref_lrelu(_ref_bn(_ref_conv(h, w2, 2, 1, bf16))).astype(bf16)
    h = _ref_lrelu(_ref_bn(_ref_conv(h, w3, 2, 1, bf16))).astype(bf16)
    h = _ref_lrelu(_ref_bn(_ref_conv(h, w4, 2, 1, bf16))).astype(bf16)
    return jax.nn.sigmoid(_ref_conv(h, w5, 1, 0, bf16))


if __name__ == "__main__":
    # The 5-stage 4x4/stride-2 architecture needs 64x64 spatial input to reach
    # the final 4x4 -> 1x1 conv.  Small batch and ndf keep it tiny.
    B, IN_SIZE, NDF = 2, 3, 8
    key = jax.random.PRNGKey(0)
    kx, kp = jax.random.split(key)
    x = jax.random.normal(kx, (B, IN_SIZE, 64, 64), dtype=jnp.float32)
    params = init_params(kp, in_size=IN_SIZE, ndf=NDF)

    fwd = jax.jit(discriminator_forward)
    out = jax.block_until_ready(fwd(x, params))
    assert out.shape == (B, 1, 1, 1), out.shape

    # Tight check against a reference with the same mixed precision.
    ref_mixed = jax.block_until_ready(ref_forward_bf16(x, params))
    err_mixed = float(jnp.max(jnp.abs(out - ref_mixed)))
    assert err_mixed < 1.5e-2, ("mixed-precision mismatch", err_mixed)

    # Looser sanity check against the full-f32 module semantics.
    ref_full = jax.block_until_ready(ref_forward_f32(x, params))
    err_full = float(jnp.max(jnp.abs(out - ref_full)))
    assert err_full < 6e-2, ("f32 reference mismatch", err_full)

    print("KERNEL_OK")
</pallas_src>

<mosaic_0001>
module attributes {stable_mosaic.version = 11 : i64} {
  func.func @_conv_leaky_kernel(%arg0: i32, %arg1: memref<1x4x3x1089xbf16, #tpu.memory_space<vmem>>, %arg2: memref<16x8x3xbf16, #tpu.memory_space<vmem>>, %arg3: memref<1x8x1055xbf16, #tpu.memory_space<vmem>>) attributes {dimension_semantics = [#tpu.dimension_semantics<parallel>], iteration_bounds = array<i64: 2>, scalar_prefetch = 0 : i64, scratch_operands = 0 : i64, tpu.core_type = #tpu.core_type<tc>, window_params = [{transform_indices = @transform_0, window_bounds = array<i64: 1, 4, 3, 1089>}, {pipeline_mode = #tpu.pipeline_mode<synchronous>, transform_indices = @transform_1, window_bounds = array<i64: 16, 8, 3>}, {transform_indices = @transform_2, window_bounds = array<i64: 1, 8, 1055>}]} {
    %c0 = arith.constant 0 : index
    %c0_0 = arith.constant 0 : index
    %c0_1 = arith.constant 0 : index
    %c0_2 = arith.constant 0 : index
    %0 = vector.load %arg1[%c0, %c0_0, %c0_1, %c0_2] : memref<1x4x3x1089xbf16, #tpu.memory_space<vmem>>, vector<1x1x3x1055xbf16>
    %1 = vector.shape_cast %0 : vector<1x1x3x1055xbf16> to vector<3x1055xbf16>
    %c0_3 = arith.constant 0 : index
    %c0_4 = arith.constant 0 : index
    %c0_5 = arith.constant 0 : index
    %2 = vector.load %arg2[%c0_3, %c0_4, %c0_5] : memref<16x8x3xbf16, #tpu.memory_space<vmem>>, vector<1x8x3xbf16>
    %3 = vector.shape_cast %2 : vector<1x8x3xbf16> to vector<8x3xbf16>
    %cst = arith.constant dense<0.000000e+00> : vector<8x1055xf32>
    %4 = tpu.matmul %3, %1, %cst {dimension_numbers = #tpu.dot_dimension_numbers<[1], [0], [0], [1], [0, 0, 1, 1], [], []>} : vector<8x3xbf16>, vector<3x1055xbf16>, vector<8x1055xf32> -> vector<8x1055xf32>
    %c0_6 = arith.constant 0 : index
    %c1 = arith.constant 1 : index
    %c0_7 = arith.constant 0 : index
    %c0_8 = arith.constant 0 : index
    %5 = vector.load %arg1[%c0_6, %c1, %c0_7, %c0_8] : memref<1x4x3x1089xbf16, #tpu.memory_space<vmem>>, vector<1x1x3x1055xbf16>
    %6 = vector.shape_cast %5 : vector<1x1x3x1055xbf16> to vector<3x1055xbf16>
    %c1_9 = arith.constant 1 : index
    %c0_10 = arith.constant 0 : index
    %c0_11 = arith.constant 0 : index
    %7 = vector.load %arg2[%c1_9, %c0_10, %c0_11] : memref<16x8x3xbf16, #tpu.memory_space<vmem>>, vector<1x8x3xbf16>
    %8 = vector.shape_cast %7 : vector<1x8x3xbf16> to vector<8x3xbf16>
    %cst_12 = arith.constant dense<0.000000e+00> : vector<8x1055xf32>
    %9 = tpu.matmul %8, %6, %cst_12 {dimension_numbers = #tpu.dot_dimension_numbers<[1], [0], [0], [1], [0, 0, 1, 1], [], []>} : vector<8x3xbf16>, vector<3x1055xbf16>, vector<8x1055xf32> -> vector<8x1055xf32>
    %10 = arith.addf %4, %9 : vector<8x1055xf32>
    %c0_13 = arith.constant 0 : index
    %c0_14 = arith.constant 0 : index
    %c0_15 = arith.constant 0 : index
    %c1_16 = arith.constant 1 : index
    %11 = vector.load %arg1[%c0_13, %c0_14, %c0_15, %c1_16] : memref<1x4x3x1089xbf16, #tpu.memory_space<vmem>>, vector<1x1x3x1055xbf16>
    %12 = vector.shape_cast %11 : vector<1x1x3x1055xbf16> to vector<3x1055xbf16>
    %c2 = arith.constant 2 : index
    %c0_17 = arith.constant 0 : index
    %c0_18 = arith.constant 0 : index
    %13 = vector.load %arg2[%c2, %c0_17, %c0_18] : memref<16x8x3xbf16, #tpu.memory_space<vmem>>, vector<1x8x3xbf16>
    %14 = vector.shape_cast %13 : vector<1x8x3xbf16> to vector<8x3xbf16>
    %cst_19 = arith.constant dense<0.000000e+00> : vector<8x1055xf32>
    %15 = tpu.matmul %14, %12, %cst_19 {dimension_numbers = #tpu.dot_dimension_numbers<[1], [0], [0], [1], [0, 0, 1, 1], [], []>} : vector<8x3xbf16>, vector<3x1055xbf16>, vector<8x1055xf32> -> vector<8x1055xf32>
    %16 = arith.addf %10, %15 : vector<8x1055xf32>
    %c0_20 = arith.constant 0 : index
    %c1_21 = arith.constant 1 : index
    %c0_22 = arith.constant 0 : index
    %c1_23 = arith.constant 1 : index
    %17 = vector.load %arg1[%c0_20, %c1_21, %c0_22, %c1_23] : memref<1x4x3x1089xbf16, #tpu.memory_space<vmem>>, vector<1x1x3x1055xbf16>
    %18 = vector.shape_cast %17 : vector<1x1x3x1055xbf16> to vector<3x1055xbf16>
    %c3 = arith.constant 3 : index
    %c0_24 = arith.constant 0 : index
    %c0_25 = arith.constant 0 : index
    %19 = vector.load %arg2[%c3, %c0_24, %c0_25] : memref<16x8x3xbf16, #tpu.memory_space<vmem>>, vector<1x8x3xbf16>
    %20 = vector.shape_cast %19 : vector<1x8x3xbf16> to vector<8x3xbf16>
    %cst_26 = arith.constant dense<0.000000e+00> : vector<8x1055xf32>
    %21 = tpu.matmul %20, %18, %cst_26 {dimension_numbers = #tpu.dot_dimension_numbers<[1], [0], [0], [1], [0, 0, 1, 1], [], []>} : vector<8x3xbf16>, vector<3x1055xbf16>, vector<8x1055xf32> -> vector<8x1055xf32>
    %22 = arith.addf %16, %21 : vector<8x1055xf32>
    %c0_27 = arith.constant 0 : index
    %c2_28 = arith.constant 2 : index
    %c0_29 = arith.constant 0 : index
    %c0_30 = arith.constant 0 : index
    %23 = vector.load %arg1[%c0_27, %c2_28, %c0_29, %c0_30] : memref<1x4x3x1089xbf16, #tpu.memory_space<vmem>>, vector<1x1x3x1055xbf16>
    %24 = vector.shape_cast %23 : vector<1x1x3x1055xbf16> to vector<3x1055xbf16>
    %c4 = arith.constant 4 : index
    %c0_31 = arith.constant 0 : index
    %c0_32 = arith.constant 0 : index
    %25 = vector.load %arg2[%c4, %c0_31, %c0_32] : memref<16x8x3xbf16, #tpu.memory_space<vmem>>, vector<1x8x3xbf16>
    %26 = vector.shape_cast %25 : vector<1x8x3xbf16> to vector<8x3xbf16>
    %cst_33 = arith.constant dense<0.000000e+00> : vector<8x1055xf32>
    %27 = tpu.matmul %26, %24, %cst_33 {dimension_numbers = #tpu.dot_dimension_numbers<[1], [0], [0], [1], [0, 0, 1, 1], [], []>} : vector<8x3xbf16>, vector<3x1055xbf16>, vector<8x1055xf32> -> vector<8x1055xf32>
    %28 = arith.addf %22, %27 : vector<8x1055xf32>
    %c0_34 = arith.constant 0 : index
    %c3_35 = arith.constant 3 : index
    %c0_36 = arith.constant 0 : index
    %c0_37 = arith.constant 0 : index
    %29 = vector.load %arg1[%c0_34, %c3_35, %c0_36, %c0_37] : memref<1x4x3x1089xbf16, #tpu.memory_space<vmem>>, vector<1x1x3x1055xbf16>
    %30 = vector.shape_cast %29 : vector<1x1x3x1055xbf16> to vector<3x1055xbf16>
    %c5 = arith.constant 5 : index
    %c0_38 = arith.constant 0 : index
    %c0_39 = arith.constant 0 : index
    %31 = vector.load %arg2[%c5, %c0_38, %c0_39] : memref<16x8x3xbf16, #tpu.memory_space<vmem>>, vector<1x8x3xbf16>
    %32 = vector.shape_cast %31 : vector<1x8x3xbf16> to vector<8x3xbf16>
    %cst_40 = arith.constant dense<0.000000e+00> : vector<8x1055xf32>
    %33 = tpu.matmul %32, %30, %cst_40 {dimension_numbers = #tpu.dot_dimension_numbers<[1], [0], [0], [1], [0, 0, 1, 1], [], []>} : vector<8x3xbf16>, vector<3x1055xbf16>, vector<8x1055xf32> -> vector<8x1055xf32>
    %34 = arith.addf %28, %33 : vector<8x1055xf32>
    %c0_41 = arith.constant 0 : index
    %c2_42 = arith.constant 2 : index
    %c0_43 = arith.constant 0 : index
    %c1_44 = arith.constant 1 : index
    %35 = vector.load %arg1[%c0_41, %c2_42, %c0_43, %c1_44] : memref<1x4x3x1089xbf16, #tpu.memory_space<vmem>>, vector<1x1x3x1055xbf16>
    %36 = vector.shape_cast %35 : vector<1x1x3x1055xbf16> to vector<3x1055xbf16>
    %c6 = arith.constant 6 : index
    %c0_45 = arith.constant 0 : index
    %c0_46 = arith.constant 0 : index
    %37 = vector.load %arg2[%c6, %c0_45, %c0_46] : memref<16x8x3xbf16, #tpu.memory_space<vmem>>, vector<1x8x3xbf16>
    %38 = vector.shape_cast %37 : vector<1x8x3xbf16> to vector<8x3xbf16>
    %cst_47 = arith.constant dense<0.000000e+00> : vector<8x1055xf32>
    %39 = tpu.matmul %38, %36, %cst_47 {dimension_numbers = #tpu.dot_dimension_numbers<[1], [0], [0], [1], [0, 0, 1, 1], [], []>} : vector<8x3xbf16>, vector<3x1055xbf16>, vector<8x1055xf32> -> vector<8x1055xf32>
    %40 = arith.addf %34, %39 : vector<8x1055xf32>
    %c0_48 = arith.constant 0 : index
    %c3_49 = arith.constant 3 : index
    %c0_50 = arith.constant 0 : index
    %c1_51 = arith.constant 1 : index
    %41 = vector.load %arg1[%c0_48, %c3_49, %c0_50, %c1_51] : memref<1x4x3x1089xbf16, #tpu.memory_space<vmem>>, vector<1x1x3x1055xbf16>
    %42 = vector.shape_cast %41 : vector<1x1x3x1055xbf16> to vector<3x1055xbf16>
    %c7 = arith.constant 7 : index
    %c0_52 = arith.constant 0 : index
    %c0_53 = arith.constant 0 : index
    %43 = vector.load %arg2[%c7, %c0_52, %c0_53] : memref<16x8x3xbf16, #tpu.memory_space<vmem>>, vector<1x8x3xbf16>
    %44 = vector.shape_cast %43 : vector<1x8x3xbf16> to vector<8x3xbf16>
    %cst_54 = arith.constant dense<0.000000e+00> : vector<8x1055xf32>
    %45 = tpu.matmul %44, %42, %cst_54 {dimension_numbers = #tpu.dot_dimension_numbers<[1], [0], [0], [1], [0, 0, 1, 1], [], []>} : vector<8x3xbf16>, vector<3x1055xbf16>, vector<8x1055xf32> -> vector<8x1055xf32>
    %46 = arith.addf %40, %45 : vector<8x1055xf32>
    %c0_55 = arith.constant 0 : index
    %c0_56 = arith.constant 0 : index
    %c0_57 = arith.constant 0 : index
    %c33 = arith.constant 33 : index
    %47 = vector.load %arg1[%c0_55, %c0_56, %c0_57, %c33] : memref<1x4x3x1089xbf16, #tpu.memory_space<vmem>>, vector<1x1x3x1055xbf16>
    %48 = vector.shape_cast %47 : vector<1x1x3x1055xbf16> to vector<3x1055xbf16>
    %c8 = arith.constant 8 : index
    %c0_58 = arith.constant 0 : index
    %c0_59 = arith.constant 0 : index
    %49 = vector.load %arg2[%c8, %c0_58, %c0_59] : memref<16x8x3xbf16, #tpu.memory_space<vmem>>, vector<1x8x3xbf16>
    %50 = vector.shape_cast %49 : vector<1x8x3xbf16> to vector<8x3xbf16>
    %cst_60 = arith.constant dense<0.000000e+00> : vector<8x1055xf32>
    %51 = tpu.matmul %50, %48, %cst_60 {dimension_numbers = #tpu.dot_dimension_numbers<[1], [0], [0], [1], [0, 0, 1, 1], [], []>} : vector<8x3xbf16>, vector<3x1055xbf16>, vector<8x1055xf32> -> vector<8x1055xf32>
    %52 = arith.addf %46, %51 : vector<8x1055xf32>
    %c0_61 = arith.constant 0 : index
    %c1_62 = arith.constant 1 : index
    %c0_63 = arith.constant 0 : index
    %c33_64 = arith.constant 33 : index
    %53 = vector.load %arg1[%c0_61, %c1_62, %c0_63, %c33_64] : memref<1x4x3x1089xbf16, #tpu.memory_space<vmem>>, vector<1x1x3x1055xbf16>
    %54 = vector.shape_cast %53 : vector<1x1x3x1055xbf16> to vector<3x1055xbf16>
    %c9 = arith.constant 9 : index
    %c0_65 = arith.constant 0 : index
    %c0_66 = arith.constant 0 : index
    %55 = vector.load %arg2[%c9, %c0_65, %c0_66] : memref<16x8x3xbf16, #tpu.memory_space<vmem>>, vector<1x8x3xbf16>
    %56 = vector.shape_cast %55 : vector<1x8x3xbf16> to vector<8x3xbf16>
    %cst_67 = arith.constant dense<0.000000e+00> : vector<8x1055xf32>
    %57 = tpu.matmul %56, %54, %cst_67 {dimension_numbers = #tpu.dot_dimension_numbers<[1], [0], [0], [1], [0, 0, 1, 1], [], []>} : vector<8x3xbf16>, vector<3x1055xbf16>, vector<8x1055xf32> -> vector<8x1055xf32>
    %58 = arith.addf %52, %57 : vector<8x1055xf32>
    %c0_68 = arith.constant 0 : index
    %c0_69 = arith.constant 0 : index
    %c0_70 = arith.constant 0 : index
    %c34 = arith.constant 34 : index
    %59 = vector.load %arg1[%c0_68, %c0_69, %c0_70, %c34] : memref<1x4x3x1089xbf16, #tpu.memory_space<vmem>>, vector<1x1x3x1055xbf16>
    %60 = vector.shape_cast %59 : vector<1x1x3x1055xbf16> to vector<3x1055xbf16>
    %c10 = arith.constant 10 : index
    %c0_71 = arith.constant 0 : index
    %c0_72 = arith.constant 0 : index
    %61 = vector.load %arg2[%c10, %c0_71, %c0_72] : memref<16x8x3xbf16, #tpu.memory_space<vmem>>, vector<1x8x3xbf16>
    %62 = vector.shape_cast %61 : vector<1x8x3xbf16> to vector<8x3xbf16>
    %cst_73 = arith.constant dense<0.000000e+00> : vector<8x1055xf32>
    %63 = tpu.matmul %62, %60, %cst_73 {dimension_numbers = #tpu.dot_dimension_numbers<[1], [0], [0], [1], [0, 0, 1, 1], [], []>} : vector<8x3xbf16>, vector<3x1055xbf16>, vector<8x1055xf32> -> vector<8x1055xf32>
    %64 = arith.addf %58, %63 : vector<8x1055xf32>
    %c0_74 = arith.constant 0 : index
    %c1_75 = arith.constant 1 : index
    %c0_76 = arith.constant 0 : index
    %c34_77 = arith.constant 34 : index
    %65 = vector.load %arg1[%c0_74, %c1_75, %c0_76, %c34_77] : memref<1x4x3x1089xbf16, #tpu.memory_space<vmem>>, vector<1x1x3x1055xbf16>
    %66 = vector.shape_cast %65 : vector<1x1x3x1055xbf16> to vector<3x1055xbf16>
    %c11 = arith.constant 11 : index
    %c0_78 = arith.constant 0 : index
    %c0_79 = arith.constant 0 : index
    %67 = vector.load %arg2[%c11, %c0_78, %c0_79] : memref<16x8x3xbf16, #tpu.memory_space<vmem>>, vector<1x8x3xbf16>
    %68 = vector.shape_cast %67 : vector<1x8x3xbf16> to vector<8x3xbf16>
    %cst_80 = arith.constant dense<0.000000e+00> : vector<8x1055xf32>
    %69 = tpu.matmul %68, %66, %cst_80 {dimension_numbers = #tpu.dot_dimension_numbers<[1], [0], [0], [1], [0, 0, 1, 1], [], []>} : vector<8x3xbf16>, vector<3x1055xbf16>, vector<8x1055xf32> -> vector<8x1055xf32>
    %70 = arith.addf %64, %69 : vector<8x1055xf32>
    %c0_81 = arith.constant 0 : index
    %c2_82 = arith.constant 2 : index
    %c0_83 = arith.constant 0 : index
    %c33_84 = arith.constant 33 : index
    %71 = vector.load %arg1[%c0_81, %c2_82, %c0_83, %c33_84] : memref<1x4x3x1089xbf16, #tpu.memory_space<vmem>>, vector<1x1x3x1055xbf16>
    %72 = vector.shape_cast %71 : vector<1x1x3x1055xbf16> to vector<3x1055xbf16>
    %c12 = arith.constant 12 : index
    %c0_85 = arith.constant 0 : index
    %c0_86 = arith.constant 0 : index
    %73 = vector.load %arg2[%c12, %c0_85, %c0_86] : memref<16x8x3xbf16, #tpu.memory_space<vmem>>, vector<1x8x3xbf16>
    %74 = vector.shape_cast %73 : vector<1x8x3xbf16> to vector<8x3xbf16>
    %cst_87 = arith.constant dense<0.000000e+00> : vector<8x1055xf32>
    %75 = tpu.matmul %74, %72, %cst_87 {dimension_numbers = #tpu.dot_dimension_numbers<[1], [0], [0], [1], [0, 0, 1, 1], [], []>} : vector<8x3xbf16>, vector<3x1055xbf16>, vector<8x1055xf32> -> vector<8x1055xf32>
    %76 = arith.addf %70, %75 : vector<8x1055xf32>
    %c0_88 = arith.constant 0 : index
    %c3_89 = arith.constant 3 : index
    %c0_90 = arith.constant 0 : index
    %c33_91 = arith.constant 33 : index
    %77 = vector.load %arg1[%c0_88, %c3_89, %c0_90, %c33_91] : memref<1x4x3x1089xbf16, #tpu.memory_space<vmem>>, vector<1x1x3x1055xbf16>
    %78 = vector.shape_cast %77 : vector<1x1x3x1055xbf16> to vector<3x1055xbf16>
    %c13 = arith.constant 13 : index
    %c0_92 = arith.constant 0 : index
    %c0_93 = arith.constant 0 : index
    %79 = vector.load %arg2[%c13, %c0_92, %c0_93] : memref<16x8x3xbf16, #tpu.memory_space<vmem>>, vector<1x8x3xbf16>
    %80 = vector.shape_cast %79 : vector<1x8x3xbf16> to vector<8x3xbf16>
    %cst_94 = arith.constant dense<0.000000e+00> : vector<8x1055xf32>
    %81 = tpu.matmul %80, %78, %cst_94 {dimension_numbers = #tpu.dot_dimension_numbers<[1], [0], [0], [1], [0, 0, 1, 1], [], []>} : vector<8x3xbf16>, vector<3x1055xbf16>, vector<8x1055xf32> -> vector<8x1055xf32>
    %82 = arith.addf %76, %81 : vector<8x1055xf32>
    %c0_95 = arith.constant 0 : index
    %c2_96 = arith.constant 2 : index
    %c0_97 = arith.constant 0 : index
    %c34_98 = arith.constant 34 : index
    %83 = vector.load %arg1[%c0_95, %c2_96, %c0_97, %c34_98] : memref<1x4x3x1089xbf16, #tpu.memory_space<vmem>>, vector<1x1x3x1055xbf16>
    %84 = vector.shape_cast %83 : vector<1x1x3x1055xbf16> to vector<3x1055xbf16>
    %c14 = arith.constant 14 : index
    %c0_99 = arith.constant 0 : index
    %c0_100 = arith.constant 0 : index
    %85 = vector.load %arg2[%c14, %c0_99, %c0_100] : memref<16x8x3xbf16, #tpu.memory_space<vmem>>, vector<1x8x3xbf16>
    %86 = vector.shape_cast %85 : vector<1x8x3xbf16> to vector<8x3xbf16>
    %cst_101 = arith.constant dense<0.000000e+00> : vector<8x1055xf32>
    %87 = tpu.matmul %86, %84, %cst_101 {dimension_numbers = #tpu.dot_dimension_numbers<[1], [0], [0], [1], [0, 0, 1, 1], [], []>} : vector<8x3xbf16>, vector<3x1055xbf16>, vector<8x1055xf32> -> vector<8x1055xf32>
    %88 = arith.addf %82, %87 : vector<8x1055xf32>
    %c0_102 = arith.constant 0 : index
    %c3_103 = arith.constant 3 : index
    %c0_104 = arith.constant 0 : index
    %c34_105 = arith.constant 34 : index
    %89 = vector.load %arg1[%c0_102, %c3_103, %c0_104, %c34_105] : memref<1x4x3x1089xbf16, #tpu.memory_space<vmem>>, vector<1x1x3x1055xbf16>
    %90 = vector.shape_cast %89 : vector<1x1x3x1055xbf16> to vector<3x1055xbf16>
    %c15 = arith.constant 15 : index
    %c0_106 = arith.constant 0 : index
    %c0_107 = arith.constant 0 : index
    %91 = vector.load %arg2[%c15, %c0_106, %c0_107] : memref<16x8x3xbf16, #tpu.memory_space<vmem>>, vector<1x8x3xbf16>
    %92 = vector.shape_cast %91 : vector<1x8x3xbf16> to vector<8x3xbf16>
    %cst_108 = arith.constant dense<0.000000e+00> : vector<8x1055xf32>
    %93 = tpu.matmul %92, %90, %cst_108 {dimension_numbers = #tpu.dot_dimension_numbers<[1], [0], [0], [1], [0, 0, 1, 1], [], []>} : vector<8x3xbf16>, vector<3x1055xbf16>, vector<8x1055xf32> -> vector<8x1055xf32>
    %94 = arith.addf %88, %93 : vector<8x1055xf32>
    %cst_109 = arith.constant 2.000000e-01 : f32
    %95 = vector.broadcast %cst_109 : f32 to vector<8x1055xf32>
    %96 = arith.mulf %95, %94 : vector<8x1055xf32>
    %97 = arith.maximumf %94, %96 : vector<8x1055xf32>
    %98 = arith.truncf %97 : vector<8x1055xf32> to vector<8x1055xbf16>
    %c0_110 = arith.constant 0 : index
    %c0_111 = arith.constant 0 : index
    %c0_112 = arith.constant 0 : index
    %99 = vector.load %arg3[%c0_110, %c0_111, %c0_112] : memref<1x8x1055xbf16, #tpu.memory_space<vmem>>, vector<1x8x1055xbf16>
    %100 = vector.shape_cast %99 : vector<1x8x1055xbf16> to vector<8x1055xbf16>
    %101 = vector.shape_cast %98 : vector<8x1055xbf16> to vector<1x8x1055xbf16>
    tpu.vector_store %arg3[%c0_110, %c0_111, %c0_112], %101 {strides = array<i32>} : memref<1x8x1055xbf16, #tpu.memory_space<vmem>>, vector<1x8x1055xbf16>,
    return
  }
  func.func @transform_0(%arg0: i32) -> (i32, i32, i32, i32) {
    %c0_i32 = arith.constant 0 : i32
    %c0_i32_0 = arith.constant 0 : i32
    %c0_i32_1 = arith.constant 0 : i32
    %c0_i32_2 = arith.constant 0 : i32
    return %arg0, %c0_i32, %c0_i32_0, %c0_i32_1 : i32, i32, i32, i32
  }
  func.func @transform_1(%arg0: i32) -> (i32, i32, i32) {
    %c0_i32 = arith.constant 0 : i32
    %c0_i32_0 = arith.constant 0 : i32
    %c0_i32_1 = arith.constant 0 : i32
    %c0_i32_2 = arith.constant 0 : i32
    return %c0_i32, %c0_i32_0, %c0_i32_1 : i32, i32, i32
  }
  func.func @transform_2(%arg0: i32) -> (i32, i32, i32) {
    %c0_i32 = arith.constant 0 : i32
    %c0_i32_0 = arith.constant 0 : i32
    %c0_i32_1 = arith.constant 0 : i32
    return %arg0, %c0_i32, %c0_i32_0 : i32, i32, i32
  }
}

module attributes {stable_mosaic.version = 11 : i64} {
  func.func @_conv_bn_leaky_kernel(%arg0: i32, %arg1: memref<4x8x578xbf16, #tpu.memory_space<vmem>>, %arg2: memref<16x16x8xbf16, #tpu.memory_space<vmem>>, %arg3: memref<1x560xf32, #tpu.memory_space<vmem>>, %arg4: memref<16x560xbf16, #tpu.memory_space<vmem>>) attributes {dimension_semantics = [#tpu.dimension_semantics<arbitrary>], iteration_bounds = array<i64: 1>, scalar_prefetch = 0 : i64, scratch_operands = 0 : i64, tpu.core_type = #tpu.core_type<tc>, window_params = [{pipeline_mode = #tpu.pipeline_mode<synchronous>, transform_indices = @transform_0, window_bounds = array<i64: 4, 8, 578>}, {pipeline_mode = #tpu.pipeline_mode<synchronous>, transform_indices = @transform_1, window_bounds = array<i64: 16, 16, 8>}, {pipeline_mode = #tpu.pipeline_mode<synchronous>, transform_indices = @transform_2, window_bounds = array<i64: 1, 560>}, {pipeline_mode = #tpu.pipeline_mode<synchronous>, transform_indices = @transform_3, window_bounds = array<i64: 16, 560>}]} {
    %c0 = arith.constant 0 : index
    %c0_0 = arith.constant 0 : index
    %c0_1 = arith.constant 0 : index
    %0 = vector.load %arg1[%c0, %c0_0, %c0_1] : memref<4x8x578xbf16, #tpu.memory_space<vmem>>, vector<1x8x560xbf16>
    %1 = vector.shape_cast %0 : vector<1x8x560xbf16> to vector<8x560xbf16>
    %c0_2 = arith.constant 0 : index
    %c0_3 = arith.constant 0 : index
    %c0_4 = arith.constant 0 : index
    %2 = vector.load %arg2[%c0_2, %c0_3, %c0_4] : memref<16x16x8xbf16, #tpu.memory_space<vmem>>, vector<1x16x8xbf16>
    %3 = vector.shape_cast %2 : vector<1x16x8xbf16> to vector<16x8xbf16>
    %cst = arith.constant dense<0.000000e+00> : vector<16x560xf32>
    %4 = tpu.matmul %3, %1, %cst {dimension_numbers = #tpu.dot_dimension_numbers<[1], [0], [0], [1], [0, 0, 1, 1], [], []>} : vector<16x8xbf16>, vector<8x560xbf16>, vector<16x560xf32> -> vector<16x560xf32>
    %c1 = arith.constant 1 : index
    %c0_5 = arith.constant 0 : index
    %c0_6 = arith.constant 0 : index
    %5 = vector.load %arg1[%c1, %c0_5, %c0_6] : memref<4x8x578xbf16, #tpu.memory_space<vmem>>, vector<1x8x560xbf16>
    %6 = vector.shape_cast %5 : vector<1x8x560xbf16> to vector<8x560xbf16>
    %c1_7 = arith.constant 1 : index
    %c0_8 = arith.constant 0 : index
    %c0_9 = arith.constant 0 : index
    %7 = vector.load %arg2[%c1_7, %c0_8, %c0_9] : memref<16x16x8xbf16, #tpu.memory_space<vmem>>, vector<1x16x8xbf16>
    %8 = vector.shape_cast %7 : vector<1x16x8xbf16> to vector<16x8xbf16>
    %cst_10 = arith.constant dense<0.000000e+00> : vector<16x560xf32>
    %9 = tpu.matmul %8, %6, %cst_10 {dimension_numbers = #tpu.dot_dimension_numbers<[1], [0], [0], [1], [0, 0, 1, 1], [], []>} : vector<16x8xbf16>, vector<8x560xbf16>, vector<16x560xf32> -> vector<16x560xf32>
    %10 = arith.addf %4, %9 : vector<16x560xf32>
    %c0_11 = arith.constant 0 : index
    %c0_12 = arith.constant 0 : index
    %c1_13 = arith.constant 1 : index
    %11 = vector.load %arg1[%c0_11, %c0_12, %c1_13] : memref<4x8x578xbf16, #tpu.memory_space<vmem>>, vector<1x8x560xbf16>
    %12 = vector.shape_cast %11 : vector<1x8x560xbf16> to vector<8x560xbf16>
    %c2 = arith.constant 2 : index
    %c0_14 = arith.constant 0 : index
    %c0_15 = arith.constant 0 : index
    %13 = vector.load %arg2[%c2, %c0_14, %c0_15] : memref<16x16x8xbf16, #tpu.memory_space<vmem>>, vector<1x16x8xbf16>
    %14 = vector.shape_cast %13 : vector<1x16x8xbf16> to vector<16x8xbf16>
    %cst_16 = arith.constant dense<0.000000e+00> : vector<16x560xf32>
    %15 = tpu.matmul %14, %12, %cst_16 {dimension_numbers = #tpu.dot_dimension_numbers<[1], [0], [0], [1], [0, 0, 1, 1], [], []>} : vector<16x8xbf16>, vector<8x560xbf16>, vector<16x560xf32> -> vector<16x560xf32>
    %16 = arith.addf %10, %15 : vector<16x560xf32>
    %c1_17 = arith.constant 1 : index
    %c0_18 = arith.constant 0 : index
    %c1_19 = arith.constant 1 : index
    %17 = vector.load %arg1[%c1_17, %c0_18, %c1_19] : memref<4x8x578xbf16, #tpu.memory_space<vmem>>, vector<1x8x560xbf16>
    %18 = vector.shape_cast %17 : vector<1x8x560xbf16> to vector<8x560xbf16>
    %c3 = arith.constant 3 : index
    %c0_20 = arith.constant 0 : index
    %c0_21 = arith.constant 0 : index
    %19 = vector.load %arg2[%c3, %c0_20, %c0_21] : memref<16x16x8xbf16, #tpu.memory_space<vmem>>, vector<1x16x8xbf16>
    %20 = vector.shape_cast %19 : vector<1x16x8xbf16> to vector<16x8xbf16>
    %cst_22 = arith.constant dense<0.000000e+00> : vector<16x560xf32>
    %21 = tpu.matmul %20, %18, %cst_22 {dimension_numbers = #tpu.dot_dimension_numbers<[1], [0], [0], [1], [0, 0, 1, 1], [], []>} : vector<16x8xbf16>, vector<8x560xbf16>, vector<16x560xf32> -> vector<16x560xf32>
    %22 = arith.addf %16, %21 : vector<16x560xf32>
    %c2_23 = arith.constant 2 : index
    %c0_24 = arith.constant 0 : index
    %c0_25 = arith.constant 0 : index
    %23 = vector.load %arg1[%c2_23, %c0_24, %c0_25] : memref<4x8x578xbf16, #tpu.memory_space<vmem>>, vector<1x8x560xbf16>
    %24 = vector.shape_cast %23 : vector<1x8x560xbf16> to vector<8x560xbf16>
    %c4 = arith.constant 4 : index
    %c0_26 = arith.constant 0 : index
    %c0_27 = arith.constant 0 : index
    %25 = vector.load %arg2[%c4, %c0_26, %c0_27] : memref<16x16x8xbf16, #tpu.memory_space<vmem>>, vector<1x16x8xbf16>
    %26 = vector.shape_cast %25 : vector<1x16x8xbf16> to vector<16x8xbf16>
    %cst_28 = arith.constant dense<0.000000e+00> : vector<16x560xf32>
    %27 = tpu.matmul %26, %24, %cst_28 {dimension_numbers = #tpu.dot_dimension_numbers<[1], [0], [0], [1], [0, 0, 1, 1], [], []>} : vector<16x8xbf16>, vector<8x560xbf16>, vector<16x560xf32> -> vector<16x560xf32>
    %28 = arith.addf %22, %27 : vector<16x560xf32>
    %c3_29 = arith.constant 3 : index
    %c0_30 = arith.constant 0 : index
    %c0_31 = arith.constant 0 : index
    %29 = vector.load %arg1[%c3_29, %c0_30, %c0_31] : memref<4x8x578xbf16, #tpu.memory_space<vmem>>, vector<1x8x560xbf16>
    %30 = vector.shape_cast %29 : vector<1x8x560xbf16> to vector<8x560xbf16>
    %c5 = arith.constant 5 : index
    %c0_32 = arith.constant 0 : index
    %c0_33 = arith.constant 0 : index
    %31 = vector.load %arg2[%c5, %c0_32, %c0_33] : memref<16x16x8xbf16, #tpu.memory_space<vmem>>, vector<1x16x8xbf16>
    %32 = vector.shape_cast %31 : vector<1x16x8xbf16> to vector<16x8xbf16>
    %cst_34 = arith.constant dense<0.000000e+00> : vector<16x560xf32>
    %33 = tpu.matmul %32, %30, %cst_34 {dimension_numbers = #tpu.dot_dimension_numbers<[1], [0], [0], [1], [0, 0, 1, 1], [], []>} : vector<16x8xbf16>, vector<8x560xbf16>, vector<16x560xf32> -> vector<16x560xf32>
    %34 = arith.addf %28, %33 : vector<16x560xf32>
    %c2_35 = arith.constant 2 : index
    %c0_36 = arith.constant 0 : index
    %c1_37 = arith.constant 1 : index
    %35 = vector.load %arg1[%c2_35, %c0_36, %c1_37] : memref<4x8x578xbf16, #tpu.memory_space<vmem>>, vector<1x8x560xbf16>
    %36 = vector.shape_cast %35 : vector<1x8x560xbf16> to vector<8x560xbf16>
    %c6 = arith.constant 6 : index
    %c0_38 = arith.constant 0 : index
    %c0_39 = arith.constant 0 : index
    %37 = vector.load %arg2[%c6, %c0_38, %c0_39] : memref<16x16x8xbf16, #tpu.memory_space<vmem>>, vector<1x16x8xbf16>
    %38 = vector.shape_cast %37 : vector<1x16x8xbf16> to vector<16x8xbf16>
    %cst_40 = arith.constant dense<0.000000e+00> : vector<16x560xf32>
    %39 = tpu.matmul %38, %36, %cst_40 {dimension_numbers = #tpu.dot_dimension_numbers<[1], [0], [0], [1], [0, 0, 1, 1], [], []>} : vector<16x8xbf16>, vector<8x560xbf16>, vector<16x560xf32> -> vector<16x560xf32>
    %40 = arith.addf %34, %39 : vector<16x560xf32>
    %c3_41 = arith.constant 3 : index
    %c0_42 = arith.constant 0 : index
    %c1_43 = arith.constant 1 : index
    %41 = vector.load %arg1[%c3_41, %c0_42, %c1_43] : memref<4x8x578xbf16, #tpu.memory_space<vmem>>, vector<1x8x560xbf16>
    %42 = vector.shape_cast %41 : vector<1x8x560xbf16> to vector<8x560xbf16>
    %c7 = arith.constant 7 : index
    %c0_44 = arith.constant 0 : index
    %c0_45 = arith.constant 0 : index
    %43 = vector.load %arg2[%c7, %c0_44, %c0_45] : memref<16x16x8xbf16, #tpu.memory_space<vmem>>, vector<1x16x8xbf16>
    %44 = vector.shape_cast %43 : vector<1x16x8xbf16> to vector<16x8xbf16>
    %cst_46 = arith.constant dense<0.000000e+00> : vector<16x560xf32>
    %45 = tpu.matmul %44, %42, %cst_46 {dimension_numbers = #tpu.dot_dimension_numbers<[1], [0], [0], [1], [0, 0, 1, 1], [], []>} : vector<16x8xbf16>, vector<8x560xbf16>, vector<16x560xf32> -> vector<16x560xf32>
    %46 = arith.addf %40, %45 : vector<16x560xf32>
    %c0_47 = arith.constant 0 : index
    %c0_48 = arith.constant 0 : index
    %c17 = arith.constant 17 : index
    %47 = vector.load %arg1[%c0_47, %c0_48, %c17] : memref<4x8x578xbf16, #tpu.memory_space<vmem>>, vector<1x8x560xbf16>
    %48 = vector.shape_cast %47 : vector<1x8x560xbf16> to vector<8x560xbf16>
    %c8 = arith.constant 8 : index
    %c0_49 = arith.constant 0 : index
    %c0_50 = arith.constant 0 : index
    %49 = vector.load %arg2[%c8, %c0_49, %c0_50] : memref<16x16x8xbf16, #tpu.memory_space<vmem>>, vector<1x16x8xbf16>
    %50 = vector.shape_cast %49 : vector<1x16x8xbf16> to vector<16x8xbf16>
    %cst_51 = arith.constant dense<0.000000e+00> : vector<16x560xf32>
    %51 = tpu.matmul %50, %48, %cst_51 {dimension_numbers = #tpu.dot_dimension_numbers<[1], [0], [0], [1], [0, 0, 1, 1], [], []>} : vector<16x8xbf16>, vector<8x560xbf16>, vector<16x560xf32> -> vector<16x560xf32>
    %52 = arith.addf %46, %51 : vector<16x560xf32>
    %c1_52 = arith.constant 1 : index
    %c0_53 = arith.constant 0 : index
    %c17_54 = arith.constant 17 : index
    %53 = vector.load %arg1[%c1_52, %c0_53, %c17_54] : memref<4x8x578xbf16, #tpu.memory_space<vmem>>, vector<1x8x560xbf16>
    %54 = vector.shape_cast %53 : vector<1x8x560xbf16> to vector<8x560xbf16>
    %c9 = arith.constant 9 : index
    %c0_55 = arith.constant 0 : index
    %c0_56 = arith.constant 0 : index
    %55 = vector.load %arg2[%c9, %c0_55, %c0_56] : memref<16x16x8xbf16, #tpu.memory_space<vmem>>, vector<1x16x8xbf16>
    %56 = vector.shape_cast %55 : vector<1x16x8xbf16> to vector<16x8xbf16>
    %cst_57 = arith.constant dense<0.000000e+00> : vector<16x560xf32>
    %57 = tpu.matmul %56, %54, %cst_57 {dimension_numbers = #tpu.dot_dimension_numbers<[1], [0], [0], [1], [0, 0, 1, 1], [], []>} : vector<16x8xbf16>, vector<8x560xbf16>, vector<16x560xf32> -> vector<16x560xf32>
    %58 = arith.addf %52, %57 : vector<16x560xf32>
    %c0_58 = arith.constant 0 : index
    %c0_59 = arith.constant 0 : index
    %c18 = arith.constant 18 : index
    %59 = vector.load %arg1[%c0_58, %c0_59, %c18] : memref<4x8x578xbf16, #tpu.memory_space<vmem>>, vector<1x8x560xbf16>
    %60 = vector.shape_cast %59 : vector<1x8x560xbf16> to vector<8x560xbf16>
    %c10 = arith.constant 10 : index
    %c0_60 = arith.constant 0 : index
    %c0_61 = arith.constant 0 : index
    %61 = vector.load %arg2[%c10, %c0_60, %c0_61] : memref<16x16x8xbf16, #tpu.memory_space<vmem>>, vector<1x16x8xbf16>
    %62 = vector.shape_cast %61 : vector<1x16x8xbf16> to vector<16x8xbf16>
    %cst_62 = arith.constant dense<0.000000e+00> : vector<16x560xf32>
    %63 = tpu.matmul %62, %60, %cst_62 {dimension_numbers = #tpu.dot_dimension_numbers<[1], [0], [0], [1], [0, 0, 1, 1], [], []>} : vector<16x8xbf16>, vector<8x560xbf16>, vector<16x560xf32> -> vector<16x560xf32>
    %64 = arith.addf %58, %63 : vector<16x560xf32>
    %c1_63 = arith.constant 1 : index
    %c0_64 = arith.constant 0 : index
    %c18_65 = arith.constant 18 : index
    %65 = vector.load %arg1[%c1_63, %c0_64, %c18_65] : memref<4x8x578xbf16, #tpu.memory_space<vmem>>, vector<1x8x560xbf16>
    %66 = vector.shape_cast %65 : vector<1x8x560xbf16> to vector<8x560xbf16>
    %c11 = arith.constant 11 : index
    %c0_66 = arith.constant 0 : index
    %c0_67 = arith.constant 0 : index
    %67 = vector.load %arg2[%c11, %c0_66, %c0_67] : memref<16x16x8xbf16, #tpu.memory_space<vmem>>, vector<1x16x8xbf16>
    %68 = vector.shape_cast %67 : vector<1x16x8xbf16> to vector<16x8xbf16>
    %cst_68 = arith.constant dense<0.000000e+00> : vector<16x560xf32>
    %69 = tpu.matmul %68, %66, %cst_68 {dimension_numbers = #tpu.dot_dimension_numbers<[1], [0], [0], [1], [0, 0, 1, 1], [], []>} : vector<16x8xbf16>, vector<8x560xbf16>, vector<16x560xf32> -> vector<16x560xf32>
    %70 = arith.addf %64, %69 : vector<16x560xf32>
    %c2_69 = arith.constant 2 : index
    %c0_70 = arith.constant 0 : index
    %c17_71 = arith.constant 17 : index
    %71 = vector.load %arg1[%c2_69, %c0_70, %c17_71] : memref<4x8x578xbf16, #tpu.memory_space<vmem>>, vector<1x8x560xbf16>
    %72 = vector.shape_cast %71 : vector<1x8x560xbf16> to vector<8x560xbf16>
    %c12 = arith.constant 12 : index
    %c0_72 = arith.constant 0 : index
    %c0_73 = arith.constant 0 : index
    %73 = vector.load %arg2[%c12, %c0_72, %c0_73] : memref<16x16x8xbf16, #tpu.memory_space<vmem>>, vector<1x16x8xbf16>
    %74 = vector.shape_cast %73 : vector<1x16x8xbf16> to vector<16x8xbf16>
    %cst_74 = arith.constant dense<0.000000e+00> : vector<16x560xf32>
    %75 = tpu.matmul %74, %72, %cst_74 {dimension_numbers = #tpu.dot_dimension_numbers<[1], [0], [0], [1], [0, 0, 1, 1], [], []>} : vector<16x8xbf16>, vector<8x560xbf16>, vector<16x560xf32> -> vector<16x560xf32>
    %76 = arith.addf %70, %75 : vector<16x560xf32>
    %c3_75 = arith.constant 3 : index
    %c0_76 = arith.constant 0 : index
    %c17_77 = arith.constant 17 : index
    %77 = vector.load %arg1[%c3_75, %c0_76, %c17_77] : memref<4x8x578xbf16, #tpu.memory_space<vmem>>, vector<1x8x560xbf16>
    %78 = vector.shape_cast %77 : vector<1x8x560xbf16> to vector<8x560xbf16>
    %c13 = arith.constant 13 : index
    %c0_78 = arith.constant 0 : index
    %c0_79 = arith.constant 0 : index
    %79 = vector.load %arg2[%c13, %c0_78, %c0_79] : memref<16x16x8xbf16, #tpu.memory_space<vmem>>, vector<1x16x8xbf16>
    %80 = vector.shape_cast %79 : vector<1x16x8xbf16> to vector<16x8xbf16>
    %cst_80 = arith.constant dense<0.000000e+00> : vector<16x560xf32>
    %81 = tpu.matmul %80, %78, %cst_80 {dimension_numbers = #tpu.dot_dimension_numbers<[1], [0], [0], [1], [0, 0, 1, 1], [], []>} : vector<16x8xbf16>, vector<8x560xbf16>, vector<16x560xf32> -> vector<16x560xf32>
    %82 = arith.addf %76, %81 : vector<16x560xf32>
    %c2_81 = arith.constant 2 : index
    %c0_82 = arith.constant 0 : index
    %c18_83 = arith.constant 18 : index
    %83 = vector.load %arg1[%c2_81, %c0_82, %c18_83] : memref<4x8x578xbf16, #tpu.memory_space<vmem>>, vector<1x8x560xbf16>
    %84 = vector.shape_cast %83 : vector<1x8x560xbf16> to vector<8x560xbf16>
    %c14 = arith.constant 14 : index
    %c0_84 = arith.constant 0 : index
    %c0_85 = arith.constant 0 : index
    %85 = vector.load %arg2[%c14, %c0_84, %c0_85] : memref<16x16x8xbf16, #tpu.memory_space<vmem>>, vector<1x16x8xbf16>
    %86 = vector.shape_cast %85 : vector<1x16x8xbf16> to vector<16x8xbf16>
    %cst_86 = arith.constant dense<0.000000e+00> : vector<16x560xf32>
    %87 = tpu.matmul %86, %84, %cst_86 {dimension_numbers = #tpu.dot_dimension_numbers<[1], [0], [0], [1], [0, 0, 1, 1], [], []>} : vector<16x8xbf16>, vector<8x560xbf16>, vector<16x560xf32> -> vector<16x560xf32>
    %88 = arith.addf %82, %87 : vector<16x560xf32>
    %c3_87 = arith.constant 3 : index
    %c0_88 = arith.constant 0 : index
    %c18_89 = arith.constant 18 : index
    %89 = vector.load %arg1[%c3_87, %c0_88, %c18_89] : memref<4x8x578xbf16, #tpu.memory_space<vmem>>, vector<1x8x560xbf16>
    %90 = vector.shape_cast %89 : vector<1x8x560xbf16> to vector<8x560xbf16>
    %c15 = arith.constant 15 : index
    %c0_90 = arith.constant 0 : index
    %c0_91 = arith.constant 0 : index
    %91 = vector.load %arg2[%c15, %c0_90, %c0_91] : memref<16x16x8xbf16, #tpu.memory_space<vmem>>, vector<1x16x8xbf16>
    %92 = vector.shape_cast %91 : vector<1x16x8xbf16> to vector<16x8xbf16>
    %cst_92 = arith.constant dense<0.000000e+00> : vector<16x560xf32>
    %93 = tpu.matmul %92, %90, %cst_92 {dimension_numbers = #tpu.dot_dimension_numbers<[1], [0], [0], [1], [0, 0, 1, 1], [], []>} : vector<16x8xbf16>, vector<8x560xbf16>, vector<16x560xf32> -> vector<16x560xf32>
    %94 = arith.addf %88, %93 : vector<16x560xf32>
    %c0_93 = arith.constant 0 : index
    %c0_94 = arith.constant 0 : index
    %95 = vector.load %arg3[%c0_93, %c0_94] : memref<1x560xf32, #tpu.memory_space<vmem>>, vector<1x560xf32>
    %96 = vector.broadcast %95 : vector<1x560xf32> to vector<16x560xf32>
    %97 = arith.mulf %94, %96 : vector<16x560xf32>
    %cst_95 = arith.constant dense<0.000000e+00> : vector<16xf32>
    %98 = vector.multi_reduction <add>, %97, %cst_95 [1] : vector<16x560xf32> to vector<16xf32>
    %99 = vector.shape_cast %98 : vector<16xf32> to vector<16x1xf32>
    %cst_96 = arith.constant 0.001953125 : f32
    %100 = vector.broadcast %cst_96 : f32 to vector<16x1xf32>
    %101 = arith.mulf %99, %100 : vector<16x1xf32>
    %102 = vector.broadcast %101 : vector<16x1xf32> to vector<16x560xf32>
    %103 = arith.subf %94, %102 : vector<16x560xf32>
    %104 = vector.broadcast %95 : vector<1x560xf32> to vector<16x560xf32>
    %105 = arith.mulf %103, %104 : vector<16x560xf32>
    %106 = arith.mulf %105, %105 : vector<16x560xf32>
    %cst_97 = arith.constant dense<0.000000e+00> : vector<16xf32>
    %107 = vector.multi_reduction <add>, %106, %cst_97 [1] : vector<16x560xf32> to vector<16xf32>
    %108 = vector.shape_cast %107 : vector<16xf32> to vector<16x1xf32>
    %cst_98 = arith.constant 0.001953125 : f32
    %109 = vector.broadcast %cst_98 : f32 to vector<16x1xf32>
    %110 = arith.mulf %108, %109 : vector<16x1xf32>
    %cst_99 = arith.constant 9.99999974E-6 : f32
    %111 = vector.broadcast %cst_99 : f32 to vector<16x1xf32>
    %112 = arith.addf %110, %111 : vector<16x1xf32>
    %113 = math.rsqrt %112 : vector<16x1xf32>
    %114 = vector.broadcast %113 : vector<16x1xf32> to vector<16x560xf32>
    %115 = arith.mulf %103, %114 : vector<16x560xf32>
    %cst_100 = arith.constant 2.000000e-01 : f32
    %116 = vector.broadcast %cst_100 : f32 to vector<16x560xf32>
    %117 = arith.mulf %116, %115 : vector<16x560xf32>
    %118 = arith.maximumf %115, %117 : vector<16x560xf32>
    %119 = arith.truncf %118 : vector<16x560xf32> to vector<16x560xbf16>
    %c0_101 = arith.constant 0 : index
    %c0_102 = arith.constant 0 : index
    %120 = vector.load %arg4[%c0_101, %c0_102] : memref<16x560xbf16, #tpu.memory_space<vmem>>, vector<16x560xbf16>
    tpu.vector_store %arg4[%c0_101, %c0_102], %119 {strides = array<i32>} : memref<16x560xbf16, #tpu.memory_space<vmem>>, vector<16x560xbf16>,
    return
  }
  func.func @transform_0(%arg0: i32) -> (i32, i32, i32) {
    %c0_i32 = arith.constant 0 : i32
    %c0_i32_0 = arith.constant 0 : i32
    %c0_i32_1 = arith.constant 0 : i32
    %c0_i32_2 = arith.constant 0 : i32
    return %c0_i32, %c0_i32_0, %c0_i32_1 : i32, i32, i32
  }
  func.func @transform_1(%arg0: i32) -> (i32, i32, i32) {
    %c0_i32 = arith.constant 0 : i32
    %c0_i32_0 = arith.constant 0 : i32
    %c0_i32_1 = arith.constant 0 : i32
    %c0_i32_2 = arith.constant 0 : i32
    return %c0_i32, %c0_i32_0, %c0_i32_1 : i32, i32, i32
  }
  func.func @transform_2(%arg0: i32) -> (i32, i32) {
    %c0_i32 = arith.constant 0 : i32
    %c0_i32_0 = arith.constant 0 : i32
    %c0_i32_1 = arith.constant 0 : i32
    return %c0_i32, %c0_i32_0 : i32, i32
  }
  func.func @transform_3(%arg0: i32) -> (i32, i32) {
    %c0_i32 = arith.constant 0 : i32
    %c0_i32_0 = arith.constant 0 : i32
    %c0_i32_1 = arith.constant 0 : i32
    return %c0_i32, %c0_i32_0 : i32, i32
  }
}

module attributes {stable_mosaic.version = 11 : i64} {
  func.func @_conv_bn_leaky_kernel(%arg0: i32, %arg1: memref<4x16x162xbf16, #tpu.memory_space<vmem>>, %arg2: memref<16x32x16xbf16, #tpu.memory_space<vmem>>, %arg3: memref<1x152xf32, #tpu.memory_space<vmem>>, %arg4: memref<32x152xbf16, #tpu.memory_space<vmem>>) attributes {dimension_semantics = [#tpu.dimension_semantics<arbitrary>], iteration_bounds = array<i64: 1>, scalar_prefetch = 0 : i64, scratch_operands = 0 : i64, tpu.core_type = #tpu.core_type<tc>, window_params = [{pipeline_mode = #tpu.pipeline_mode<synchronous>, transform_indices = @transform_0, window_bounds = array<i64: 4, 16, 162>}, {pipeline_mode = #tpu.pipeline_mode<synchronous>, transform_indices = @transform_1, window_bounds = array<i64: 16, 32, 16>}, {pipeline_mode = #tpu.pipeline_mode<synchronous>, transform_indices = @transform_2, window_bounds = array<i64: 1, 152>}, {pipeline_mode = #tpu.pipeline_mode<synchronous>, transform_indices = @transform_3, window_bounds = array<i64: 32, 152>}]} {
    %c0 = arith.constant 0 : index
    %c0_0 = arith.constant 0 : index
    %c0_1 = arith.constant 0 : index
    %0 = vector.load %arg1[%c0, %c0_0, %c0_1] : memref<4x16x162xbf16, #tpu.memory_space<vmem>>, vector<1x16x152xbf16>
    %1 = vector.shape_cast %0 : vector<1x16x152xbf16> to vector<16x152xbf16>
    %c0_2 = arith.constant 0 : index
    %c0_3 = arith.constant 0 : index
    %c0_4 = arith.constant 0 : index
    %2 = vector.load %arg2[%c0_2, %c0_3, %c0_4] : memref<16x32x16xbf16, #tpu.memory_space<vmem>>, vector<1x32x16xbf16>
    %3 = vector.shape_cast %2 : vector<1x32x16xbf16> to vector<32x16xbf16>
    %cst = arith.constant dense<0.000000e+00> : vector<32x152xf32>
    %4 = tpu.matmul %3, %1, %cst {dimension_numbers = #tpu.dot_dimension_numbers<[1], [0], [0], [1], [0, 0, 1, 1], [], []>} : vector<32x16xbf16>, vector<16x152xbf16>, vector<32x152xf32> -> vector<32x152xf32>
    %c1 = arith.constant 1 : index
    %c0_5 = arith.constant 0 : index
    %c0_6 = arith.constant 0 : index
    %5 = vector.load %arg1[%c1, %c0_5, %c0_6] : memref<4x16x162xbf16, #tpu.memory_space<vmem>>, vector<1x16x152xbf16>
    %6 = vector.shape_cast %5 : vector<1x16x152xbf16> to vector<16x152xbf16>
    %c1_7 = arith.constant 1 : index
    %c0_8 = arith.constant 0 : index
    %c0_9 = arith.constant 0 : index
    %7 = vector.load %arg2[%c1_7, %c0_8, %c0_9] : memref<16x32x16xbf16, #tpu.memory_space<vmem>>, vector<1x32x16xbf16>
    %8 = vector.shape_cast %7 : vector<1x32x16xbf16> to vector<32x16xbf16>
    %cst_10 = arith.constant dense<0.000000e+00> : vector<32x152xf32>
    %9 = tpu.matmul %8, %6, %cst_10 {dimension_numbers = #tpu.dot_dimension_numbers<[1], [0], [0], [1], [0, 0, 1, 1], [], []>} : vector<32x16xbf16>, vector<16x152xbf16>, vector<32x152xf32> -> vector<32x152xf32>
    %10 = arith.addf %4, %9 : vector<32x152xf32>
    %c0_11 = arith.constant 0 : index
    %c0_12 = arith.constant 0 : index
    %c1_13 = arith.constant 1 : index
    %11 = vector.load %arg1[%c0_11, %c0_12, %c1_13] : memref<4x16x162xbf16, #tpu.memory_space<vmem>>, vector<1x16x152xbf16>
    %12 = vector.shape_cast %11 : vector<1x16x152xbf16> to vector<16x152xbf16>
    %c2 = arith.constant 2 : index
    %c0_14 = arith.constant 0 : index
    %c0_15 = arith.constant 0 : index
    %13 = vector.load %arg2[%c2, %c0_14, %c0_15] : memref<16x32x16xbf16, #tpu.memory_space<vmem>>, vector<1x32x16xbf16>
    %14 = vector.shape_cast %13 : vector<1x32x16xbf16> to vector<32x16xbf16>
    %cst_16 = arith.constant dense<0.000000e+00> : vector<32x152xf32>
    %15 = tpu.matmul %14, %12, %cst_16 {dimension_numbers = #tpu.dot_dimension_numbers<[1], [0], [0], [1], [0, 0, 1, 1], [], []>} : vector<32x16xbf16>, vector<16x152xbf16>, vector<32x152xf32> -> vector<32x152xf32>
    %16 = arith.addf %10, %15 : vector<32x152xf32>
    %c1_17 = arith.constant 1 : index
    %c0_18 = arith.constant 0 : index
    %c1_19 = arith.constant 1 : index
    %17 = vector.load %arg1[%c1_17, %c0_18, %c1_19] : memref<4x16x162xbf16, #tpu.memory_space<vmem>>, vector<1x16x152xbf16>
    %18 = vector.shape_cast %17 : vector<1x16x152xbf16> to vector<16x152xbf16>
    %c3 = arith.constant 3 : index
    %c0_20 = arith.constant 0 : index
    %c0_21 = arith.constant 0 : index
    %19 = vector.load %arg2[%c3, %c0_20, %c0_21] : memref<16x32x16xbf16, #tpu.memory_space<vmem>>, vector<1x32x16xbf16>
    %20 = vector.shape_cast %19 : vector<1x32x16xbf16> to vector<32x16xbf16>
    %cst_22 = arith.constant dense<0.000000e+00> : vector<32x152xf32>
    %21 = tpu.matmul %20, %18, %cst_22 {dimension_numbers = #tpu.dot_dimension_numbers<[1], [0], [0], [1], [0, 0, 1, 1], [], []>} : vector<32x16xbf16>, vector<16x152xbf16>, vector<32x152xf32> -> vector<32x152xf32>
    %22 = arith.addf %16, %21 : vector<32x152xf32>
    %c2_23 = arith.constant 2 : index
    %c0_24 = arith.constant 0 : index
    %c0_25 = arith.constant 0 : index
    %23 = vector.load %arg1[%c2_23, %c0_24, %c0_25] : memref<4x16x162xbf16, #tpu.memory_space<vmem>>, vector<1x16x152xbf16>
    %24 = vector.shape_cast %23 : vector<1x16x152xbf16> to vector<16x152xbf16>
    %c4 = arith.constant 4 : index
    %c0_26 = arith.constant 0 : index
    %c0_27 = arith.constant 0 : index
    %25 = vector.load %arg2[%c4, %c0_26, %c0_27] : memref<16x32x16xbf16, #tpu.memory_space<vmem>>, vector<1x32x16xbf16>
    %26 = vector.shape_cast %25 : vector<1x32x16xbf16> to vector<32x16xbf16>
    %cst_28 = arith.constant dense<0.000000e+00> : vector<32x152xf32>
    %27 = tpu.matmul %26, %24, %cst_28 {dimension_numbers = #tpu.dot_dimension_numbers<[1], [0], [0], [1], [0, 0, 1, 1], [], []>} : vector<32x16xbf16>, vector<16x152xbf16>, vector<32x152xf32> -> vector<32x152xf32>
    %28 = arith.addf %22, %27 : vector<32x152xf32>
    %c3_29 = arith.constant 3 : index
    %c0_30 = arith.constant 0 : index
    %c0_31 = arith.constant 0 : index
    %29 = vector.load %arg1[%c3_29, %c0_30, %c0_31] : memref<4x16x162xbf16, #tpu.memory_space<vmem>>, vector<1x16x152xbf16>
    %30 = vector.shape_cast %29 : vector<1x16x152xbf16> to vector<16x152xbf16>
    %c5 = arith.constant 5 : index
    %c0_32 = arith.constant 0 : index
    %c0_33 = arith.constant 0 : index
    %31 = vector.load %arg2[%c5, %c0_32, %c0_33] : memref<16x32x16xbf16, #tpu.memory_space<vmem>>, vector<1x32x16xbf16>
    %32 = vector.shape_cast %31 : vector<1x32x16xbf16> to vector<32x16xbf16>
    %cst_34 = arith.constant dense<0.000000e+00> : vector<32x152xf32>
    %33 = tpu.matmul %32, %30, %cst_34 {dimension_numbers = #tpu.dot_dimension_numbers<[1], [0], [0], [1], [0, 0, 1, 1], [], []>} : vector<32x16xbf16>, vector<16x152xbf16>, vector<32x152xf32> -> vector<32x152xf32>
    %34 = arith.addf %28, %33 : vector<32x152xf32>
    %c2_35 = arith.constant 2 : index
    %c0_36 = arith.constant 0 : index
    %c1_37 = arith.constant 1 : index
    %35 = vector.load %arg1[%c2_35, %c0_36, %c1_37] : memref<4x16x162xbf16, #tpu.memory_space<vmem>>, vector<1x16x152xbf16>
    %36 = vector.shape_cast %35 : vector<1x16x152xbf16> to vector<16x152xbf16>
    %c6 = arith.constant 6 : index
    %c0_38 = arith.constant 0 : index
    %c0_39 = arith.constant 0 : index
    %37 = vector.load %arg2[%c6, %c0_38, %c0_39] : memref<16x32x16xbf16, #tpu.memory_space<vmem>>, vector<1x32x16xbf16>
    %38 = vector.shape_cast %37 : vector<1x32x16xbf16> to vector<32x16xbf16>
    %cst_40 = arith.constant dense<0.000000e+00> : vector<32x152xf32>
    %39 = tpu.matmul %38, %36, %cst_40 {dimension_numbers = #tpu.dot_dimension_numbers<[1], [0], [0], [1], [0, 0, 1, 1], [], []>} : vector<32x16xbf16>, vector<16x152xbf16>, vector<32x152xf32> -> vector<32x152xf32>
    %40 = arith.addf %34, %39 : vector<32x152xf32>
    %c3_41 = arith.constant 3 : index
    %c0_42 = arith.constant 0 : index
    %c1_43 = arith.constant 1 : index
    %41 = vector.load %arg1[%c3_41, %c0_42, %c1_43] : memref<4x16x162xbf16, #tpu.memory_space<vmem>>, vector<1x16x152xbf16>
    %42 = vector.shape_cast %41 : vector<1x16x152xbf16> to vector<16x152xbf16>
    %c7 = arith.constant 7 : index
    %c0_44 = arith.constant 0 : index
    %c0_45 = arith.constant 0 : index
    %43 = vector.load %arg2[%c7, %c0_44, %c0_45] : memref<16x32x16xbf16, #tpu.memory_space<vmem>>, vector<1x32x16xbf16>
    %44 = vector.shape_cast %43 : vector<1x32x16xbf16> to vector<32x16xbf16>
    %cst_46 = arith.constant dense<0.000000e+00> : vector<32x152xf32>
    %45 = tpu.matmul %44, %42, %cst_46 {dimension_numbers = #tpu.dot_dimension_numbers<[1], [0], [0], [1], [0, 0, 1, 1], [], []>} : vector<32x16xbf16>, vector<16x152xbf16>, vector<32x152xf32> -> vector<32x152xf32>
    %46 = arith.addf %40, %45 : vector<32x152xf32>
    %c0_47 = arith.constant 0 : index
    %c0_48 = arith.constant 0 : index
    %c9 = arith.constant 9 : index
    %47 = vector.load %arg1[%c0_47, %c0_48, %c9] : memref<4x16x162xbf16, #tpu.memory_space<vmem>>, vector<1x16x152xbf16>
    %48 = vector.shape_cast %47 : vector<1x16x152xbf16> to vector<16x152xbf16>
    %c8 = arith.constant 8 : index
    %c0_49 = arith.constant 0 : index
    %c0_50 = arith.constant 0 : index
    %49 = vector.load %arg2[%c8, %c0_49, %c0_50] : memref<16x32x16xbf16, #tpu.memory_space<vmem>>, vector<1x32x16xbf16>
    %50 = vector.shape_cast %49 : vector<1x32x16xbf16> to vector<32x16xbf16>
    %cst_51 = arith.constant dense<0.000000e+00> : vector<32x152xf32>
    %51 = tpu.matmul %50, %48, %cst_51 {dimension_numbers = #tpu.dot_dimension_numbers<[1], [0], [0], [1], [0, 0, 1, 1], [], []>} : vector<32x16xbf16>, vector<16x152xbf16>, vector<32x152xf32> -> vector<32x152xf32>
    %52 = arith.addf %46, %51 : vector<32x152xf32>
    %c1_52 = arith.constant 1 : index
    %c0_53 = arith.constant 0 : index
    %c9_54 = arith.constant 9 : index
    %53 = vector.load %arg1[%c1_52, %c0_53, %c9_54] : memref<4x16x162xbf16, #tpu.memory_space<vmem>>, vector<1x16x152xbf16>
    %54 = vector.shape_cast %53 : vector<1x16x152xbf16> to vector<16x152xbf16>
    %c9_55 = arith.constant 9 : index
    %c0_56 = arith.constant 0 : index
    %c0_57 = arith.constant 0 : index
    %55 = vector.load %arg2[%c9_55, %c0_56, %c0_57] : memref<16x32x16xbf16, #tpu.memory_space<vmem>>, vector<1x32x16xbf16>
    %56 = vector.shape_cast %55 : vector<1x32x16xbf16> to vector<32x16xbf16>
    %cst_58 = arith.constant dense<0.000000e+00> : vector<32x152xf32>
    %57 = tpu.matmul %56, %54, %cst_58 {dimension_numbers = #tpu.dot_dimension_numbers<[1], [0], [0], [1], [0, 0, 1, 1], [], []>} : vector<32x16xbf16>, vector<16x152xbf16>, vector<32x152xf32> -> vector<32x152xf32>
    %58 = arith.addf %52, %57 : vector<32x152xf32>
    %c0_59 = arith.constant 0 : index
    %c0_60 = arith.constant 0 : index
    %c10 = arith.constant 10 : index
    %59 = vector.load %arg1[%c0_59, %c0_60, %c10] : memref<4x16x162xbf16, #tpu.memory_space<vmem>>, vector<1x16x152xbf16>
    %60 = vector.shape_cast %59 : vector<1x16x152xbf16> to vector<16x152xbf16>
    %c10_61 = arith.constant 10 : index
    %c0_62 = arith.constant 0 : index
    %c0_63 = arith.constant 0 : index
    %61 = vector.load %arg2[%c10_61, %c0_62, %c0_63] : memref<16x32x16xbf16, #tpu.memory_space<vmem>>, vector<1x32x16xbf16>
    %62 = vector.shape_cast %61 : vector<1x32x16xbf16> to vector<32x16xbf16>
    %cst_64 = arith.constant dense<0.000000e+00> : vector<32x152xf32>
    %63 = tpu.matmul %62, %60, %cst_64 {dimension_numbers = #tpu.dot_dimension_numbers<[1], [0], [0], [1], [0, 0, 1, 1], [], []>} : vector<32x16xbf16>, vector<16x152xbf16>, vector<32x152xf32> -> vector<32x152xf32>
    %64 = arith.addf %58, %63 : vector<32x152xf32>
    %c1_65 = arith.constant 1 : index
    %c0_66 = arith.constant 0 : index
    %c10_67 = arith.constant 10 : index
    %65 = vector.load %arg1[%c1_65, %c0_66, %c10_67] : memref<4x16x162xbf16, #tpu.memory_space<vmem>>, vector<1x16x152xbf16>
    %66 = vector.shape_cast %65 : vector<1x16x152xbf16> to vector<16x152xbf16>
    %c11 = arith.constant 11 : index
    %c0_68 = arith.constant 0 : index
    %c0_69 = arith.constant 0 : index
    %67 = vector.load %arg2[%c11, %c0_68, %c0_69] : memref<16x32x16xbf16, #tpu.memory_space<vmem>>, vector<1x32x16xbf16>
    %68 = vector.shape_cast %67 : vector<1x32x16xbf16> to vector<32x16xbf16>
    %cst_70 = arith.constant dense<0.000000e+00> : vector<32x152xf32>
    %69 = tpu.matmul %68, %66, %cst_70 {dimension_numbers = #tpu.dot_dimension_numbers<[1], [0], [0], [1], [0, 0, 1, 1], [], []>} : vector<32x16xbf16>, vector<16x152xbf16>, vector<32x152xf32> -> vector<32x152xf32>
    %70 = arith.addf %64, %69 : vector<32x152xf32>
    %c2_71 = arith.constant 2 : index
    %c0_72 = arith.constant 0 : index
    %c9_73 = arith.constant 9 : index
    %71 = vector.load %arg1[%c2_71, %c0_72, %c9_73] : memref<4x16x162xbf16, #tpu.memory_space<vmem>>, vector<1x16x152xbf16>
    %72 = vector.shape_cast %71 : vector<1x16x152xbf16> to vector<16x152xbf16>
    %c12 = arith.constant 12 : index
    %c0_74 = arith.constant 0 : index
    %c0_75 = arith.constant 0 : index
    %73 = vector.load %arg2[%c12, %c0_74, %c0_75] : memref<16x32x16xbf16, #tpu.memory_space<vmem>>, vector<1x32x16xbf16>
    %74 = vector.shape_cast %73 : vector<1x32x16xbf16> to vector<32x16xbf16>
    %cst_76 = arith.constant dense<0.000000e+00> : vector<32x152xf32>
    %75 = tpu.matmul %74, %72, %cst_76 {dimension_numbers = #tpu.dot_dimension_numbers<[1], [0], [0], [1], [0, 0, 1, 1], [], []>} : vector<32x16xbf16>, vector<16x152xbf16>, vector<32x152xf32> -> vector<32x152xf32>
    %76 = arith.addf %70, %75 : vector<32x152xf32>
    %c3_77 = arith.constant 3 : index
    %c0_78 = arith.constant 0 : index
    %c9_79 = arith.constant 9 : index
    %77 = vector.load %arg1[%c3_77, %c0_78, %c9_79] : memref<4x16x162xbf16, #tpu.memory_space<vmem>>, vector<1x16x152xbf16>
    %78 = vector.shape_cast %77 : vector<1x16x152xbf16> to vector<16x152xbf16>
    %c13 = arith.constant 13 : index
    %c0_80 = arith.constant 0 : index
    %c0_81 = arith.constant 0 : index
    %79 = vector.load %arg2[%c13, %c0_80, %c0_81] : memref<16x32x16xbf16, #tpu.memory_space<vmem>>, vector<1x32x16xbf16>
    %80 = vector.shape_cast %79 : vector<1x32x16xbf16> to vector<32x16xbf16>
    %cst_82 = arith.constant dense<0.000000e+00> : vector<32x152xf32>
    %81 = tpu.matmul %80, %78, %cst_82 {dimension_numbers = #tpu.dot_dimension_numbers<[1], [0], [0], [1], [0, 0, 1, 1], [], []>} : vector<32x16xbf16>, vector<16x152xbf16>, vector<32x152xf32> -> vector<32x152xf32>
    %82 = arith.addf %76, %81 : vector<32x152xf32>
    %c2_83 = arith.constant 2 : index
    %c0_84 = arith.constant 0 : index
    %c10_85 = arith.constant 10 : index
    %83 = vector.load %arg1[%c2_83, %c0_84, %c10_85] : memref<4x16x162xbf16, #tpu.memory_space<vmem>>, vector<1x16x152xbf16>
    %84 = vector.shape_cast %83 : vector<1x16x152xbf16> to vector<16x152xbf16>
    %c14 = arith.constant 14 : index
    %c0_86 = arith.constant 0 : index
    %c0_87 = arith.constant 0 : index
    %85 = vector.load %arg2[%c14, %c0_86, %c0_87] : memref<16x32x16xbf16, #tpu.memory_space<vmem>>, vector<1x32x16xbf16>
    %86 = vector.shape_cast %85 : vector<1x32x16xbf16> to vector<32x16xbf16>
    %cst_88 = arith.constant dense<0.000000e+00> : vector<32x152xf32>
    %87 = tpu.matmul %86, %84, %cst_88 {dimension_numbers = #tpu.dot_dimension_numbers<[1], [0], [0], [1], [0, 0, 1, 1], [], []>} : vector<32x16xbf16>, vector<16x152xbf16>, vector<32x152xf32> -> vector<32x152xf32>
    %88 = arith.addf %82, %87 : vector<32x152xf32>
    %c3_89 = arith.constant 3 : index
    %c0_90 = arith.constant 0 : index
    %c10_91 = arith.constant 10 : index
    %89 = vector.load %arg1[%c3_89, %c0_90, %c10_91] : memref<4x16x162xbf16, #tpu.memory_space<vmem>>, vector<1x16x152xbf16>
    %90 = vector.shape_cast %89 : vector<1x16x152xbf16> to vector<16x152xbf16>
    %c15 = arith.constant 15 : index
    %c0_92 = arith.constant 0 : index
    %c0_93 = arith.constant 0 : index
    %91 = vector.load %arg2[%c15, %c0_92, %c0_93] : memref<16x32x16xbf16, #tpu.memory_space<vmem>>, vector<1x32x16xbf16>
    %92 = vector.shape_cast %91 : vector<1x32x16xbf16> to vector<32x16xbf16>
    %cst_94 = arith.constant dense<0.000000e+00> : vector<32x152xf32>
    %93 = tpu.matmul %92, %90, %cst_94 {dimension_numbers = #tpu.dot_dimension_numbers<[1], [0], [0], [1], [0, 0, 1, 1], [], []>} : vector<32x16xbf16>, vector<16x152xbf16>, vector<32x152xf32> -> vector<32x152xf32>
    %94 = arith.addf %88, %93 : vector<32x152xf32>
    %c0_95 = arith.constant 0 : index
    %c0_96 = arith.constant 0 : index
    %95 = vector.load %arg3[%c0_95, %c0_96] : memref<1x152xf32, #tpu.memory_space<vmem>>, vector<1x152xf32>
    %96 = vector.broadcast %95 : vector<1x152xf32> to vector<32x152xf32>
    %97 = arith.mulf %94, %96 : vector<32x152xf32>
    %cst_97 = arith.constant dense<0.000000e+00> : vector<32xf32>
    %98 = vector.multi_reduction <add>, %97, %cst_97 [1] : vector<32x152xf32> to vector<32xf32>
    %99 = vector.shape_cast %98 : vector<32xf32> to vector<32x1xf32>
    %cst_98 = arith.constant 7.812500e-03 : f32
    %100 = vector.broadcast %cst_98 : f32 to vector<32x1xf32>
    %101 = arith.mulf %99, %100 : vector<32x1xf32>
    %102 = vector.broadcast %101 : vector<32x1xf32> to vector<32x152xf32>
    %103 = arith.subf %94, %102 : vector<32x152xf32>
    %104 = vector.broadcast %95 : vector<1x152xf32> to vector<32x152xf32>
    %105 = arith.mulf %103, %104 : vector<32x152xf32>
    %106 = arith.mulf %105, %105 : vector<32x152xf32>
    %cst_99 = arith.constant dense<0.000000e+00> : vector<32xf32>
    %107 = vector.multi_reduction <add>, %106, %cst_99 [1] : vector<32x152xf32> to vector<32xf32>
    %108 = vector.shape_cast %107 : vector<32xf32> to vector<32x1xf32>
    %cst_100 = arith.constant 7.812500e-03 : f32
    %109 = vector.broadcast %cst_100 : f32 to vector<32x1xf32>
    %110 = arith.mulf %108, %109 : vector<32x1xf32>
    %cst_101 = arith.constant 9.99999974E-6 : f32
    %111 = vector.broadcast %cst_101 : f32 to vector<32x1xf32>
    %112 = arith.addf %110, %111 : vector<32x1xf32>
    %113 = math.rsqrt %112 : vector<32x1xf32>
    %114 = vector.broadcast %113 : vector<32x1xf32> to vector<32x152xf32>
    %115 = arith.mulf %103, %114 : vector<32x152xf32>
    %cst_102 = arith.constant 2.000000e-01 : f32
    %116 = vector.broadcast %cst_102 : f32 to vector<32x152xf32>
    %117 = arith.mulf %116, %115 : vector<32x152xf32>
    %118 = arith.maximumf %115, %117 : vector<32x152xf32>
    %119 = arith.truncf %118 : vector<32x152xf32> to vector<32x152xbf16>
    %c0_103 = arith.constant 0 : index
    %c0_104 = arith.constant 0 : index
    %120 = vector.load %arg4[%c0_103, %c0_104] : memref<32x152xbf16, #tpu.memory_space<vmem>>, vector<32x152xbf16>
    tpu.vector_store %arg4[%c0_103, %c0_104], %119 {strides = array<i32>} : memref<32x152xbf16, #tpu.memory_space<vmem>>, vector<32x152xbf16>,
    return
  }
  func.func @transform_0(%arg0: i32) -> (i32, i32, i32) {
    %c0_i32 = arith.constant 0 : i32
    %c0_i32_0 = arith.constant 0 : i32
    %c0_i32_1 = arith.constant 0 : i32
    %c0_i32_2 = arith.constant 0 : i32
    return %c0_i32, %c0_i32_0, %c0_i32_1 : i32, i32, i32
  }
  func.func @transform_1(%arg0: i32) -> (i32, i32, i32) {
    %c0_i32 = arith.constant 0 : i32
    %c0_i32_0 = arith.constant 0 : i32
    %c0_i32_1 = arith.constant 0 : i32
    %c0_i32_2 = arith.constant 0 : i32
    return %c0_i32, %c0_i32_0, %c0_i32_1 : i32, i32, i32
  }
  func.func @transform_2(%arg0: i32) -> (i32, i32) {
    %c0_i32 = arith.constant 0 : i32
    %c0_i32_0 = arith.constant 0 : i32
    %c0_i32_1 = arith.constant 0 : i32
    return %c0_i32, %c0_i32_0 : i32, i32
  }
  func.func @transform_3(%arg0: i32) -> (i32, i32) {
    %c0_i32 = arith.constant 0 : i32
    %c0_i32_0 = arith.constant 0 : i32
    %c0_i32_1 = arith.constant 0 : i32
    return %c0_i32, %c0_i32_0 : i32, i32
  }
}

module attributes {stable_mosaic.version = 11 : i64} {
  func.func @_conv_bn_leaky_kernel(%arg0: i32, %arg1: memref<4x32x50xbf16, #tpu.memory_space<vmem>>, %arg2: memref<16x64x32xbf16, #tpu.memory_space<vmem>>, %arg3: memref<1x44xf32, #tpu.memory_space<vmem>>, %arg4: memref<64x44xbf16, #tpu.memory_space<vmem>>) attributes {dimension_semantics = [#tpu.dimension_semantics<arbitrary>], iteration_bounds = array<i64: 1>, scalar_prefetch = 0 : i64, scratch_operands = 0 : i64, tpu.core_type = #tpu.core_type<tc>, window_params = [{pipeline_mode = #tpu.pipeline_mode<synchronous>, transform_indices = @transform_0, window_bounds = array<i64: 4, 32, 50>}, {pipeline_mode = #tpu.pipeline_mode<synchronous>, transform_indices = @transform_1, window_bounds = array<i64: 16, 64, 32>}, {pipeline_mode = #tpu.pipeline_mode<synchronous>, transform_indices = @transform_2, window_bounds = array<i64: 1, 44>}, {pipeline_mode = #tpu.pipeline_mode<synchronous>, transform_indices = @transform_3, window_bounds = array<i64: 64, 44>}]} {
    %c0 = arith.constant 0 : index
    %c0_0 = arith.constant 0 : index
    %c0_1 = arith.constant 0 : index
    %0 = vector.load %arg1[%c0, %c0_0, %c0_1] : memref<4x32x50xbf16, #tpu.memory_space<vmem>>, vector<1x32x44xbf16>
    %1 = vector.shape_cast %0 : vector<1x32x44xbf16> to vector<32x44xbf16>
    %c0_2 = arith.constant 0 : index
    %c0_3 = arith.constant 0 : index
    %c0_4 = arith.constant 0 : index
    %2 = vector.load %arg2[%c0_2, %c0_3, %c0_4] : memref<16x64x32xbf16, #tpu.memory_space<vmem>>, vector<1x64x32xbf16>
    %3 = vector.shape_cast %2 : vector<1x64x32xbf16> to vector<64x32xbf16>
    %cst = arith.constant dense<0.000000e+00> : vector<64x44xf32>
    %4 = tpu.matmul %3, %1, %cst {dimension_numbers = #tpu.dot_dimension_numbers<[1], [0], [0], [1], [0, 0, 1, 1], [], []>} : vector<64x32xbf16>, vector<32x44xbf16>, vector<64x44xf32> -> vector<64x44xf32>
    %c1 = arith.constant 1 : index
    %c0_5 = arith.constant 0 : index
    %c0_6 = arith.constant 0 : index
    %5 = vector.load %arg1[%c1, %c0_5, %c0_6] : memref<4x32x50xbf16, #tpu.memory_space<vmem>>, vector<1x32x44xbf16>
    %6 = vector.shape_cast %5 : vector<1x32x44xbf16> to vector<32x44xbf16>
    %c1_7 = arith.constant 1 : index
    %c0_8 = arith.constant 0 : index
    %c0_9 = arith.constant 0 : index
    %7 = vector.load %arg2[%c1_7, %c0_8, %c0_9] : memref<16x64x32xbf16, #tpu.memory_space<vmem>>, vector<1x64x32xbf16>
    %8 = vector.shape_cast %7 : vector<1x64x32xbf16> to vector<64x32xbf16>
    %cst_10 = arith.constant dense<0.000000e+00> : vector<64x44xf32>
    %9 = tpu.matmul %8, %6, %cst_10 {dimension_numbers = #tpu.dot_dimension_numbers<[1], [0], [0], [1], [0, 0, 1, 1], [], []>} : vector<64x32xbf16>, vector<32x44xbf16>, vector<64x44xf32> -> vector<64x44xf32>
    %10 = arith.addf %4, %9 : vector<64x44xf32>
    %c0_11 = arith.constant 0 : index
    %c0_12 = arith.constant 0 : index
    %c1_13 = arith.constant 1 : index
    %11 = vector.load %arg1[%c0_11, %c0_12, %c1_13] : memref<4x32x50xbf16, #tpu.memory_space<vmem>>, vector<1x32x44xbf16>
    %12 = vector.shape_cast %11 : vector<1x32x44xbf16> to vector<32x44xbf16>
    %c2 = arith.constant 2 : index
    %c0_14 = arith.constant 0 : index
    %c0_15 = arith.constant 0 : index
    %13 = vector.load %arg2[%c2, %c0_14, %c0_15] : memref<16x64x32xbf16, #tpu.memory_space<vmem>>, vector<1x64x32xbf16>
    %14 = vector.shape_cast %13 : vector<1x64x32xbf16> to vector<64x32xbf16>
    %cst_16 = arith.constant dense<0.000000e+00> : vector<64x44xf32>
    %15 = tpu.matmul %14, %12, %cst_16 {dimension_numbers = #tpu.dot_dimension_numbers<[1], [0], [0], [1], [0, 0, 1, 1], [], []>} : vector<64x32xbf16>, vector<32x44xbf16>, vector<64x44xf32> -> vector<64x44xf32>
    %16 = arith.addf %10, %15 : vector<64x44xf32>
    %c1_17 = arith.constant 1 : index
    %c0_18 = arith.constant 0 : index
    %c1_19 = arith.constant 1 : index
    %17 = vector.load %arg1[%c1_17, %c0_18, %c1_19] : memref<4x32x50xbf16, #tpu.memory_space<vmem>>, vector<1x32x44xbf16>
    %18 = vector.shape_cast %17 : vector<1x32x44xbf16> to vector<32x44xbf16>
    %c3 = arith.constant 3 : index
    %c0_20 = arith.constant 0 : index
    %c0_21 = arith.constant 0 : index
    %19 = vector.load %arg2[%c3, %c0_20, %c0_21] : memref<16x64x32xbf16, #tpu.memory_space<vmem>>, vector<1x64x32xbf16>
    %20 = vector.shape_cast %19 : vector<1x64x32xbf16> to vector<64x32xbf16>
    %cst_22 = arith.constant dense<0.000000e+00> : vector<64x44xf32>
    %21 = tpu.matmul %20, %18, %cst_22 {dimension_numbers = #tpu.dot_dimension_numbers<[1], [0], [0], [1], [0, 0, 1, 1], [], []>} : vector<64x32xbf16>, vector<32x44xbf16>, vector<64x44xf32> -> vector<64x44xf32>
    %22 = arith.addf %16, %21 : vector<64x44xf32>
    %c2_23 = arith.constant 2 : index
    %c0_24 = arith.constant 0 : index
    %c0_25 = arith.constant 0 : index
    %23 = vector.load %arg1[%c2_23, %c0_24, %c0_25] : memref<4x32x50xbf16, #tpu.memory_space<vmem>>, vector<1x32x44xbf16>
    %24 = vector.shape_cast %23 : vector<1x32x44xbf16> to vector<32x44xbf16>
    %c4 = arith.constant 4 : index
    %c0_26 = arith.constant 0 : index
    %c0_27 = arith.constant 0 : index
    %25 = vector.load %arg2[%c4, %c0_26, %c0_27] : memref<16x64x32xbf16, #tpu.memory_space<vmem>>, vector<1x64x32xbf16>
    %26 = vector.shape_cast %25 : vector<1x64x32xbf16> to vector<64x32xbf16>
    %cst_28 = arith.constant dense<0.000000e+00> : vector<64x44xf32>
    %27 = tpu.matmul %26, %24, %cst_28 {dimension_numbers = #tpu.dot_dimension_numbers<[1], [0], [0], [1], [0, 0, 1, 1], [], []>} : vector<64x32xbf16>, vector<32x44xbf16>, vector<64x44xf32> -> vector<64x44xf32>
    %28 = arith.addf %22, %27 : vector<64x44xf32>
    %c3_29 = arith.constant 3 : index
    %c0_30 = arith.constant 0 : index
    %c0_31 = arith.constant 0 : index
    %29 = vector.load %arg1[%c3_29, %c0_30, %c0_31] : memref<4x32x50xbf16, #tpu.memory_space<vmem>>, vector<1x32x44xbf16>
    %30 = vector.shape_cast %29 : vector<1x32x44xbf16> to vector<32x44xbf16>
    %c5 = arith.constant 5 : index
    %c0_32 = arith.constant 0 : index
    %c0_33 = arith.constant 0 : index
    %31 = vector.load %arg2[%c5, %c0_32, %c0_33] : memref<16x64x32xbf16, #tpu.memory_space<vmem>>, vector<1x64x32xbf16>
    %32 = vector.shape_cast %31 : vector<1x64x32xbf16> to vector<64x32xbf16>
    %cst_34 = arith.constant dense<0.000000e+00> : vector<64x44xf32>
    %33 = tpu.matmul %32, %30, %cst_34 {dimension_numbers = #tpu.dot_dimension_numbers<[1], [0], [0], [1], [0, 0, 1, 1], [], []>} : vector<64x32xbf16>, vector<32x44xbf16>, vector<64x44xf32> -> vector<64x44xf32>
    %34 = arith.addf %28, %33 : vector<64x44xf32>
    %c2_35 = arith.constant 2 : index
    %c0_36 = arith.constant 0 : index
    %c1_37 = arith.constant 1 : index
    %35 = vector.load %arg1[%c2_35, %c0_36, %c1_37] : memref<4x32x50xbf16, #tpu.memory_space<vmem>>, vector<1x32x44xbf16>
    %36 = vector.shape_cast %35 : vector<1x32x44xbf16> to vector<32x44xbf16>
    %c6 = arith.constant 6 : index
    %c0_38 = arith.constant 0 : index
    %c0_39 = arith.constant 0 : index
    %37 = vector.load %arg2[%c6, %c0_38, %c0_39] : memref<16x64x32xbf16, #tpu.memory_space<vmem>>, vector<1x64x32xbf16>
    %38 = vector.shape_cast %37 : vector<1x64x32xbf16> to vector<64x32xbf16>
    %cst_40 = arith.constant dense<0.000000e+00> : vector<64x44xf32>
    %39 = tpu.matmul %38, %36, %cst_40 {dimension_numbers = #tpu.dot_dimension_numbers<[1], [0], [0], [1], [0, 0, 1, 1], [], []>} : vector<64x32xbf16>, vector<32x44xbf16>, vector<64x44xf32> -> vector<64x44xf32>
    %40 = arith.addf %34, %39 : vector<64x44xf32>
    %c3_41 = arith.constant 3 : index
    %c0_42 = arith.constant 0 : index
    %c1_43 = arith.constant 1 : index
    %41 = vector.load %arg1[%c3_41, %c0_42, %c1_43] : memref<4x32x50xbf16, #tpu.memory_space<vmem>>, vector<1x32x44xbf16>
    %42 = vector.shape_cast %41 : vector<1x32x44xbf16> to vector<32x44xbf16>
    %c7 = arith.constant 7 : index
    %c0_44 = arith.constant 0 : index
    %c0_45 = arith.constant 0 : index
    %43 = vector.load %arg2[%c7, %c0_44, %c0_45] : memref<16x64x32xbf16, #tpu.memory_space<vmem>>, vector<1x64x32xbf16>
    %44 = vector.shape_cast %43 : vector<1x64x32xbf16> to vector<64x32xbf16>
    %cst_46 = arith.constant dense<0.000000e+00> : vector<64x44xf32>
    %45 = tpu.matmul %44, %42, %cst_46 {dimension_numbers = #tpu.dot_dimension_numbers<[1], [0], [0], [1], [0, 0, 1, 1], [], []>} : vector<64x32xbf16>, vector<32x44xbf16>, vector<64x44xf32> -> vector<64x44xf32>
    %46 = arith.addf %40, %45 : vector<64x44xf32>
    %c0_47 = arith.constant 0 : index
    %c0_48 = arith.constant 0 : index
    %c5_49 = arith.constant 5 : index
    %47 = vector.load %arg1[%c0_47, %c0_48, %c5_49] : memref<4x32x50xbf16, #tpu.memory_space<vmem>>, vector<1x32x44xbf16>
    %48 = vector.shape_cast %47 : vector<1x32x44xbf16> to vector<32x44xbf16>
    %c8 = arith.constant 8 : index
    %c0_50 = arith.constant 0 : index
    %c0_51 = arith.constant 0 : index
    %49 = vector.load %arg2[%c8, %c0_50, %c0_51] : memref<16x64x32xbf16, #tpu.memory_space<vmem>>, vector<1x64x32xbf16>
    %50 = vector.shape_cast %49 : vector<1x64x32xbf16> to vector<64x32xbf16>
    %cst_52 = arith.constant dense<0.000000e+00> : vector<64x44xf32>
    %51 = tpu.matmul %50, %48, %cst_52 {dimension_numbers = #tpu.dot_dimension_numbers<[1], [0], [0], [1], [0, 0, 1, 1], [], []>} : vector<64x32xbf16>, vector<32x44xbf16>, vector<64x44xf32> -> vector<64x44xf32>
    %52 = arith.addf %46, %51 : vector<64x44xf32>
    %c1_53 = arith.constant 1 : index
    %c0_54 = arith.constant 0 : index
    %c5_55 = arith.constant 5 : index
    %53 = vector.load %arg1[%c1_53, %c0_54, %c5_55] : memref<4x32x50xbf16, #tpu.memory_space<vmem>>, vector<1x32x44xbf16>
    %54 = vector.shape_cast %53 : vector<1x32x44xbf16> to vector<32x44xbf16>
    %c9 = arith.constant 9 : index
    %c0_56 = arith.constant 0 : index
    %c0_57 = arith.constant 0 : index
    %55 = vector.load %arg2[%c9, %c0_56, %c0_57] : memref<16x64x32xbf16, #tpu.memory_space<vmem>>, vector<1x64x32xbf16>
    %56 = vector.shape_cast %55 : vector<1x64x32xbf16> to vector<64x32xbf16>
    %cst_58 = arith.constant dense<0.000000e+00> : vector<64x44xf32>
    %57 = tpu.matmul %56, %54, %cst_58 {dimension_numbers = #tpu.dot_dimension_numbers<[1], [0], [0], [1], [0, 0, 1, 1], [], []>} : vector<64x32xbf16>, vector<32x44xbf16>, vector<64x44xf32> -> vector<64x44xf32>
    %58 = arith.addf %52, %57 : vector<64x44xf32>
    %c0_59 = arith.constant 0 : index
    %c0_60 = arith.constant 0 : index
    %c6_61 = arith.constant 6 : index
    %59 = vector.load %arg1[%c0_59, %c0_60, %c6_61] : memref<4x32x50xbf16, #tpu.memory_space<vmem>>, vector<1x32x44xbf16>
    %60 = vector.shape_cast %59 : vector<1x32x44xbf16> to vector<32x44xbf16>
    %c10 = arith.constant 10 : index
    %c0_62 = arith.constant 0 : index
    %c0_63 = arith.constant 0 : index
    %61 = vector.load %arg2[%c10, %c0_62, %c0_63] : memref<16x64x32xbf16, #tpu.memory_space<vmem>>, vector<1x64x32xbf16>
    %62 = vector.shape_cast %61 : vector<1x64x32xbf16> to vector<64x32xbf16>
    %cst_64 = arith.constant dense<0.000000e+00> : vector<64x44xf32>
    %63 = tpu.matmul %62, %60, %cst_64 {dimension_numbers = #tpu.dot_dimension_numbers<[1], [0], [0], [1], [0, 0, 1, 1], [], []>} : vector<64x32xbf16>, vector<32x44xbf16>, vector<64x44xf32> -> vector<64x44xf32>
    %64 = arith.addf %58, %63 : vector<64x44xf32>
    %c1_65 = arith.constant 1 : index
    %c0_66 = arith.constant 0 : index
    %c6_67 = arith.constant 6 : index
    %65 = vector.load %arg1[%c1_65, %c0_66, %c6_67] : memref<4x32x50xbf16, #tpu.memory_space<vmem>>, vector<1x32x44xbf16>
    %66 = vector.shape_cast %65 : vector<1x32x44xbf16> to vector<32x44xbf16>
    %c11 = arith.constant 11 : index
    %c0_68 = arith.constant 0 : index
    %c0_69 = arith.constant 0 : index
    %67 = vector.load %arg2[%c11, %c0_68, %c0_69] : memref<16x64x32xbf16, #tpu.memory_space<vmem>>, vector<1x64x32xbf16>
    %68 = vector.shape_cast %67 : vector<1x64x32xbf16> to vector<64x32xbf16>
    %cst_70 = arith.constant dense<0.000000e+00> : vector<64x44xf32>
    %69 = tpu.matmul %68, %66, %cst_70 {dimension_numbers = #tpu.dot_dimension_numbers<[1], [0], [0], [1], [0, 0, 1, 1], [], []>} : vector<64x32xbf16>, vector<32x44xbf16>, vector<64x44xf32> -> vector<64x44xf32>
    %70 = arith.addf %64, %69 : vector<64x44xf32>
    %c2_71 = arith.constant 2 : index
    %c0_72 = arith.constant 0 : index
    %c5_73 = arith.constant 5 : index
    %71 = vector.load %arg1[%c2_71, %c0_72, %c5_73] : memref<4x32x50xbf16, #tpu.memory_space<vmem>>, vector<1x32x44xbf16>
    %72 = vector.shape_cast %71 : vector<1x32x44xbf16> to vector<32x44xbf16>
    %c12 = arith.constant 12 : index
    %c0_74 = arith.constant 0 : index
    %c0_75 = arith.constant 0 : index
    %73 = vector.load %arg2[%c12, %c0_74, %c0_75] : memref<16x64x32xbf16, #tpu.memory_space<vmem>>, vector<1x64x32xbf16>
    %74 = vector.shape_cast %73 : vector<1x64x32xbf16> to vector<64x32xbf16>
    %cst_76 = arith.constant dense<0.000000e+00> : vector<64x44xf32>
    %75 = tpu.matmul %74, %72, %cst_76 {dimension_numbers = #tpu.dot_dimension_numbers<[1], [0], [0], [1], [0, 0, 1, 1], [], []>} : vector<64x32xbf16>, vector<32x44xbf16>, vector<64x44xf32> -> vector<64x44xf32>
    %76 = arith.addf %70, %75 : vector<64x44xf32>
    %c3_77 = arith.constant 3 : index
    %c0_78 = arith.constant 0 : index
    %c5_79 = arith.constant 5 : index
    %77 = vector.load %arg1[%c3_77, %c0_78, %c5_79] : memref<4x32x50xbf16, #tpu.memory_space<vmem>>, vector<1x32x44xbf16>
    %78 = vector.shape_cast %77 : vector<1x32x44xbf16> to vector<32x44xbf16>
    %c13 = arith.constant 13 : index
    %c0_80 = arith.constant 0 : index
    %c0_81 = arith.constant 0 : index
    %79 = vector.load %arg2[%c13, %c0_80, %c0_81] : memref<16x64x32xbf16, #tpu.memory_space<vmem>>, vector<1x64x32xbf16>
    %80 = vector.shape_cast %79 : vector<1x64x32xbf16> to vector<64x32xbf16>
    %cst_82 = arith.constant dense<0.000000e+00> : vector<64x44xf32>
    %81 = tpu.matmul %80, %78, %cst_82 {dimension_numbers = #tpu.dot_dimension_numbers<[1], [0], [0], [1], [0, 0, 1, 1], [], []>} : vector<64x32xbf16>, vector<32x44xbf16>, vector<64x44xf32> -> vector<64x44xf32>
    %82 = arith.addf %76, %81 : vector<64x44xf32>
    %c2_83 = arith.constant 2 : index
    %c0_84 = arith.constant 0 : index
    %c6_85 = arith.constant 6 : index
    %83 = vector.load %arg1[%c2_83, %c0_84, %c6_85] : memref<4x32x50xbf16, #tpu.memory_space<vmem>>, vector<1x32x44xbf16>
    %84 = vector.shape_cast %83 : vector<1x32x44xbf16> to vector<32x44xbf16>
    %c14 = arith.constant 14 : index
    %c0_86 = arith.constant 0 : index
    %c0_87 = arith.constant 0 : index
    %85 = vector.load %arg2[%c14, %c0_86, %c0_87] : memref<16x64x32xbf16, #tpu.memory_space<vmem>>, vector<1x64x32xbf16>
    %86 = vector.shape_cast %85 : vector<1x64x32xbf16> to vector<64x32xbf16>
    %cst_88 = arith.constant dense<0.000000e+00> : vector<64x44xf32>
    %87 = tpu.matmul %86, %84, %cst_88 {dimension_numbers = #tpu.dot_dimension_numbers<[1], [0], [0], [1], [0, 0, 1, 1], [], []>} : vector<64x32xbf16>, vector<32x44xbf16>, vector<64x44xf32> -> vector<64x44xf32>
    %88 = arith.addf %82, %87 : vector<64x44xf32>
    %c3_89 = arith.constant 3 : index
    %c0_90 = arith.constant 0 : index
    %c6_91 = arith.constant 6 : index
    %89 = vector.load %arg1[%c3_89, %c0_90, %c6_91] : memref<4x32x50xbf16, #tpu.memory_space<vmem>>, vector<1x32x44xbf16>
    %90 = vector.shape_cast %89 : vector<1x32x44xbf16> to vector<32x44xbf16>
    %c15 = arith.constant 15 : index
    %c0_92 = arith.constant 0 : index
    %c0_93 = arith.constant 0 : index
    %91 = vector.load %arg2[%c15, %c0_92, %c0_93] : memref<16x64x32xbf16, #tpu.memory_space<vmem>>, vector<1x64x32xbf16>
    %92 = vector.shape_cast %91 : vector<1x64x32xbf16> to vector<64x32xbf16>
    %cst_94 = arith.constant dense<0.000000e+00> : vector<64x44xf32>
    %93 = tpu.matmul %92, %90, %cst_94 {dimension_numbers = #tpu.dot_dimension_numbers<[1], [0], [0], [1], [0, 0, 1, 1], [], []>} : vector<64x32xbf16>, vector<32x44xbf16>, vector<64x44xf32> -> vector<64x44xf32>
    %94 = arith.addf %88, %93 : vector<64x44xf32>
    %c0_95 = arith.constant 0 : index
    %c0_96 = arith.constant 0 : index
    %95 = vector.load %arg3[%c0_95, %c0_96] : memref<1x44xf32, #tpu.memory_space<vmem>>, vector<1x44xf32>
    %96 = vector.broadcast %95 : vector<1x44xf32> to vector<64x44xf32>
    %97 = arith.mulf %94, %96 : vector<64x44xf32>
    %cst_97 = arith.constant dense<0.000000e+00> : vector<64xf32>
    %98 = vector.multi_reduction <add>, %97, %cst_97 [1] : vector<64x44xf32> to vector<64xf32>
    %99 = vector.shape_cast %98 : vector<64xf32> to vector<64x1xf32>
    %cst_98 = arith.constant 3.125000e-02 : f32
    %100 = vector.broadcast %cst_98 : f32 to vector<64x1xf32>
    %101 = arith.mulf %99, %100 : vector<64x1xf32>
    %102 = vector.broadcast %101 : vector<64x1xf32> to vector<64x44xf32>
    %103 = arith.subf %94, %102 : vector<64x44xf32>
    %104 = vector.broadcast %95 : vector<1x44xf32> to vector<64x44xf32>
    %105 = arith.mulf %103, %104 : vector<64x44xf32>
    %106 = arith.mulf %105, %105 : vector<64x44xf32>
    %cst_99 = arith.constant dense<0.000000e+00> : vector<64xf32>
    %107 = vector.multi_reduction <add>, %106, %cst_99 [1] : vector<64x44xf32> to vector<64xf32>
    %108 = vector.shape_cast %107 : vector<64xf32> to vector<64x1xf32>
    %cst_100 = arith.constant 3.125000e-02 : f32
    %109 = vector.broadcast %cst_100 : f32 to vector<64x1xf32>
    %110 = arith.mulf %108, %109 : vector<64x1xf32>
    %cst_101 = arith.constant 9.99999974E-6 : f32
    %111 = vector.broadcast %cst_101 : f32 to vector<64x1xf32>
    %112 = arith.addf %110, %111 : vector<64x1xf32>
    %113 = math.rsqrt %112 : vector<64x1xf32>
    %114 = vector.broadcast %113 : vector<64x1xf32> to vector<64x44xf32>
    %115 = arith.mulf %103, %114 : vector<64x44xf32>
    %cst_102 = arith.constant 2.000000e-01 : f32
    %116 = vector.broadcast %cst_102 : f32 to vector<64x44xf32>
    %117 = arith.mulf %116, %115 : vector<64x44xf32>
    %118 = arith.maximumf %115, %117 : vector<64x44xf32>
    %119 = arith.truncf %118 : vector<64x44xf32> to vector<64x44xbf16>
    %c0_103 = arith.constant 0 : index
    %c0_104 = arith.constant 0 : index
    %120 = vector.load %arg4[%c0_103, %c0_104] : memref<64x44xbf16, #tpu.memory_space<vmem>>, vector<64x44xbf16>
    tpu.vector_store %arg4[%c0_103, %c0_104], %119 {strides = array<i32>} : memref<64x44xbf16, #tpu.memory_space<vmem>>, vector<64x44xbf16>,
    return
  }
  func.func @transform_0(%arg0: i32) -> (i32, i32, i32) {
    %c0_i32 = arith.constant 0 : i32
    %c0_i32_0 = arith.constant 0 : i32
    %c0_i32_1 = arith.constant 0 : i32
    %c0_i32_2 = arith.constant 0 : i32
    return %c0_i32, %c0_i32_0, %c0_i32_1 : i32, i32, i32
  }
  func.func @transform_1(%arg0: i32) -> (i32, i32, i32) {
    %c0_i32 = arith.constant 0 : i32
    %c0_i32_0 = arith.constant 0 : i32
    %c0_i32_1 = arith.constant 0 : i32
    %c0_i32_2 = arith.constant 0 : i32
    return %c0_i32, %c0_i32_0, %c0_i32_1 : i32, i32, i32
  }
  func.func @transform_2(%arg0: i32) -> (i32, i32) {
    %c0_i32 = arith.constant 0 : i32
    %c0_i32_0 = arith.constant 0 : i32
    %c0_i32_1 = arith.constant 0 : i32
    return %c0_i32, %c0_i32_0 : i32, i32
  }
  func.func @transform_3(%arg0: i32) -> (i32, i32) {
    %c0_i32 = arith.constant 0 : i32
    %c0_i32_0 = arith.constant 0 : i32
    %c0_i32_1 = arith.constant 0 : i32
    return %c0_i32, %c0_i32_0 : i32, i32
  }
}

</mosaic_0001>

<llo_original>
// kernel: discriminator_forward.4
$region0: #{discriminator_forward.4}
  #allocation0 [shape = 'u32[]', space=smem, size = 0x4, offset = 0x4, fixed_abs, tag = 'smem constant byte address 0x4 - core index']
  #allocation1 [shape = 'u32[144,128]{1,0:T(1,128)}', space=vmem, size = 0x12000, scoped, tag = 'internal scratch']
  %s0 = inlined_call_operand.vmem [shape: bf16[2,4,3,1089], index: 0, kind: input, shape index: {}]
  %s1 = inlined_call_operand.vmem [shape: bf16[16,8,3], index: 1, kind: input, shape index: {}]
  %s2 = inlined_call_operand.vmem [shape: bf16[2,8,1055], index: 2, kind: output, shape index: {}]
  %s3 = sld [smem:[#allocation0]]
  $region41: #{discriminator_forward.4} parent=0
    _
  %s5 = ssub.s32 1, %s3
  %s6 = scalar_select 0, %s5, %s3
  loop: start=0, step=1, limit=4
  $region2: #{discriminator_forward.4} parent=0 // loop_pre_header
    _
  $region3: #{discriminator_forward.4} parent=0 // loop_header
    %s8 = sphi 0, %s12
    %p9 = scmp.ge.s32.totalorder %s8, 4
    %s18 = sphi 0, %s20
    %s21 = sphi 0, %s18
    %s22 = sphi 0, %s21
    %s38 = sphi 0, %s22
    %s42 = sphi 0, %s42
    %s44 = sphi 0, %s42
    %s45 = sphi 0, %s44
    %s59 = sphi 0, %s45
    %s65 = sphi 0, %s67
    %s68 = sphi 0, %s65
    %s69 = sphi 0, %s68
    %s85 = sphi 0, %s69
  $region4: #{discriminator_forward.4} parent=0 // loop_header_branch
    %11 = sbr.rel (%p9) target = $region8
  $region5: #{discriminator_forward.4} parent=0 // loop_body
    %s13 = ssub.s32 %s8, 1
    %s14 = ssub.s32 %s8, 2
    %s15 = sadd.s32 %s8, 1
    %s16 = ssub.s32 %s8, %s15
    %p17 = scmp.eq.s32.totalorder %s16, 0
    %s19 = sadd.s32 %s18, 1
    %s20 = scalar_select %p17, %s18, %s19
    %p23 = pneg %p17
    %p24 = scmp.eq.s32.totalorder %s8, 1
    %p25 = por %p23, %p24
    %p26 = scmp.ne.s32.totalorder %s18, %s21
    %p27 = scmp.eq.s32.totalorder %s8, 0
    %p28 = por %p26, %p27
    %p29 = scmp.ne.s32.totalorder %s18, %s21
    %p30 = scmp.eq.s32.totalorder %s13, 1
    %p31 = por %p29, %p30
    %p32 = scmp.ne.s32.totalorder %s21, %s22
    %p33 = scmp.eq.s32.totalorder %s13, 0
    %p34 = por %p32, %p33
    %p35 = scmp.ne.s32.totalorder %s21, %s22
    %p36 = scmp.eq.s32.totalorder %s14, 1
    %p37 = por %p35, %p36
    %p39 = scmp.ne.s32.totalorder %s22, %s38
    %p40 = scmp.eq.s32.totalorder %s14, 0
    %p41 = por %p39, %p40
    %s43 = sadd.s32 %s42, 1
    %p46 = scmp.eq.s32.totalorder %s8, 1
    %p47 = scmp.ne.s32.totalorder %s42, %s44
    %p48 = scmp.eq.s32.totalorder %s8, 0
    %p49 = por %p47, %p48
    %p50 = scmp.ne.s32.totalorder %s42, %s44
    %p51 = scmp.eq.s32.totalorder %s13, 1
    %p52 = por %p50, %p51
    %p53 = scmp.ne.s32.totalorder %s44, %s45
    %p54 = scmp.eq.s32.totalorder %s13, 0
    %p55 = por %p53, %p54
    %p56 = scmp.ne.s32.totalorder %s44, %s45
    %p57 = scmp.eq.s32.totalorder %s14, 1
    %p58 = por %p56, %p57
    %p60 = scmp.ne.s32.totalorder %s45, %s59
    %p61 = scmp.eq.s32.totalorder %s14, 0
    %p62 = por %p60, %p61
    %s63 = ssub.s32 %s8, %s15
    %p64 = scmp.eq.s32.totalorder %s63, 0
    %s66 = sadd.s32 %s65, 1
    %s67 = scalar_select %p64, %s65, %s66
    %p70 = pneg %p64
    %p71 = scmp.eq.s32.totalorder %s8, 1
    %p72 = por %p70, %p71
    %p73 = scmp.ne.s32.totalorder %s65, %s68
    %p74 = scmp.eq.s32.totalorder %s8, 0
    %p75 = por %p73, %p74
    %p76 = scmp.ne.s32.totalorder %s65, %s68
    %p77 = scmp.eq.s32.totalorder %s13, 1
    %p78 = por %p76, %p77
    %p79 = scmp.ne.s32.totalorder %s68, %s69
    %p80 = scmp.eq.s32.totalorder %s13, 0
    %p81 = por %p79, %p80
    %p82 = scmp.ne.s32.totalorder %s68, %s69
    %p83 = scmp.eq.s32.totalorder %s14, 1
    %p84 = por %p82, %p83
    %p86 = scmp.ne.s32.totalorder %s69, %s85
    %p87 = scmp.eq.s32.totalorder %s14, 0
    %p88 = por %p86, %p87
    %p89 = scmp.le.s32.totalorder 1, %s8
    %p90 = scmp.lt.s32.totalorder %s8, 3
    %p91 = pnand %p89, %p90
    %p92 = pneg %p91
    // Predicated region
    $region9: #{discriminator_forward.4} parent=5 // pred_check
      _
    $region10: #{discriminator_forward.4} parent=5 // pred_check_branch
      %94 = sbr.rel (%p91) target = $region12
    $region11: #{discriminator_forward.4} parent=5 // pred_region
      %s95 = ssub.s32 %s8, 1
      // Predicated region
      $region13: #{discriminator_forward.4} parent=11 // pred_check
        %p96 = pneg %p55
      $region14: #{discriminator_forward.4} parent=11 // pred_check_branch
        %98 = sbr.rel (%p96) target = $region16
      $region15: #{discriminator_forward.4} parent=11 // pred_region
        _
      $region16: #{discriminator_forward.4} parent=11 // pred_fallthru
        _
    $region12: #{discriminator_forward.4} parent=5 // pred_fallthru
      _
    %p99 = scmp.lt.s32.totalorder %s8, 2
    // Predicated region
    $region17: #{discriminator_forward.4} parent=5 // pred_check
      %p100 = pneg %p99
    $region18: #{discriminator_forward.4} parent=5 // pred_check_branch
      %102 = sbr.rel (%p100) target = $region20
    $region19: #{discriminator_forward.4} parent=5 // pred_region
      // Predicated region
      $region21: #{discriminator_forward.4} parent=19 // pred_check
        %p103 = pneg %p28
      $region22: #{discriminator_forward.4} parent=19 // pred_check_branch
        %105 = sbr.rel (%p103) target = $region24
      $region23: #{discriminator_forward.4} parent=19 // pred_region
        %p106 = scmp.lt.s32.totalorder %s8, 1
        %s107 = scalar_select %p106, %s8, 1
        %s108 = smul.addr %s107, 36
        %s109 = smul.addr %s108, 2
        %s110 = scalar_lea.vmem %s0, %s109
      $region24: #{discriminator_forward.4} parent=19 // pred_fallthru
        _
    $region20: #{discriminator_forward.4} parent=5 // pred_fallthru
      _
    %p111 = scmp.le.s32.totalorder 1, %s8
    %p112 = scmp.lt.s32.totalorder %s8, 3
    %p113 = pnand %p111, %p112
    %p114 = pneg %p113
    // Predicated region
    $region25: #{discriminator_forward.4} parent=5 // pred_check
      _
    $region26: #{discriminator_forward.4} parent=5 // pred_check_branch
      %116 = sbr.rel (%p113) target = $region28
    $region27: #{discriminator_forward.4} parent=5 // pred_region
      %s117 = ssub.s32 %s8, 1
      %p118 = scmp.lt.s32.totalorder %s13, 1
      %s119 = scalar_select %p118, %s13, 1
      %s120 = smul.addr %s119, 36
      %s121 = smul.addr %s120, 2
      %s122 = scalar_lea.vmem %s0, %s121
      %p123 = pneg %p34
      %p124 = pneg %p31
      %p125 = pneg %p55
      %p126 = pneg %p52
      %p127 = pneg %p81
      %p128 = pneg %p78
      %p129 = scmp.lt.s32.totalorder %s13, 1
      %s130 = scalar_select %p129, %s13, 1
      %s131 = smul.addr %s130, 9
      %s132 = smul.addr %s131, 4
      %s133 = scalar_lea.vmem %s2, %s132
      %p134 = scmp.lt.s32.totalorder %s13, 1
      %s135 = scalar_select %p134, %s13, 1
      %s136 = smul.addr %s135, 36
      %s137 = smul.addr %s136, 2
      %s138 = scalar_lea.vmem %s0, %s137
      %p139 = scmp.lt.s32.totalorder %s13, 1
      %s140 = scalar_select %p139, %s13, 1
      %s141 = smul.addr %s140, 9
      %s142 = smul.addr %s141, 4
      %s143 = scalar_lea.vmem %s2, %s142
      %v145 = vld [vmem:[%s138] sm:$0xff]
      %v146 = vld [vmem:[%s138 + $0x8] sm:$0xff]
      %v147 = vld [vmem:[%s138 + $0x10] sm:$0x3]
      %v148 = vld [vmem:[%s1] sm:$0xf]
      %s149 = scalar_lea.vmem %s138, 18
      %v150 = vld [vmem:[%s149] sm:$0xff]
      %v151 = vld [vmem:[%s149 + $0x8] sm:$0xff]
      %v152 = vld [vmem:[%s149 + $0x10] sm:$0x3]
      %s153 = scalar_lea.vmem %s1, 4
      %v154 = vld [vmem:[%s153] sm:$0xf]
      %v158 = vcombine.high %v150, %v150
      %v160 = vunpack.c.l.s4 1983009808
      %v161 = vunpack.c.0.s8 %v160
      %v162 = vlaneseq
      %v163 = vshrl.u32 %v162, 7
      %v164 = vsub.s32 %v161, %v163
      %v165 = vrot.slane %v150, %v164
      %v167 = vunpack.c.l.s4 1983009808
      %v168 = vunpack.c.0.s8 %v167
      %v169 = vlaneseq
      %v170 = vshrl.u32 %v169, 7
      %v171 = vsub.s32 %v168, %v170
      %v172 = vrot.slane %v158, %v171
      %v173 = vcombine.high %v165, %v165
      %v174 = vcombine.high %v172, %v172
      %v175 = vcombine.high %v151, %v151
      %v177 = vunpack.c.l.s4 1983009808
      %v178 = vunpack.c.0.s8 %v177
      %v179 = vlaneseq
      %v180 = vshrl.u32 %v179, 7
      %v181 = vsub.s32 %v178, %v180
      %v182 = vrot.slane %v151, %v181
      %v184 = vunpack.c.l.s4 1983009808
      %v185 = vunpack.c.0.s8 %v184
      %v186 = vlaneseq
      %v187 = vshrl.u32 %v186, 7
      %v188 = vsub.s32 %v185, %v187
      %v189 = vrot.slane %v175, %v188
      %v190 = vcombine.high %v182, %v182
      %v191 = vcombine.high %v189, %v189
      %v193 = vunpack.c.l.s4 1983009808
      %v194 = vunpack.c.0.s8 %v193
      %v195 = vlaneseq
      %v196 = vshrl.u32 %v195, 7
      %v197 = vsub.s32 %v194, %v196
      %v198 = vrot.slane %v152, %v197
      %vm199 = vcmask 23552
      %v201 = vsel %vm199, %v154, 0
      %vm203 = vcmask 1040384
      %vm204 = vcmask 1041408
      %v205 = vsel %vm203, 4294967295, 65535
      %v206 = vsel %vm204, %v205, 0
      %v208 = vand.u32 %v165, %v206
      %v211 = vand.u32 %v173, %v206
      %v214 = vand.u32 %v172, %v206
      %v217 = vand.u32 %v174, %v206
      %v220 = vand.u32 %v182, %v206
      %v223 = vand.u32 %v190, %v206
      %v226 = vand.u32 %v189, %v206
      %v229 = vand.u32 %v191, %v206
      %v232 = vand.u32 %v198, %v206
      %234 = vmatprep.subr.bf16.mxu0 0
      %235 = vmatpush1.bf16.msra.mxu0 0
      %236 = vmatprep.subr.bf16.mxu0 0
      %237 = vmatpush1.bf16.msra.mxu0 0
      %238 = vmatprep.subr.bf16.mxu0 0
      %239 = vmatpush1.bf16.msra.mxu0 0
      %240 = vmatprep.subr.bf16.mxu0 0
      %241 = vmatpush1.bf16.msra.mxu0 0
      %242 = vmatprep.subr.bf16.mxu0 0
      %243 = vmatpush1.bf16.msra.mxu0 0
      %244 = vmatprep.subr.bf16.mxu0 0
      %245 = vmatpush1.bf16.msra.mxu0 0
      %246 = vmatprep.subr.bf16.mxu0 0
      %247 = vmatpush1.bf16.msra.mxu0 0
      %248 = vmatprep.subr.bf16.mxu0 %v211
      %249 = vmatpush1.bf16.msra.mxu0 %v208
      %250 = vmatprep.subr.bf16.mxu0 0
      %251 = vmatpush2.bf16.msra.mxu0 0
      %252 = vmatprep.subr.bf16.mxu0 0
      %253 = vmatpush2.bf16.msra.mxu0 0
      %254 = vmatprep.subr.bf16.mxu0 0
      %255 = vmatpush2.bf16.msra.mxu0 0
      %256 = vmatprep.subr.bf16.mxu0 0
      %257 = vmatpush2.bf16.msra.mxu0 0
      %258 = vmatprep.subr.bf16.mxu0 0
      %259 = vmatpush2.bf16.msra.mxu0 0
      %260 = vmatprep.subr.bf16.mxu0 0
      %261 = vmatpush2.bf16.msra.mxu0 0
      %262 = vmatprep.subr.bf16.mxu0 0
      %263 = vmatpush2.bf16.msra.mxu0 0
      %264 = vmatprep.subr.bf16.mxu0 0
      %265 = vmatpush2.bf16.msra.mxu0 0
      %266 = vmatprep.mubr.bf16.mxu0 0
      %267 = vmatmul.mubr.bf16.gmra.mxu0 %v201
      %v268 = vpop.f32.mrf.mxu0
      %v269 = vadd.f32 0.0, %v268
      %v270 = vpop.f32.mrf.mxu0
      %v271 = vadd.f32 0.0, %v270
      %v272 = vpop.f32.mrf.mxu0
      %v273 = vpop.f32.mrf.mxu0
      %274 = vdwg.mxu0
      %275 = vmatprep.subr.bf16.mxu0 0
      %276 = vmatpush1.bf16.msra.mxu0 0
      %277 = vmatprep.subr.bf16.mxu0 0
      %278 = vmatpush1.bf16.msra.mxu0 0
      %279 = vmatprep.subr.bf16.mxu0 0
      %280 = vmatpush1.bf16.msra.mxu0 0
      %281 = vmatprep.subr.bf16.mxu0 0
      %282 = vmatpush1.bf16.msra.mxu0 0
      %283 = vmatprep.subr.bf16.mxu0 0
      %284 = vmatpush1.bf16.msra.mxu0 0
      %285 = vmatprep.subr.bf16.mxu0 0
      %286 = vmatpush1.bf16.msra.mxu0 0
      %287 = vmatprep.subr.bf16.mxu0 0
      %288 = vmatpush1.bf16.msra.mxu0 0
      %289 = vmatprep.subr.bf16.mxu0 %v217
      %290 = vmatpush1.bf16.msra.mxu0 %v214
      %291 = vmatprep.subr.bf16.mxu0 0
      %292 = vmatpush2.bf16.msra.mxu0 0
      %293 = vmatprep.subr.bf16.mxu0 0
      %294 = vmatpush2.bf16.msra.mxu0 0
      %295 = vmatprep.subr.bf16.mxu0 0
      %296 = vmatpush2.bf16.msra.mxu0 0
      %297 = vmatprep.subr.bf16.mxu0 0
      %298 = vmatpush2.bf16.msra.mxu0 0
      %299 = vmatprep.subr.bf16.mxu0 0
      %300 = vmatpush2.bf16.msra.mxu0 0
      %301 = vmatprep.subr.bf16.mxu0 0
      %302 = vmatpush2.bf16.msra.mxu0 0
      %303 = vmatprep.subr.bf16.mxu0 0
      %304 = vmatpush2.bf16.msra.mxu0 0
      %305 = vmatprep.subr.bf16.mxu0 0
      %306 = vmatpush2.bf16.msra.mxu0 0
      %307 = vmatprep.mubr.bf16.mxu0 0
      %308 = vmatmul.mubr.bf16.gmra.mxu0 %v201
      %v309 = vpop.f32.mrf.mxu0
      %v310 = vadd.f32 0.0, %v309
      %v311 = vpop.f32.mrf.mxu0
      %v312 = vadd.f32 0.0, %v311
      %v313 = vpop.f32.mrf.mxu0
      %v314 = vpop.f32.mrf.mxu0
      %315 = vdwg.mxu0
      %316 = vmatprep.subr.bf16.mxu0 0
      %317 = vmatpush1.bf16.msra.mxu0 0
      %318 = vmatprep.subr.bf16.mxu0 0
      %319 = vmatpush1.bf16.msra.mxu0 0
      %320 = vmatprep.subr.bf16.mxu0 0
      %321 = vmatpush1.bf16.msra.mxu0 0
      %322 = vmatprep.subr.bf16.mxu0 0
      %323 = vmatpush1.bf16.msra.mxu0 0
      %324 = vmatprep.subr.bf16.mxu0 0
      %325 = vmatpush1.bf16.msra.mxu0 0
      %326 = vmatprep.subr.bf16.mxu0 0
      %327 = vmatpush1.bf16.msra.mxu0 0
      %328 = vmatprep.subr.bf16.mxu0 0
      %329 = vmatpush1.bf16.msra.mxu0 0
      %330 = vmatprep.subr.bf16.mxu0 %v223
      %331 = vmatpush1.bf16.msra.mxu0 %v220
      %332 = vmatprep.subr.bf16.mxu0 0
      %333 = vmatpush2.bf16.msra.mxu0 0
      %334 = vmatprep.subr.bf16.mxu0 0
      %335 = vmatpush2.bf16.msra.mxu0 0
      %336 = vmatprep.subr.bf16.mxu0 0
      %337 = vmatpush2.bf16.msra.mxu0 0
      %338 = vmatprep.subr.bf16.mxu0 0
      %339 = vmatpush2.bf16.msra.mxu0 0
      %340 = vmatprep.subr.bf16.mxu0 0
      %341 = vmatpush2.bf16.msra.mxu0 0
      %342 = vmatprep.subr.bf16.mxu0 0
      %343 = vmatpush2.bf16.msra.mxu0 0
      %344 = vmatprep.subr.bf16.mxu0 0
      %345 = vmatpush2.bf16.msra.mxu0 0
      %346 = vmatprep.subr.bf16.mxu0 0
      %347 = vmatpush2.bf16.msra.mxu0 0
      %348 = vmatprep.mubr.bf16.mxu0 0
      %349 = vmatmul.mubr.bf16.gmra.mxu0 %v201
      %v350 = vpop.f32.mrf.mxu0
      %v351 = vadd.f32 0.0, %v350
      %v352 = vpop.f32.mrf.mxu0
      %v353 = vadd.f32 0.0, %v352
      %v354 = vpop.f32.mrf.mxu0
      %v355 = vpop.f32.mrf.mxu0
      %356 = vdwg.mxu0
      %357 = vmatprep.subr.bf16.mxu0 0
      %358 = vmatpush1.bf16.msra.mxu0 0
      %359 = vmatprep.subr.bf16.mxu0 0
      %360 = vmatpush1.bf16.msra.mxu0 0
      %361 = vmatprep.subr.bf16.mxu0 0
      %362 = vmatpush1.bf16.msra.mxu0 0
      %363 = vmatprep.subr.bf16.mxu0 0
      %364 = vmatpush1.bf16.msra.mxu0 0
      %365 = vmatprep.subr.bf16.mxu0 0
      %366 = vmatpush1.bf16.msra.mxu0 0
      %367 = vmatprep.subr.bf16.mxu0 0
      %368 = vmatpush1.bf16.msra.mxu0 0
      %369 = vmatprep.subr.bf16.mxu0 0
      %370 = vmatpush1.bf16.msra.mxu0 0
      %371 = vmatprep.subr.bf16.mxu0 %v229
      %372 = vmatpush1.bf16.msra.mxu0 %v226
      %373 = vmatprep.subr.bf16.mxu0 0
      %374 = vmatpush2.bf16.msra.mxu0 0
      %375 = vmatprep.subr.bf16.mxu0 0
      %376 = vmatpush2.bf16.msra.mxu0 0
      %377 = vmatprep.subr.bf16.mxu0 0
      %378 = vmatpush2.bf16.msra.mxu0 0
      %379 = vmatprep.subr.bf16.mxu0 0
      %380 = vmatpush2.bf16.msra.mxu0 0
      %381 = vmatprep.subr.bf16.mxu0 0
      %382 = vmatpush2.bf16.msra.mxu0 0
      %383 = vmatprep.subr.bf16.mxu0 0
      %384 = vmatpush2.bf16.msra.mxu0 0
      %385 = vmatprep.subr.bf16.mxu0 0
      %386 = vmatpush2.bf16.msra.mxu0 0
      %387 = vmatprep.subr.bf16.mxu0 0
      %388 = vmatpush2.bf16.msra.mxu0 0
      %389 = vmatprep.mubr.bf16.mxu0 0
      %390 = vmatmul.mubr.bf16.gmra.mxu0 %v201
      %v391 = vpop.f32.mrf.mxu0
      %v392 = vadd.f32 0.0, %v391
      %v393 = vpop.f32.mrf.mxu0
      %v394 = vadd.f32 0.0, %v393
      %v395 = vpop.f32.mrf.mxu0
      %v396 = vpop.f32.mrf.mxu0
      %397 = vdwg.mxu0
      %398 = vmatprep.subr.bf16.mxu0 0
      %399 = vmatpush1.bf16.msra.mxu0 0
      %400 = vmatprep.subr.bf16.mxu0 0
      %401 = vmatpush1.bf16.msra.mxu0 0
      %402 = vmatprep.subr.bf16.mxu0 0
      %403 = vmatpush1.bf16.msra.mxu0 0
      %404 = vmatprep.subr.bf16.mxu0 0
      %405 = vmatpush1.bf16.msra.mxu0 0
      %406 = vmatprep.subr.bf16.mxu0 0
      %407 = vmatpush1.bf16.msra.mxu0 0
      %408 = vmatprep.subr.bf16.mxu0 0
      %409 = vmatpush1.bf16.msra.mxu0 0
      %410 = vmatprep.subr.bf16.mxu0 0
      %411 = vmatpush1.bf16.msra.mxu0 0
      %412 = vmatprep.subr.bf16.mxu0 0
      %413 = vmatpush1.bf16.msra.mxu0 %v232
      %414 = vmatprep.subr.bf16.mxu0 0
      %415 = vmatpush2.bf16.msra.mxu0 0
      %416 = vmatprep.subr.bf16.mxu0 0
      %417 = vmatpush2.bf16.msra.mxu0 0
      %418 = vmatprep.subr.bf16.mxu0 0
      %419 = vmatpush2.bf16.msra.mxu0 0
      %420 = vmatprep.subr.bf16.mxu0 0
      %421 = vmatpush2.bf16.msra.mxu0 0
      %422 = vmatprep.subr.bf16.mxu0 0
      %423 = vmatpush2.bf16.msra.mxu0 0
      %424 = vmatprep.subr.bf16.mxu0 0
      %425 = vmatpush2.bf16.msra.mxu0 0
      %426 = vmatprep.subr.bf16.mxu0 0
      %427 = vmatpush2.bf16.msra.mxu0 0
      %428 = vmatprep.subr.bf16.mxu0 0
      %429 = vmatpush2.bf16.msra.mxu0 0
      %430 = vmatprep.mubr.bf16.mxu0 0
      %431 = vmatmul.mubr.bf16.gmra.mxu0 %v201
      %v432 = vpop.f32.mrf.mxu0
      %v433 = vadd.f32 0.0, %v432
      %v434 = vpop.f32.mrf.mxu0
      %v435 = vpop.f32.mrf.mxu0
      %v436 = vpop.f32.mrf.mxu0
      %437 = vdwg.mxu0
      %v441 = vcombine.high %v145, %v145
      %v443 = vunpack.c.l.s4 1983009808
      %v444 = vunpack.c.0.s8 %v443
      %v445 = vlaneseq
      %v446 = vshrl.u32 %v445, 7
      %v447 = vsub.s32 %v444, %v446
      %v448 = vrot.slane %v145, %v447
      %v450 = vunpack.c.l.s4 1983009808
      %v451 = vunpack.c.0.s8 %v450
      %v452 = vlaneseq
      %v453 = vshrl.u32 %v452, 7
      %v454 = vsub.s32 %v451, %v453
      %v455 = vrot.slane %v441, %v454
      %v456 = vcombine.high %v448, %v448
      %v457 = vcombine.high %v455, %v455
      %v458 = vcombine.high %v146, %v146
      %v460 = vunpack.c.l.s4 1983009808
      %v461 = vunpack.c.0.s8 %v460
      %v462 = vlaneseq
      %v463 = vshrl.u32 %v462, 7
      %v464 = vsub.s32 %v461, %v463
      %v465 = vrot.slane %v146, %v464
      %v467 = vunpack.c.l.s4 1983009808
      %v468 = vunpack.c.0.s8 %v467
      %v469 = vlaneseq
      %v470 = vshrl.u32 %v469, 7
      %v471 = vsub.s32 %v468, %v470
      %v472 = vrot.slane %v458, %v471
      %v473 = vcombine.high %v465, %v465
      %v474 = vcombine.high %v472, %v472
      %v476 = vunpack.c.l.s4 1983009808
      %v477 = vunpack.c.0.s8 %v476
      %v478 = vlaneseq
      %v479 = vshrl.u32 %v478, 7
      %v480 = vsub.s32 %v477, %v479
      %v481 = vrot.slane %v147, %v480
      %v483 = vsel %vm199, %v148, 0
      %v486 = vand.u32 %v448, %v206
      %v489 = vand.u32 %v456, %v206
      %v492 = vand.u32 %v455, %v206
      %v495 = vand.u32 %v457, %v206
      %v498 = vand.u32 %v465, %v206
      %v501 = vand.u32 %v473, %v206
      %v504 = vand.u32 %v472, %v206
      %v507 = vand.u32 %v474, %v206
      %v510 = vand.u32 %v481, %v206
      %512 = vmatprep.subr.bf16.mxu0 0
      %513 = vmatpush1.bf16.msra.mxu0 0
      %514 = vmatprep.subr.bf16.mxu0 0
      %515 = vmatpush1.bf16.msra.mxu0 0
      %516 = vmatprep.subr.bf16.mxu0 0
      %517 = vmatpush1.bf16.msra.mxu0 0
      %518 = vmatprep.subr.bf16.mxu0 0
      %519 = vmatpush1.bf16.msra.mxu0 0
      %520 = vmatprep.subr.bf16.mxu0 0
      %521 = vmatpush1.bf16.msra.mxu0 0
      %522 = vmatprep.subr.bf16.mxu0 0
      %523 = vmatpush1.bf16.msra.mxu0 0
      %524 = vmatprep.subr.bf16.mxu0 0
      %525 = vmatpush1.bf16.msra.mxu0 0
      %526 = vmatprep.subr.bf16.mxu0 %v489
      %527 = vmatpush1.bf16.msra.mxu0 %v486
      %528 = vmatprep.subr.bf16.mxu0 0
      %529 = vmatpush2.bf16.msra.mxu0 0
      %530 = vmatprep.subr.bf16.mxu0 0
      %531 = vmatpush2.bf16.msra.mxu0 0
      %532 = vmatprep.subr.bf16.mxu0 0
      %533 = vmatpush2.bf16.msra.mxu0 0
      %534 = vmatprep.subr.bf16.mxu0 0
      %535 = vmatpush2.bf16.msra.mxu0 0
      %536 = vmatprep.subr.bf16.mxu0 0
      %537 = vmatpush2.bf16.msra.mxu0 0
      %538 = vmatprep.subr.bf16.mxu0 0
      %539 = vmatpush2.bf16.msra.mxu0 0
      %540 = vmatprep.subr.bf16.mxu0 0
      %541 = vmatpush2.bf16.msra.mxu0 0
      %542 = vmatprep.subr.bf16.mxu0 0
      %543 = vmatpush2.bf16.msra.mxu0 0
      %544 = vmatprep.mubr.bf16.mxu0 0
      %545 = vmatmul.mubr.bf16.gmra.mxu0 %v483
      %v546 = vpop.f32.mrf.mxu0
      %v547 = vadd.f32 %v269, %v546
      %v548 = vpop.f32.mrf.mxu0
      %v549 = vadd.f32 %v271, %v548
      %v550 = vpop.f32.mrf.mxu0
      %v551 = vpop.f32.mrf.mxu0
      %552 = vdwg.mxu0
      %553 = vmatprep.subr.bf16.mxu0 0
      %554 = vmatpush1.bf16.msra.mxu0 0
      %555 = vmatprep.subr.bf16.mxu0 0
      %556 = vmatpush1.bf16.msra.mxu0 0
      %557 = vmatprep.subr.bf16.mxu0 0
      %558 = vmatpush1.bf16.msra.mxu0 0
      %559 = vmatprep.subr.bf16.mxu0 0
      %560 = vmatpush1.bf16.msra.mxu0 0
      %561 = vmatprep.subr.bf16.mxu0 0
      %562 = vmatpush1.bf16.msra.mxu0 0
      %563 = vmatprep.subr.bf16.mxu0 0
      %564 = vmatpush1.bf16.msra.mxu0 0
      %565 = vmatprep.subr.bf16.mxu0 0
      %566 = vmatpush1.bf16.msra.mxu0 0
      %567 = vmatprep.subr.bf16.mxu0 %v495
      %568 = vmatpush1.bf16.msra.mxu0 %v492
      %569 = vmatprep.subr.bf16.mxu0 0
      %570 = vmatpush2.bf16.msra.mxu0 0
      %571 = vmatprep.subr.bf16.mxu0 0
      %572 = vmatpush2.bf16.msra.mxu0 0
      %573 = vmatprep.subr.bf16.mxu0 0
      %574 = vmatpush2.bf16.msra.mxu0 0
      %575 = vmatprep.subr.bf16.mxu0 0
      %576 = vmatpush2.bf16.msra.mxu0 0
      %577 = vmatprep.subr.bf16.mxu0 0
      %578 = vmatpush2.bf16.msra.mxu0 0
      %579 = vmatprep.subr.bf16.mxu0 0
      %580 = vmatpush2.bf16.msra.mxu0 0
      %581 = vmatprep.subr.bf16.mxu0 0
      %582 = vmatpush2.bf16.msra.mxu0 0
      %583 = vmatprep.subr.bf16.mxu0 0
      %584 = vmatpush2.bf16.msra.mxu0 0
      %585 = vmatprep.mubr.bf16.mxu0 0
      %586 = vmatmul.mubr.bf16.gmra.mxu0 %v483
      %v587 = vpop.f32.mrf.mxu0
      %v588 = vadd.f32 %v310, %v587
      %v589 = vpop.f32.mrf.mxu0
      %v590 = vadd.f32 %v312, %v589
      %v591 = vpop.f32.mrf.mxu0
      %v592 = vpop.f32.mrf.mxu0
      %593 = vdwg.mxu0
      %594 = vmatprep.subr.bf16.mxu0 0
      %595 = vmatpush1.bf16.msra.mxu0 0
      %596 = vmatprep.subr.bf16.mxu0 0
      %597 = vmatpush1.bf16.msra.mxu0 0
      %598 = vmatprep.subr.bf16.mxu0 0
      %599 = vmatpush1.bf16.msra.mxu0 0
      %600 = vmatprep.subr.bf16.mxu0 0
      %601 = vmatpush1.bf16.msra.mxu0 0
      %602 = vmatprep.subr.bf16.mxu0 0
      %603 = vmatpush1.bf16.msra.mxu0 0
      %604 = vmatprep.subr.bf16.mxu0 0
      %605 = vmatpush1.bf16.msra.mxu0 0
      %606 = vmatprep.subr.bf16.mxu0 0
      %607 = vmatpush1.bf16.msra.mxu0 0
      %608 = vmatprep.subr.bf16.mxu0 %v501
      %609 = vmatpush1.bf16.msra.mxu0 %v498
      %610 = vmatprep.subr.bf16.mxu0 0
      %611 = vmatpush2.bf16.msra.mxu0 0
      %612 = vmatprep.subr.bf16.mxu0 0
      %613 = vmatpush2.bf16.msra.mxu0 0
      %614 = vmatprep.subr.bf16.mxu0 0
      %615 = vmatpush2.bf16.msra.mxu0 0
      %616 = vmatprep.subr.bf16.mxu0 0
      %617 = vmatpush2.bf16.msra.mxu0 0
      %618 = vmatprep.subr.bf16.mxu0 0
      %619 = vmatpush2.bf16.msra.mxu0 0
      %620 = vmatprep.subr.bf16.mxu0 0
      %621 = vmatpush2.bf16.msra.mxu0 0
      %622 = vmatprep.subr.bf16.mxu0 0
      %623 = vmatpush2.bf16.msra.mxu0 0
      %624 = vmatprep.subr.bf16.mxu0 0
      %625 = vmatpush2.bf16.msra.mxu0 0
      %626 = vmatprep.mubr.bf16.mxu0 0
      %627 = vmatmul.mubr.bf16.gmra.mxu0 %v483
      %v628 = vpop.f32.mrf.mxu0
      %v629 = vadd.f32 %v351, %v628
      %v630 = vpop.f32.mrf.mxu0
      %v631 = vadd.f32 %v353, %v630
      %v632 = vpop.f32.mrf.mxu0
      %v633 = vpop.f32.mrf.mxu0
      %634 = vdwg.mxu0
      %635 = vmatprep.subr.bf16.mxu0 0
      %636 = vmatpush1.bf16.msra.mxu0 0
      %637 = vmatprep.subr.bf16.mxu0 0
      %638 = vmatpush1.bf16.msra.mxu0 0
      %639 = vmatprep.subr.bf16.mxu0 0
      %640 = vmatpush1.bf16.msra.mxu0 0
      %641 = vmatprep.subr.bf16.mxu0 0
      %642 = vmatpush1.bf16.msra.mxu0 0
      %643 = vmatprep.subr.bf16.mxu0 0
      %644 = vmatpush1.bf16.msra.mxu0 0
      %645 = vmatprep.subr.bf16.mxu0 0
      %646 = vmatpush1.bf16.msra.mxu0 0
      %647 = vmatprep.subr.bf16.mxu0 0
      %648 = vmatpush1.bf16.msra.mxu0 0
      %649 = vmatprep.subr.bf16.mxu0 %v507
      %650 = vmatpush1.bf16.msra.mxu0 %v504
      %651 = vmatprep.subr.bf16.mxu0 0
      %652 = vmatpush2.bf16.msra.mxu0 0
      %653 = vmatprep.subr.bf16.mxu0 0
      %654 = vmatpush2.bf16.msra.mxu0 0
      %655 = vmatprep.subr.bf16.mxu0 0
      %656 = vmatpush2.bf16.msra.mxu0 0
      %657 = vmatprep.subr.bf16.mxu0 0
      %658 = vmatpush2.bf16.msra.mxu0 0
      %659 = vmatprep.subr.bf16.mxu0 0
      %660 = vmatpush2.bf16.msra.mxu0 0
      %661 = vmatprep.subr.bf16.mxu0 0
      %662 = vmatpush2.bf16.msra.mxu0 0
      %663 = vmatprep.subr.bf16.mxu0 0
      %664 = vmatpush2.bf16.msra.mxu0 0
      %665 = vmatprep.subr.bf16.mxu0 0
      %666 = vmatpush2.bf16.msra.mxu0 0
      %667 = vmatprep.mubr.bf16.mxu0 0
      %668 = vmatmul.mubr.bf16.gmra.mxu0 %v483
      %v669 = vpop.f32.mrf.mxu0
      %v670 = vadd.f32 %v392, %v669
      %v671 = vpop.f32.mrf.mxu0
      %v672 = vadd.f32 %v394, %v671
      %v673 = vpop.f32.mrf.mxu0
      %v674 = vpop.f32.mrf.mxu0
      %675 = vdwg.mxu0
      %676 = vmatprep.subr.bf16.mxu0 0
      %677 = vmatpush1.bf16.msra.mxu0 0
      %678 = vmatprep.subr.bf16.mxu0 0
      %679 = vmatpush1.bf16.msra.mxu0 0
      %680 = vmatprep.subr.bf16.mxu0 0
      %681 = vmatpush1.bf16.msra.mxu0 0
      %682 = vmatprep.subr.bf16.mxu0 0
      %683 = vmatpush1.bf16.msra.mxu0 0
      %684 = vmatprep.subr.bf16.mxu0 0
      %685 = vmatpush1.bf16.msra.mxu0 0
      %686 = vmatprep.subr.bf16.mxu0 0
      %687 = vmatpush1.bf16.msra.mxu0 0
      %688 = vmatprep.subr.bf16.mxu0 0
      %689 = vmatpush1.bf16.msra.mxu0 0
      %690 = vmatprep.subr.bf16.mxu0 0
      %691 = vmatpush1.bf16.msra.mxu0 %v510
      %692 = vmatprep.subr.bf16.mxu0 0
      %693 = vmatpush2.bf16.msra.mxu0 0
      %694 = vmatprep.subr.bf16.mxu0 0
      %695 = vmatpush2.bf16.msra.mxu0 0
      %696 = vmatprep.subr.bf16.mxu0 0
      %697 = vmatpush2.bf16.msra.mxu0 0
      %698 = vmatprep.subr.bf16.mxu0 0
      %699 = vmatpush2.bf16.msra.mxu0 0
      %700 = vmatprep.subr.bf16.mxu0 0
      %701 = vmatpush2.bf16.msra.mxu0 0
      %702 = vmatprep.subr.bf16.mxu0 0
      %703 = vmatpush2.bf16.msra.mxu0 0
      %704 = vmatprep.subr.bf16.mxu0 0
      %705 = vmatpush2.bf16.msra.mxu0 0
      %706 = vmatprep.subr.bf16.mxu0 0
      %707 = vmatpush2.bf16.msra.mxu0 0
      %708 = vmatprep.mubr.bf16.mxu0 0
      %709 = vmatmul.mubr.bf16.gmra.mxu0 %v483
      %v710 = vpop.f32.mrf.mxu0
      %v711 = vadd.f32 %v433, %v710
      %v712 = vpop.f32.mrf.mxu0
      %v713 = vpop.f32.mrf.mxu0
      %v714 = vpop.f32.mrf.mxu0
      %715 = vdwg.mxu0
      %v716 = vld [vmem:[%s138] sm:$0xff]
      %v717 = vld [vmem:[%s138 + $0x8] sm:$0xff]
      %v718 = vld [vmem:[%s138 + $0x10] sm:$0x3]
      %s719 = scalar_lea.vmem %s1, 8
      %v720 = vld [vmem:[%s719] sm:$0xf]
      %v724 = vcombine.high %v716, %v716
      %v726 = vunpack.c.l.s4 1983009808
      %v727 = vunpack.c.0.s8 %v726
      %v728 = vlaneseq
      %v729 = vshrl.u32 %v728, 7
      %v730 = vsub.s32 %v727, %v729
      %v731 = vrot.slane %v716, %v730
      %v733 = vunpack.c.l.s4 1983009808
      %v734 = vunpack.c.0.s8 %v733
      %v735 = vlaneseq
      %v736 = vshrl.u32 %v735, 7
      %v737 = vsub.s32 %v734, %v736
      %v738 = vrot.slane %v724, %v737
      %v739 = vcombine.high %v731, %v731
      %v740 = vcombine.high %v738, %v738
      %v741 = vcombine.high %v717, %v717
      %v743 = vunpack.c.l.s4 1983009808
      %v744 = vunpack.c.0.s8 %v743
      %v745 = vlaneseq
      %v746 = vshrl.u32 %v745, 7
      %v747 = vsub.s32 %v744, %v746
      %v748 = vrot.slane %v717, %v747
      %v750 = vunpack.c.l.s4 1983009808
      %v751 = vunpack.c.0.s8 %v750
      %v752 = vlaneseq
      %v753 = vshrl.u32 %v752, 7
      %v754 = vsub.s32 %v751, %v753
      %v755 = vrot.slane %v741, %v754
      %v756 = vcombine.high %v748, %v748
      %v757 = vcombine.high %v755, %v755
      %v759 = vunpack.c.l.s4 1983009808
      %v760 = vunpack.c.0.s8 %v759
      %v761 = vlaneseq
      %v762 = vshrl.u32 %v761, 7
      %v763 = vsub.s32 %v760, %v762
      %v764 = vrot.slane %v718, %v763
      %765 = vrot.lane.b32.xlu0 %v731, 127
      %v766 = vpop.permute.xlu0 %765
      %767 = vrot.lane.b32.xlu0 %v739, 127
      %v768 = vpop.permute.xlu0 %767
      %769 = vrot.lane.b32.xlu0 %v738, 127
      %v770 = vpop.permute.xlu0 %769
      %771 = vrot.lane.b32.xlu0 %v740, 127
      %v772 = vpop.permute.xlu0 %771
      %773 = vrot.lane.b32.xlu0 %v748, 127
      %v774 = vpop.permute.xlu0 %773
      %775 = vrot.lane.b32.xlu0 %v756, 127
      %v776 = vpop.permute.xlu0 %775
      %777 = vrot.lane.b32.xlu0 %v755, 127
      %v778 = vpop.permute.xlu0 %777
      %779 = vrot.lane.b32.xlu0 %v757, 127
      %v780 = vpop.permute.xlu0 %779
      %781 = vrot.lane.b32.xlu0 %v764, 127
      %v782 = vpop.permute.xlu0 %781
      %vm783 = vcmask 1039360
      %v784 = vsel %vm783, %v766, %v768
      %v785 = vsel %vm783, %v768, %v770
      %v786 = vsel %vm783, %v770, %v772
      %v787 = vsel %vm783, %v772, %v774
      %v788 = vsel %vm783, %v774, %v776
      %v789 = vsel %vm783, %v776, %v778
      %v790 = vsel %vm783, %v778, %v780
      %v791 = vsel %vm783, %v780, %v782
      %v793 = vsel %vm199, %v720, 0
      %v796 = vand.u32 %v784, %v206
      %v799 = vand.u32 %v785, %v206
      %v802 = vand.u32 %v786, %v206
      %v805 = vand.u32 %v787, %v206
      %v808 = vand.u32 %v788, %v206
      %v811 = vand.u32 %v789, %v206
      %v814 = vand.u32 %v790, %v206
      %v817 = vand.u32 %v791, %v206
      %v820 = vand.u32 %v782, %v206
      %822 = vmatprep.subr.bf16.mxu0 0
      %823 = vmatpush1.bf16.msra.mxu0 0
      %824 = vmatprep.subr.bf16.mxu0 0
      %825 = vmatpush1.bf16.msra.mxu0 0
      %826 = vmatprep.subr.bf16.mxu0 0
      %827 = vmatpush1.bf16.msra.mxu0 0
      %828 = vmatprep.subr.bf16.mxu0 0
      %829 = vmatpush1.bf16.msra.mxu0 0
      %830 = vmatprep.subr.bf16.mxu0 0
      %831 = vmatpush1.bf16.msra.mxu0 0
      %832 = vmatprep.subr.bf16.mxu0 0
      %833 = vmatpush1.bf16.msra.mxu0 0
      %834 = vmatprep.subr.bf16.mxu0 0
      %835 = vmatpush1.bf16.msra.mxu0 0
      %836 = vmatprep.subr.bf16.mxu0 %v799
      %837 = vmatpush1.bf16.msra.mxu0 %v796
      %838 = vmatprep.subr.bf16.mxu0 0
      %839 = vmatpush2.bf16.msra.mxu0 0
      %840 = vmatprep.subr.bf16.mxu0 0
      %841 = vmatpush2.bf16.msra.mxu0 0
      %842 = vmatprep.subr.bf16.mxu0 0
      %843 = vmatpush2.bf16.msra.mxu0 0
      %844 = vmatprep.subr.bf16.mxu0 0
      %845 = vmatpush2.bf16.msra.mxu0 0
      %846 = vmatprep.subr.bf16.mxu0 0
      %847 = vmatpush2.bf16.msra.mxu0 0
      %848 = vmatprep.subr.bf16.mxu0 0
      %849 = vmatpush2.bf16.msra.mxu0 0
      %850 = vmatprep.subr.bf16.mxu0 0
      %851 = vmatpush2.bf16.msra.mxu0 0
      %852 = vmatprep.subr.bf16.mxu0 0
      %853 = vmatpush2.bf16.msra.mxu0 0
      %854 = vmatprep.mubr.bf16.mxu0 0
      %855 = vmatmul.mubr.bf16.gmra.mxu0 %v793
      %v856 = vpop.f32.mrf.mxu0
      %v857 = vadd.f32 0.0, %v856
      %v858 = vpop.f32.mrf.mxu0
      %v859 = vadd.f32 0.0, %v858
      %v860 = vpop.f32.mrf.mxu0
      %v861 = vpop.f32.mrf.mxu0
      %862 = vdwg.mxu0
      %863 = vmatprep.subr.bf16.mxu0 0
      %864 = vmatpush1.bf16.msra.mxu0 0
      %865 = vmatprep.subr.bf16.mxu0 0
      %866 = vmatpush1.bf16.msra.mxu0 0
      %867 = vmatprep.subr.bf16.mxu0 0
      %868 = vmatpush1.bf16.msra.mxu0 0
      %869 = vmatprep.subr.bf16.mxu0 0
      %870 = vmatpush1.bf16.msra.mxu0 0
      %871 = vmatprep.subr.bf16.mxu0 0
      %872 = vmatpush1.bf16.msra.mxu0 0
      %873 = vmatprep.subr.bf16.mxu0 0
      %874 = vmatpush1.bf16.msra.mxu0 0
      %875 = vmatprep.subr.bf16.mxu0 0
      %876 = vmatpush1.bf16.msra.mxu0 0
      %877 = vmatprep.subr.bf16.mxu0 %v805
      %878 = vmatpush1.bf16.msra.mxu0 %v802
      %879 = vmatprep.subr.bf16.mxu0 0
      %880 = vmatpush2.bf16.msra.mxu0 0
      %881 = vmatprep.subr.bf16.mxu0 0
      %882 = vmatpush2.bf16.msra.mxu0 0
      %883 = vmatprep.subr.bf16.mxu0 0
      %884 = vmatpush2.bf16.msra.mxu0 0
      %885 = vmatprep.subr.bf16.mxu0 0
      %886 = vmatpush2.bf16.msra.mxu0 0
      %887 = vmatprep.subr.bf16.mxu0 0
      %888 = vmatpush2.bf16.msra.mxu0 0
      %889 = vmatprep.subr.bf16.mxu0 0
      %890 = vmatpush2.bf16.msra.mxu0 0
      %891 = vmatprep.subr.bf16.mxu0 0
      %892 = vmatpush2.bf16.msra.mxu0 0
      %893 = vmatprep.subr.bf16.mxu0 0
      %894 = vmatpush2.bf16.msra.mxu0 0
      %895 = vmatprep.mubr.bf16.mxu0 0
      %896 = vmatmul.mubr.bf16.gmra.mxu0 %v793
      %v897 = vpop.f32.mrf.mxu0
      %v898 = vadd.f32 0.0, %v897
      %v899 = vpop.f32.mrf.mxu0
      %v900 = vadd.f32 0.0, %v899
      %v901 = vpop.f32.mrf.mxu0
      %v902 = vpop.f32.mrf.mxu0
      %903 = vdwg.mxu0
      %904 = vmatprep.subr.bf16.mxu0 0
      %905 = vmatpush1.bf16.msra.mxu0 0
      %906 = vmatprep.subr.bf16.mxu0 0
      %907 = vmatpush1.bf16.msra.mxu0 0
      %908 = vmatprep.subr.bf16.mxu0 0
      %909 = vmatpush1.bf16.msra.mxu0 0
      %910 = vmatprep.subr.bf16.mxu0 0
      %911 = vmatpush1.bf16.msra.mxu0 0
      %912 = vmatprep.subr.bf16.mxu0 0
      %913 = vmatpush1.bf16.msra.mxu0 0
      %914 = vmatprep.subr.bf16.mxu0 0
      %915 = vmatpush1.bf16.msra.mxu0 0
      %916 = vmatprep.subr.bf16.mxu0 0
      %917 = vmatpush1.bf16.msra.mxu0 0
      %918 = vmatprep.subr.bf16.mxu0 %v811
      %919 = vmatpush1.bf16.msra.mxu0 %v808
      %920 = vmatprep.subr.bf16.mxu0 0
      %921 = vmatpush2.bf16.msra.mxu0 0
      %922 = vmatprep.subr.bf16.mxu0 0
      %923 = vmatpush2.bf16.msra.mxu0 0
      %924 = vmatprep.subr.bf16.mxu0 0
      %925 = vmatpush2.bf16.msra.mxu0 0
      %926 = vmatprep.subr.bf16.mxu0 0
      %927 = vmatpush2.bf16.msra.mxu0 0
      %928 = vmatprep.subr.bf16.mxu0 0
      %929 = vmatpush2.bf16.msra.mxu0 0
      %930 = vmatprep.subr.bf16.mxu0 0
      %931 = vmatpush2.bf16.msra.mxu0 0
      %932 = vmatprep.subr.bf16.mxu0 0
      %933 = vmatpush2.bf16.msra.mxu0 0
      %934 = vmatprep.subr.bf16.mxu0 0
      %935 = vmatpush2.bf16.msra.mxu0 0
      %936 = vmatprep.mubr.bf16.mxu0 0
      %937 = vmatmul.mubr.bf16.gmra.mxu0 %v793
      %v938 = vpop.f32.mrf.mxu0
      %v939 = vadd.f32 0.0, %v938
      %v940 = vpop.f32.mrf.mxu0
      %v941 = vadd.f32 0.0, %v940
      %v942 = vpop.f32.mrf.mxu0
      %v943 = vpop.f32.mrf.mxu0
      %944 = vdwg.mxu0
      %945 = vmatprep.subr.bf16.mxu0 0
      %946 = vmatpush1.bf16.msra.mxu0 0
      %947 = vmatprep.subr.bf16.mxu0 0
      %948 = vmatpush1.bf16.msra.mxu0 0
      %949 = vmatprep.subr.bf16.mxu0 0
      %950 = vmatpush1.bf16.msra.mxu0 0
      %951 = vmatprep.subr.bf16.mxu0 0
      %952 = vmatpush1.bf16.msra.mxu0 0
      %953 = vmatprep.subr.bf16.mxu0 0
      %954 = vmatpush1.bf16.msra.mxu0 0
      %955 = vmatprep.subr.bf16.mxu0 0
      %956 = vmatpush1.bf16.msra.mxu0 0
      %957 = vmatprep.subr.bf16.mxu0 0
      %958 = vmatpush1.bf16.msra.mxu0 0
      %959 = vmatprep.subr.bf16.mxu0 %v817
      %960 = vmatpush1.bf16.msra.mxu0 %v814
      %961 = vmatprep.subr.bf16.mxu0 0
      %962 = vmatpush2.bf16.msra.mxu0 0
      %963 = vmatprep.subr.bf16.mxu0 0
      %964 = vmatpush2.bf16.msra.mxu0 0
      %965 = vmatprep.subr.bf16.mxu0 0
      %966 = vmatpush2.bf16.msra.mxu0 0
      %967 = vmatprep.subr.bf16.mxu0 0
      %968 = vmatpush2.bf16.msra.mxu0 0
      %969 = vmatprep.subr.bf16.mxu0 0
      %970 = vmatpush2.bf16.msra.mxu0 0
      %971 = vmatprep.subr.bf16.mxu0 0
      %972 = vmatpush2.bf16.msra.mxu0 0
      %973 = vmatprep.subr.bf16.mxu0 0
      %974 = vmatpush2.bf16.msra.mxu0 0
      %975 = vmatprep.subr.bf16.mxu0 0
      %976 = vmatpush2.bf16.msra.mxu0 0
      %977 = vmatprep.mubr.bf16.mxu0 0
      %978 = vmatmul.mubr.bf16.gmra.mxu0 %v793
      %v979 = vpop.f32.mrf.mxu0
      %v980 = vadd.f32 0.0, %v979
      %v981 = vpop.f32.mrf.mxu0
      %v982 = vadd.f32 0.0, %v981
      %v983 = vpop.f32.mrf.mxu0
      %v984 = vpop.f32.mrf.mxu0
      %985 = vdwg.mxu0
      %986 = vmatprep.subr.bf16.mxu0 0
      %987 = vmatpush1.bf16.msra.mxu0 0
      %988 = vmatprep.subr.bf16.mxu0 0
      %989 = vmatpush1.bf16.msra.mxu0 0
      %990 = vmatprep.subr.bf16.mxu0 0
      %991 = vmatpush1.bf16.msra.mxu0 0
      %992 = vmatprep.subr.bf16.mxu0 0
      %993 = vmatpush1.bf16.msra.mxu0 0
      %994 = vmatprep.subr.bf16.mxu0 0
      %995 = vmatpush1.bf16.msra.mxu0 0
      %996 = vmatprep.subr.bf16.mxu0 0
      %997 = vmatpush1.bf16.msra.mxu0 0
      %998 = vmatprep.subr.bf16.mxu0 0
      %999 = vmatpush1.bf16.msra.mxu0 0
      %1000 = vmatprep.subr.bf16.mxu0 0
      %1001 = vmatpush1.bf16.msra.mxu0 %v820
      %1002 = vmatprep.subr.bf16.mxu0 0
      %1003 = vmatpush2.bf16.msra.mxu0 0
      %1004 = vmatprep.subr.bf16.mxu0 0
      %1005 = vmatpush2.bf16.msra.mxu0 0
      %1006 = vmatprep.subr.bf16.mxu0 0
      %1007 = vmatpush2.bf16.msra.mxu0 0
      %1008 = vmatprep.subr.bf16.mxu0 0
      %1009 = vmatpush2.bf16.msra.mxu0 0
      %1010 = vmatprep.subr.bf16.mxu0 0
      %1011 = vmatpush2.bf16.msra.mxu0 0
      %1012 = vmatprep.subr.bf16.mxu0 0
      %1013 = vmatpush2.bf16.msra.mxu0 0
      %1014 = vmatprep.subr.bf16.mxu0 0
      %1015 = vmatpush2.bf16.msra.mxu0 0
      %1016 = vmatprep.subr.bf16.mxu0 0
      %1017 = vmatpush2.bf16.msra.mxu0 0
      %1018 = vmatprep.mubr.bf16.mxu0 0
      %1019 = vmatmul.mubr.bf16.gmra.mxu0 %v793
      %v1020 = vpop.f32.mrf.mxu0
      %v1021 = vadd.f32 0.0, %v1020
      %v1022 = vpop.f32.mrf.mxu0
      %v1023 = vpop.f32.mrf.mxu0
      %v1024 = vpop.f32.mrf.mxu0
      %1025 = vdwg.mxu0
      %v1026 = vadd.f32 %v547, %v857
      %v1027 = vadd.f32 %v549, %v859
      %v1028 = vadd.f32 %v588, %v898
      %v1029 = vadd.f32 %v590, %v900
      %v1030 = vadd.f32 %v629, %v939
      %v1031 = vadd.f32 %v631, %v941
      %v1032 = vadd.f32 %v670, %v980
      %v1033 = vadd.f32 %v672, %v982
      %v1034 = vadd.f32 %v711, %v1021
      %v1035 = vld [vmem:[%s149] sm:$0xff]
      %v1036 = vld [vmem:[%s149 + $0x8] sm:$0xff]
      %v1037 = vld [vmem:[%s149 + $0x10] sm:$0x3]
      %s1038 = scalar_lea.vmem %s1, 12
      %v1039 = vld [vmem:[%s1038] sm:$0xf]
      %v1043 = vcombine.high %v1035, %v1035
      %v1045 = vunpack.c.l.s4 1983009808
      %v1046 = vunpack.c.0.s8 %v1045
      %v1047 = vlaneseq
      %v1048 = vshrl.u32 %v1047, 7
      %v1049 = vsub.s32 %v1046, %v1048
      %v1050 = vrot.slane %v1035, %v1049
      %v1052 = vunpack.c.l.s4 1983009808
      %v1053 = vunpack.c.0.s8 %v1052
      %v1054 = vlaneseq
      %v1055 = vshrl.u32 %v1054, 7
      %v1056 = vsub.s32 %v1053, %v1055
      %v1057 = vrot.slane %v1043, %v1056
      %v1058 = vcombine.high %v1050, %v1050
      %v1059 = vcombine.high %v1057, %v1057
      %v1060 = vcombine.high %v1036, %v1036
      %v1062 = vunpack.c.l.s4 1983009808
      %v1063 = vunpack.c.0.s8 %v1062
      %v1064 = vlaneseq
      %v1065 = vshrl.u32 %v1064, 7
      %v1066 = vsub.s32 %v1063, %v1065
      %v1067 = vrot.slane %v1036, %v1066
      %v1069 = vunpack.c.l.s4 1983009808
      %v1070 = vunpack.c.0.s8 %v1069
      %v1071 = vlaneseq
      %v1072 = vshrl.u32 %v1071, 7
      %v1073 = vsub.s32 %v1070, %v1072
      %v1074 = vrot.slane %v1060, %v1073
      %v1075 = vcombine.high %v1067, %v1067
      %v1076 = vcombine.high %v1074, %v1074
      %v1078 = vunpack.c.l.s4 1983009808
      %v1079 = vunpack.c.0.s8 %v1078
      %v1080 = vlaneseq
      %v1081 = vshrl.u32 %v1080, 7
      %v1082 = vsub.s32 %v1079, %v1081
      %v1083 = vrot.slane %v1037, %v1082
      %1084 = vrot.lane.b32.xlu0 %v1050, 127
      %v1085 = vpop.permute.xlu0 %1084
      %1086 = vrot.lane.b32.xlu0 %v1058, 127
      %v1087 = vpop.permute.xlu0 %1086
      %1088 = vrot.lane.b32.xlu0 %v1057, 127
      %v1089 = vpop.permute.xlu0 %1088
      %1090 = vrot.lane.b32.xlu0 %v1059, 127
      %v1091 = vpop.permute.xlu0 %1090
      %1092 = vrot.lane.b32.xlu0 %v1067, 127
      %v1093 = vpop.permute.xlu0 %1092
      %1094 = vrot.lane.b32.xlu0 %v1075, 127
      %v1095 = vpop.permute.xlu0 %1094
      %1096 = vrot.lane.b32.xlu0 %v1074, 127
      %v1097 = vpop.permute.xlu0 %1096
      %1098 = vrot.lane.b32.xlu0 %v1076, 127
      %v1099 = vpop.permute.xlu0 %1098
      %1100 = vrot.lane.b32.xlu0 %v1083, 127
      %v1101 = vpop.permute.xlu0 %1100
      %v1102 = vsel %vm783, %v1085, %v1087
      %v1103 = vsel %vm783, %v1087, %v1089
      %v1104 = vsel %vm783, %v1089, %v1091
      %v1105 = vsel %vm783, %v1091, %v1093
      %v1106 = vsel %vm783, %v1093, %v1095
      %v1107 = vsel %vm783, %v1095, %v1097
      %v1108 = vsel %vm783, %v1097, %v1099
      %v1109 = vsel %vm783, %v1099, %v1101
      %v1111 = vsel %vm199, %v1039, 0
      %v1114 = vand.u32 %v1102, %v206
      %v1117 = vand.u32 %v1103, %v206
      %v1120 = vand.u32 %v1104, %v206
      %v1123 = vand.u32 %v1105, %v206
      %v1126 = vand.u32 %v1106, %v206
      %v1129 = vand.u32 %v1107, %v206
      %v1132 = vand.u32 %v1108, %v206
      %v1135 = vand.u32 %v1109, %v206
      %v1138 = vand.u32 %v1101, %v206
      %1140 = vmatprep.subr.bf16.mxu0 0
      %1141 = vmatpush1.bf16.msra.mxu0 0
      %1142 = vmatprep.subr.bf16.mxu0 0
      %1143 = vmatpush1.bf16.msra.mxu0 0
      %1144 = vmatprep.subr.bf16.mxu0 0
      %1145 = vmatpush1.bf16.msra.mxu0 0
      %1146 = vmatprep.subr.bf16.mxu0 0
      %1147 = vmatpush1.bf16.msra.mxu0 0
      %1148 = vmatprep.subr.bf16.mxu0 0
      %1149 = vmatpush1.bf16.msra.mxu0 0
      %1150 = vmatprep.subr.bf16.mxu0 0
      %1151 = vmatpush1.bf16.msra.mxu0 0
      %1152 = vmatprep.subr.bf16.mxu0 0
      %1153 = vmatpush1.bf16.msra.mxu0 0
      %1154 = vmatprep.subr.bf16.mxu0 %v1117
      %1155 = vmatpush1.bf16.msra.mxu0 %v1114
      %1156 = vmatprep.subr.bf16.mxu0 0
      %1157 = vmatpush2.bf16.msra.mxu0 0
      %1158 = vmatprep.subr.bf16.mxu0 0
      %1159 = vmatpush2.bf16.msra.mxu0 0
      %1160 = vmatprep.subr.bf16.mxu0 0
      %1161 = vmatpush2.bf16.msra.mxu0 0
      %1162 = vmatprep.subr.bf16.mxu0 0
      %1163 = vmatpush2.bf16.msra.mxu0 0
      %1164 = vmatprep.subr.bf16.mxu0 0
      %1165 = vmatpush2.bf16.msra.mxu0 0
      %1166 = vmatprep.subr.bf16.mxu0 0
      %1167 = vmatpush2.bf16.msra.mxu0 0
      %1168 = vmatprep.subr.bf16.mxu0 0
      %1169 = vmatpush2.bf16.msra.mxu0 0
      %1170 = vmatprep.subr.bf16.mxu0 0
      %1171 = vmatpush2.bf16.msra.mxu0 0
      %1172 = vmatprep.mubr.bf16.mxu0 0
      %1173 = vmatmul.mubr.bf16.gmra.mxu0 %v1111
      %v1174 = vpop.f32.mrf.mxu0
      %v1175 = vadd.f32 0.0, %v1174
      %v1176 = vpop.f32.mrf.mxu0
      %v1177 = vadd.f32 0.0, %v1176
      %v1178 = vpop.f32.mrf.mxu0
      %v1179 = vpop.f32.mrf.mxu0
      %1180 = vdwg.mxu0
      %1181 = vmatprep.subr.bf16.mxu0 0
      %1182 = vmatpush1.bf16.msra.mxu0 0
      %1183 = vmatprep.subr.bf16.mxu0 0
      %1184 = vmatpush1.bf16.msra.mxu0 0
      %1185 = vmatprep.subr.bf16.mxu0 0
      %1186 = vmatpush1.bf16.msra.mxu0 0
      %1187 = vmatprep.subr.bf16.mxu0 0
      %1188 = vmatpush1.bf16.msra.mxu0 0
      %1189 = vmatprep.subr.bf16.mxu0 0
      %1190 = vmatpush1.bf16.msra.mxu0 0
      %1191 = vmatprep.subr.bf16.mxu0 0
      %1192 = vmatpush1.bf16.msra.mxu0 0
      %1193 = vmatprep.subr.bf16.mxu0 0
      %1194 = vmatpush1.bf16.msra.mxu0 0
      %1195 = vmatprep.subr.bf16.mxu0 %v1123
      %1196 = vmatpush1.bf16.msra.mxu0 %v1120
      %1197 = vmatprep.subr.bf16.mxu0 0
      %1198 = vmatpush2.bf16.msra.mxu0 0
      %1199 = vmatprep.subr.bf16.mxu0 0
      %1200 = vmatpush2.bf16.msra.mxu0 0
      %1201 = vmatprep.subr.bf16.mxu0 0
      %1202 = vmatpush2.bf16.msra.mxu0 0
      %1203 = vmatprep.subr.bf16.mxu0 0
      %1204 = vmatpush2.bf16.msra.mxu0 0
      %1205 = vmatprep.subr.bf16.mxu0 0
      %1206 = vmatpush2.bf16.msra.mxu0 0
      %1207 = vmatprep.subr.bf16.mxu0 0
      %1208 = vmatpush2.bf16.msra.mxu0 0
      %1209 = vmatprep.subr.bf16.mxu0 0
      %1210 = vmatpush2.bf16.msra.mxu0 0
      %1211 = vmatprep.subr.bf16.mxu0 0
      %1212 = vmatpush2.bf16.msra.mxu0 0
      %1213 = vmatprep.mubr.bf16.mxu0 0
      %1214 = vmatmul.mubr.bf16.gmra.mxu0 %v1111
      %v1215 = vpop.f32.mrf.mxu0
      %v1216 = vadd.f32 0.0, %v1215
      %v1217 = vpop.f32.mrf.mxu0
      %v1218 = vadd.f32 0.0, %v1217
      %v1219 = vpop.f32.mrf.mxu0
      %v1220 = vpop.f32.mrf.mxu0
      %1221 = vdwg.mxu0
      %1222 = vmatprep.subr.bf16.mxu0 0
      %1223 = vmatpush1.bf16.msra.mxu0 0
      %1224 = vmatprep.subr.bf16.mxu0 0
      %1225 = vmatpush1.bf16.msra.mxu0 0
      %1226 = vmatprep.subr.bf16.mxu0 0
      %1227 = vmatpush1.bf16.msra.mxu0 0
      %1228 = vmatprep.subr.bf16.mxu0 0
      %1229 = vmatpush1.bf16.msra.mxu0 0
      %1230 = vmatprep.subr.bf16.mxu0 0
      %1231 = vmatpush1.bf16.msra.mxu0 0
      %1232 = vmatprep.subr.bf16.mxu0 0
      %1233 = vmatpush1.bf16.msra.mxu0 0
      %1234 = vmatprep.subr.bf16.mxu0 0
      %1235 = vmatpush1.bf16.msra.mxu0 0
      %1236 = vmatprep.subr.bf16.mxu0 %v1129
      %1237 = vmatpush1.bf16.msra.mxu0 %v1126
      %1238 = vmatprep.subr.bf16.mxu0 0
      %1239 = vmatpush2.bf16.msra.mxu0 0
      %1240 = vmatprep.subr.bf16.mxu0 0
      %1241 = vmatpush2.bf16.msra.mxu0 0
      %1242 = vmatprep.subr.bf16.mxu0 0
      %1243 = vmatpush2.bf16.msra.mxu0 0
      %1244 = vmatprep.subr.bf16.mxu0 0
      %1245 = vmatpush2.bf16.msra.mxu0 0
      %1246 = vmatprep.subr.bf16.mxu0 0
      %1247 = vmatpush2.bf16.msra.mxu0 0
      %1248 = vmatprep.subr.bf16.mxu0 0
      %1249 = vmatpush2.bf16.msra.mxu0 0
      %1250 = vmatprep.subr.bf16.mxu0 0
      %1251 = vmatpush2.bf16.msra.mxu0 0
      %1252 = vmatprep.subr.bf16.mxu0 0
      %1253 = vmatpush2.bf16.msra.mxu0 0
      %1254 = vmatprep.mubr.bf16.mxu0 0
      %1255 = vmatmul.mubr.bf16.gmra.mxu0 %v1111
      %v1256 = vpop.f32.mrf.mxu0
      %v1257 = vadd.f32 0.0, %v1256
      %v1258 = vpop.f32.mrf.mxu0
      %v1259 = vadd.f32 0.0, %v1258
      %v1260 = vpop.f32.mrf.mxu0
      %v1261 = vpop.f32.mrf.mxu0
      %1262 = vdwg.mxu0
      %1263 = vmatprep.subr.bf16.mxu0 0
      %1264 = vmatpush1.bf16.msra.mxu0 0
      %1265 = vmatprep.subr.bf16.mxu0 0
      %1266 = vmatpush1.bf16.msra.mxu0 0
      %1267 = vmatprep.subr.bf16.mxu0 0
      %1268 = vmatpush1.bf16.msra.mxu0 0
      %1269 = vmatprep.subr.bf16.mxu0 0
      %1270 = vmatpush1.bf16.msra.mxu0 0
      %1271 = vmatprep.subr.bf16.mxu0 0
      %1272 = vmatpush1.bf16.msra.mxu0 0
      %1273 = vmatprep.subr.bf16.mxu0 0
      %1274 = vmatpush1.bf16.msra.mxu0 0
      %1275 = vmatprep.subr.bf16.mxu0 0
      %1276 = vmatpush1.bf16.msra.mxu0 0
      %1277 = vmatprep.subr.bf16.mxu0 %v1135
      %1278 = vmatpush1.bf16.msra.mxu0 %v1132
      %1279 = vmatprep.subr.bf16.mxu0 0
      %1280 = vmatpush2.bf16.msra.mxu0 0
      %1281 = vmatprep.subr.bf16.mxu0 0
      %1282 = vmatpush2.bf16.msra.mxu0 0
      %1283 = vmatprep.subr.bf16.mxu0 0
      %1284 = vmatpush2.bf16.msra.mxu0 0
      %1285 = vmatprep.subr.bf16.mxu0 0
      %1286 = vmatpush2.bf16.msra.mxu0 0
      %1287 = vmatprep.subr.bf16.mxu0 0
      %1288 = vmatpush2.bf16.msra.mxu0 0
      %1289 = vmatprep.subr.bf16.mxu0 0
      %1290 = vmatpush2.bf16.msra.mxu0 0
      %1291 = vmatprep.subr.bf16.mxu0 0
      %1292 = vmatpush2.bf16.msra.mxu0 0
      %1293 = vmatprep.subr.bf16.mxu0 0
      %1294 = vmatpush2.bf16.msra.mxu0 0
      %1295 = vmatprep.mubr.bf16.mxu0 0
      %1296 = vmatmul.mubr.bf16.gmra.mxu0 %v1111
      %v1297 = vpop.f32.mrf.mxu0
      %v1298 = vadd.f32 0.0, %v1297
      %v1299 = vpop.f32.mrf.mxu0
      %v1300 = vadd.f32 0.0, %v1299
      %v1301 = vpop.f32.mrf.mxu0
      %v1302 = vpop.f32.mrf.mxu0
      %1303 = vdwg.mxu0
      %1304 = vmatprep.subr.bf16.mxu0 0
      %1305 = vmatpush1.bf16.msra.mxu0 0
      %1306 = vmatprep.subr.bf16.mxu0 0
      %1307 = vmatpush1.bf16.msra.mxu0 0
      %1308 = vmatprep.subr.bf16.mxu0 0
      %1309 = vmatpush1.bf16.msra.mxu0 0
      %1310 = vmatprep.subr.bf16.mxu0 0
      %1311 = vmatpush1.bf16.msra.mxu0 0
      %1312 = vmatprep.subr.bf16.mxu0 0
      %1313 = vmatpush1.bf16.msra.mxu0 0
      %1314 = vmatprep.subr.bf16.mxu0 0
      %1315 = vmatpush1.bf16.msra.mxu0 0
      %1316 = vmatprep.subr.bf16.mxu0 0
      %1317 = vmatpush1.bf16.msra.mxu0 0
      %1318 = vmatprep.subr.bf16.mxu0 0
      %1319 = vmatpush1.bf16.msra.mxu0 %v1138
      %1320 = vmatprep.subr.bf16.mxu0 0
      %1321 = vmatpush2.bf16.msra.mxu0 0
      %1322 = vmatprep.subr.bf16.mxu0 0
      %1323 = vmatpush2.bf16.msra.mxu0 0
      %1324 = vmatprep.subr.bf16.mxu0 0
      %1325 = vmatpush2.bf16.msra.mxu0 0
      %1326 = vmatprep.subr.bf16.mxu0 0
      %1327 = vmatpush2.bf16.msra.mxu0 0
      %1328 = vmatprep.subr.bf16.mxu0 0
      %1329 = vmatpush2.bf16.msra.mxu0 0
      %1330 = vmatprep.subr.bf16.mxu0 0
      %1331 = vmatpush2.bf16.msra.mxu0 0
      %1332 = vmatprep.subr.bf16.mxu0 0
      %1333 = vmatpush2.bf16.msra.mxu0 0
      %1334 = vmatprep.subr.bf16.mxu0 0
      %1335 = vmatpush2.bf16.msra.mxu0 0
      %1336 = vmatprep.mubr.bf16.mxu0 0
      %1337 = vmatmul.mubr.bf16.gmra.mxu0 %v1111
      %v1338 = vpop.f32.mrf.mxu0
      %v1339 = vadd.f32 0.0, %v1338
      %v1340 = vpop.f32.mrf.mxu0
      %v1341 = vpop.f32.mrf.mxu0
      %v1342 = vpop.f32.mrf.mxu0
      %1343 = vdwg.mxu0
      %v1344 = vadd.f32 %v1026, %v1175
      %v1345 = vadd.f32 %v1027, %v1177
      %v1346 = vadd.f32 %v1028, %v1216
      %v1347 = vadd.f32 %v1029, %v1218
      %v1348 = vadd.f32 %v1030, %v1257
      %v1349 = vadd.f32 %v1031, %v1259
      %v1350 = vadd.f32 %v1032, %v1298
      %v1351 = vadd.f32 %v1033, %v1300
      %v1352 = vadd.f32 %v1034, %v1339
      %s1353 = scalar_lea.vmem %s138, 36
      %v1354 = vld [vmem:[%s1353] sm:$0xff]
      %v1355 = vld [vmem:[%s1353 + $0x8] sm:$0xff]
      %v1356 = vld [vmem:[%s1353 + $0x10] sm:$0x3]
      %s1357 = scalar_lea.vmem %s1, 16
      %v1358 = vld [vmem:[%s1357] sm:$0xf]
      %v1362 = vcombine.high %v1354, %v1354
      %v1364 = vunpack.c.l.s4 1983009808
      %v1365 = vunpack.c.0.s8 %v1364
      %v1366 = vlaneseq
      %v1367 = vshrl.u32 %v1366, 7
      %v1368 = vsub.s32 %v1365, %v1367
      %v1369 = vrot.slane %v1354, %v1368
      %v1371 = vunpack.c.l.s4 1983009808
      %v1372 = vunpack.c.0.s8 %v1371
      %v1373 = vlaneseq
      %v1374 = vshrl.u32 %v1373, 7
      %v1375 = vsub.s32 %v1372, %v1374
      %v1376 = vrot.slane %v1362, %v1375
      %v1377 = vcombine.high %v1369, %v1369
      %v1378 = vcombine.high %v1376, %v1376
      %v1379 = vcombine.high %v1355, %v1355
      %v1381 = vunpack.c.l.s4 1983009808
      %v1382 = vunpack.c.0.s8 %v1381
      %v1383 = vlaneseq
      %v1384 = vshrl.u32 %v1383, 7
      %v1385 = vsub.s32 %v1382, %v1384
      %v1386 = vrot.slane %v1355, %v1385
      %v1388 = vunpack.c.l.s4 1983009808
      %v1389 = vunpack.c.0.s8 %v1388
      %v1390 = vlaneseq
      %v1391 = vshrl.u32 %v1390, 7
      %v1392 = vsub.s32 %v1389, %v1391
      %v1393 = vrot.slane %v1379, %v1392
      %v1394 = vcombine.high %v1386, %v1386
      %v1395 = vcombine.high %v1393, %v1393
      %v1397 = vunpack.c.l.s4 1983009808
      %v1398 = vunpack.c.0.s8 %v1397
      %v1399 = vlaneseq
      %v1400 = vshrl.u32 %v1399, 7
      %v1401 = vsub.s32 %v1398, %v1400
      %v1402 = vrot.slane %v1356, %v1401
      %v1404 = vsel %vm199, %v1358, 0
      %v1407 = vand.u32 %v1369, %v206
      %v1410 = vand.u32 %v1377, %v206
      %v1413 = vand.u32 %v1376, %v206
      %v1416 = vand.u32 %v1378, %v206
      %v1419 = vand.u32 %v1386, %v206
      %v1422 = vand.u32 %v1394, %v206
      %v1425 = vand.u32 %v1393, %v206
      %v1428 = vand.u32 %v1395, %v206
      %v1431 = vand.u32 %v1402, %v206
      %1433 = vmatprep.subr.bf16.mxu0 0
      %1434 = vmatpush1.bf16.msra.mxu0 0
      %1435 = vmatprep.subr.bf16.mxu0 0
      %1436 = vmatpush1.bf16.msra.mxu0 0
      %1437 = vmatprep.subr.bf16.mxu0 0
      %1438 = vmatpush1.bf16.msra.mxu0 0
      %1439 = vmatprep.subr.bf16.mxu0 0
      %1440 = vmatpush1.bf16.msra.mxu0 0
      %1441 = vmatprep.subr.bf16.mxu0 0
      %1442 = vmatpush1.bf16.msra.mxu0 0
      %1443 = vmatprep.subr.bf16.mxu0 0
      %1444 = vmatpush1.bf16.msra.mxu0 0
      %1445 = vmatprep.subr.bf16.mxu0 0
      %1446 = vmatpush1.bf16.msra.mxu0 0
      %1447 = vmatprep.subr.bf16.mxu0 %v1410
      %1448 = vmatpush1.bf16.msra.mxu0 %v1407
      %1449 = vmatprep.subr.bf16.mxu0 0
      %1450 = vmatpush2.bf16.msra.mxu0 0
      %1451 = vmatprep.subr.bf16.mxu0 0
      %1452 = vmatpush2.bf16.msra.mxu0 0
      %1453 = vmatprep.subr.bf16.mxu0 0
      %1454 = vmatpush2.bf16.msra.mxu0 0
      %1455 = vmatprep.subr.bf16.mxu0 0
      %1456 = vmatpush2.bf16.msra.mxu0 0
      %1457 = vmatprep.subr.bf16.mxu0 0
      %1458 = vmatpush2.bf16.msra.mxu0 0
      %1459 = vmatprep.subr.bf16.mxu0 0
      %1460 = vmatpush2.bf16.msra.mxu0 0
      %1461 = vmatprep.subr.bf16.mxu0 0
      %1462 = vmatpush2.bf16.msra.mxu0 0
      %1463 = vmatprep.subr.bf16.mxu0 0
      %1464 = vmatpush2.bf16.msra.mxu0 0
      %1465 = vmatprep.mubr.bf16.mxu0 0
      %1466 = vmatmul.mubr.bf16.gmra.mxu0 %v1404
      %v1467 = vpop.f32.mrf.mxu0
      %v1468 = vadd.f32 0.0, %v1467
      %v1469 = vpop.f32.mrf.mxu0
      %v1470 = vadd.f32 0.0, %v1469
      %v1471 = vpop.f32.mrf.mxu0
      %v1472 = vpop.f32.mrf.mxu0
      %1473 = vdwg.mxu0
      %1474 = vmatprep.subr.bf16.mxu0 0
      %1475 = vmatpush1.bf16.msra.mxu0 0
      %1476 = vmatprep.subr.bf16.mxu0 0
      %1477 = vmatpush1.bf16.msra.mxu0 0
      %1478 = vmatprep.subr.bf16.mxu0 0
      %1479 = vmatpush1.bf16.msra.mxu0 0
      %1480 = vmatprep.subr.bf16.mxu0 0
      %1481 = vmatpush1.bf16.msra.mxu0 0
      %1482 = vmatprep.subr.bf16.mxu0 0
      %1483 = vmatpush1.bf16.msra.mxu0 0
      %1484 = vmatprep.subr.bf16.mxu0 0
      %1485 = vmatpush1.bf16.msra.mxu0 0
      %1486 = vmatprep.subr.bf16.mxu0 0
      %1487 = vmatpush1.bf16.msra.mxu0 0
      %1488 = vmatprep.subr.bf16.mxu0 %v1416
      %1489 = vmatpush1.bf16.msra.mxu0 %v1413
      %1490 = vmatprep.subr.bf16.mxu0 0
      %1491 = vmatpush2.bf16.msra.mxu0 0
      %1492 = vmatprep.subr.bf16.mxu0 0
      %1493 = vmatpush2.bf16.msra.mxu0 0
      %1494 = vmatprep.subr.bf16.mxu0 0
      %1495 = vmatpush2.bf16.msra.mxu0 0
      %1496 = vmatprep.subr.bf16.mxu0 0
      %1497 = vmatpush2.bf16.msra.mxu0 0
      %1498 = vmatprep.subr.bf16.mxu0 0
      %1499 = vmatpush2.bf16.msra.mxu0 0
      %1500 = vmatprep.subr.bf16.mxu0 0
      %1501 = vmatpush2.bf16.msra.mxu0 0
      %1502 = vmatprep.subr.bf16.mxu0 0
      %1503 = vmatpush2.bf16.msra.mxu0 0
      %1504 = vmatprep.subr.bf16.mxu0 0
      %1505 = vmatpush2.bf16.msra.mxu0 0
      %1506 = vmatprep.mubr.bf16.mxu0 0
      %1507 = vmatmul.mubr.bf16.gmra.mxu0 %v1404
      %v1508 = vpop.f32.mrf.mxu0
      %v1509 = vadd.f32 0.0, %v1508
      %v1510 = vpop.f32.mrf.mxu0
      %v1511 = vadd.f32 0.0, %v1510
      %v1512 = vpop.f32.mrf.mxu0
      %v1513 = vpop.f32.mrf.mxu0
      %1514 = vdwg.mxu0
      %1515 = vmatprep.subr.bf16.mxu0 0
      %1516 = vmatpush1.bf16.msra.mxu0 0
      %1517 = vmatprep.subr.bf16.mxu0 0
      %1518 = vmatpush1.bf16.msra.mxu0 0
      %1519 = vmatprep.subr.bf16.mxu0 0
      %1520 = vmatpush1.bf16.msra.mxu0 0
      %1521 = vmatprep.subr.bf16.mxu0 0
      %1522 = vmatpush1.bf16.msra.mxu0 0
      %1523 = vmatprep.subr.bf16.mxu0 0
      %1524 = vmatpush1.bf16.msra.mxu0 0
      %1525 = vmatprep.subr.bf16.mxu0 0
      %1526 = vmatpush1.bf16.msra.mxu0 0
      %1527 = vmatprep.subr.bf16.mxu0 0
      %1528 = vmatpush1.bf16.msra.mxu0 0
      %1529 = vmatprep.subr.bf16.mxu0 %v1422
      %1530 = vmatpush1.bf16.msra.mxu0 %v1419
      %1531 = vmatprep.subr.bf16.mxu0 0
      %1532 = vmatpush2.bf16.msra.mxu0 0
      %1533 = vmatprep.subr.bf16.mxu0 0
      %1534 = vmatpush2.bf16.msra.mxu0 0
      %1535 = vmatprep.subr.bf16.mxu0 0
      %1536 = vmatpush2.bf16.msra.mxu0 0
      %1537 = vmatprep.subr.bf16.mxu0 0
      %1538 = vmatpush2.bf16.msra.mxu0 0
      %1539 = vmatprep.subr.bf16.mxu0 0
      %1540 = vmatpush2.bf16.msra.mxu0 0
      %1541 = vmatprep.subr.bf16.mxu0 0
      %1542 = vmatpush2.bf16.msra.mxu0 0
      %1543 = vmatprep.subr.bf16.mxu0 0
      %1544 = vmatpush2.bf16.msra.mxu0 0
      %1545 = vmatprep.subr.bf16.mxu0 0
      %1546 = vmatpush2.bf16.msra.mxu0 0
      %1547 = vmatprep.mubr.bf16.mxu0 0
      %1548 = vmatmul.mubr.bf16.gmra.mxu0 %v1404
      %v1549 = vpop.f32.mrf.mxu0
      %v1550 = vadd.f32 0.0, %v1549
      %v1551 = vpop.f32.mrf.mxu0
      %v1552 = vadd.f32 0.0, %v1551
      %v1553 = vpop.f32.mrf.mxu0
      %v1554 = vpop.f32.mrf.mxu0
      %1555 = vdwg.mxu0
      %1556 = vmatprep.subr.bf16.mxu0 0
      %1557 = vmatpush1.bf16.msra.mxu0 0
      %1558 = vmatprep.subr.bf16.mxu0 0
      %1559 = vmatpush1.bf16.msra.mxu0 0
      %1560 = vmatprep.subr.bf16.mxu0 0
      %1561 = vmatpush1.bf16.msra.mxu0 0
      %1562 = vmatprep.subr.bf16.mxu0 0
      %1563 = vmatpush1.bf16.msra.mxu0 0
      %1564 = vmatprep.subr.bf16.mxu0 0
      %1565 = vmatpush1.bf16.msra.mxu0 0
      %1566 = vmatprep.subr.bf16.mxu0 0
      %1567 = vmatpush1.bf16.msra.mxu0 0
      %1568 = vmatprep.subr.bf16.mxu0 0
      %1569 = vmatpush1.bf16.msra.mxu0 0
      %1570 = vmatprep.subr.bf16.mxu0 %v1428
      %1571 = vmatpush1.bf16.msra.mxu0 %v1425
      %1572 = vmatprep.subr.bf16.mxu0 0
      %1573 = vmatpush2.bf16.msra.mxu0 0
      %1574 = vmatprep.subr.bf16.mxu0 0
      %1575 = vmatpush2.bf16.msra.mxu0 0
      %1576 = vmatprep.subr.bf16.mxu0 0
      %1577 = vmatpush2.bf16.msra.mxu0 0
      %1578 = vmatprep.subr.bf16.mxu0 0
      %1579 = vmatpush2.bf16.msra.mxu0 0
      %1580 = vmatprep.subr.bf16.mxu0 0
      %1581 = vmatpush2.bf16.msra.mxu0 0
      %1582 = vmatprep.subr.bf16.mxu0 0
      %1583 = vmatpush2.bf16.msra.mxu0 0
      %1584 = vmatprep.subr.bf16.mxu0 0
      %1585 = vmatpush2.bf16.msra.mxu0 0
      %1586 = vmatprep.subr.bf16.mxu0 0
      %1587 = vmatpush2.bf16.msra.mxu0 0
      %1588 = vmatprep.mubr.bf16.mxu0 0
      %1589 = vmatmul.mubr.bf16.gmra.mxu0 %v1404
      %v1590 = vpop.f32.mrf.mxu0
      %v1591 = vadd.f32 0.0, %v1590
      %v1592 = vpop.f32.mrf.mxu0
      %v1593 = vadd.f32 0.0, %v1592
      %v1594 = vpop.f32.mrf.mxu0
      %v1595 = vpop.f32.mrf.mxu0
      %1596 = vdwg.mxu0
      %1597 = vmatprep.subr.bf16.mxu0 0
      %1598 = vmatpush1.bf16.msra.mxu0 0
      %1599 = vmatprep.subr.bf16.mxu0 0
      %1600 = vmatpush1.bf16.msra.mxu0 0
      %1601 = vmatprep.subr.bf16.mxu0 0
      %1602 = vmatpush1.bf16.msra.mxu0 0
      %1603 = vmatprep.subr.bf16.mxu0 0
      %1604 = vmatpush1.bf16.msra.mxu0 0
      %1605 = vmatprep.subr.bf16.mxu0 0
      %1606 = vmatpush1.bf16.msra.mxu0 0
      %1607 = vmatprep.subr.bf16.mxu0 0
      %1608 = vmatpush1.bf16.msra.mxu0 0
      %1609 = vmatprep.subr.bf16.mxu0 0
      %1610 = vmatpush1.bf16.msra.mxu0 0
      %1611 = vmatprep.subr.bf16.mxu0 0
      %1612 = vmatpush1.bf16.msra.mxu0 %v1431
      %1613 = vmatprep.subr.bf16.mxu0 0
      %1614 = vmatpush2.bf16.msra.mxu0 0
      %1615 = vmatprep.subr.bf16.mxu0 0
      %1616 = vmatpush2.bf16.msra.mxu0 0
      %1617 = vmatprep.subr.bf16.mxu0 0
      %1618 = vmatpush2.bf16.msra.mxu0 0
      %1619 = vmatprep.subr.bf16.mxu0 0
      %1620 = vmatpush2.bf16.msra.mxu0 0
      %1621 = vmatprep.subr.bf16.mxu0 0
      %1622 = vmatpush2.bf16.msra.mxu0 0
      %1623 = vmatprep.subr.bf16.mxu0 0
      %1624 = vmatpush2.bf16.msra.mxu0 0
      %1625 = vmatprep.subr.bf16.mxu0 0
      %1626 = vmatpush2.bf16.msra.mxu0 0
      %1627 = vmatprep.subr.bf16.mxu0 0
      %1628 = vmatpush2.bf16.msra.mxu0 0
      %1629 = vmatprep.mubr.bf16.mxu0 0
      %1630 = vmatmul.mubr.bf16.gmra.mxu0 %v1404
      %v1631 = vpop.f32.mrf.mxu0
      %v1632 = vadd.f32 0.0, %v1631
      %v1633 = vpop.f32.mrf.mxu0
      %v1634 = vpop.f32.mrf.mxu0
      %v1635 = vpop.f32.mrf.mxu0
      %1636 = vdwg.mxu0
      %v1637 = vadd.f32 %v1344, %v1468
      %v1638 = vadd.f32 %v1345, %v1470
      %v1639 = vadd.f32 %v1346, %v1509
      %v1640 = vadd.f32 %v1347, %v1511
      %v1641 = vadd.f32 %v1348, %v1550
      %v1642 = vadd.f32 %v1349, %v1552
      %v1643 = vadd.f32 %v1350, %v1591
      %v1644 = vadd.f32 %v1351, %v1593
      %v1645 = vadd.f32 %v1352, %v1632
      %s1646 = scalar_lea.vmem %s138, 54
      %v1647 = vld [vmem:[%s1646] sm:$0xff]
      %v1648 = vld [vmem:[%s1646 + $0x8] sm:$0xff]
      %v1649 = vld [vmem:[%s1646 + $0x10] sm:$0x3]
      %s1650 = scalar_lea.vmem %s1, 20
      %v1651 = vld [vmem:[%s1650] sm:$0xf]
      %v1655 = vcombine.high %v1647, %v1647
      %v1657 = vunpack.c.l.s4 1983009808
      %v1658 = vunpack.c.0.s8 %v1657
      %v1659 = vlaneseq
      %v1660 = vshrl.u32 %v1659, 7
      %v1661 = vsub.s32 %v1658, %v1660
      %v1662 = vrot.slane %v1647, %v1661
      %v1664 = vunpack.c.l.s4 1983009808
      %v1665 = vunpack.c.0.s8 %v1664
      %v1666 = vlaneseq
      %v1667 = vshrl.u32 %v1666, 7
      %v1668 = vsub.s32 %v1665, %v1667
      %v1669 = vrot.slane %v1655, %v1668
      %v1670 = vcombine.high %v1662, %v1662
      %v1671 = vcombine.high %v1669, %v1669
      %v1672 = vcombine.high %v1648, %v1648
      %v1674 = vunpack.c.l.s4 1983009808
      %v1675 = vunpack.c.0.s8 %v1674
      %v1676 = vlaneseq
      %v1677 = vshrl.u32 %v1676, 7
      %v1678 = vsub.s32 %v1675, %v1677
      %v1679 = vrot.slane %v1648, %v1678
      %v1681 = vunpack.c.l.s4 1983009808
      %v1682 = vunpack.c.0.s8 %v1681
      %v1683 = vlaneseq
      %v1684 = vshrl.u32 %v1683, 7
      %v1685 = vsub.s32 %v1682, %v1684
      %v1686 = vrot.slane %v1672, %v1685
      %v1687 = vcombine.high %v1679, %v1679
      %v1688 = vcombine.high %v1686, %v1686
      %v1690 = vunpack.c.l.s4 1983009808
      %v1691 = vunpack.c.0.s8 %v1690
      %v1692 = vlaneseq
      %v1693 = vshrl.u32 %v1692, 7
      %v1694 = vsub.s32 %v1691, %v1693
      %v1695 = vrot.slane %v1649, %v1694
      %v1697 = vsel %vm199, %v1651, 0
      %v1700 = vand.u32 %v1662, %v206
      %v1703 = vand.u32 %v1670, %v206
      %v1706 = vand.u32 %v1669, %v206
      %v1709 = vand.u32 %v1671, %v206
      %v1712 = vand.u32 %v1679, %v206
      %v1715 = vand.u32 %v1687, %v206
      %v1718 = vand.u32 %v1686, %v206
      %v1721 = vand.u32 %v1688, %v206
      %v1724 = vand.u32 %v1695, %v206
      %1726 = vmatprep.subr.bf16.mxu0 0
      %1727 = vmatpush1.bf16.msra.mxu0 0
      %1728 = vmatprep.subr.bf16.mxu0 0
      %1729 = vmatpush1.bf16.msra.mxu0 0
      %1730 = vmatprep.subr.bf16.mxu0 0
      %1731 = vmatpush1.bf16.msra.mxu0 0
      %1732 = vmatprep.subr.bf16.mxu0 0
      %1733 = vmatpush1.bf16.msra.mxu0 0
      %1734 = vmatprep.subr.bf16.mxu0 0
      %1735 = vmatpush1.bf16.msra.mxu0 0
      %1736 = vmatprep.subr.bf16.mxu0 0
      %1737 = vmatpush1.bf16.msra.mxu0 0
      %1738 = vmatprep.subr.bf16.mxu0 0
      %1739 = vmatpush1.bf16.msra.mxu0 0
      %1740 = vmatprep.subr.bf16.mxu0 %v1703
      %1741 = vmatpush1.bf16.msra.mxu0 %v1700
      %1742 = vmatprep.subr.bf16.mxu0 0
      %1743 = vmatpush2.bf16.msra.mxu0 0
      %1744 = vmatprep.subr.bf16.mxu0 0
      %1745 = vmatpush2.bf16.msra.mxu0 0
      %1746 = vmatprep.subr.bf16.mxu0 0
      %1747 = vmatpush2.bf16.msra.mxu0 0
      %1748 = vmatprep.subr.bf16.mxu0 0
      %1749 = vmatpush2.bf16.msra.mxu0 0
      %1750 = vmatprep.subr.bf16.mxu0 0
      %1751 = vmatpush2.bf16.msra.mxu0 0
      %1752 = vmatprep.subr.bf16.mxu0 0
      %1753 = vmatpush2.bf16.msra.mxu0 0
      %1754 = vmatprep.subr.bf16.mxu0 0
      %1755 = vmatpush2.bf16.msra.mxu0 0
      %1756 = vmatprep.subr.bf16.mxu0 0
      %1757 = vmatpush2.bf16.msra.mxu0 0
      %1758 = vmatprep.mubr.bf16.mxu0 0
      %1759 = vmatmul.mubr.bf16.gmra.mxu0 %v1697
      %v1760 = vpop.f32.mrf.mxu0
      %v1761 = vadd.f32 0.0, %v1760
      %v1762 = vpop.f32.mrf.mxu0
      %v1763 = vadd.f32 0.0, %v1762
      %v1764 = vpop.f32.mrf.mxu0
      %v1765 = vpop.f32.mrf.mxu0
      %1766 = vdwg.mxu0
      %1767 = vmatprep.subr.bf16.mxu0 0
      %1768 = vmatpush1.bf16.msra.mxu0 0
      %1769 = vmatprep.subr.bf16.mxu0 0
      %1770 = vmatpush1.bf16.msra.mxu0 0
      %1771 = vmatprep.subr.bf16.mxu0 0
      %1772 = vmatpush1.bf16.msra.mxu0 0
      %1773 = vmatprep.subr.bf16.mxu0 0
      %1774 = vmatpush1.bf16.msra.mxu0 0
      %1775 = vmatprep.subr.bf16.mxu0 0
      %1776 = vmatpush1.bf16.msra.mxu0 0
      %1777 = vmatprep.subr.bf16.mxu0 0
      %1778 = vmatpush1.bf16.msra.mxu0 0
      %1779 = vmatprep.subr.bf16.mxu0 0
      %1780 = vmatpush1.bf16.msra.mxu0 0
      %1781 = vmatprep.subr.bf16.mxu0 %v1709
      %1782 = vmatpush1.bf16.msra.mxu0 %v1706
      %1783 = vmatprep.subr.bf16.mxu0 0
      %1784 = vmatpush2.bf16.msra.mxu0 0
      %1785 = vmatprep.subr.bf16.mxu0 0
      %1786 = vmatpush2.bf16.msra.mxu0 0
      %1787 = vmatprep.subr.bf16.mxu0 0
      %1788 = vmatpush2.bf16.msra.mxu0 0
      %1789 = vmatprep.subr.bf16.mxu0 0
      %1790 = vmatpush2.bf16.msra.mxu0 0
      %1791 = vmatprep.subr.bf16.mxu0 0
      %1792 = vmatpush2.bf16.msra.mxu0 0
      %1793 = vmatprep.subr.bf16.mxu0 0
      %1794 = vmatpush2.bf16.msra.mxu0 0
      %1795 = vmatprep.subr.bf16.mxu0 0
      %1796 = vmatpush2.bf16.msra.mxu0 0
      %1797 = vmatprep.subr.bf16.mxu0 0
      %1798 = vmatpush2.bf16.msra.mxu0 0
      %1799 = vmatprep.mubr.bf16.mxu0 0
      %1800 = vmatmul.mubr.bf16.gmra.mxu0 %v1697
      %v1801 = vpop.f32.mrf.mxu0
      %v1802 = vadd.f32 0.0, %v1801
      %v1803 = vpop.f32.mrf.mxu0
      %v1804 = vadd.f32 0.0, %v1803
      %v1805 = vpop.f32.mrf.mxu0
      %v1806 = vpop.f32.mrf.mxu0
      %1807 = vdwg.mxu0
      %1808 = vmatprep.subr.bf16.mxu0 0
      %1809 = vmatpush1.bf16.msra.mxu0 0
      %1810 = vmatprep.subr.bf16.mxu0 0
      %1811 = vmatpush1.bf16.msra.mxu0 0
      %1812 = vmatprep.subr.bf16.mxu0 0
      %1813 = vmatpush1.bf16.msra.mxu0 0
      %1814 = vmatprep.subr.bf16.mxu0 0
      %1815 = vmatpush1.bf16.msra.mxu0 0
      %1816 = vmatprep.subr.bf16.mxu0 0
      %1817 = vmatpush1.bf16.msra.mxu0 0
      %1818 = vmatprep.subr.bf16.mxu0 0
      %1819 = vmatpush1.bf16.msra.mxu0 0
      %1820 = vmatprep.subr.bf16.mxu0 0
      %1821 = vmatpush1.bf16.msra.mxu0 0
      %1822 = vmatprep.subr.bf16.mxu0 %v1715
      %1823 = vmatpush1.bf16.msra.mxu0 %v1712
      %1824 = vmatprep.subr.bf16.mxu0 0
      %1825 = vmatpush2.bf16.msra.mxu0 0
      %1826 = vmatprep.subr.bf16.mxu0 0
      %1827 = vmatpush2.bf16.msra.mxu0 0
      %1828 = vmatprep.subr.bf16.mxu0 0
      %1829 = vmatpush2.bf16.msra.mxu0 0
      %1830 = vmatprep.subr.bf16.mxu0 0
      %1831 = vmatpush2.bf16.msra.mxu0 0
      %1832 = vmatprep.subr.bf16.mxu0 0
      %1833 = vmatpush2.bf16.msra.mxu0 0
      %1834 = vmatprep.subr.bf16.mxu0 0
      %1835 = vmatpush2.bf16.msra.mxu0 0
      %1836 = vmatprep.subr.bf16.mxu0 0
      %1837 = vmatpush2.bf16.msra.mxu0 0
      %1838 = vmatprep.subr.bf16.mxu0 0
      %1839 = vmatpush2.bf16.msra.mxu0 0
      %1840 = vmatprep.mubr.bf16.mxu0 0
      %1841 = vmatmul.mubr.bf16.gmra.mxu0 %v1697
      %v1842 = vpop.f32.mrf.mxu0
      %v1843 = vadd.f32 0.0, %v1842
      %v1844 = vpop.f32.mrf.mxu0
      %v1845 = vadd.f32 0.0, %v1844
      %v1846 = vpop.f32.mrf.mxu0
      %v1847 = vpop.f32.mrf.mxu0
      %1848 = vdwg.mxu0
      %1849 = vmatprep.subr.bf16.mxu0 0
      %1850 = vmatpush1.bf16.msra.mxu0 0
      %1851 = vmatprep.subr.bf16.mxu0 0
      %1852 = vmatpush1.bf16.msra.mxu0 0
      %1853 = vmatprep.subr.bf16.mxu0 0
      %1854 = vmatpush1.bf16.msra.mxu0 0
      %1855 = vmatprep.subr.bf16.mxu0 0
      %1856 = vmatpush1.bf16.msra.mxu0 0
      %1857 = vmatprep.subr.bf16.mxu0 0
      %1858 = vmatpush1.bf16.msra.mxu0 0
      %1859 = vmatprep.subr.bf16.mxu0 0
      %1860 = vmatpush1.bf16.msra.mxu0 0
      %1861 = vmatprep.subr.bf16.mxu0 0
      %1862 = vmatpush1.bf16.msra.mxu0 0
      %1863 = vmatprep.subr.bf16.mxu0 %v1721
      %1864 = vmatpush1.bf16.msra.mxu0 %v1718
      %1865 = vmatprep.subr.bf16.mxu0 0
      %1866 = vmatpush2.bf16.msra.mxu0 0
      %1867 = vmatprep.subr.bf16.mxu0 0
      %1868 = vmatpush2.bf16.msra.mxu0 0
      %1869 = vmatprep.subr.bf16.mxu0 0
      %1870 = vmatpush2.bf16.msra.mxu0 0
      %1871 = vmatprep.subr.bf16.mxu0 0
      %1872 = vmatpush2.bf16.msra.mxu0 0
      %1873 = vmatprep.subr.bf16.mxu0 0
      %1874 = vmatpush2.bf16.msra.mxu0 0
      %1875 = vmatprep.subr.bf16.mxu0 0
      %1876 = vmatpush2.bf16.msra.mxu0 0
      %1877 = vmatprep.subr.bf16.mxu0 0
      %1878 = vmatpush2.bf16.msra.mxu0 0
      %1879 = vmatprep.subr.bf16.mxu0 0
      %1880 = vmatpush2.bf16.msra.mxu0 0
      %1881 = vmatprep.mubr.bf16.mxu0 0
      %1882 = vmatmul.mubr.bf16.gmra.mxu0 %v1697
      %v1883 = vpop.f32.mrf.mxu0
      %v1884 = vadd.f32 0.0, %v1883
      %v1885 = vpop.f32.mrf.mxu0
      %v1886 = vadd.f32 0.0, %v1885
      %v1887 = vpop.f32.mrf.mxu0
      %v1888 = vpop.f32.mrf.mxu0
      %1889 = vdwg.mxu0
      %1890 = vmatprep.subr.bf16.mxu0 0
      %1891 = vmatpush1.bf16.msra.mxu0 0
      %1892 = vmatprep.subr.bf16.mxu0 0
      %1893 = vmatpush1.bf16.msra.mxu0 0
      %1894 = vmatprep.subr.bf16.mxu0 0
      %1895 = vmatpush1.bf16.msra.mxu0 0
      %1896 = vmatprep.subr.bf16.mxu0 0
      %1897 = vmatpush1.bf16.msra.mxu0 0
      %1898 = vmatprep.subr.bf16.mxu0 0
      %1899 = vmatpush1.bf16.msra.mxu0 0
      %1900 = vmatprep.subr.bf16.mxu0 0
      %1901 = vmatpush1.bf16.msra.mxu0 0
      %1902 = vmatprep.subr.bf16.mxu0 0
      %1903 = vmatpush1.bf16.msra.mxu0 0
      %1904 = vmatprep.subr.bf16.mxu0 0
      %1905 = vmatpush1.bf16.msra.mxu0 %v1724
      %1906 = vmatprep.subr.bf16.mxu0 0
      %1907 = vmatpush2.bf16.msra.mxu0 0
      %1908 = vmatprep.subr.bf16.mxu0 0
      %1909 = vmatpush2.bf16.msra.mxu0 0
      %1910 = vmatprep.subr.bf16.mxu0 0
      %1911 = vmatpush2.bf16.msra.mxu0 0
      %1912 = vmatprep.subr.bf16.mxu0 0
      %1913 = vmatpush2.bf16.msra.mxu0 0
      %1914 = vmatprep.subr.bf16.mxu0 0
      %1915 = vmatpush2.bf16.msra.mxu0 0
      %1916 = vmatprep.subr.bf16.mxu0 0
      %1917 = vmatpush2.bf16.msra.mxu0 0
      %1918 = vmatprep.subr.bf16.mxu0 0
      %1919 = vmatpush2.bf16.msra.mxu0 0
      %1920 = vmatprep.subr.bf16.mxu0 0
      %1921 = vmatpush2.bf16.msra.mxu0 0
      %1922 = vmatprep.mubr.bf16.mxu0 0
      %1923 = vmatmul.mubr.bf16.gmra.mxu0 %v1697
      %v1924 = vpop.f32.mrf.mxu0
      %v1925 = vadd.f32 0.0, %v1924
      %v1926 = vpop.f32.mrf.mxu0
      %v1927 = vpop.f32.mrf.mxu0
      %v1928 = vpop.f32.mrf.mxu0
      %1929 = vdwg.mxu0
      %v1930 = vadd.f32 %v1637, %v1761
      %v1931 = vadd.f32 %v1638, %v1763
      %v1932 = vadd.f32 %v1639, %v1802
      %v1933 = vadd.f32 %v1640, %v1804
      %v1934 = vadd.f32 %v1641, %v1843
      %v1935 = vadd.f32 %v1642, %v1845
      %v1936 = vadd.f32 %v1643, %v1884
      %v1937 = vadd.f32 %v1644, %v1886
      %v1938 = vadd.f32 %v1645, %v1925
      %v1939 = vld [vmem:[%s1353] sm:$0xff]
      %v1940 = vld [vmem:[%s1353 + $0x8] sm:$0xff]
      %v1941 = vld [vmem:[%s1353 + $0x10] sm:$0x3]
      %s1942 = scalar_lea.vmem %s1, 24
      %v1943 = vld [vmem:[%s1942] sm:$0xf]
      %v1947 = vcombine.high %v1939, %v1939
      %v1949 = vunpack.c.l.s4 1983009808
      %v1950 = vunpack.c.0.s8 %v1949
      %v1951 = vlaneseq
      %v1952 = vshrl.u32 %v1951, 7
      %v1953 = vsub.s32 %v1950, %v1952
      %v1954 = vrot.slane %v1939, %v1953
      %v1956 = vunpack.c.l.s4 1983009808
      %v1957 = vunpack.c.0.s8 %v1956
      %v1958 = vlaneseq
      %v1959 = vshrl.u32 %v1958, 7
      %v1960 = vsub.s32 %v1957, %v1959
      %v1961 = vrot.slane %v1947, %v1960
      %v1962 = vcombine.high %v1954, %v1954
      %v1963 = vcombine.high %v1961, %v1961
      %v1964 = vcombine.high %v1940, %v1940
      %v1966 = vunpack.c.l.s4 1983009808
      %v1967 = vunpack.c.0.s8 %v1966
      %v1968 = vlaneseq
      %v1969 = vshrl.u32 %v1968, 7
      %v1970 = vsub.s32 %v1967, %v1969
      %v1971 = vrot.slane %v1940, %v1970
      %v1973 = vunpack.c.l.s4 1983009808
      %v1974 = vunpack.c.0.s8 %v1973
      %v1975 = vlaneseq
      %v1976 = vshrl.u32 %v1975, 7
      %v1977 = vsub.s32 %v1974, %v1976
      %v1978 = vrot.slane %v1964, %v1977
      %v1979 = vcombine.high %v1971, %v1971
      %v1980 = vcombine.high %v1978, %v1978
      %v1982 = vunpack.c.l.s4 1983009808
      %v1983 = vunpack.c.0.s8 %v1982
      %v1984 = vlaneseq
      %v1985 = vshrl.u32 %v1984, 7
      %v1986 = vsub.s32 %v1983, %v1985
      %v1987 = vrot.slane %v1941, %v1986
      %1988 = vrot.lane.b32.xlu0 %v1954, 127
      %v1989 = vpop.permute.xlu0 %1988
      %1990 = vrot.lane.b32.xlu0 %v1962, 127
      %v1991 = vpop.permute.xlu0 %1990
      %1992 = vrot.lane.b32.xlu0 %v1961, 127
      %v1993 = vpop.permute.xlu0 %1992
      %1994 = vrot.lane.b32.xlu0 %v1963, 127
      %v1995 = vpop.permute.xlu0 %1994
      %1996 = vrot.lane.b32.xlu0 %v1971, 127
      %v1997 = vpop.permute.xlu0 %1996
      %1998 = vrot.lane.b32.xlu0 %v1979, 127
      %v1999 = vpop.permute.xlu0 %1998
      %2000 = vrot.lane.b32.xlu0 %v1978, 127
      %v2001 = vpop.permute.xlu0 %2000
      %2002 = vrot.lane.b32.xlu0 %v1980, 127
      %v2003 = vpop.permute.xlu0 %2002
      %2004 = vrot.lane.b32.xlu0 %v1987, 127
      %v2005 = vpop.permute.xlu0 %2004
      %v2006 = vsel %vm783, %v1989, %v1991
      %v2007 = vsel %vm783, %v1991, %v1993
      %v2008 = vsel %vm783, %v1993, %v1995
      %v2009 = vsel %vm783, %v1995, %v1997
      %v2010 = vsel %vm783, %v1997, %v1999
      %v2011 = vsel %vm783, %v1999, %v2001
      %v2012 = vsel %vm783, %v2001, %v2003
      %v2013 = vsel %vm783, %v2003, %v2005
      %v2015 = vsel %vm199, %v1943, 0
      %v2018 = vand.u32 %v2006, %v206
      %v2021 = vand.u32 %v2007, %v206
      %v2024 = vand.u32 %v2008, %v206
      %v2027 = vand.u32 %v2009, %v206
      %v2030 = vand.u32 %v2010, %v206
      %v2033 = vand.u32 %v2011, %v206
      %v2036 = vand.u32 %v2012, %v206
      %v2039 = vand.u32 %v2013, %v206
      %v2042 = vand.u32 %v2005, %v206
      %2044 = vmatprep.subr.bf16.mxu0 0
      %2045 = vmatpush1.bf16.msra.mxu0 0
      %2046 = vmatprep.subr.bf16.mxu0 0
      %2047 = vmatpush1.bf16.msra.mxu0 0
      %2048 = vmatprep.subr.bf16.mxu0 0
      %2049 = vmatpush1.bf16.msra.mxu0 0
      %2050 = vmatprep.subr.bf16.mxu0 0
      %2051 = vmatpush1.bf16.msra.mxu0 0
      %2052 = vmatprep.subr.bf16.mxu0 0
      %2053 = vmatpush1.bf16.msra.mxu0 0
      %2054 = vmatprep.subr.bf16.mxu0 0
      %2055 = vmatpush1.bf16.msra.mxu0 0
      %2056 = vmatprep.subr.bf16.mxu0 0
      %2057 = vmatpush1.bf16.msra.mxu0 0
      %2058 = vmatprep.subr.bf16.mxu0 %v2021
      %2059 = vmatpush1.bf16.msra.mxu0 %v2018
      %2060 = vmatprep.subr.bf16.mxu0 0
      %2061 = vmatpush2.bf16.msra.mxu0 0
      %2062 = vmatprep.subr.bf16.mxu0 0
      %2063 = vmatpush2.bf16.msra.mxu0 0
      %2064 = vmatprep.subr.bf16.mxu0 0
      %2065 = vmatpush2.bf16.msra.mxu0 0
      %2066 = vmatprep.subr.bf16.mxu0 0
      %2067 = vmatpush2.bf16.msra.mxu0 0
      %2068 = vmatprep.subr.bf16.mxu0 0
      %2069 = vmatpush2.bf16.msra.mxu0 0
      %2070 = vmatprep.subr.bf16.mxu0 0
      %2071 = vmatpush2.bf16.msra.mxu0 0
      %2072 = vmatprep.subr.bf16.mxu0 0
      %2073 = vmatpush2.bf16.msra.mxu0 0
      %2074 = vmatprep.subr.bf16.mxu0 0
      %2075 = vmatpush2.bf16.msra.mxu0 0
      %2076 = vmatprep.mubr.bf16.mxu0 0
      %2077 = vmatmul.mubr.bf16.gmra.mxu0 %v2015
      %v2078 = vpop.f32.mrf.mxu0
      %v2079 = vadd.f32 0.0, %v2078
      %v2080 = vpop.f32.mrf.mxu0
      %v2081 = vadd.f32 0.0, %v2080
      %v2082 = vpop.f32.mrf.mxu0
      %v2083 = vpop.f32.mrf.mxu0
      %2084 = vdwg.mxu0
      %2085 = vmatprep.subr.bf16.mxu0 0
      %2086 = vmatpush1.bf16.msra.mxu0 0
      %2087 = vmatprep.subr.bf16.mxu0 0
      %2088 = vmatpush1.bf16.msra.mxu0 0
      %2089 = vmatprep.subr.bf16.mxu0 0
      %2090 = vmatpush1.bf16.msra.mxu0 0
      %2091 = vmatprep.subr.bf16.mxu0 0
      %2092 = vmatpush1.bf16.msra.mxu0 0
      %2093 = vmatprep.subr.bf16.mxu0 0
      %2094 = vmatpush1.bf16.msra.mxu0 0
      %2095 = vmatprep.subr.bf16.mxu0 0
      %2096 = vmatpush1.bf16.msra.mxu0 0
      %2097 = vmatprep.subr.bf16.mxu0 0
      %2098 = vmatpush1.bf16.msra.mxu0 0
      %2099 = vmatprep.subr.bf16.mxu0 %v2027
      %2100 = vmatpush1.bf16.msra.mxu0 %v2024
      %2101 = vmatprep.subr.bf16.mxu0 0
      %2102 = vmatpush2.bf16.msra.mxu0 0
      %2103 = vmatprep.subr.bf16.mxu0 0
      %2104 = vmatpush2.bf16.msra.mxu0 0
      %2105 = vmatprep.subr.bf16.mxu0 0
      %2106 = vmatpush2.bf16.msra.mxu0 0
      %2107 = vmatprep.subr.bf16.mxu0 0
      %2108 = vmatpush2.bf16.msra.mxu0 0
      %2109 = vmatprep.subr.bf16.mxu0 0
      %2110 = vmatpush2.bf16.msra.mxu0 0
      %2111 = vmatprep.subr.bf16.mxu0 0
      %2112 = vmatpush2.bf16.msra.mxu0 0
      %2113 = vmatprep.subr.bf16.mxu0 0
      %2114 = vmatpush2.bf16.msra.mxu0 0
      %2115 = vmatprep.subr.bf16.mxu0 0
      %2116 = vmatpush2.bf16.msra.mxu0 0
      %2117 = vmatprep.mubr.bf16.mxu0 0
      %2118 = vmatmul.mubr.bf16.gmra.mxu0 %v2015
      %v2119 = vpop.f32.mrf.mxu0
      %v2120 = vadd.f32 0.0, %v2119
      %v2121 = vpop.f32.mrf.mxu0
      %v2122 = vadd.f32 0.0, %v2121
      %v2123 = vpop.f32.mrf.mxu0
      %v2124 = vpop.f32.mrf.mxu0
      %2125 = vdwg.mxu0
      %2126 = vmatprep.subr.bf16.mxu0 0
      %2127 = vmatpush1.bf16.msra.mxu0 0
      %2128 = vmatprep.subr.bf16.mxu0 0
      %2129 = vmatpush1.bf16.msra.mxu0 0
      %2130 = vmatprep.subr.bf16.mxu0 0
      %2131 = vmatpush1.bf16.msra.mxu0 0
      %2132 = vmatprep.subr.bf16.mxu0 0
      %2133 = vmatpush1.bf16.msra.mxu0 0
      %2134 = vmatprep.subr.bf16.mxu0 0
      %2135 = vmatpush1.bf16.msra.mxu0 0
      %2136 = vmatprep.subr.bf16.mxu0 0
      %2137 = vmatpush1.bf16.msra.mxu0 0
      %2138 = vmatprep.subr.bf16.mxu0 0
      %2139 = vmatpush1.bf16.msra.mxu0 0
      %2140 = vmatprep.subr.bf16.mxu0 %v2033
      %2141 = vmatpush1.bf16.msra.mxu0 %v2030
      %2142 = vmatprep.subr.bf16.mxu0 0
      %2143 = vmatpush2.bf16.msra.mxu0 0
      %2144 = vmatprep.subr.bf16.mxu0 0
      %2145 = vmatpush2.bf16.msra.mxu0 0
      %2146 = vmatprep.subr.bf16.mxu0 0
      %2147 = vmatpush2.bf16.msra.mxu0 0
      %2148 = vmatprep.subr.bf16.mxu0 0
      %2149 = vmatpush2.bf16.msra.mxu0 0
      %2150 = vmatprep.subr.bf16.mxu0 0
      %2151 = vmatpush2.bf16.msra.mxu0 0
      %2152 = vmatprep.subr.bf16.mxu0 0
      %2153 = vmatpush2.bf16.msra.mxu0 0
      %2154 = vmatprep.subr.bf16.mxu0 0
      %2155 = vmatpush2.bf16.msra.mxu0 0
      %2156 = vmatprep.subr.bf16.mxu0 0
      %2157 = vmatpush2.bf16.msra.mxu0 0
      %2158 = vmatprep.mubr.bf16.mxu0 0
      %2159 = vmatmul.mubr.bf16.gmra.mxu0 %v2015
      %v2160 = vpop.f32.mrf.mxu0
      %v2161 = vadd.f32 0.0, %v2160
      %v2162 = vpop.f32.mrf.mxu0
      %v2163 = vadd.f32 0.0, %v2162
      %v2164 = vpop.f32.mrf.mxu0
      %v2165 = vpop.f32.mrf.mxu0
      %2166 = vdwg.mxu0
      %2167 = vmatprep.subr.bf16.mxu0 0
      %2168 = vmatpush1.bf16.msra.mxu0 0
      %2169 = vmatprep.subr.bf16.mxu0 0
      %2170 = vmatpush1.bf16.msra.mxu0 0
      %2171 = vmatprep.subr.bf16.mxu0 0
      %2172 = vmatpush1.bf16.msra.mxu0 0
      %2173 = vmatprep.subr.bf16.mxu0 0
      %2174 = vmatpush1.bf16.msra.mxu0 0
      %2175 = vmatprep.subr.bf16.mxu0 0
      %2176 = vmatpush1.bf16.msra.mxu0 0
      %2177 = vmatprep.subr.bf16.mxu0 0
      %2178 = vmatpush1.bf16.msra.mxu0 0
      %2179 = vmatprep.subr.bf16.mxu0 0
      %2180 = vmatpush1.bf16.msra.mxu0 0
      %2181 = vmatprep.subr.bf16.mxu0 %v2039
      %2182 = vmatpush1.bf16.msra.mxu0 %v2036
      %2183 = vmatprep.subr.bf16.mxu0 0
      %2184 = vmatpush2.bf16.msra.mxu0 0
      %2185 = vmatprep.subr.bf16.mxu0 0
      %2186 = vmatpush2.bf16.msra.mxu0 0
      %2187 = vmatprep.subr.bf16.mxu0 0
      %2188 = vmatpush2.bf16.msra.mxu0 0
      %2189 = vmatprep.subr.bf16.mxu0 0
      %2190 = vmatpush2.bf16.msra.mxu0 0
      %2191 = vmatprep.subr.bf16.mxu0 0
      %2192 = vmatpush2.bf16.msra.mxu0 0
      %2193 = vmatprep.subr.bf16.mxu0 0
      %2194 = vmatpush2.bf16.msra.mxu0 0
      %2195 = vmatprep.subr.bf16.mxu0 0
      %2196 = vmatpush2.bf16.msra.mxu0 0
      %2197 = vmatprep.subr.bf16.mxu0 0
      %2198 = vmatpush2.bf16.msra.mxu0 0
      %2199 = vmatprep.mubr.bf16.mxu0 0
      %2200 = vmatmul.mubr.bf16.gmra.mxu0 %v2015
      %v2201 = vpop.f32.mrf.mxu0
      %v2202 = vadd.f32 0.0, %v2201
      %v2203 = vpop.f32.mrf.mxu0
      %v2204 = vadd.f32 0.0, %v2203
      %v2205 = vpop.f32.mrf.mxu0
      %v2206 = vpop.f32.mrf.mxu0
      %2207 = vdwg.mxu0
      %2208 = vmatprep.subr.bf16.mxu0 0
      %2209 = vmatpush1.bf16.msra.mxu0 0
      %2210 = vmatprep.subr.bf16.mxu0 0
      %2211 = vmatpush1.bf16.msra.mxu0 0
      %2212 = vmatprep.subr.bf16.mxu0 0
      %2213 = vmatpush1.bf16.msra.mxu0 0
      %2214 = vmatprep.subr.bf16.mxu0 0
      %2215 = vmatpush1.bf16.msra.mxu0 0
      %2216 = vmatprep.subr.bf16.mxu0 0
      %2217 = vmatpush1.bf16.msra.mxu0 0
      %2218 = vmatprep.subr.bf16.mxu0 0
      %2219 = vmatpush1.bf16.msra.mxu0 0
      %2220 = vmatprep.subr.bf16.mxu0 0
      %2221 = vmatpush1.bf16.msra.mxu0 0
      %2222 = vmatprep.subr.bf16.mxu0 0
      %2223 = vmatpush1.bf16.msra.mxu0 %v2042
      %2224 = vmatprep.subr.bf16.mxu0 0
      %2225 = vmatpush2.bf16.msra.mxu0 0
      %2226 = vmatprep.subr.bf16.mxu0 0
      %2227 = vmatpush2.bf16.msra.mxu0 0
      %2228 = vmatprep.subr.bf16.mxu0 0
      %2229 = vmatpush2.bf16.msra.mxu0 0
      %2230 = vmatprep.subr.bf16.mxu0 0
      %2231 = vmatpush2.bf16.msra.mxu0 0
      %2232 = vmatprep.subr.bf16.mxu0 0
      %2233 = vmatpush2.bf16.msra.mxu0 0
      %2234 = vmatprep.subr.bf16.mxu0 0
      %2235 = vmatpush2.bf16.msra.mxu0 0
      %2236 = vmatprep.subr.bf16.mxu0 0
      %2237 = vmatpush2.bf16.msra.mxu0 0
      %2238 = vmatprep.subr.bf16.mxu0 0
      %2239 = vmatpush2.bf16.msra.mxu0 0
      %2240 = vmatprep.mubr.bf16.mxu0 0
      %2241 = vmatmul.mubr.bf16.gmra.mxu0 %v2015
      %v2242 = vpop.f32.mrf.mxu0
      %v2243 = vadd.f32 0.0, %v2242
      %v2244 = vpop.f32.mrf.mxu0
      %v2245 = vpop.f32.mrf.mxu0
      %v2246 = vpop.f32.mrf.mxu0
      %2247 = vdwg.mxu0
      %v2248 = vadd.f32 %v1930, %v2079
      %v2249 = vadd.f32 %v1931, %v2081
      %v2250 = vadd.f32 %v1932, %v2120
      %v2251 = vadd.f32 %v1933, %v2122
      %v2252 = vadd.f32 %v1934, %v2161
      %v2253 = vadd.f32 %v1935, %v2163
      %v2254 = vadd.f32 %v1936, %v2202
      %v2255 = vadd.f32 %v1937, %v2204
      %v2256 = vadd.f32 %v1938, %v2243
      %v2257 = vld [vmem:[%s1646] sm:$0xff]
      %v2258 = vld [vmem:[%s1646 + $0x8] sm:$0xff]
      %v2259 = vld [vmem:[%s1646 + $0x10] sm:$0x3]
      %s2260 = scalar_lea.vmem %s1, 28
      %v2261 = vld [vmem:[%s2260] sm:$0xf]
      %v2265 = vcombine.high %v2257, %v2257
      %v2267 = vunpack.c.l.s4 1983009808
      %v2268 = vunpack.c.0.s8 %v2267
      %v2269 = vlaneseq
      %v2270 = vshrl.u32 %v2269, 7
      %v2271 = vsub.s32 %v2268, %v2270
      %v2272 = vrot.slane %v2257, %v2271
      %v2274 = vunpack.c.l.s4 1983009808
      %v2275 = vunpack.c.0.s8 %v2274
      %v2276 = vlaneseq
      %v2277 = vshrl.u32 %v2276, 7
      %v2278 = vsub.s32 %v2275, %v2277
      %v2279 = vrot.slane %v2265, %v2278
      %v2280 = vcombine.high %v2272, %v2272
      %v2281 = vcombine.high %v2279, %v2279
      %v2282 = vcombine.high %v2258, %v2258
      %v2284 = vunpack.c.l.s4 1983009808
      %v2285 = vunpack.c.0.s8 %v2284
      %v2286 = vlaneseq
      %v2287 = vshrl.u32 %v2286, 7
      %v2288 = vsub.s32 %v2285, %v2287
      %v2289 = vrot.slane %v2258, %v2288
      %v2291 = vunpack.c.l.s4 1983009808
      %v2292 = vunpack.c.0.s8 %v2291
      %v2293 = vlaneseq
      %v2294 = vshrl.u32 %v2293, 7
      %v2295 = vsub.s32 %v2292, %v2294
      %v2296 = vrot.slane %v2282, %v2295
      %v2297 = vcombine.high %v2289, %v2289
      %v2298 = vcombine.high %v2296, %v2296
      %v2300 = vunpack.c.l.s4 1983009808
      %v2301 = vunpack.c.0.s8 %v2300
      %v2302 = vlaneseq
      %v2303 = vshrl.u32 %v2302, 7
      %v2304 = vsub.s32 %v2301, %v2303
      %v2305 = vrot.slane %v2259, %v2304
      %2306 = vrot.lane.b32.xlu0 %v2272, 127
      %v2307 = vpop.permute.xlu0 %2306
      %2308 = vrot.lane.b32.xlu0 %v2280, 127
      %v2309 = vpop.permute.xlu0 %2308
      %2310 = vrot.lane.b32.xlu0 %v2279, 127
      %v2311 = vpop.permute.xlu0 %2310
      %2312 = vrot.lane.b32.xlu0 %v2281, 127
      %v2313 = vpop.permute.xlu0 %2312
      %2314 = vrot.lane.b32.xlu0 %v2289, 127
      %v2315 = vpop.permute.xlu0 %2314
      %2316 = vrot.lane.b32.xlu0 %v2297, 127
      %v2317 = vpop.permute.xlu0 %2316
      %2318 = vrot.lane.b32.xlu0 %v2296, 127
      %v2319 = vpop.permute.xlu0 %2318
      %2320 = vrot.lane.b32.xlu0 %v2298, 127
      %v2321 = vpop.permute.xlu0 %2320
      %2322 = vrot.lane.b32.xlu0 %v2305, 127
      %v2323 = vpop.permute.xlu0 %2322
      %v2324 = vsel %vm783, %v2307, %v2309
      %v2325 = vsel %vm783, %v2309, %v2311
      %v2326 = vsel %vm783, %v2311, %v2313
      %v2327 = vsel %vm783, %v2313, %v2315
      %v2328 = vsel %vm783, %v2315, %v2317
      %v2329 = vsel %vm783, %v2317, %v2319
      %v2330 = vsel %vm783, %v2319, %v2321
      %v2331 = vsel %vm783, %v2321, %v2323
      %v2333 = vsel %vm199, %v2261, 0
      %v2336 = vand.u32 %v2324, %v206
      %v2339 = vand.u32 %v2325, %v206
      %v2342 = vand.u32 %v2326, %v206
      %v2345 = vand.u32 %v2327, %v206
      %v2348 = vand.u32 %v2328, %v206
      %v2351 = vand.u32 %v2329, %v206
      %v2354 = vand.u32 %v2330, %v206
      %v2357 = vand.u32 %v2331, %v206
      %v2360 = vand.u32 %v2323, %v206
      %2362 = vmatprep.subr.bf16.mxu0 0
      %2363 = vmatpush1.bf16.msra.mxu0 0
      %2364 = vmatprep.subr.bf16.mxu0 0
      %2365 = vmatpush1.bf16.msra.mxu0 0
      %2366 = vmatprep.subr.bf16.mxu0 0
      %2367 = vmatpush1.bf16.msra.mxu0 0
      %2368 = vmatprep.subr.bf16.mxu0 0
      %2369 = vmatpush1.bf16.msra.mxu0 0
      %2370 = vmatprep.subr.bf16.mxu0 0
      %2371 = vmatpush1.bf16.msra.mxu0 0
      %2372 = vmatprep.subr.bf16.mxu0 0
      %2373 = vmatpush1.bf16.msra.mxu0 0
      %2374 = vmatprep.subr.bf16.mxu0 0
      %2375 = vmatpush1.bf16.msra.mxu0 0
      %2376 = vmatprep.subr.bf16.mxu0 %v2339
      %2377 = vmatpush1.bf16.msra.mxu0 %v2336
      %2378 = vmatprep.subr.bf16.mxu0 0
      %2379 = vmatpush2.bf16.msra.mxu0 0
      %2380 = vmatprep.subr.bf16.mxu0 0
      %2381 = vmatpush2.bf16.msra.mxu0 0
      %2382 = vmatprep.subr.bf16.mxu0 0
      %2383 = vmatpush2.bf16.msra.mxu0 0
      %2384 = vmatprep.subr.bf16.mxu0 0
      %2385 = vmatpush2.bf16.msra.mxu0 0
      %2386 = vmatprep.subr.bf16.mxu0 0
      %2387 = vmatpush2.bf16.msra.mxu0 0
      %2388 = vmatprep.subr.bf16.mxu0 0
      %2389 = vmatpush2.bf16.msra.mxu0 0
      %2390 = vmatprep.subr.bf16.mxu0 0
      %2391 = vmatpush2.bf16.msra.mxu0 0
      %2392 = vmatprep.subr.bf16.mxu0 0
      %2393 = vmatpush2.bf16.msra.mxu0 0
      %2394 = vmatprep.mubr.bf16.mxu0 0
      %2395 = vmatmul.mubr.bf16.gmra.mxu0 %v2333
      %v2396 = vpop.f32.mrf.mxu0
      %v2397 = vadd.f32 0.0, %v2396
      %v2398 = vpop.f32.mrf.mxu0
      %v2399 = vadd.f32 0.0, %v2398
      %v2400 = vpop.f32.mrf.mxu0
      %v2401 = vpop.f32.mrf.mxu0
      %2402 = vdwg.mxu0
      %2403 = vmatprep.subr.bf16.mxu0 0
      %2404 = vmatpush1.bf16.msra.mxu0 0
      %2405 = vmatprep.subr.bf16.mxu0 0
      %2406 = vmatpush1.bf16.msra.mxu0 0
      %2407 = vmatprep.subr.bf16.mxu0 0
      %2408 = vmatpush1.bf16.msra.mxu0 0
      %2409 = vmatprep.subr.bf16.mxu0 0
      %2410 = vmatpush1.bf16.msra.mxu0 0
      %2411 = vmatprep.subr.bf16.mxu0 0
      %2412 = vmatpush1.bf16.msra.mxu0 0
      %2413 = vmatprep.subr.bf16.mxu0 0
      %2414 = vmatpush1.bf16.msra.mxu0 0
      %2415 = vmatprep.subr.bf16.mxu0 0
      %2416 = vmatpush1.bf16.msra.mxu0 0
      %2417 = vmatprep.subr.bf16.mxu0 %v2345
      %2418 = vmatpush1.bf16.msra.mxu0 %v2342
      %2419 = vmatprep.subr.bf16.mxu0 0
      %2420 = vmatpush2.bf16.msra.mxu0 0
      %2421 = vmatprep.subr.bf16.mxu0 0
      %2422 = vmatpush2.bf16.msra.mxu0 0
      %2423 = vmatprep.subr.bf16.mxu0 0
      %2424 = vmatpush2.bf16.msra.mxu0 0
      %2425 = vmatprep.subr.bf16.mxu0 0
      %2426 = vmatpush2.bf16.msra.mxu0 0
      %2427 = vmatprep.subr.bf16.mxu0 0
      %2428 = vmatpush2.bf16.msra.mxu0 0
      %2429 = vmatprep.subr.bf16.mxu0 0
      %2430 = vmatpush2.bf16.msra.mxu0 0
      %2431 = vmatprep.subr.bf16.mxu0 0
      %2432 = vmatpush2.bf16.msra.mxu0 0
      %2433 = vmatprep.subr.bf16.mxu0 0
      %2434 = vmatpush2.bf16.msra.mxu0 0
      %2435 = vmatprep.mubr.bf16.mxu0 0
      %2436 = vmatmul.mubr.bf16.gmra.mxu0 %v2333
      %v2437 = vpop.f32.mrf.mxu0
      %v2438 = vadd.f32 0.0, %v2437
      %v2439 = vpop.f32.mrf.mxu0
      %v2440 = vadd.f32 0.0, %v2439
      %v2441 = vpop.f32.mrf.mxu0
      %v2442 = vpop.f32.mrf.mxu0
      %2443 = vdwg.mxu0
      %2444 = vmatprep.subr.bf16.mxu0 0
      %2445 = vmatpush1.bf16.msra.mxu0 0
      %2446 = vmatprep.subr.bf16.mxu0 0
      %2447 = vmatpush1.bf16.msra.mxu0 0
      %2448 = vmatprep.subr.bf16.mxu0 0
      %2449 = vmatpush1.bf16.msra.mxu0 0
      %2450 = vmatprep.subr.bf16.mxu0 0
      %2451 = vmatpush1.bf16.msra.mxu0 0
      %2452 = vmatprep.subr.bf16.mxu0 0
      %2453 = vmatpush1.bf16.msra.mxu0 0
      %2454 = vmatprep.subr.bf16.mxu0 0
      %2455 = vmatpush1.bf16.msra.mxu0 0
      %2456 = vmatprep.subr.bf16.mxu0 0
      %2457 = vmatpush1.bf16.msra.mxu0 0
      %2458 = vmatprep.subr.bf16.mxu0 %v2351
      %2459 = vmatpush1.bf16.msra.mxu0 %v2348
      %2460 = vmatprep.subr.bf16.mxu0 0
      %2461 = vmatpush2.bf16.msra.mxu0 0
      %2462 = vmatprep.subr.bf16.mxu0 0
      %2463 = vmatpush2.bf16.msra.mxu0 0
      %2464 = vmatprep.subr.bf16.mxu0 0
      %2465 = vmatpush2.bf16.msra.mxu0 0
      %2466 = vmatprep.subr.bf16.mxu0 0
      %2467 = vmatpush2.bf16.msra.mxu0 0
      %2468 = vmatprep.subr.bf16.mxu0 0
      %2469 = vmatpush2.bf16.msra.mxu0 0
      %2470 = vmatprep.subr.bf16.mxu0 0
      %2471 = vmatpush2.bf16.msra.mxu0 0
      %2472 = vmatprep.subr.bf16.mxu0 0
      %2473 = vmatpush2.bf16.msra.mxu0 0
      %2474 = vmatprep.subr.bf16.mxu0 0
      %2475 = vmatpush2.bf16.msra.mxu0 0
      %2476 = vmatprep.mubr.bf16.mxu0 0
      %2477 = vmatmul.mubr.bf16.gmra.mxu0 %v2333
      %v2478 = vpop.f32.mrf.mxu0
      %v2479 = vadd.f32 0.0, %v2478
      %v2480 = vpop.f32.mrf.mxu0
      %v2481 = vadd.f32 0.0, %v2480
      %v2482 = vpop.f32.mrf.mxu0
      %v2483 = vpop.f32.mrf.mxu0
      %2484 = vdwg.mxu0
      %2485 = vmatprep.subr.bf16.mxu0 0
      %2486 = vmatpush1.bf16.msra.mxu0 0
      %2487 = vmatprep.subr.bf16.mxu0 0
      %2488 = vmatpush1.bf16.msra.mxu0 0
      %2489 = vmatprep.subr.bf16.mxu0 0
      %2490 = vmatpush1.bf16.msra.mxu0 0
      %2491 = vmatprep.subr.bf16.mxu0 0
      %2492 = vmatpush1.bf16.msra.mxu0 0
      %2493 = vmatprep.subr.bf16.mxu0 0
      %2494 = vmatpush1.bf16.msra.mxu0 0
      %2495 = vmatprep.subr.bf16.mxu0 0
      %2496 = vmatpush1.bf16.msra.mxu0 0
      %2497 = vmatprep.subr.bf16.mxu0 0
      %2498 = vmatpush1.bf16.msra.mxu0 0
      %2499 = vmatprep.subr.bf16.mxu0 %v2357
      %2500 = vmatpush1.bf16.msra.mxu0 %v2354
      %2501 = vmatprep.subr.bf16.mxu0 0
      %2502 = vmatpush2.bf16.msra.mxu0 0
      %2503 = vmatprep.subr.bf16.mxu0 0
      %2504 = vmatpush2.bf16.msra.mxu0 0
      %2505 = vmatprep.subr.bf16.mxu0 0
      %2506 = vmatpush2.bf16.msra.mxu0 0
      %2507 = vmatprep.subr.bf16.mxu0 0
      %2508 = vmatpush2.bf16.msra.mxu0 0
      %2509 = vmatprep.subr.bf16.mxu0 0
      %2510 = vmatpush2.bf16.msra.mxu0 0
      %2511 = vmatprep.subr.bf16.mxu0 0
      %2512 = vmatpush2.bf16.msra.mxu0 0
      %2513 = vmatprep.subr.bf16.mxu0 0
      %2514 = vmatpush2.bf16.msra.mxu0 0
      %2515 = vmatprep.subr.bf16.mxu0 0
      %2516 = vmatpush2.bf16.msra.mxu0 0
      %2517 = vmatprep.mubr.bf16.mxu0 0
      %2518 = vmatmul.mubr.bf16.gmra.mxu0 %v2333
      %v2519 = vpop.f32.mrf.mxu0
      %v2520 = vadd.f32 0.0, %v2519
      %v2521 = vpop.f32.mrf.mxu0
      %v2522 = vadd.f32 0.0, %v2521
      %v2523 = vpop.f32.mrf.mxu0
      %v2524 = vpop.f32.mrf.mxu0
      %2525 = vdwg.mxu0
      %2526 = vmatprep.subr.bf16.mxu0 0
      %2527 = vmatpush1.bf16.msra.mxu0 0
      %2528 = vmatprep.subr.bf16.mxu0 0
      %2529 = vmatpush1.bf16.msra.mxu0 0
      %2530 = vmatprep.subr.bf16.mxu0 0
      %2531 = vmatpush1.bf16.msra.mxu0 0
      %2532 = vmatprep.subr.bf16.mxu0 0
      %2533 = vmatpush1.bf16.msra.mxu0 0
      %2534 = vmatprep.subr.bf16.mxu0 0
      %2535 = vmatpush1.bf16.msra.mxu0 0
      %2536 = vmatprep.subr.bf16.mxu0 0
      %2537 = vmatpush1.bf16.msra.mxu0 0
      %2538 = vmatprep.subr.bf16.mxu0 0
      %2539 = vmatpush1.bf16.msra.mxu0 0
      %2540 = vmatprep.subr.bf16.mxu0 0
      %2541 = vmatpush1.bf16.msra.mxu0 %v2360
      %2542 = vmatprep.subr.bf16.mxu0 0
      %2543 = vmatpush2.bf16.msra.mxu0 0
      %2544 = vmatprep.subr.bf16.mxu0 0
      %2545 = vmatpush2.bf16.msra.mxu0 0
      %2546 = vmatprep.subr.bf16.mxu0 0
      %2547 = vmatpush2.bf16.msra.mxu0 0
      %2548 = vmatprep.subr.bf16.mxu0 0
      %2549 = vmatpush2.bf16.msra.mxu0 0
      %2550 = vmatprep.subr.bf16.mxu0 0
      %2551 = vmatpush2.bf16.msra.mxu0 0
      %2552 = vmatprep.subr.bf16.mxu0 0
      %2553 = vmatpush2.bf16.msra.mxu0 0
      %2554 = vmatprep.subr.bf16.mxu0 0
      %2555 = vmatpush2.bf16.msra.mxu0 0
      %2556 = vmatprep.subr.bf16.mxu0 0
      %2557 = vmatpush2.bf16.msra.mxu0 0
      %2558 = vmatprep.mubr.bf16.mxu0 0
      %2559 = vmatmul.mubr.bf16.gmra.mxu0 %v2333
      %v2560 = vpop.f32.mrf.mxu0
      %v2561 = vadd.f32 0.0, %v2560
      %v2562 = vpop.f32.mrf.mxu0
      %v2563 = vpop.f32.mrf.mxu0
      %v2564 = vpop.f32.mrf.mxu0
      %2565 = vdwg.mxu0
      %v2566 = vadd.f32 %v2248, %v2397
      %v2567 = vadd.f32 %v2249, %v2399
      %v2568 = vadd.f32 %v2250, %v2438
      %v2569 = vadd.f32 %v2251, %v2440
      %v2570 = vadd.f32 %v2252, %v2479
      %v2571 = vadd.f32 %v2253, %v2481
      %v2572 = vadd.f32 %v2254, %v2520
      %v2573 = vadd.f32 %v2255, %v2522
      %v2574 = vadd.f32 %v2256, %v2561
      %v2575 = vld [vmem:[%s138] sm:$0xff]
      %v2576 = vld [vmem:[%s138 + $0x8] sm:$0xff]
      %v2577 = vld [vmem:[%s138 + $0x10] sm:$0x3]
      %s2578 = scalar_lea.vmem %s1, 32
      %v2579 = vld [vmem:[%s2578] sm:$0xf]
      %v2583 = vcombine.high %v2575, %v2575
      %v2585 = vunpack.c.l.s4 1983009808
      %v2586 = vunpack.c.0.s8 %v2585
      %v2587 = vlaneseq
      %v2588 = vshrl.u32 %v2587, 7
      %v2589 = vsub.s32 %v2586, %v2588
      %v2590 = vrot.slane %v2575, %v2589
      %v2592 = vunpack.c.l.s4 1983009808
      %v2593 = vunpack.c.0.s8 %v2592
      %v2594 = vlaneseq
      %v2595 = vshrl.u32 %v2594, 7
      %v2596 = vsub.s32 %v2593, %v2595
      %v2597 = vrot.slane %v2583, %v2596
      %v2598 = vcombine.high %v2590, %v2590
      %v2599 = vcombine.high %v2597, %v2597
      %v2600 = vcombine.high %v2576, %v2576
      %v2602 = vunpack.c.l.s4 1983009808
      %v2603 = vunpack.c.0.s8 %v2602
      %v2604 = vlaneseq
      %v2605 = vshrl.u32 %v2604, 7
      %v2606 = vsub.s32 %v2603, %v2605
      %v2607 = vrot.slane %v2576, %v2606
      %v2609 = vunpack.c.l.s4 1983009808
      %v2610 = vunpack.c.0.s8 %v2609
      %v2611 = vlaneseq
      %v2612 = vshrl.u32 %v2611, 7
      %v2613 = vsub.s32 %v2610, %v2612
      %v2614 = vrot.slane %v2600, %v2613
      %v2615 = vcombine.high %v2607, %v2607
      %v2616 = vcombine.high %v2614, %v2614
      %v2618 = vunpack.c.l.s4 1983009808
      %v2619 = vunpack.c.0.s8 %v2618
      %v2620 = vlaneseq
      %v2621 = vshrl.u32 %v2620, 7
      %v2622 = vsub.s32 %v2619, %v2621
      %v2623 = vrot.slane %v2577, %v2622
      %2624 = vrot.lane.b32.xlu0 %v2590, 95
      %v2625 = vpop.permute.xlu0 %2624
      %2626 = vrot.lane.b32.xlu0 %v2598, 95
      %v2627 = vpop.permute.xlu0 %2626
      %2628 = vrot.lane.b32.xlu0 %v2597, 95
      %v2629 = vpop.permute.xlu0 %2628
      %2630 = vrot.lane.b32.xlu0 %v2599, 95
      %v2631 = vpop.permute.xlu0 %2630
      %2632 = vrot.lane.b32.xlu0 %v2607, 95
      %v2633 = vpop.permute.xlu0 %2632
      %2634 = vrot.lane.b32.xlu0 %v2615, 95
      %v2635 = vpop.permute.xlu0 %2634
      %2636 = vrot.lane.b32.xlu0 %v2614, 95
      %v2637 = vpop.permute.xlu0 %2636
      %2638 = vrot.lane.b32.xlu0 %v2616, 95
      %v2639 = vpop.permute.xlu0 %2638
      %2640 = vrot.lane.b32.xlu0 %v2623, 95
      %v2641 = vpop.permute.xlu0 %2640
      %vm2642 = vcmask 777216
      %v2643 = vsel %vm2642, %v2625, %v2627
      %v2644 = vsel %vm2642, %v2627, %v2629
      %v2645 = vsel %vm2642, %v2629, %v2631
      %v2646 = vsel %vm2642, %v2631, %v2633
      %v2647 = vsel %vm2642, %v2633, %v2635
      %v2648 = vsel %vm2642, %v2635, %v2637
      %v2649 = vsel %vm2642, %v2637, %v2639
      %v2650 = vsel %vm2642, %v2639, %v2641
      %v2652 = vsel %vm199, %v2579, 0
      %v2655 = vand.u32 %v2643, %v206
      %v2658 = vand.u32 %v2644, %v206
      %v2661 = vand.u32 %v2645, %v206
      %v2664 = vand.u32 %v2646, %v206
      %v2667 = vand.u32 %v2647, %v206
      %v2670 = vand.u32 %v2648, %v206
      %v2673 = vand.u32 %v2649, %v206
      %v2676 = vand.u32 %v2650, %v206
      %v2679 = vand.u32 %v2641, %v206
      %2681 = vmatprep.subr.bf16.mxu0 0
      %2682 = vmatpush1.bf16.msra.mxu0 0
      %2683 = vmatprep.subr.bf16.mxu0 0
      %2684 = vmatpush1.bf16.msra.mxu0 0
      %2685 = vmatprep.subr.bf16.mxu0 0
      %2686 = vmatpush1.bf16.msra.mxu0 0
      %2687 = vmatprep.subr.bf16.mxu0 0
      %2688 = vmatpush1.bf16.msra.mxu0 0
      %2689 = vmatprep.subr.bf16.mxu0 0
      %2690 = vmatpush1.bf16.msra.mxu0 0
      %2691 = vmatprep.subr.bf16.mxu0 0
      %2692 = vmatpush1.bf16.msra.mxu0 0
      %2693 = vmatprep.subr.bf16.mxu0 0
      %2694 = vmatpush1.bf16.msra.mxu0 0
      %2695 = vmatprep.subr.bf16.mxu0 %v2658
      %2696 = vmatpush1.bf16.msra.mxu0 %v2655
      %2697 = vmatprep.subr.bf16.mxu0 0
      %2698 = vmatpush2.bf16.msra.mxu0 0
      %2699 = vmatprep.subr.bf16.mxu0 0
      %2700 = vmatpush2.bf16.msra.mxu0 0
      %2701 = vmatprep.subr.bf16.mxu0 0
      %2702 = vmatpush2.bf16.msra.mxu0 0
      %2703 = vmatprep.subr.bf16.mxu0 0
      %2704 = vmatpush2.bf16.msra.mxu0 0
      %2705 = vmatprep.subr.bf16.mxu0 0
      %2706 = vmatpush2.bf16.msra.mxu0 0
      %2707 = vmatprep.subr.bf16.mxu0 0
      %2708 = vmatpush2.bf16.msra.mxu0 0
      %2709 = vmatprep.subr.bf16.mxu0 0
      %2710 = vmatpush2.bf16.msra.mxu0 0
      %2711 = vmatprep.subr.bf16.mxu0 0
      %2712 = vmatpush2.bf16.msra.mxu0 0
      %2713 = vmatprep.mubr.bf16.mxu0 0
      %2714 = vmatmul.mubr.bf16.gmra.mxu0 %v2652
      %v2715 = vpop.f32.mrf.mxu0
      %v2716 = vadd.f32 0.0, %v2715
      %v2717 = vpop.f32.mrf.mxu0
      %v2718 = vadd.f32 0.0, %v2717
      %v2719 = vpop.f32.mrf.mxu0
      %v2720 = vpop.f32.mrf.mxu0
      %2721 = vdwg.mxu0
      %2722 = vmatprep.subr.bf16.mxu0 0
      %2723 = vmatpush1.bf16.msra.mxu0 0
      %2724 = vmatprep.subr.bf16.mxu0 0
      %2725 = vmatpush1.bf16.msra.mxu0 0
      %2726 = vmatprep.subr.bf16.mxu0 0
      %2727 = vmatpush1.bf16.msra.mxu0 0
      %2728 = vmatprep.subr.bf16.mxu0 0
      %2729 = vmatpush1.bf16.msra.mxu0 0
      %2730 = vmatprep.subr.bf16.mxu0 0
      %2731 = vmatpush1.bf16.msra.mxu0 0
      %2732 = vmatprep.subr.bf16.mxu0 0
      %2733 = vmatpush1.bf16.msra.mxu0 0
      %2734 = vmatprep.subr.bf16.mxu0 0
      %2735 = vmatpush1.bf16.msra.mxu0 0
      %2736 = vmatprep.subr.bf16.mxu0 %v2664
      %2737 = vmatpush1.bf16.msra.mxu0 %v2661
      %2738 = vmatprep.subr.bf16.mxu0 0
      %2739 = vmatpush2.bf16.msra.mxu0 0
      %2740 = vmatprep.subr.bf16.mxu0 0
      %2741 = vmatpush2.bf16.msra.mxu0 0
      %2742 = vmatprep.subr.bf16.mxu0 0
      %2743 = vmatpush2.bf16.msra.mxu0 0
      %2744 = vmatprep.subr.bf16.mxu0 0
      %2745 = vmatpush2.bf16.msra.mxu0 0
      %2746 = vmatprep.subr.bf16.mxu0 0
      %2747 = vmatpush2.bf16.msra.mxu0 0
      %2748 = vmatprep.subr.bf16.mxu0 0
      %2749 = vmatpush2.bf16.msra.mxu0 0
      %2750 = vmatprep.subr.bf16.mxu0 0
      %2751 = vmatpush2.bf16.msra.mxu0 0
      %2752 = vmatprep.subr.bf16.mxu0 0
      %2753 = vmatpush2.bf16.msra.mxu0 0
      %2754 = vmatprep.mubr.bf16.mxu0 0
      %2755 = vmatmul.mubr.bf16.gmra.mxu0 %v2652
      %v2756 = vpop.f32.mrf.mxu0
      %v2757 = vadd.f32 0.0, %v2756
      %v2758 = vpop.f32.mrf.mxu0
      %v2759 = vadd.f32 0.0, %v2758
      %v2760 = vpop.f32.mrf.mxu0
      %v2761 = vpop.f32.mrf.mxu0
      %2762 = vdwg.mxu0
      %2763 = vmatprep.subr.bf16.mxu0 0
      %2764 = vmatpush1.bf16.msra.mxu0 0
      %2765 = vmatprep.subr.bf16.mxu0 0
      %2766 = vmatpush1.bf16.msra.mxu0 0
      %2767 = vmatprep.subr.bf16.mxu0 0
      %2768 = vmatpush1.bf16.msra.mxu0 0
      %2769 = vmatprep.subr.bf16.mxu0 0
      %2770 = vmatpush1.bf16.msra.mxu0 0
      %2771 = vmatprep.subr.bf16.mxu0 0
      %2772 = vmatpush1.bf16.msra.mxu0 0
      %2773 = vmatprep.subr.bf16.mxu0 0
      %2774 = vmatpush1.bf16.msra.mxu0 0
      %2775 = vmatprep.subr.bf16.mxu0 0
      %2776 = vmatpush1.bf16.msra.mxu0 0
      %2777 = vmatprep.subr.bf16.mxu0 %v2670
      %2778 = vmatpush1.bf16.msra.mxu0 %v2667
      %2779 = vmatprep.subr.bf16.mxu0 0
      %2780 = vmatpush2.bf16.msra.mxu0 0
      %2781 = vmatprep.subr.bf16.mxu0 0
      %2782 = vmatpush2.bf16.msra.mxu0 0
      %2783 = vmatprep.subr.bf16.mxu0 0
      %2784 = vmatpush2.bf16.msra.mxu0 0
      %2785 = vmatprep.subr.bf16.mxu0 0
      %2786 = vmatpush2.bf16.msra.mxu0 0
      %2787 = vmatprep.subr.bf16.mxu0 0
      %2788 = vmatpush2.bf16.msra.mxu0 0
      %2789 = vmatprep.subr.bf16.mxu0 0
      %2790 = vmatpush2.bf16.msra.mxu0 0
      %2791 = vmatprep.subr.bf16.mxu0 0
      %2792 = vmatpush2.bf16.msra.mxu0 0
      %2793 = vmatprep.subr.bf16.mxu0 0
      %2794 = vmatpush2.bf16.msra.mxu0 0
      %2795 = vmatprep.mubr.bf16.mxu0 0
      %2796 = vmatmul.mubr.bf16.gmra.mxu0 %v2652
      %v2797 = vpop.f32.mrf.mxu0
      %v2798 = vadd.f32 0.0, %v2797
      %v2799 = vpop.f32.mrf.mxu0
      %v2800 = vadd.f32 0.0, %v2799
      %v2801 = vpop.f32.mrf.mxu0
      %v2802 = vpop.f32.mrf.mxu0
      %2803 = vdwg.mxu0
      %2804 = vmatprep.subr.bf16.mxu0 0
      %2805 = vmatpush1.bf16.msra.mxu0 0
      %2806 = vmatprep.subr.bf16.mxu0 0
      %2807 = vmatpush1.bf16.msra.mxu0 0
      %2808 = vmatprep.subr.bf16.mxu0 0
      %2809 = vmatpush1.bf16.msra.mxu0 0
      %2810 = vmatprep.subr.bf16.mxu0 0
      %2811 = vmatpush1.bf16.msra.mxu0 0
      %2812 = vmatprep.subr.bf16.mxu0 0
      %2813 = vmatpush1.bf16.msra.mxu0 0
      %2814 = vmatprep.subr.bf16.mxu0 0
      %2815 = vmatpush1.bf16.msra.mxu0 0
      %2816 = vmatprep.subr.bf16.mxu0 0
      %2817 = vmatpush1.bf16.msra.mxu0 0
      %2818 = vmatprep.subr.bf16.mxu0 %v2676
      %2819 = vmatpush1.bf16.msra.mxu0 %v2673
      %2820 = vmatprep.subr.bf16.mxu0 0
      %2821 = vmatpush2.bf16.msra.mxu0 0
      %2822 = vmatprep.subr.bf16.mxu0 0
      %2823 = vmatpush2.bf16.msra.mxu0 0
      %2824 = vmatprep.subr.bf16.mxu0 0
      %2825 = vmatpush2.bf16.msra.mxu0 0
      %2826 = vmatprep.subr.bf16.mxu0 0
      %2827 = vmatpush2.bf16.msra.mxu0 0
      %2828 = vmatprep.subr.bf16.mxu0 0
      %2829 = vmatpush2.bf16.msra.mxu0 0
      %2830 = vmatprep.subr.bf16.mxu0 0
      %2831 = vmatpush2.bf16.msra.mxu0 0
      %2832 = vmatprep.subr.bf16.mxu0 0
      %2833 = vmatpush2.bf16.msra.mxu0 0
      %2834 = vmatprep.subr.bf16.mxu0 0
      %2835 = vmatpush2.bf16.msra.mxu0 0
      %2836 = vmatprep.mubr.bf16.mxu0 0
      %2837 = vmatmul.mubr.bf16.gmra.mxu0 %v2652
      %v2838 = vpop.f32.mrf.mxu0
      %v2839 = vadd.f32 0.0, %v2838
      %v2840 = vpop.f32.mrf.mxu0
      %v2841 = vadd.f32 0.0, %v2840
      %v2842 = vpop.f32.mrf.mxu0
      %v2843 = vpop.f32.mrf.mxu0
      %2844 = vdwg.mxu0
      %2845 = vmatprep.subr.bf16.mxu0 0
      %2846 = vmatpush1.bf16.msra.mxu0 0
      %2847 = vmatprep.subr.bf16.mxu0 0
      %2848 = vmatpush1.bf16.msra.mxu0 0
      %2849 = vmatprep.subr.bf16.mxu0 0
      %2850 = vmatpush1.bf16.msra.mxu0 0
      %2851 = vmatprep.subr.bf16.mxu0 0
      %2852 = vmatpush1.bf16.msra.mxu0 0
      %2853 = vmatprep.subr.bf16.mxu0 0
      %2854 = vmatpush1.bf16.msra.mxu0 0
      %2855 = vmatprep.subr.bf16.mxu0 0
      %2856 = vmatpush1.bf16.msra.mxu0 0
      %2857 = vmatprep.subr.bf16.mxu0 0
      %2858 = vmatpush1.bf16.msra.mxu0 0
      %2859 = vmatprep.subr.bf16.mxu0 0
      %2860 = vmatpush1.bf16.msra.mxu0 %v2679
      %2861 = vmatprep.subr.bf16.mxu0 0
      %2862 = vmatpush2.bf16.msra.mxu0 0
      %2863 = vmatprep.subr.bf16.mxu0 0
      %2864 = vmatpush2.bf16.msra.mxu0 0
      %2865 = vmatprep.subr.bf16.mxu0 0
      %2866 = vmatpush2.bf16.msra.mxu0 0
      %2867 = vmatprep.subr.bf16.mxu0 0
      %2868 = vmatpush2.bf16.msra.mxu0 0
      %2869 = vmatprep.subr.bf16.mxu0 0
      %2870 = vmatpush2.bf16.msra.mxu0 0
      %2871 = vmatprep.subr.bf16.mxu0 0
      %2872 = vmatpush2.bf16.msra.mxu0 0
      %2873 = vmatprep.subr.bf16.mxu0 0
      %2874 = vmatpush2.bf16.msra.mxu0 0
      %2875 = vmatprep.subr.bf16.mxu0 0
      %2876 = vmatpush2.bf16.msra.mxu0 0
      %2877 = vmatprep.mubr.bf16.mxu0 0
      %2878 = vmatmul.mubr.bf16.gmra.mxu0 %v2652
      %v2879 = vpop.f32.mrf.mxu0
      %v2880 = vadd.f32 0.0, %v2879
      %v2881 = vpop.f32.mrf.mxu0
      %v2882 = vpop.f32.mrf.mxu0
      %v2883 = vpop.f32.mrf.mxu0
      %2884 = vdwg.mxu0
      %v2885 = vadd.f32 %v2566, %v2716
      %v2886 = vadd.f32 %v2567, %v2718
      %v2887 = vadd.f32 %v2568, %v2757
      %v2888 = vadd.f32 %v2569, %v2759
      %v2889 = vadd.f32 %v2570, %v2798
      %v2890 = vadd.f32 %v2571, %v2800
      %v2891 = vadd.f32 %v2572, %v2839
      %v2892 = vadd.f32 %v2573, %v2841
      %v2893 = vadd.f32 %v2574, %v2880
      %v2894 = vld [vmem:[%s149] sm:$0xff]
      %v2895 = vld [vmem:[%s149 + $0x8] sm:$0xff]
      %v2896 = vld [vmem:[%s149 + $0x10] sm:$0x3]
      %s2897 = scalar_lea.vmem %s1, 36
      %v2898 = vld [vmem:[%s2897] sm:$0xf]
      %v2902 = vcombine.high %v2894, %v2894
      %v2904 = vunpack.c.l.s4 1983009808
      %v2905 = vunpack.c.0.s8 %v2904
      %v2906 = vlaneseq
      %v2907 = vshrl.u32 %v2906, 7
      %v2908 = vsub.s32 %v2905, %v2907
      %v2909 = vrot.slane %v2894, %v2908
      %v2911 = vunpack.c.l.s4 1983009808
      %v2912 = vunpack.c.0.s8 %v2911
      %v2913 = vlaneseq
      %v2914 = vshrl.u32 %v2913, 7
      %v2915 = vsub.s32 %v2912, %v2914
      %v2916 = vrot.slane %v2902, %v2915
      %v2917 = vcombine.high %v2909, %v2909
      %v2918 = vcombine.high %v2916, %v2916
      %v2919 = vcombine.high %v2895, %v2895
      %v2921 = vunpack.c.l.s4 1983009808
      %v2922 = vunpack.c.0.s8 %v2921
      %v2923 = vlaneseq
      %v2924 = vshrl.u32 %v2923, 7
      %v2925 = vsub.s32 %v2922, %v2924
      %v2926 = vrot.slane %v2895, %v2925
      %v2928 = vunpack.c.l.s4 1983009808
      %v2929 = vunpack.c.0.s8 %v2928
      %v2930 = vlaneseq
      %v2931 = vshrl.u32 %v2930, 7
      %v2932 = vsub.s32 %v2929, %v2931
      %v2933 = vrot.slane %v2919, %v2932
      %v2934 = vcombine.high %v2926, %v2926
      %v2935 = vcombine.high %v2933, %v2933
      %v2937 = vunpack.c.l.s4 1983009808
      %v2938 = vunpack.c.0.s8 %v2937
      %v2939 = vlaneseq
      %v2940 = vshrl.u32 %v2939, 7
      %v2941 = vsub.s32 %v2938, %v2940
      %v2942 = vrot.slane %v2896, %v2941
      %2943 = vrot.lane.b32.xlu0 %v2909, 95
      %v2944 = vpop.permute.xlu0 %2943
      %2945 = vrot.lane.b32.xlu0 %v2917, 95
      %v2946 = vpop.permute.xlu0 %2945
      %2947 = vrot.lane.b32.xlu0 %v2916, 95
      %v2948 = vpop.permute.xlu0 %2947
      %2949 = vrot.lane.b32.xlu0 %v2918, 95
      %v2950 = vpop.permute.xlu0 %2949
      %2951 = vrot.lane.b32.xlu0 %v2926, 95
      %v2952 = vpop.permute.xlu0 %2951
      %2953 = vrot.lane.b32.xlu0 %v2934, 95
      %v2954 = vpop.permute.xlu0 %2953
      %2955 = vrot.lane.b32.xlu0 %v2933, 95
      %v2956 = vpop.permute.xlu0 %2955
      %2957 = vrot.lane.b32.xlu0 %v2935, 95
      %v2958 = vpop.permute.xlu0 %2957
      %2959 = vrot.lane.b32.xlu0 %v2942, 95
      %v2960 = vpop.permute.xlu0 %2959
      %v2961 = vsel %vm2642, %v2944, %v2946
      %v2962 = vsel %vm2642, %v2946, %v2948
      %v2963 = vsel %vm2642, %v2948, %v2950
      %v2964 = vsel %vm2642, %v2950, %v2952
      %v2965 = vsel %vm2642, %v2952, %v2954
      %v2966 = vsel %vm2642, %v2954, %v2956
      %v2967 = vsel %vm2642, %v2956, %v2958
      %v2968 = vsel %vm2642, %v2958, %v2960
      %v2970 = vsel %vm199, %v2898, 0
      %v2973 = vand.u32 %v2961, %v206
      %v2976 = vand.u32 %v2962, %v206
      %v2979 = vand.u32 %v2963, %v206
      %v2982 = vand.u32 %v2964, %v206
      %v2985 = vand.u32 %v2965, %v206
      %v2988 = vand.u32 %v2966, %v206
      %v2991 = vand.u32 %v2967, %v206
      %v2994 = vand.u32 %v2968, %v206
      %v2997 = vand.u32 %v2960, %v206
      %2999 = vmatprep.subr.bf16.mxu0 0
      %3000 = vmatpush1.bf16.msra.mxu0 0
      %3001 = vmatprep.subr.bf16.mxu0 0
      %3002 = vmatpush1.bf16.msra.mxu0 0
      %3003 = vmatprep.subr.bf16.mxu0 0
      %3004 = vmatpush1.bf16.msra.mxu0 0
      %3005 = vmatprep.subr.bf16.mxu0 0
      %3006 = vmatpush1.bf16.msra.mxu0 0
      %3007 = vmatprep.subr.bf16.mxu0 0
      %3008 = vmatpush1.bf16.msra.mxu0 0
      %3009 = vmatprep.subr.bf16.mxu0 0
      %3010 = vmatpush1.bf16.msra.mxu0 0
      %3011 = vmatprep.subr.bf16.mxu0 0
      %3012 = vmatpush1.bf16.msra.mxu0 0
      %3013 = vmatprep.subr.bf16.mxu0 %v2976
      %3014 = vmatpush1.bf16.msra.mxu0 %v2973
      %3015 = vmatprep.subr.bf16.mxu0 0
      %3016 = vmatpush2.bf16.msra.mxu0 0
      %3017 = vmatprep.subr.bf16.mxu0 0
      %3018 = vmatpush2.bf16.msra.mxu0 0
      %3019 = vmatprep.subr.bf16.mxu0 0
      %3020 = vmatpush2.bf16.msra.mxu0 0
      %3021 = vmatprep.subr.bf16.mxu0 0
      %3022 = vmatpush2.bf16.msra.mxu0 0
      %3023 = vmatprep.subr.bf16.mxu0 0
      %3024 = vmatpush2.bf16.msra.mxu0 0
      %3025 = vmatprep.subr.bf16.mxu0 0
      %3026 = vmatpush2.bf16.msra.mxu0 0
      %3027 = vmatprep.subr.bf16.mxu0 0
      %3028 = vmatpush2.bf16.msra.mxu0 0
      %3029 = vmatprep.subr.bf16.mxu0 0
      %3030 = vmatpush2.bf16.msra.mxu0 0
      %3031 = vmatprep.mubr.bf16.mxu0 0
      %3032 = vmatmul.mubr.bf16.gmra.mxu0 %v2970
      %v3033 = vpop.f32.mrf.mxu0
      %v3034 = vadd.f32 0.0, %v3033
      %v3035 = vpop.f32.mrf.mxu0
      %v3036 = vadd.f32 0.0, %v3035
      %v3037 = vpop.f32.mrf.mxu0
      %v3038 = vpop.f32.mrf.mxu0
      %3039 = vdwg.mxu0
      %3040 = vmatprep.subr.bf16.mxu0 0
      %3041 = vmatpush1.bf16.msra.mxu0 0
      %3042 = vmatprep.subr.bf16.mxu0 0
      %3043 = vmatpush1.bf16.msra.mxu0 0
      %3044 = vmatprep.subr.bf16.mxu0 0
      %3045 = vmatpush1.bf16.msra.mxu0 0
      %3046 = vmatprep.subr.bf16.mxu0 0
      %3047 = vmatpush1.bf16.msra.mxu0 0
      %3048 = vmatprep.subr.bf16.mxu0 0
      %3049 = vmatpush1.bf16.msra.mxu0 0
      %3050 = vmatprep.subr.bf16.mxu0 0
      %3051 = vmatpush1.bf16.msra.mxu0 0
      %3052 = vmatprep.subr.bf16.mxu0 0
      %3053 = vmatpush1.bf16.msra.mxu0 0
      %3054 = vmatprep.subr.bf16.mxu0 %v2982
      %3055 = vmatpush1.bf16.msra.mxu0 %v2979
      %3056 = vmatprep.subr.bf16.mxu0 0
      %3057 = vmatpush2.bf16.msra.mxu0 0
      %3058 = vmatprep.subr.bf16.mxu0 0
      %3059 = vmatpush2.bf16.msra.mxu0 0
      %3060 = vmatprep.subr.bf16.mxu0 0
      %3061 = vmatpush2.bf16.msra.mxu0 0
      %3062 = vmatprep.subr.bf16.mxu0 0
      %3063 = vmatpush2.bf16.msra.mxu0 0
      %3064 = vmatprep.subr.bf16.mxu0 0
      %3065 = vmatpush2.bf16.msra.mxu0 0
      %3066 = vmatprep.subr.bf16.mxu0 0
      %3067 = vmatpush2.bf16.msra.mxu0 0
      %3068 = vmatprep.subr.bf16.mxu0 0
      %3069 = vmatpush2.bf16.msra.mxu0 0
      %3070 = vmatprep.subr.bf16.mxu0 0
      %3071 = vmatpush2.bf16.msra.mxu0 0
      %3072 = vmatprep.mubr.bf16.mxu0 0
      %3073 = vmatmul.mubr.bf16.gmra.mxu0 %v2970
      %v3074 = vpop.f32.mrf.mxu0
      %v3075 = vadd.f32 0.0, %v3074
      %v3076 = vpop.f32.mrf.mxu0
      %v3077 = vadd.f32 0.0, %v3076
      %v3078 = vpop.f32.mrf.mxu0
      %v3079 = vpop.f32.mrf.mxu0
      %3080 = vdwg.mxu0
      %3081 = vmatprep.subr.bf16.mxu0 0
      %3082 = vmatpush1.bf16.msra.mxu0 0
      %3083 = vmatprep.subr.bf16.mxu0 0
      %3084 = vmatpush1.bf16.msra.mxu0 0
      %3085 = vmatprep.subr.bf16.mxu0 0
      %3086 = vmatpush1.bf16.msra.mxu0 0
      %3087 = vmatprep.subr.bf16.mxu0 0
      %3088 = vmatpush1.bf16.msra.mxu0 0
      %3089 = vmatprep.subr.bf16.mxu0 0
      %3090 = vmatpush1.bf16.msra.mxu0 0
      %3091 = vmatprep.subr.bf16.mxu0 0
      %3092 = vmatpush1.bf16.msra.mxu0 0
      %3093 = vmatprep.subr.bf16.mxu0 0
      %3094 = vmatpush1.bf16.msra.mxu0 0
      %3095 = vmatprep.subr.bf16.mxu0 %v2988
      %3096 = vmatpush1.bf16.msra.mxu0 %v2985
      %3097 = vmatprep.subr.bf16.mxu0 0
      %3098 = vmatpush2.bf16.msra.mxu0 0
      %3099 = vmatprep.subr.bf16.mxu0 0
      %3100 = vmatpush2.bf16.msra.mxu0 0
      %3101 = vmatprep.subr.bf16.mxu0 0
      %3102 = vmatpush2.bf16.msra.mxu0 0
      %3103 = vmatprep.subr.bf16.mxu0 0
      %3104 = vmatpush2.bf16.msra.mxu0 0
      %3105 = vmatprep.subr.bf16.mxu0 0
      %3106 = vmatpush2.bf16.msra.mxu0 0
      %3107 = vmatprep.subr.bf16.mxu0 0
      %3108 = vmatpush2.bf16.msra.mxu0 0
      %3109 = vmatprep.subr.bf16.mxu0 0
      %3110 = vmatpush2.bf16.msra.mxu0 0
      %3111 = vmatprep.subr.bf16.mxu0 0
      %3112 = vmatpush2.bf16.msra.mxu0 0
      %3113 = vmatprep.mubr.bf16.mxu0 0
      %3114 = vmatmul.mubr.bf16.gmra.mxu0 %v2970
      %v3115 = vpop.f32.mrf.mxu0
      %v3116 = vadd.f32 0.0, %v3115
      %v3117 = vpop.f32.mrf.mxu0
      %v3118 = vadd.f32 0.0, %v3117
      %v3119 = vpop.f32.mrf.mxu0
      %v3120 = vpop.f32.mrf.mxu0
      %3121 = vdwg.mxu0
      %3122 = vmatprep.subr.bf16.mxu0 0
      %3123 = vmatpush1.bf16.msra.mxu0 0
      %3124 = vmatprep.subr.bf16.mxu0 0
      %3125 = vmatpush1.bf16.msra.mxu0 0
      %3126 = vmatprep.subr.bf16.mxu0 0
      %3127 = vmatpush1.bf16.msra.mxu0 0
      %3128 = vmatprep.subr.bf16.mxu0 0
      %3129 = vmatpush1.bf16.msra.mxu0 0
      %3130 = vmatprep.subr.bf16.mxu0 0
      %3131 = vmatpush1.bf16.msra.mxu0 0
      %3132 = vmatprep.subr.bf16.mxu0 0
      %3133 = vmatpush1.bf16.msra.mxu0 0
      %3134 = vmatprep.subr.bf16.mxu0 0
      %3135 = vmatpush1.bf16.msra.mxu0 0
      %3136 = vmatprep.subr.bf16.mxu0 %v2994
      %3137 = vmatpush1.bf16.msra.mxu0 %v2991
      %3138 = vmatprep.subr.bf16.mxu0 0
      %3139 = vmatpush2.bf16.msra.mxu0 0
      %3140 = vmatprep.subr.bf16.mxu0 0
      %3141 = vmatpush2.bf16.msra.mxu0 0
      %3142 = vmatprep.subr.bf16.mxu0 0
      %3143 = vmatpush2.bf16.msra.mxu0 0
      %3144 = vmatprep.subr.bf16.mxu0 0
      %3145 = vmatpush2.bf16.msra.mxu0 0
      %3146 = vmatprep.subr.bf16.mxu0 0
      %3147 = vmatpush2.bf16.msra.mxu0 0
      %3148 = vmatprep.subr.bf16.mxu0 0
      %3149 = vmatpush2.bf16.msra.mxu0 0
      %3150 = vmatprep.subr.bf16.mxu0 0
      %3151 = vmatpush2.bf16.msra.mxu0 0
      %3152 = vmatprep.subr.bf16.mxu0 0
      %3153 = vmatpush2.bf16.msra.mxu0 0
      %3154 = vmatprep.mubr.bf16.mxu0 0
      %3155 = vmatmul.mubr.bf16.gmra.mxu0 %v2970
      %v3156 = vpop.f32.mrf.mxu0
      %v3157 = vadd.f32 0.0, %v3156
      %v3158 = vpop.f32.mrf.mxu0
      %v3159 = vadd.f32 0.0, %v3158
      %v3160 = vpop.f32.mrf.mxu0
      %v3161 = vpop.f32.mrf.mxu0
      %3162 = vdwg.mxu0
      %3163 = vmatprep.subr.bf16.mxu0 0
      %3164 = vmatpush1.bf16.msra.mxu0 0
      %3165 = vmatprep.subr.bf16.mxu0 0
      %3166 = vmatpush1.bf16.msra.mxu0 0
      %3167 = vmatprep.subr.bf16.mxu0 0
      %3168 = vmatpush1.bf16.msra.mxu0 0
      %3169 = vmatprep.subr.bf16.mxu0 0
      %3170 = vmatpush1.bf16.msra.mxu0 0
      %3171 = vmatprep.subr.bf16.mxu0 0
      %3172 = vmatpush1.bf16.msra.mxu0 0
      %3173 = vmatprep.subr.bf16.mxu0 0
      %3174 = vmatpush1.bf16.msra.mxu0 0
      %3175 = vmatprep.subr.bf16.mxu0 0
      %3176 = vmatpush1.bf16.msra.mxu0 0
      %3177 = vmatprep.subr.bf16.mxu0 0
      %3178 = vmatpush1.bf16.msra.mxu0 %v2997
      %3179 = vmatprep.subr.bf16.mxu0 0
      %3180 = vmatpush2.bf16.msra.mxu0 0
      %3181 = vmatprep.subr.bf16.mxu0 0
      %3182 = vmatpush2.bf16.msra.mxu0 0
      %3183 = vmatprep.subr.bf16.mxu0 0
      %3184 = vmatpush2.bf16.msra.mxu0 0
      %3185 = vmatprep.subr.bf16.mxu0 0
      %3186 = vmatpush2.bf16.msra.mxu0 0
      %3187 = vmatprep.subr.bf16.mxu0 0
      %3188 = vmatpush2.bf16.msra.mxu0 0
      %3189 = vmatprep.subr.bf16.mxu0 0
      %3190 = vmatpush2.bf16.msra.mxu0 0
      %3191 = vmatprep.subr.bf16.mxu0 0
      %3192 = vmatpush2.bf16.msra.mxu0 0
      %3193 = vmatprep.subr.bf16.mxu0 0
      %3194 = vmatpush2.bf16.msra.mxu0 0
      %3195 = vmatprep.mubr.bf16.mxu0 0
      %3196 = vmatmul.mubr.bf16.gmra.mxu0 %v2970
      %v3197 = vpop.f32.mrf.mxu0
      %v3198 = vadd.f32 0.0, %v3197
      %v3199 = vpop.f32.mrf.mxu0
      %v3200 = vpop.f32.mrf.mxu0
      %v3201 = vpop.f32.mrf.mxu0
      %3202 = vdwg.mxu0
      %v3203 = vadd.f32 %v2885, %v3034
      %v3204 = vadd.f32 %v2886, %v3036
      %v3205 = vadd.f32 %v2887, %v3075
      %v3206 = vadd.f32 %v2888, %v3077
      %v3207 = vadd.f32 %v2889, %v3116
      %v3208 = vadd.f32 %v2890, %v3118
      %v3209 = vadd.f32 %v2891, %v3157
      %v3210 = vadd.f32 %v2892, %v3159
      %v3211 = vadd.f32 %v2893, %v3198
      %v3212 = vld [vmem:[%s138] sm:$0xff]
      %v3213 = vld [vmem:[%s138 + $0x8] sm:$0xff]
      %v3214 = vld [vmem:[%s138 + $0x10] sm:$0x3]
      %s3215 = scalar_lea.vmem %s1, 40
      %v3216 = vld [vmem:[%s3215] sm:$0xf]
      %v3220 = vcombine.high %v3212, %v3212
      %v3222 = vunpack.c.l.s4 1983009808
      %v3223 = vunpack.c.0.s8 %v3222
      %v3224 = vlaneseq
      %v3225 = vshrl.u32 %v3224, 7
      %v3226 = vsub.s32 %v3223, %v3225
      %v3227 = vrot.slane %v3212, %v3226
      %v3229 = vunpack.c.l.s4 1983009808
      %v3230 = vunpack.c.0.s8 %v3229
      %v3231 = vlaneseq
      %v3232 = vshrl.u32 %v3231, 7
      %v3233 = vsub.s32 %v3230, %v3232
      %v3234 = vrot.slane %v3220, %v3233
      %v3235 = vcombine.high %v3227, %v3227
      %v3236 = vcombine.high %v3234, %v3234
      %v3237 = vcombine.high %v3213, %v3213
      %v3239 = vunpack.c.l.s4 1983009808
      %v3240 = vunpack.c.0.s8 %v3239
      %v3241 = vlaneseq
      %v3242 = vshrl.u32 %v3241, 7
      %v3243 = vsub.s32 %v3240, %v3242
      %v3244 = vrot.slane %v3213, %v3243
      %v3246 = vunpack.c.l.s4 1983009808
      %v3247 = vunpack.c.0.s8 %v3246
      %v3248 = vlaneseq
      %v3249 = vshrl.u32 %v3248, 7
      %v3250 = vsub.s32 %v3247, %v3249
      %v3251 = vrot.slane %v3237, %v3250
      %v3252 = vcombine.high %v3244, %v3244
      %v3253 = vcombine.high %v3251, %v3251
      %v3255 = vunpack.c.l.s4 1983009808
      %v3256 = vunpack.c.0.s8 %v3255
      %v3257 = vlaneseq
      %v3258 = vshrl.u32 %v3257, 7
      %v3259 = vsub.s32 %v3256, %v3258
      %v3260 = vrot.slane %v3214, %v3259
      %3261 = vrot.lane.b32.xlu0 %v3227, 94
      %v3262 = vpop.permute.xlu0 %3261
      %3263 = vrot.lane.b32.xlu0 %v3235, 94
      %v3264 = vpop.permute.xlu0 %3263
      %3265 = vrot.lane.b32.xlu0 %v3234, 94
      %v3266 = vpop.permute.xlu0 %3265
      %3267 = vrot.lane.b32.xlu0 %v3236, 94
      %v3268 = vpop.permute.xlu0 %3267
      %3269 = vrot.lane.b32.xlu0 %v3244, 94
      %v3270 = vpop.permute.xlu0 %3269
      %3271 = vrot.lane.b32.xlu0 %v3252, 94
      %v3272 = vpop.permute.xlu0 %3271
      %3273 = vrot.lane.b32.xlu0 %v3251, 94
      %v3274 = vpop.permute.xlu0 %3273
      %3275 = vrot.lane.b32.xlu0 %v3253, 94
      %v3276 = vpop.permute.xlu0 %3275
      %3277 = vrot.lane.b32.xlu0 %v3260, 94
      %v3278 = vpop.permute.xlu0 %3277
      %vm3279 = vcmask 769024
      %v3280 = vsel %vm3279, %v3262, %v3264
      %v3281 = vsel %vm3279, %v3264, %v3266
      %v3282 = vsel %vm3279, %v3266, %v3268
      %v3283 = vsel %vm3279, %v3268, %v3270
      %v3284 = vsel %vm3279, %v3270, %v3272
      %v3285 = vsel %vm3279, %v3272, %v3274
      %v3286 = vsel %vm3279, %v3274, %v3276
      %v3287 = vsel %vm3279, %v3276, %v3278
      %v3289 = vsel %vm199, %v3216, 0
      %v3292 = vand.u32 %v3280, %v206
      %v3295 = vand.u32 %v3281, %v206
      %v3298 = vand.u32 %v3282, %v206
      %v3301 = vand.u32 %v3283, %v206
      %v3304 = vand.u32 %v3284, %v206
      %v3307 = vand.u32 %v3285, %v206
      %v3310 = vand.u32 %v3286, %v206
      %v3313 = vand.u32 %v3287, %v206
      %v3316 = vand.u32 %v3278, %v206
      %3318 = vmatprep.subr.bf16.mxu0 0
      %3319 = vmatpush1.bf16.msra.mxu0 0
      %3320 = vmatprep.subr.bf16.mxu0 0
      %3321 = vmatpush1.bf16.msra.mxu0 0
      %3322 = vmatprep.subr.bf16.mxu0 0
      %3323 = vmatpush1.bf16.msra.mxu0 0
      %3324 = vmatprep.subr.bf16.mxu0 0
      %3325 = vmatpush1.bf16.msra.mxu0 0
      %3326 = vmatprep.subr.bf16.mxu0 0
      %3327 = vmatpush1.bf16.msra.mxu0 0
      %3328 = vmatprep.subr.bf16.mxu0 0
      %3329 = vmatpush1.bf16.msra.mxu0 0
      %3330 = vmatprep.subr.bf16.mxu0 0
      %3331 = vmatpush1.bf16.msra.mxu0 0
      %3332 = vmatprep.subr.bf16.mxu0 %v3295
      %3333 = vmatpush1.bf16.msra.mxu0 %v3292
      %3334 = vmatprep.subr.bf16.mxu0 0
      %3335 = vmatpush2.bf16.msra.mxu0 0
      %3336 = vmatprep.subr.bf16.mxu0 0
      %3337 = vmatpush2.bf16.msra.mxu0 0
      %3338 = vmatprep.subr.bf16.mxu0 0
      %3339 = vmatpush2.bf16.msra.mxu0 0
      %3340 = vmatprep.subr.bf16.mxu0 0
      %3341 = vmatpush2.bf16.msra.mxu0 0
      %3342 = vmatprep.subr.bf16.mxu0 0
      %3343 = vmatpush2.bf16.msra.mxu0 0
      %3344 = vmatprep.subr.bf16.mxu0 0
      %3345 = vmatpush2.bf16.msra.mxu0 0
      %3346 = vmatprep.subr.bf16.mxu0 0
      %3347 = vmatpush2.bf16.msra.mxu0 0
      %3348 = vmatprep.subr.bf16.mxu0 0
      %3349 = vmatpush2.bf16.msra.mxu0 0
      %3350 = vmatprep.mubr.bf16.mxu0 0
      %3351 = vmatmul.mubr.bf16.gmra.mxu0 %v3289
      %v3352 = vpop.f32.mrf.mxu0
      %v3353 = vadd.f32 0.0, %v3352
      %v3354 = vpop.f32.mrf.mxu0
      %v3355 = vadd.f32 0.0, %v3354
      %v3356 = vpop.f32.mrf.mxu0
      %v3357 = vpop.f32.mrf.mxu0
      %3358 = vdwg.mxu0
      %3359 = vmatprep.subr.bf16.mxu0 0
      %3360 = vmatpush1.bf16.msra.mxu0 0
      %3361 = vmatprep.subr.bf16.mxu0 0
      %3362 = vmatpush1.bf16.msra.mxu0 0
      %3363 = vmatprep.subr.bf16.mxu0 0
      %3364 = vmatpush1.bf16.msra.mxu0 0
      %3365 = vmatprep.subr.bf16.mxu0 0
      %3366 = vmatpush1.bf16.msra.mxu0 0
      %3367 = vmatprep.subr.bf16.mxu0 0
      %3368 = vmatpush1.bf16.msra.mxu0 0
      %3369 = vmatprep.subr.bf16.mxu0 0
      %3370 = vmatpush1.bf16.msra.mxu0 0
      %3371 = vmatprep.subr.bf16.mxu0 0
      %3372 = vmatpush1.bf16.msra.mxu0 0
      %3373 = vmatprep.subr.bf16.mxu0 %v3301
      %3374 = vmatpush1.bf16.msra.mxu0 %v3298
      %3375 = vmatprep.subr.bf16.mxu0 0
      %3376 = vmatpush2.bf16.msra.mxu0 0
      %3377 = vmatprep.subr.bf16.mxu0 0
      %3378 = vmatpush2.bf16.msra.mxu0 0
      %3379 = vmatprep.subr.bf16.mxu0 0
      %3380 = vmatpush2.bf16.msra.mxu0 0
      %3381 = vmatprep.subr.bf16.mxu0 0
      %3382 = vmatpush2.bf16.msra.mxu0 0
      %3383 = vmatprep.subr.bf16.mxu0 0
      %3384 = vmatpush2.bf16.msra.mxu0 0
      %3385 = vmatprep.subr.bf16.mxu0 0
      %3386 = vmatpush2.bf16.msra.mxu0 0
      %3387 = vmatprep.subr.bf16.mxu0 0
      %3388 = vmatpush2.bf16.msra.mxu0 0
      %3389 = vmatprep.subr.bf16.mxu0 0
      %3390 = vmatpush2.bf16.msra.mxu0 0
      %3391 = vmatprep.mubr.bf16.mxu0 0
      %3392 = vmatmul.mubr.bf16.gmra.mxu0 %v3289
      %v3393 = vpop.f32.mrf.mxu0
      %v3394 = vadd.f32 0.0, %v3393
      %v3395 = vpop.f32.mrf.mxu0
      %v3396 = vadd.f32 0.0, %v3395
      %v3397 = vpop.f32.mrf.mxu0
      %v3398 = vpop.f32.mrf.mxu0
      %3399 = vdwg.mxu0
      %3400 = vmatprep.subr.bf16.mxu0 0
      %3401 = vmatpush1.bf16.msra.mxu0 0
      %3402 = vmatprep.subr.bf16.mxu0 0
      %3403 = vmatpush1.bf16.msra.mxu0 0
      %3404 = vmatprep.subr.bf16.mxu0 0
      %3405 = vmatpush1.bf16.msra.mxu0 0
      %3406 = vmatprep.subr.bf16.mxu0 0
      %3407 = vmatpush1.bf16.msra.mxu0 0
      %3408 = vmatprep.subr.bf16.mxu0 0
      %3409 = vmatpush1.bf16.msra.mxu0 0
      %3410 = vmatprep.subr.bf16.mxu0 0
      %3411 = vmatpush1.bf16.msra.mxu0 0
      %3412 = vmatprep.subr.bf16.mxu0 0
      %3413 = vmatpush1.bf16.msra.mxu0 0
      %3414 = vmatprep.subr.bf16.mxu0 %v3307
      %3415 = vmatpush1.bf16.msra.mxu0 %v3304
      %3416 = vmatprep.subr.bf16.mxu0 0
      %3417 = vmatpush2.bf16.msra.mxu0 0
      %3418 = vmatprep.subr.bf16.mxu0 0
      %3419 = vmatpush2.bf16.msra.mxu0 0
      %3420 = vmatprep.subr.bf16.mxu0 0
      %3421 = vmatpush2.bf16.msra.mxu0 0
      %3422 = vmatprep.subr.bf16.mxu0 0
      %3423 = vmatpush2.bf16.msra.mxu0 0
      %3424 = vmatprep.subr.bf16.mxu0 0
      %3425 = vmatpush2.bf16.msra.mxu0 0
      %3426 = vmatprep.subr.bf16.mxu0 0
      %3427 = vmatpush2.bf16.msra.mxu0 0
      %3428 = vmatprep.subr.bf16.mxu0 0
      %3429 = vmatpush2.bf16.msra.mxu0 0
      %3430 = vmatprep.subr.bf16.mxu0 0
      %3431 = vmatpush2.bf16.msra.mxu0 0
      %3432 = vmatprep.mubr.bf16.mxu0 0
      %3433 = vmatmul.mubr.bf16.gmra.mxu0 %v3289
      %v3434 = vpop.f32.mrf.mxu0
      %v3435 = vadd.f32 0.0, %v3434
      %v3436 = vpop.f32.mrf.mxu0
      %v3437 = vadd.f32 0.0, %v3436
      %v3438 = vpop.f32.mrf.mxu0
      %v3439 = vpop.f32.mrf.mxu0
      %3440 = vdwg.mxu0
      %3441 = vmatprep.subr.bf16.mxu0 0
      %3442 = vmatpush1.bf16.msra.mxu0 0
      %3443 = vmatprep.subr.bf16.mxu0 0
      %3444 = vmatpush1.bf16.msra.mxu0 0
      %3445 = vmatprep.subr.bf16.mxu0 0
      %3446 = vmatpush1.bf16.msra.mxu0 0
      %3447 = vmatprep.subr.bf16.mxu0 0
      %3448 = vmatpush1.bf16.msra.mxu0 0
      %3449 = vmatprep.subr.bf16.mxu0 0
      %3450 = vmatpush1.bf16.msra.mxu0 0
      %3451 = vmatprep.subr.bf16.mxu0 0
      %3452 = vmatpush1.bf16.msra.mxu0 0
      %3453 = vmatprep.subr.bf16.mxu0 0
      %3454 = vmatpush1.bf16.msra.mxu0 0
      %3455 = vmatprep.subr.bf16.mxu0 %v3313
      %3456 = vmatpush1.bf16.msra.mxu0 %v3310
      %3457 = vmatprep.subr.bf16.mxu0 0
      %3458 = vmatpush2.bf16.msra.mxu0 0
      %3459 = vmatprep.subr.bf16.mxu0 0
      %3460 = vmatpush2.bf16.msra.mxu0 0
      %3461 = vmatprep.subr.bf16.mxu0 0
      %3462 = vmatpush2.bf16.msra.mxu0 0
      %3463 = vmatprep.subr.bf16.mxu0 0
      %3464 = vmatpush2.bf16.msra.mxu0 0
      %3465 = vmatprep.subr.bf16.mxu0 0
      %3466 = vmatpush2.bf16.msra.mxu0 0
      %3467 = vmatprep.subr.bf16.mxu0 0
      %3468 = vmatpush2.bf16.msra.mxu0 0
      %3469 = vmatprep.subr.bf16.mxu0 0
      %3470 = vmatpush2.bf16.msra.mxu0 0
      %3471 = vmatprep.subr.bf16.mxu0 0
      %3472 = vmatpush2.bf16.msra.mxu0 0
      %3473 = vmatprep.mubr.bf16.mxu0 0
      %3474 = vmatmul.mubr.bf16.gmra.mxu0 %v3289
      %v3475 = vpop.f32.mrf.mxu0
      %v3476 = vadd.f32 0.0, %v3475
      %v3477 = vpop.f32.mrf.mxu0
      %v3478 = vadd.f32 0.0, %v3477
      %v3479 = vpop.f32.mrf.mxu0
      %v3480 = vpop.f32.mrf.mxu0
      %3481 = vdwg.mxu0
      %3482 = vmatprep.subr.bf16.mxu0 0
      %3483 = vmatpush1.bf16.msra.mxu0 0
      %3484 = vmatprep.subr.bf16.mxu0 0
      %3485 = vmatpush1.bf16.msra.mxu0 0
      %3486 = vmatprep.subr.bf16.mxu0 0
      %3487 = vmatpush1.bf16.msra.mxu0 0
      %3488 = vmatprep.subr.bf16.mxu0 0
      %3489 = vmatpush1.bf16.msra.mxu0 0
      %3490 = vmatprep.subr.bf16.mxu0 0
      %3491 = vmatpush1.bf16.msra.mxu0 0
      %3492 = vmatprep.subr.bf16.mxu0 0
      %3493 = vmatpush1.bf16.msra.mxu0 0
      %3494 = vmatprep.subr.bf16.mxu0 0
      %3495 = vmatpush1.bf16.msra.mxu0 0
      %3496 = vmatprep.subr.bf16.mxu0 0
      %3497 = vmatpush1.bf16.msra.mxu0 %v3316
      %3498 = vmatprep.subr.bf16.mxu0 0
      %3499 = vmatpush2.bf16.msra.mxu0 0
      %3500 = vmatprep.subr.bf16.mxu0 0
      %3501 = vmatpush2.bf16.msra.mxu0 0
      %3502 = vmatprep.subr.bf16.mxu0 0
      %3503 = vmatpush2.bf16.msra.mxu0 0
      %3504 = vmatprep.subr.bf16.mxu0 0
      %3505 = vmatpush2.bf16.msra.mxu0 0
      %3506 = vmatprep.subr.bf16.mxu0 0
      %3507 = vmatpush2.bf16.msra.mxu0 0
      %3508 = vmatprep.subr.bf16.mxu0 0
      %3509 = vmatpush2.bf16.msra.mxu0 0
      %3510 = vmatprep.subr.bf16.mxu0 0
      %3511 = vmatpush2.bf16.msra.mxu0 0
      %3512 = vmatprep.subr.bf16.mxu0 0
      %3513 = vmatpush2.bf16.msra.mxu0 0
      %3514 = vmatprep.mubr.bf16.mxu0 0
      %3515 = vmatmul.mubr.bf16.gmra.mxu0 %v3289
      %v3516 = vpop.f32.mrf.mxu0
      %v3517 = vadd.f32 0.0, %v3516
      %v3518 = vpop.f32.mrf.mxu0
      %v3519 = vpop.f32.mrf.mxu0
      %v3520 = vpop.f32.mrf.mxu0
      %3521 = vdwg.mxu0
      %v3522 = vadd.f32 %v3203, %v3353
      %v3523 = vadd.f32 %v3204, %v3355
      %v3524 = vadd.f32 %v3205, %v3394
      %v3525 = vadd.f32 %v3206, %v3396
      %v3526 = vadd.f32 %v3207, %v3435
      %v3527 = vadd.f32 %v3208, %v3437
      %v3528 = vadd.f32 %v3209, %v3476
      %v3529 = vadd.f32 %v3210, %v3478
      %v3530 = vadd.f32 %v3211, %v3517
      %v3531 = vld [vmem:[%s149] sm:$0xff]
      %v3532 = vld [vmem:[%s149 + $0x8] sm:$0xff]
      %v3533 = vld [vmem:[%s149 + $0x10] sm:$0x3]
      %s3534 = scalar_lea.vmem %s1, 44
      %v3535 = vld [vmem:[%s3534] sm:$0xf]
      %v3539 = vcombine.high %v3531, %v3531
      %v3541 = vunpack.c.l.s4 1983009808
      %v3542 = vunpack.c.0.s8 %v3541
      %v3543 = vlaneseq
      %v3544 = vshrl.u32 %v3543, 7
      %v3545 = vsub.s32 %v3542, %v3544
      %v3546 = vrot.slane %v3531, %v3545
      %v3548 = vunpack.c.l.s4 1983009808
      %v3549 = vunpack.c.0.s8 %v3548
      %v3550 = vlaneseq
      %v3551 = vshrl.u32 %v3550, 7
      %v3552 = vsub.s32 %v3549, %v3551
      %v3553 = vrot.slane %v3539, %v3552
      %v3554 = vcombine.high %v3546, %v3546
      %v3555 = vcombine.high %v3553, %v3553
      %v3556 = vcombine.high %v3532, %v3532
      %v3558 = vunpack.c.l.s4 1983009808
      %v3559 = vunpack.c.0.s8 %v3558
      %v3560 = vlaneseq
      %v3561 = vshrl.u32 %v3560, 7
      %v3562 = vsub.s32 %v3559, %v3561
      %v3563 = vrot.slane %v3532, %v3562
      %v3565 = vunpack.c.l.s4 1983009808
      %v3566 = vunpack.c.0.s8 %v3565
      %v3567 = vlaneseq
      %v3568 = vshrl.u32 %v3567, 7
      %v3569 = vsub.s32 %v3566, %v3568
      %v3570 = vrot.slane %v3556, %v3569
      %v3571 = vcombine.high %v3563, %v3563
      %v3572 = vcombine.high %v3570, %v3570
      %v3574 = vunpack.c.l.s4 1983009808
      %v3575 = vunpack.c.0.s8 %v3574
      %v3576 = vlaneseq
      %v3577 = vshrl.u32 %v3576, 7
      %v3578 = vsub.s32 %v3575, %v3577
      %v3579 = vrot.slane %v3533, %v3578
      %3580 = vrot.lane.b32.xlu0 %v3546, 94
      %v3581 = vpop.permute.xlu0 %3580
      %3582 = vrot.lane.b32.xlu0 %v3554, 94
      %v3583 = vpop.permute.xlu0 %3582
      %3584 = vrot.lane.b32.xlu0 %v3553, 94
      %v3585 = vpop.permute.xlu0 %3584
      %3586 = vrot.lane.b32.xlu0 %v3555, 94
      %v3587 = vpop.permute.xlu0 %3586
      %3588 = vrot.lane.b32.xlu0 %v3563, 94
      %v3589 = vpop.permute.xlu0 %3588
      %3590 = vrot.lane.b32.xlu0 %v3571, 94
      %v3591 = vpop.permute.xlu0 %3590
      %3592 = vrot.lane.b32.xlu0 %v3570, 94
      %v3593 = vpop.permute.xlu0 %3592
      %3594 = vrot.lane.b32.xlu0 %v3572, 94
      %v3595 = vpop.permute.xlu0 %3594
      %3596 = vrot.lane.b32.xlu0 %v3579, 94
      %v3597 = vpop.permute.xlu0 %3596
      %v3598 = vsel %vm3279, %v3581, %v3583
      %v3599 = vsel %vm3279, %v3583, %v3585
      %v3600 = vsel %vm3279, %v3585, %v3587
      %v3601 = vsel %vm3279, %v3587, %v3589
      %v3602 = vsel %vm3279, %v3589, %v3591
      %v3603 = vsel %vm3279, %v3591, %v3593
      %v3604 = vsel %vm3279, %v3593, %v3595
      %v3605 = vsel %vm3279, %v3595, %v3597
      %v3607 = vsel %vm199, %v3535, 0
      %v3610 = vand.u32 %v3598, %v206
      %v3613 = vand.u32 %v3599, %v206
      %v3616 = vand.u32 %v3600, %v206
      %v3619 = vand.u32 %v3601, %v206
      %v3622 = vand.u32 %v3602, %v206
      %v3625 = vand.u32 %v3603, %v206
      %v3628 = vand.u32 %v3604, %v206
      %v3631 = vand.u32 %v3605, %v206
      %v3634 = vand.u32 %v3597, %v206
      %3636 = vmatprep.subr.bf16.mxu0 0
      %3637 = vmatpush1.bf16.msra.mxu0 0
      %3638 = vmatprep.subr.bf16.mxu0 0
      %3639 = vmatpush1.bf16.msra.mxu0 0
      %3640 = vmatprep.subr.bf16.mxu0 0
      %3641 = vmatpush1.bf16.msra.mxu0 0
      %3642 = vmatprep.subr.bf16.mxu0 0
      %3643 = vmatpush1.bf16.msra.mxu0 0
      %3644 = vmatprep.subr.bf16.mxu0 0
      %3645 = vmatpush1.bf16.msra.mxu0 0
      %3646 = vmatprep.subr.bf16.mxu0 0
      %3647 = vmatpush1.bf16.msra.mxu0 0
      %3648 = vmatprep.subr.bf16.mxu0 0
      %3649 = vmatpush1.bf16.msra.mxu0 0
      %3650 = vmatprep.subr.bf16.mxu0 %v3613
      %3651 = vmatpush1.bf16.msra.mxu0 %v3610
      %3652 = vmatprep.subr.bf16.mxu0 0
      %3653 = vmatpush2.bf16.msra.mxu0 0
      %3654 = vmatprep.subr.bf16.mxu0 0
      %3655 = vmatpush2.bf16.msra.mxu0 0
      %3656 = vmatprep.subr.bf16.mxu0 0
      %3657 = vmatpush2.bf16.msra.mxu0 0
      %3658 = vmatprep.subr.bf16.mxu0 0
      %3659 = vmatpush2.bf16.msra.mxu0 0
      %3660 = vmatprep.subr.bf16.mxu0 0
      %3661 = vmatpush2.bf16.msra.mxu0 0
      %3662 = vmatprep.subr.bf16.mxu0 0
      %3663 = vmatpush2.bf16.msra.mxu0 0
      %3664 = vmatprep.subr.bf16.mxu0 0
      %3665 = vmatpush2.bf16.msra.mxu0 0
      %3666 = vmatprep.subr.bf16.mxu0 0
      %3667 = vmatpush2.bf16.msra.mxu0 0
      %3668 = vmatprep.mubr.bf16.mxu0 0
      %3669 = vmatmul.mubr.bf16.gmra.mxu0 %v3607
      %v3670 = vpop.f32.mrf.mxu0
      %v3671 = vadd.f32 0.0, %v3670
      %v3672 = vpop.f32.mrf.mxu0
      %v3673 = vadd.f32 0.0, %v3672
      %v3674 = vpop.f32.mrf.mxu0
      %v3675 = vpop.f32.mrf.mxu0
      %3676 = vdwg.mxu0
      %3677 = vmatprep.subr.bf16.mxu0 0
      %3678 = vmatpush1.bf16.msra.mxu0 0
      %3679 = vmatprep.subr.bf16.mxu0 0
      %3680 = vmatpush1.bf16.msra.mxu0 0
      %3681 = vmatprep.subr.bf16.mxu0 0
      %3682 = vmatpush1.bf16.msra.mxu0 0
      %3683 = vmatprep.subr.bf16.mxu0 0
      %3684 = vmatpush1.bf16.msra.mxu0 0
      %3685 = vmatprep.subr.bf16.mxu0 0
      %3686 = vmatpush1.bf16.msra.mxu0 0
      %3687 = vmatprep.subr.bf16.mxu0 0
      %3688 = vmatpush1.bf16.msra.mxu0 0
      %3689 = vmatprep.subr.bf16.mxu0 0
      %3690 = vmatpush1.bf16.msra.mxu0 0
      %3691 = vmatprep.subr.bf16.mxu0 %v3619
      %3692 = vmatpush1.bf16.msra.mxu0 %v3616
      %3693 = vmatprep.subr.bf16.mxu0 0
      %3694 = vmatpush2.bf16.msra.mxu0 0
      %3695 = vmatprep.subr.bf16.mxu0 0
      %3696 = vmatpush2.bf16.msra.mxu0 0
      %3697 = vmatprep.subr.bf16.mxu0 0
      %3698 = vmatpush2.bf16.msra.mxu0 0
      %3699 = vmatprep.subr.bf16.mxu0 0
      %3700 = vmatpush2.bf16.msra.mxu0 0
      %3701 = vmatprep.subr.bf16.mxu0 0
      %3702 = vmatpush2.bf16.msra.mxu0 0
      %3703 = vmatprep.subr.bf16.mxu0 0
      %3704 = vmatpush2.bf16.msra.mxu0 0
      %3705 = vmatprep.subr.bf16.mxu0 0
      %3706 = vmatpush2.bf16.msra.mxu0 0
      %3707 = vmatprep.subr.bf16.mxu0 0
      %3708 = vmatpush2.bf16.msra.mxu0 0
      %3709 = vmatprep.mubr.bf16.mxu0 0
      %3710 = vmatmul.mubr.bf16.gmra.mxu0 %v3607
      %v3711 = vpop.f32.mrf.mxu0
      %v3712 = vadd.f32 0.0, %v3711
      %v3713 = vpop.f32.mrf.mxu0
      %v3714 = vadd.f32 0.0, %v3713
      %v3715 = vpop.f32.mrf.mxu0
      %v3716 = vpop.f32.mrf.mxu0
      %3717 = vdwg.mxu0
      %3718 = vmatprep.subr.bf16.mxu0 0
      %3719 = vmatpush1.bf16.msra.mxu0 0
      %3720 = vmatprep.subr.bf16.mxu0 0
      %3721 = vmatpush1.bf16.msra.mxu0 0
      %3722 = vmatprep.subr.bf16.mxu0 0
      %3723 = vmatpush1.bf16.msra.mxu0 0
      %3724 = vmatprep.subr.bf16.mxu0 0
      %3725 = vmatpush1.bf16.msra.mxu0 0
      %3726 = vmatprep.subr.bf16.mxu0 0
      %3727 = vmatpush1.bf16.msra.mxu0 0
      %3728 = vmatprep.subr.bf16.mxu0 0
      %3729 = vmatpush1.bf16.msra.mxu0 0
      %3730 = vmatprep.subr.bf16.mxu0 0
      %3731 = vmatpush1.bf16.msra.mxu0 0
      %3732 = vmatprep.subr.bf16.mxu0 %v3625
      %3733 = vmatpush1.bf16.msra.mxu0 %v3622
      %3734 = vmatprep.subr.bf16.mxu0 0
      %3735 = vmatpush2.bf16.msra.mxu0 0
      %3736 = vmatprep.subr.bf16.mxu0 0
      %3737 = vmatpush2.bf16.msra.mxu0 0
      %3738 = vmatprep.subr.bf16.mxu0 0
      %3739 = vmatpush2.bf16.msra.mxu0 0
      %3740 = vmatprep.subr.bf16.mxu0 0
      %3741 = vmatpush2.bf16.msra.mxu0 0
      %3742 = vmatprep.subr.bf16.mxu0 0
      %3743 = vmatpush2.bf16.msra.mxu0 0
      %3744 = vmatprep.subr.bf16.mxu0 0
      %3745 = vmatpush2.bf16.msra.mxu0 0
      %3746 = vmatprep.subr.bf16.mxu0 0
      %3747 = vmatpush2.bf16.msra.mxu0 0
      %3748 = vmatprep.subr.bf16.mxu0 0
      %3749 = vmatpush2.bf16.msra.mxu0 0
      %3750 = vmatprep.mubr.bf16.mxu0 0
      %3751 = vmatmul.mubr.bf16.gmra.mxu0 %v3607
      %v3752 = vpop.f32.mrf.mxu0
      %v3753 = vadd.f32 0.0, %v3752
      %v3754 = vpop.f32.mrf.mxu0
      %v3755 = vadd.f32 0.0, %v3754
      %v3756 = vpop.f32.mrf.mxu0
      %v3757 = vpop.f32.mrf.mxu0
      %3758 = vdwg.mxu0
      %3759 = vmatprep.subr.bf16.mxu0 0
      %3760 = vmatpush1.bf16.msra.mxu0 0
      %3761 = vmatprep.subr.bf16.mxu0 0
      %3762 = vmatpush1.bf16.msra.mxu0 0
      %3763 = vmatprep.subr.bf16.mxu0 0
      %3764 = vmatpush1.bf16.msra.mxu0 0
      %3765 = vmatprep.subr.bf16.mxu0 0
      %3766 = vmatpush1.bf16.msra.mxu0 0
      %3767 = vmatprep.subr.bf16.mxu0 0
      %3768 = vmatpush1.bf16.msra.mxu0 0
      %3769 = vmatprep.subr.bf16.mxu0 0
      %3770 = vmatpush1.bf16.msra.mxu0 0
      %3771 = vmatprep.subr.bf16.mxu0 0
      %3772 = vmatpush1.bf16.msra.mxu0 0
      %3773 = vmatprep.subr.bf16.mxu0 %v3631
      %3774 = vmatpush1.bf16.msra.mxu0 %v3628
      %3775 = vmatprep.subr.bf16.mxu0 0
      %3776 = vmatpush2.bf16.msra.mxu0 0
      %3777 = vmatprep.subr.bf16.mxu0 0
      %3778 = vmatpush2.bf16.msra.mxu0 0
      %3779 = vmatprep.subr.bf16.mxu0 0
      %3780 = vmatpush2.bf16.msra.mxu0 0
      %3781 = vmatprep.subr.bf16.mxu0 0
      %3782 = vmatpush2.bf16.msra.mxu0 0
      %3783 = vmatprep.subr.bf16.mxu0 0
      %3784 = vmatpush2.bf16.msra.mxu0 0
      %3785 = vmatprep.subr.bf16.mxu0 0
      %3786 = vmatpush2.bf16.msra.mxu0 0
      %3787 = vmatprep.subr.bf16.mxu0 0
      %3788 = vmatpush2.bf16.msra.mxu0 0
      %3789 = vmatprep.subr.bf16.mxu0 0
      %3790 = vmatpush2.bf16.msra.mxu0 0
      %3791 = vmatprep.mubr.bf16.mxu0 0
      %3792 = vmatmul.mubr.bf16.gmra.mxu0 %v3607
      %v3793 = vpop.f32.mrf.mxu0
      %v3794 = vadd.f32 0.0, %v3793
      %v3795 = vpop.f32.mrf.mxu0
      %v3796 = vadd.f32 0.0, %v3795
      %v3797 = vpop.f32.mrf.mxu0
      %v3798 = vpop.f32.mrf.mxu0
      %3799 = vdwg.mxu0
      %3800 = vmatprep.subr.bf16.mxu0 0
      %3801 = vmatpush1.bf16.msra.mxu0 0
      %3802 = vmatprep.subr.bf16.mxu0 0
      %3803 = vmatpush1.bf16.msra.mxu0 0
      %3804 = vmatprep.subr.bf16.mxu0 0
      %3805 = vmatpush1.bf16.msra.mxu0 0
      %3806 = vmatprep.subr.bf16.mxu0 0
      %3807 = vmatpush1.bf16.msra.mxu0 0
      %3808 = vmatprep.subr.bf16.mxu0 0
      %3809 = vmatpush1.bf16.msra.mxu0 0
      %3810 = vmatprep.subr.bf16.mxu0 0
      %3811 = vmatpush1.bf16.msra.mxu0 0
      %3812 = vmatprep.subr.bf16.mxu0 0
      %3813 = vmatpush1.bf16.msra.mxu0 0
      %3814 = vmatprep.subr.bf16.mxu0 0
      %3815 = vmatpush1.bf16.msra.mxu0 %v3634
      %3816 = vmatprep.subr.bf16.mxu0 0
      %3817 = vmatpush2.bf16.msra.mxu0 0
      %3818 = vmatprep.subr.bf16.mxu0 0
      %3819 = vmatpush2.bf16.msra.mxu0 0
      %3820 = vmatprep.subr.bf16.mxu0 0
      %3821 = vmatpush2.bf16.msra.mxu0 0
      %3822 = vmatprep.subr.bf16.mxu0 0
      %3823 = vmatpush2.bf16.msra.mxu0 0
      %3824 = vmatprep.subr.bf16.mxu0 0
      %3825 = vmatpush2.bf16.msra.mxu0 0
      %3826 = vmatprep.subr.bf16.mxu0 0
      %3827 = vmatpush2.bf16.msra.mxu0 0
      %3828 = vmatprep.subr.bf16.mxu0 0
      %3829 = vmatpush2.bf16.msra.mxu0 0
      %3830 = vmatprep.subr.bf16.mxu0 0
      %3831 = vmatpush2.bf16.msra.mxu0 0
      %3832 = vmatprep.mubr.bf16.mxu0 0
      %3833 = vmatmul.mubr.bf16.gmra.mxu0 %v3607
      %v3834 = vpop.f32.mrf.mxu0
      %v3835 = vadd.f32 0.0, %v3834
      %v3836 = vpop.f32.mrf.mxu0
      %v3837 = vpop.f32.mrf.mxu0
      %v3838 = vpop.f32.mrf.mxu0
      %3839 = vdwg.mxu0
      %v3840 = vadd.f32 %v3522, %v3671
      %v3841 = vadd.f32 %v3523, %v3673
      %v3842 = vadd.f32 %v3524, %v3712
      %v3843 = vadd.f32 %v3525, %v3714
      %v3844 = vadd.f32 %v3526, %v3753
      %v3845 = vadd.f32 %v3527, %v3755
      %v3846 = vadd.f32 %v3528, %v3794
      %v3847 = vadd.f32 %v3529, %v3796
      %v3848 = vadd.f32 %v3530, %v3835
      %v3849 = vld [vmem:[%s1353] sm:$0xff]
      %v3850 = vld [vmem:[%s1353 + $0x8] sm:$0xff]
      %v3851 = vld [vmem:[%s1353 + $0x10] sm:$0x3]
      %s3852 = scalar_lea.vmem %s1, 48
      %v3853 = vld [vmem:[%s3852] sm:$0xf]
      %v3857 = vcombine.high %v3849, %v3849
      %v3859 = vunpack.c.l.s4 1983009808
      %v3860 = vunpack.c.0.s8 %v3859
      %v3861 = vlaneseq
      %v3862 = vshrl.u32 %v3861, 7
      %v3863 = vsub.s32 %v3860, %v3862
      %v3864 = vrot.slane %v3849, %v3863
      %v3866 = vunpack.c.l.s4 1983009808
      %v3867 = vunpack.c.0.s8 %v3866
      %v3868 = vlaneseq
      %v3869 = vshrl.u32 %v3868, 7
      %v3870 = vsub.s32 %v3867, %v3869
      %v3871 = vrot.slane %v3857, %v3870
      %v3872 = vcombine.high %v3864, %v3864
      %v3873 = vcombine.high %v3871, %v3871
      %v3874 = vcombine.high %v3850, %v3850
      %v3876 = vunpack.c.l.s4 1983009808
      %v3877 = vunpack.c.0.s8 %v3876
      %v3878 = vlaneseq
      %v3879 = vshrl.u32 %v3878, 7
      %v3880 = vsub.s32 %v3877, %v3879
      %v3881 = vrot.slane %v3850, %v3880
      %v3883 = vunpack.c.l.s4 1983009808
      %v3884 = vunpack.c.0.s8 %v3883
      %v3885 = vlaneseq
      %v3886 = vshrl.u32 %v3885, 7
      %v3887 = vsub.s32 %v3884, %v3886
      %v3888 = vrot.slane %v3874, %v3887
      %v3889 = vcombine.high %v3881, %v3881
      %v3890 = vcombine.high %v3888, %v3888
      %v3892 = vunpack.c.l.s4 1983009808
      %v3893 = vunpack.c.0.s8 %v3892
      %v3894 = vlaneseq
      %v3895 = vshrl.u32 %v3894, 7
      %v3896 = vsub.s32 %v3893, %v3895
      %v3897 = vrot.slane %v3851, %v3896
      %3898 = vrot.lane.b32.xlu0 %v3864, 95
      %v3899 = vpop.permute.xlu0 %3898
      %3900 = vrot.lane.b32.xlu0 %v3872, 95
      %v3901 = vpop.permute.xlu0 %3900
      %3902 = vrot.lane.b32.xlu0 %v3871, 95
      %v3903 = vpop.permute.xlu0 %3902
      %3904 = vrot.lane.b32.xlu0 %v3873, 95
      %v3905 = vpop.permute.xlu0 %3904
      %3906 = vrot.lane.b32.xlu0 %v3881, 95
      %v3907 = vpop.permute.xlu0 %3906
      %3908 = vrot.lane.b32.xlu0 %v3889, 95
      %v3909 = vpop.permute.xlu0 %3908
      %3910 = vrot.lane.b32.xlu0 %v3888, 95
      %v3911 = vpop.permute.xlu0 %3910
      %3912 = vrot.lane.b32.xlu0 %v3890, 95
      %v3913 = vpop.permute.xlu0 %3912
      %3914 = vrot.lane.b32.xlu0 %v3897, 95
      %v3915 = vpop.permute.xlu0 %3914
      %v3916 = vsel %vm2642, %v3899, %v3901
      %v3917 = vsel %vm2642, %v3901, %v3903
      %v3918 = vsel %vm2642, %v3903, %v3905
      %v3919 = vsel %vm2642, %v3905, %v3907
      %v3920 = vsel %vm2642, %v3907, %v3909
      %v3921 = vsel %vm2642, %v3909, %v3911
      %v3922 = vsel %vm2642, %v3911, %v3913
      %v3923 = vsel %vm2642, %v3913, %v3915
      %v3925 = vsel %vm199, %v3853, 0
      %v3928 = vand.u32 %v3916, %v206
      %v3931 = vand.u32 %v3917, %v206
      %v3934 = vand.u32 %v3918, %v206
      %v3937 = vand.u32 %v3919, %v206
      %v3940 = vand.u32 %v3920, %v206
      %v3943 = vand.u32 %v3921, %v206
      %v3946 = vand.u32 %v3922, %v206
      %v3949 = vand.u32 %v3923, %v206
      %v3952 = vand.u32 %v3915, %v206
      %3954 = vmatprep.subr.bf16.mxu0 0
      %3955 = vmatpush1.bf16.msra.mxu0 0
      %3956 = vmatprep.subr.bf16.mxu0 0
      %3957 = vmatpush1.bf16.msra.mxu0 0
      %3958 = vmatprep.subr.bf16.mxu0 0
      %3959 = vmatpush1.bf16.msra.mxu0 0
      %3960 = vmatprep.subr.bf16.mxu0 0
      %3961 = vmatpush1.bf16.msra.mxu0 0
      %3962 = vmatprep.subr.bf16.mxu0 0
      %3963 = vmatpush1.bf16.msra.mxu0 0
      %3964 = vmatprep.subr.bf16.mxu0 0
      %3965 = vmatpush1.bf16.msra.mxu0 0
      %3966 = vmatprep.subr.bf16.mxu0 0
      %3967 = vmatpush1.bf16.msra.mxu0 0
      %3968 = vmatprep.subr.bf16.mxu0 %v3931
      %3969 = vmatpush1.bf16.msra.mxu0 %v3928
      %3970 = vmatprep.subr.bf16.mxu0 0
      %3971 = vmatpush2.bf16.msra.mxu0 0
      %3972 = vmatprep.subr.bf16.mxu0 0
      %3973 = vmatpush2.bf16.msra.mxu0 0
      %3974 = vmatprep.subr.bf16.mxu0 0
      %3975 = vmatpush2.bf16.msra.mxu0 0
      %3976 = vmatprep.subr.bf16.mxu0 0
      %3977 = vmatpush2.bf16.msra.mxu0 0
      %3978 = vmatprep.subr.bf16.mxu0 0
      %3979 = vmatpush2.bf16.msra.mxu0 0
      %3980 = vmatprep.subr.bf16.mxu0 0
      %3981 = vmatpush2.bf16.msra.mxu0 0
      %3982 = vmatprep.subr.bf16.mxu0 0
      %3983 = vmatpush2.bf16.msra.mxu0 0
      %3984 = vmatprep.subr.bf16.mxu0 0
      %3985 = vmatpush2.bf16.msra.mxu0 0
      %3986 = vmatprep.mubr.bf16.mxu0 0
      %3987 = vmatmul.mubr.bf16.gmra.mxu0 %v3925
      %v3988 = vpop.f32.mrf.mxu0
      %v3989 = vadd.f32 0.0, %v3988
      %v3990 = vpop.f32.mrf.mxu0
      %v3991 = vadd.f32 0.0, %v3990
      %v3992 = vpop.f32.mrf.mxu0
      %v3993 = vpop.f32.mrf.mxu0
      %3994 = vdwg.mxu0
      %3995 = vmatprep.subr.bf16.mxu0 0
      %3996 = vmatpush1.bf16.msra.mxu0 0
      %3997 = vmatprep.subr.bf16.mxu0 0
      %3998 = vmatpush1.bf16.msra.mxu0 0
      %3999 = vmatprep.subr.bf16.mxu0 0
      %4000 = vmatpush1.bf16.msra.mxu0 0
      %4001 = vmatprep.subr.bf16.mxu0 0
      %4002 = vmatpush1.bf16.msra.mxu0 0
      %4003 = vmatprep.subr.bf16.mxu0 0
      %4004 = vmatpush1.bf16.msra.mxu0 0
      %4005 = vmatprep.subr.bf16.mxu0 0
      %4006 = vmatpush1.bf16.msra.mxu0 0
      %4007 = vmatprep.subr.bf16.mxu0 0
      %4008 = vmatpush1.bf16.msra.mxu0 0
      %4009 = vmatprep.subr.bf16.mxu0 %v3937
      %4010 = vmatpush1.bf16.msra.mxu0 %v3934
      %4011 = vmatprep.subr.bf16.mxu0 0
      %4012 = vmatpush2.bf16.msra.mxu0 0
      %4013 = vmatprep.subr.bf16.mxu0 0
      %4014 = vmatpush2.bf16.msra.mxu0 0
      %4015 = vmatprep.subr.bf16.mxu0 0
      %4016 = vmatpush2.bf16.msra.mxu0 0
      %4017 = vmatprep.subr.bf16.mxu0 0
      %4018 = vmatpush2.bf16.msra.mxu0 0
      %4019 = vmatprep.subr.bf16.mxu0 0
      %4020 = vmatpush2.bf16.msra.mxu0 0
      %4021 = vmatprep.subr.bf16.mxu0 0
      %4022 = vmatpush2.bf16.msra.mxu0 0
      %4023 = vmatprep.subr.bf16.mxu0 0
      %4024 = vmatpush2.bf16.msra.mxu0 0
      %4025 = vmatprep.subr.bf16.mxu0 0
      %4026 = vmatpush2.bf16.msra.mxu0 0
      %4027 = vmatprep.mubr.bf16.mxu0 0
      %4028 = vmatmul.mubr.bf16.gmra.mxu0 %v3925
      %v4029 = vpop.f32.mrf.mxu0
      %v4030 = vadd.f32 0.0, %v4029
      %v4031 = vpop.f32.mrf.mxu0
      %v4032 = vadd.f32 0.0, %v4031
      %v4033 = vpop.f32.mrf.mxu0
      %v4034 = vpop.f32.mrf.mxu0
      %4035 = vdwg.mxu0
      %4036 = vmatprep.subr.bf16.mxu0 0
      %4037 = vmatpush1.bf16.msra.mxu0 0
      %4038 = vmatprep.subr.bf16.mxu0 0
      %4039 = vmatpush1.bf16.msra.mxu0 0
      %4040 = vmatprep.subr.bf16.mxu0 0
      %4041 = vmatpush1.bf16.msra.mxu0 0
      %4042 = vmatprep.subr.bf16.mxu0 0
      %4043 = vmatpush1.bf16.msra.mxu0 0
      %4044 = vmatprep.subr.bf16.mxu0 0
      %4045 = vmatpush1.bf16.msra.mxu0 0
      %4046 = vmatprep.subr.bf16.mxu0 0
      %4047 = vmatpush1.bf16.msra.mxu0 0
      %4048 = vmatprep.subr.bf16.mxu0 0
      %4049 = vmatpush1.bf16.msra.mxu0 0
      %4050 = vmatprep.subr.bf16.mxu0 %v3943
      %4051 = vmatpush1.bf16.msra.mxu0 %v3940
      %4052 = vmatprep.subr.bf16.mxu0 0
      %4053 = vmatpush2.bf16.msra.mxu0 0
      %4054 = vmatprep.subr.bf16.mxu0 0
      %4055 = vmatpush2.bf16.msra.mxu0 0
      %4056 = vmatprep.subr.bf16.mxu0 0
      %4057 = vmatpush2.bf16.msra.mxu0 0
      %4058 = vmatprep.subr.bf16.mxu0 0
      %4059 = vmatpush2.bf16.msra.mxu0 0
      %4060 = vmatprep.subr.bf16.mxu0 0
      %4061 = vmatpush2.bf16.msra.mxu0 0
      %4062 = vmatprep.subr.bf16.mxu0 0
      %4063 = vmatpush2.bf16.msra.mxu0 0
      %4064 = vmatprep.subr.bf16.mxu0 0
      %4065 = vmatpush2.bf16.msra.mxu0 0
      %4066 = vmatprep.subr.bf16.mxu0 0
      %4067 = vmatpush2.bf16.msra.mxu0 0
      %4068 = vmatprep.mubr.bf16.mxu0 0
      %4069 = vmatmul.mubr.bf16.gmra.mxu0 %v3925
      %v4070 = vpop.f32.mrf.mxu0
      %v4071 = vadd.f32 0.0, %v4070
      %v4072 = vpop.f32.mrf.mxu0
      %v4073 = vadd.f32 0.0, %v4072
      %v4074 = vpop.f32.mrf.mxu0
      %v4075 = vpop.f32.mrf.mxu0
      %4076 = vdwg.mxu0
      %4077 = vmatprep.subr.bf16.mxu0 0
      %4078 = vmatpush1.bf16.msra.mxu0 0
      %4079 = vmatprep.subr.bf16.mxu0 0
      %4080 = vmatpush1.bf16.msra.mxu0 0
      %4081 = vmatprep.subr.bf16.mxu0 0
      %4082 = vmatpush1.bf16.msra.mxu0 0
      %4083 = vmatprep.subr.bf16.mxu0 0
      %4084 = vmatpush1.bf16.msra.mxu0 0
      %4085 = vmatprep.subr.bf16.mxu0 0
      %4086 = vmatpush1.bf16.msra.mxu0 0
      %4087 = vmatprep.subr.bf16.mxu0 0
      %4088 = vmatpush1.bf16.msra.mxu0 0
      %4089 = vmatprep.subr.bf16.mxu0 0
      %4090 = vmatpush1.bf16.msra.mxu0 0
      %4091 = vmatprep.subr.bf16.mxu0 %v3949
      %4092 = vmatpush1.bf16.msra.mxu0 %v3946
      %4093 = vmatprep.subr.bf16.mxu0 0
      %4094 = vmatpush2.bf16.msra.mxu0 0
      %4095 = vmatprep.subr.bf16.mxu0 0
      %4096 = vmatpush2.bf16.msra.mxu0 0
      %4097 = vmatprep.subr.bf16.mxu0 0
      %4098 = vmatpush2.bf16.msra.mxu0 0
      %4099 = vmatprep.subr.bf16.mxu0 0
      %4100 = vmatpush2.bf16.msra.mxu0 0
      %4101 = vmatprep.subr.bf16.mxu0 0
      %4102 = vmatpush2.bf16.msra.mxu0 0
      %4103 = vmatprep.subr.bf16.mxu0 0
      %4104 = vmatpush2.bf16.msra.mxu0 0
      %4105 = vmatprep.subr.bf16.mxu0 0
      %4106 = vmatpush2.bf16.msra.mxu0 0
      %4107 = vmatprep.subr.bf16.mxu0 0
      %4108 = vmatpush2.bf16.msra.mxu0 0
      %4109 = vmatprep.mubr.bf16.mxu0 0
      %4110 = vmatmul.mubr.bf16.gmra.mxu0 %v3925
      %v4111 = vpop.f32.mrf.mxu0
      %v4112 = vadd.f32 0.0, %v4111
      %v4113 = vpop.f32.mrf.mxu0
      %v4114 = vadd.f32 0.0, %v4113
      %v4115 = vpop.f32.mrf.mxu0
      %v4116 = vpop.f32.mrf.mxu0
      %4117 = vdwg.mxu0
      %4118 = vmatprep.subr.bf16.mxu0 0
      %4119 = vmatpush1.bf16.msra.mxu0 0
      %4120 = vmatprep.subr.bf16.mxu0 0
      %4121 = vmatpush1.bf16.msra.mxu0 0
      %4122 = vmatprep.subr.bf16.mxu0 0
      %4123 = vmatpush1.bf16.msra.mxu0 0
      %4124 = vmatprep.subr.bf16.mxu0 0
      %4125 = vmatpush1.bf16.msra.mxu0 0
      %4126 = vmatprep.subr.bf16.mxu0 0
      %4127 = vmatpush1.bf16.msra.mxu0 0
      %4128 = vmatprep.subr.bf16.mxu0 0
      %4129 = vmatpush1.bf16.msra.mxu0 0
      %4130 = vmatprep.subr.bf16.mxu0 0
      %4131 = vmatpush1.bf16.msra.mxu0 0
      %4132 = vmatprep.subr.bf16.mxu0 0
      %4133 = vmatpush1.bf16.msra.mxu0 %v3952
      %4134 = vmatprep.subr.bf16.mxu0 0
      %4135 = vmatpush2.bf16.msra.mxu0 0
      %4136 = vmatprep.subr.bf16.mxu0 0
      %4137 = vmatpush2.bf16.msra.mxu0 0
      %4138 = vmatprep.subr.bf16.mxu0 0
      %4139 = vmatpush2.bf16.msra.mxu0 0
      %4140 = vmatprep.subr.bf16.mxu0 0
      %4141 = vmatpush2.bf16.msra.mxu0 0
      %4142 = vmatprep.subr.bf16.mxu0 0
      %4143 = vmatpush2.bf16.msra.mxu0 0
      %4144 = vmatprep.subr.bf16.mxu0 0
      %4145 = vmatpush2.bf16.msra.mxu0 0
      %4146 = vmatprep.subr.bf16.mxu0 0
      %4147 = vmatpush2.bf16.msra.mxu0 0
      %4148 = vmatprep.subr.bf16.mxu0 0
      %4149 = vmatpush2.bf16.msra.mxu0 0
      %4150 = vmatprep.mubr.bf16.mxu0 0
      %4151 = vmatmul.mubr.bf16.gmra.mxu0 %v3925
      %v4152 = vpop.f32.mrf.mxu0
      %v4153 = vadd.f32 0.0, %v4152
      %v4154 = vpop.f32.mrf.mxu0
      %v4155 = vpop.f32.mrf.mxu0
      %v4156 = vpop.f32.mrf.mxu0
      %4157 = vdwg.mxu0
      %v4158 = vadd.f32 %v3840, %v3989
      %v4159 = vadd.f32 %v3841, %v3991
      %v4160 = vadd.f32 %v3842, %v4030
      %v4161 = vadd.f32 %v3843, %v4032
      %v4162 = vadd.f32 %v3844, %v4071
      %v4163 = vadd.f32 %v3845, %v4073
      %v4164 = vadd.f32 %v3846, %v4112
      %v4165 = vadd.f32 %v3847, %v4114
      %v4166 = vadd.f32 %v3848, %v4153
      %v4167 = vld [vmem:[%s1646] sm:$0xff]
      %v4168 = vld [vmem:[%s1646 + $0x8] sm:$0xff]
      %v4169 = vld [vmem:[%s1646 + $0x10] sm:$0x3]
      %s4170 = scalar_lea.vmem %s1, 52
      %v4171 = vld [vmem:[%s4170] sm:$0xf]
      %v4175 = vcombine.high %v4167, %v4167
      %v4177 = vunpack.c.l.s4 1983009808
      %v4178 = vunpack.c.0.s8 %v4177
      %v4179 = vlaneseq
      %v4180 = vshrl.u32 %v4179, 7
      %v4181 = vsub.s32 %v4178, %v4180
      %v4182 = vrot.slane %v4167, %v4181
      %v4184 = vunpack.c.l.s4 1983009808
      %v4185 = vunpack.c.0.s8 %v4184
      %v4186 = vlaneseq
      %v4187 = vshrl.u32 %v4186, 7
      %v4188 = vsub.s32 %v4185, %v4187
      %v4189 = vrot.slane %v4175, %v4188
      %v4190 = vcombine.high %v4182, %v4182
      %v4191 = vcombine.high %v4189, %v4189
      %v4192 = vcombine.high %v4168, %v4168
      %v4194 = vunpack.c.l.s4 1983009808
      %v4195 = vunpack.c.0.s8 %v4194
      %v4196 = vlaneseq
      %v4197 = vshrl.u32 %v4196, 7
      %v4198 = vsub.s32 %v4195, %v4197
      %v4199 = vrot.slane %v4168, %v4198
      %v4201 = vunpack.c.l.s4 1983009808
      %v4202 = vunpack.c.0.s8 %v4201
      %v4203 = vlaneseq
      %v4204 = vshrl.u32 %v4203, 7
      %v4205 = vsub.s32 %v4202, %v4204
      %v4206 = vrot.slane %v4192, %v4205
      %v4207 = vcombine.high %v4199, %v4199
      %v4208 = vcombine.high %v4206, %v4206
      %v4210 = vunpack.c.l.s4 1983009808
      %v4211 = vunpack.c.0.s8 %v4210
      %v4212 = vlaneseq
      %v4213 = vshrl.u32 %v4212, 7
      %v4214 = vsub.s32 %v4211, %v4213
      %v4215 = vrot.slane %v4169, %v4214
      %4216 = vrot.lane.b32.xlu0 %v4182, 95
      %v4217 = vpop.permute.xlu0 %4216
      %4218 = vrot.lane.b32.xlu0 %v4190, 95
      %v4219 = vpop.permute.xlu0 %4218
      %4220 = vrot.lane.b32.xlu0 %v4189, 95
      %v4221 = vpop.permute.xlu0 %4220
      %4222 = vrot.lane.b32.xlu0 %v4191, 95
      %v4223 = vpop.permute.xlu0 %4222
      %4224 = vrot.lane.b32.xlu0 %v4199, 95
      %v4225 = vpop.permute.xlu0 %4224
      %4226 = vrot.lane.b32.xlu0 %v4207, 95
      %v4227 = vpop.permute.xlu0 %4226
      %4228 = vrot.lane.b32.xlu0 %v4206, 95
      %v4229 = vpop.permute.xlu0 %4228
      %4230 = vrot.lane.b32.xlu0 %v4208, 95
      %v4231 = vpop.permute.xlu0 %4230
      %4232 = vrot.lane.b32.xlu0 %v4215, 95
      %v4233 = vpop.permute.xlu0 %4232
      %v4234 = vsel %vm2642, %v4217, %v4219
      %v4235 = vsel %vm2642, %v4219, %v4221
      %v4236 = vsel %vm2642, %v4221, %v4223
      %v4237 = vsel %vm2642, %v4223, %v4225
      %v4238 = vsel %vm2642, %v4225, %v4227
      %v4239 = vsel %vm2642, %v4227, %v4229
      %v4240 = vsel %vm2642, %v4229, %v4231
      %v4241 = vsel %vm2642, %v4231, %v4233
      %v4243 = vsel %vm199, %v4171, 0
      %v4246 = vand.u32 %v4234, %v206
      %v4249 = vand.u32 %v4235, %v206
      %v4252 = vand.u32 %v4236, %v206
      %v4255 = vand.u32 %v4237, %v206
      %v4258 = vand.u32 %v4238, %v206
      %v4261 = vand.u32 %v4239, %v206
      %v4264 = vand.u32 %v4240, %v206
      %v4267 = vand.u32 %v4241, %v206
      %v4270 = vand.u32 %v4233, %v206
      %4272 = vmatprep.subr.bf16.mxu0 0
      %4273 = vmatpush1.bf16.msra.mxu0 0
      %4274 = vmatprep.subr.bf16.mxu0 0
      %4275 = vmatpush1.bf16.msra.mxu0 0
      %4276 = vmatprep.subr.bf16.mxu0 0
      %4277 = vmatpush1.bf16.msra.mxu0 0
      %4278 = vmatprep.subr.bf16.mxu0 0
      %4279 = vmatpush1.bf16.msra.mxu0 0
      %4280 = vmatprep.subr.bf16.mxu0 0
      %4281 = vmatpush1.bf16.msra.mxu0 0
      %4282 = vmatprep.subr.bf16.mxu0 0
      %4283 = vmatpush1.bf16.msra.mxu0 0
      %4284 = vmatprep.subr.bf16.mxu0 0
      %4285 = vmatpush1.bf16.msra.mxu0 0
      %4286 = vmatprep.subr.bf16.mxu0 %v4249
      %4287 = vmatpush1.bf16.msra.mxu0 %v4246
      %4288 = vmatprep.subr.bf16.mxu0 0
      %4289 = vmatpush2.bf16.msra.mxu0 0
      %4290 = vmatprep.subr.bf16.mxu0 0
      %4291 = vmatpush2.bf16.msra.mxu0 0
      %4292 = vmatprep.subr.bf16.mxu0 0
      %4293 = vmatpush2.bf16.msra.mxu0 0
      %4294 = vmatprep.subr.bf16.mxu0 0
      %4295 = vmatpush2.bf16.msra.mxu0 0
      %4296 = vmatprep.subr.bf16.mxu0 0
      %4297 = vmatpush2.bf16.msra.mxu0 0
      %4298 = vmatprep.subr.bf16.mxu0 0
      %4299 = vmatpush2.bf16.msra.mxu0 0
      %4300 = vmatprep.subr.bf16.mxu0 0
      %4301 = vmatpush2.bf16.msra.mxu0 0
      %4302 = vmatprep.subr.bf16.mxu0 0
      %4303 = vmatpush2.bf16.msra.mxu0 0
      %4304 = vmatprep.mubr.bf16.mxu0 0
      %4305 = vmatmul.mubr.bf16.gmra.mxu0 %v4243
      %v4306 = vpop.f32.mrf.mxu0
      %v4307 = vadd.f32 0.0, %v4306
      %v4308 = vpop.f32.mrf.mxu0
      %v4309 = vadd.f32 0.0, %v4308
      %v4310 = vpop.f32.mrf.mxu0
      %v4311 = vpop.f32.mrf.mxu0
      %4312 = vdwg.mxu0
      %4313 = vmatprep.subr.bf16.mxu0 0
      %4314 = vmatpush1.bf16.msra.mxu0 0
      %4315 = vmatprep.subr.bf16.mxu0 0
      %4316 = vmatpush1.bf16.msra.mxu0 0
      %4317 = vmatprep.subr.bf16.mxu0 0
      %4318 = vmatpush1.bf16.msra.mxu0 0
      %4319 = vmatprep.subr.bf16.mxu0 0
      %4320 = vmatpush1.bf16.msra.mxu0 0
      %4321 = vmatprep.subr.bf16.mxu0 0
      %4322 = vmatpush1.bf16.msra.mxu0 0
      %4323 = vmatprep.subr.bf16.mxu0 0
      %4324 = vmatpush1.bf16.msra.mxu0 0
      %4325 = vmatprep.subr.bf16.mxu0 0
      %4326 = vmatpush1.bf16.msra.mxu0 0
      %4327 = vmatprep.subr.bf16.mxu0 %v4255
      %4328 = vmatpush1.bf16.msra.mxu0 %v4252
      %4329 = vmatprep.subr.bf16.mxu0 0
      %4330 = vmatpush2.bf16.msra.mxu0 0
      %4331 = vmatprep.subr.bf16.mxu0 0
      %4332 = vmatpush2.bf16.msra.mxu0 0
      %4333 = vmatprep.subr.bf16.mxu0 0
      %4334 = vmatpush2.bf16.msra.mxu0 0
      %4335 = vmatprep.subr.bf16.mxu0 0
      %4336 = vmatpush2.bf16.msra.mxu0 0
      %4337 = vmatprep.subr.bf16.mxu0 0
      %4338 = vmatpush2.bf16.msra.mxu0 0
      %4339 = vmatprep.subr.bf16.mxu0 0
      %4340 = vmatpush2.bf16.msra.mxu0 0
      %4341 = vmatprep.subr.bf16.mxu0 0
      %4342 = vmatpush2.bf16.msra.mxu0 0
      %4343 = vmatprep.subr.bf16.mxu0 0
      %4344 = vmatpush2.bf16.msra.mxu0 0
      %4345 = vmatprep.mubr.bf16.mxu0 0
      %4346 = vmatmul.mubr.bf16.gmra.mxu0 %v4243
      %v4347 = vpop.f32.mrf.mxu0
      %v4348 = vadd.f32 0.0, %v4347
      %v4349 = vpop.f32.mrf.mxu0
      %v4350 = vadd.f32 0.0, %v4349
      %v4351 = vpop.f32.mrf.mxu0
      %v4352 = vpop.f32.mrf.mxu0
      %4353 = vdwg.mxu0
      %4354 = vmatprep.subr.bf16.mxu0 0
      %4355 = vmatpush1.bf16.msra.mxu0 0
      %4356 = vmatprep.subr.bf16.mxu0 0
      %4357 = vmatpush1.bf16.msra.mxu0 0
      %4358 = vmatprep.subr.bf16.mxu0 0
      %4359 = vmatpush1.bf16.msra.mxu0 0
      %4360 = vmatprep.subr.bf16.mxu0 0
      %4361 = vmatpush1.bf16.msra.mxu0 0
      %4362 = vmatprep.subr.bf16.mxu0 0
      %4363 = vmatpush1.bf16.msra.mxu0 0
      %4364 = vmatprep.subr.bf16.mxu0 0
      %4365 = vmatpush1.bf16.msra.mxu0 0
      %4366 = vmatprep.subr.bf16.mxu0 0
      %4367 = vmatpush1.bf16.msra.mxu0 0
      %4368 = vmatprep.subr.bf16.mxu0 %v4261
      %4369 = vmatpush1.bf16.msra.mxu0 %v4258
      %4370 = vmatprep.subr.bf16.mxu0 0
      %4371 = vmatpush2.bf16.msra.mxu0 0
      %4372 = vmatprep.subr.bf16.mxu0 0
      %4373 = vmatpush2.bf16.msra.mxu0 0
      %4374 = vmatprep.subr.bf16.mxu0 0
      %4375 = vmatpush2.bf16.msra.mxu0 0
      %4376 = vmatprep.subr.bf16.mxu0 0
      %4377 = vmatpush2.bf16.msra.mxu0 0
      %4378 = vmatprep.subr.bf16.mxu0 0
      %4379 = vmatpush2.bf16.msra.mxu0 0
      %4380 = vmatprep.subr.bf16.mxu0 0
      %4381 = vmatpush2.bf16.msra.mxu0 0
      %4382 = vmatprep.subr.bf16.mxu0 0
      %4383 = vmatpush2.bf16.msra.mxu0 0
      %4384 = vmatprep.subr.bf16.mxu0 0
      %4385 = vmatpush2.bf16.msra.mxu0 0
      %4386 = vmatprep.mubr.bf16.mxu0 0
      %4387 = vmatmul.mubr.bf16.gmra.mxu0 %v4243
      %v4388 = vpop.f32.mrf.mxu0
      %v4389 = vadd.f32 0.0, %v4388
      %v4390 = vpop.f32.mrf.mxu0
      %v4391 = vadd.f32 0.0, %v4390
      %v4392 = vpop.f32.mrf.mxu0
      %v4393 = vpop.f32.mrf.mxu0
      %4394 = vdwg.mxu0
      %4395 = vmatprep.subr.bf16.mxu0 0
      %4396 = vmatpush1.bf16.msra.mxu0 0
      %4397 = vmatprep.subr.bf16.mxu0 0
      %4398 = vmatpush1.bf16.msra.mxu0 0
      %4399 = vmatprep.subr.bf16.mxu0 0
      %4400 = vmatpush1.bf16.msra.mxu0 0
      %4401 = vmatprep.subr.bf16.mxu0 0
      %4402 = vmatpush1.bf16.msra.mxu0 0
      %4403 = vmatprep.subr.bf16.mxu0 0
      %4404 = vmatpush1.bf16.msra.mxu0 0
      %4405 = vmatprep.subr.bf16.mxu0 0
      %4406 = vmatpush1.bf16.msra.mxu0 0
      %4407 = vmatprep.subr.bf16.mxu0 0
      %4408 = vmatpush1.bf16.msra.mxu0 0
      %4409 = vmatprep.subr.bf16.mxu0 %v4267
      %4410 = vmatpush1.bf16.msra.mxu0 %v4264
      %4411 = vmatprep.subr.bf16.mxu0 0
      %4412 = vmatpush2.bf16.msra.mxu0 0
      %4413 = vmatprep.subr.bf16.mxu0 0
      %4414 = vmatpush2.bf16.msra.mxu0 0
      %4415 = vmatprep.subr.bf16.mxu0 0
      %4416 = vmatpush2.bf16.msra.mxu0 0
      %4417 = vmatprep.subr.bf16.mxu0 0
      %4418 = vmatpush2.bf16.msra.mxu0 0
      %4419 = vmatprep.subr.bf16.mxu0 0
      %4420 = vmatpush2.bf16.msra.mxu0 0
      %4421 = vmatprep.subr.bf16.mxu0 0
      %4422 = vmatpush2.bf16.msra.mxu0 0
      %4423 = vmatprep.subr.bf16.mxu0 0
      %4424 = vmatpush2.bf16.msra.mxu0 0
      %4425 = vmatprep.subr.bf16.mxu0 0
      %4426 = vmatpush2.bf16.msra.mxu0 0
      %4427 = vmatprep.mubr.bf16.mxu0 0
      %4428 = vmatmul.mubr.bf16.gmra.mxu0 %v4243
      %v4429 = vpop.f32.mrf.mxu0
      %v4430 = vadd.f32 0.0, %v4429
      %v4431 = vpop.f32.mrf.mxu0
      %v4432 = vadd.f32 0.0, %v4431
      %v4433 = vpop.f32.mrf.mxu0
      %v4434 = vpop.f32.mrf.mxu0
      %4435 = vdwg.mxu0
      %4436 = vmatprep.subr.bf16.mxu0 0
      %4437 = vmatpush1.bf16.msra.mxu0 0
      %4438 = vmatprep.subr.bf16.mxu0 0
      %4439 = vmatpush1.bf16.msra.mxu0 0
      %4440 = vmatprep.subr.bf16.mxu0 0
      %4441 = vmatpush1.bf16.msra.mxu0 0
      %4442 = vmatprep.subr.bf16.mxu0 0
      %4443 = vmatpush1.bf16.msra.mxu0 0
      %4444 = vmatprep.subr.bf16.mxu0 0
      %4445 = vmatpush1.bf16.msra.mxu0 0
      %4446 = vmatprep.subr.bf16.mxu0 0
      %4447 = vmatpush1.bf16.msra.mxu0 0
      %4448 = vmatprep.subr.bf16.mxu0 0
      %4449 = vmatpush1.bf16.msra.mxu0 0
      %4450 = vmatprep.subr.bf16.mxu0 0
      %4451 = vmatpush1.bf16.msra.mxu0 %v4270
      %4452 = vmatprep.subr.bf16.mxu0 0
      %4453 = vmatpush2.bf16.msra.mxu0 0
      %4454 = vmatprep.subr.bf16.mxu0 0
      %4455 = vmatpush2.bf16.msra.mxu0 0
      %4456 = vmatprep.subr.bf16.mxu0 0
      %4457 = vmatpush2.bf16.msra.mxu0 0
      %4458 = vmatprep.subr.bf16.mxu0 0
      %4459 = vmatpush2.bf16.msra.mxu0 0
      %4460 = vmatprep.subr.bf16.mxu0 0
      %4461 = vmatpush2.bf16.msra.mxu0 0
      %4462 = vmatprep.subr.bf16.mxu0 0
      %4463 = vmatpush2.bf16.msra.mxu0 0
      %4464 = vmatprep.subr.bf16.mxu0 0
      %4465 = vmatpush2.bf16.msra.mxu0 0
      %4466 = vmatprep.subr.bf16.mxu0 0
      %4467 = vmatpush2.bf16.msra.mxu0 0
      %4468 = vmatprep.mubr.bf16.mxu0 0
      %4469 = vmatmul.mubr.bf16.gmra.mxu0 %v4243
      %v4470 = vpop.f32.mrf.mxu0
      %v4471 = vadd.f32 0.0, %v4470
      %v4472 = vpop.f32.mrf.mxu0
      %v4473 = vpop.f32.mrf.mxu0
      %v4474 = vpop.f32.mrf.mxu0
      %4475 = vdwg.mxu0
      %v4476 = vadd.f32 %v4158, %v4307
      %v4477 = vadd.f32 %v4159, %v4309
      %v4478 = vadd.f32 %v4160, %v4348
      %v4479 = vadd.f32 %v4161, %v4350
      %v4480 = vadd.f32 %v4162, %v4389
      %v4481 = vadd.f32 %v4163, %v4391
      %v4482 = vadd.f32 %v4164, %v4430
      %v4483 = vadd.f32 %v4165, %v4432
      %v4484 = vadd.f32 %v4166, %v4471
      %v4485 = vld [vmem:[%s1353] sm:$0xff]
      %v4486 = vld [vmem:[%s1353 + $0x8] sm:$0xff]
      %v4487 = vld [vmem:[%s1353 + $0x10] sm:$0x3]
      %s4488 = scalar_lea.vmem %s1, 56
      %v4489 = vld [vmem:[%s4488] sm:$0xf]
      %v4493 = vcombine.high %v4485, %v4485
      %v4495 = vunpack.c.l.s4 1983009808
      %v4496 = vunpack.c.0.s8 %v4495
      %v4497 = vlaneseq
      %v4498 = vshrl.u32 %v4497, 7
      %v4499 = vsub.s32 %v4496, %v4498
      %v4500 = vrot.slane %v4485, %v4499
      %v4502 = vunpack.c.l.s4 1983009808
      %v4503 = vunpack.c.0.s8 %v4502
      %v4504 = vlaneseq
      %v4505 = vshrl.u32 %v4504, 7
      %v4506 = vsub.s32 %v4503, %v4505
      %v4507 = vrot.slane %v4493, %v4506
      %v4508 = vcombine.high %v4500, %v4500
      %v4509 = vcombine.high %v4507, %v4507
      %v4510 = vcombine.high %v4486, %v4486
      %v4512 = vunpack.c.l.s4 1983009808
      %v4513 = vunpack.c.0.s8 %v4512
      %v4514 = vlaneseq
      %v4515 = vshrl.u32 %v4514, 7
      %v4516 = vsub.s32 %v4513, %v4515
      %v4517 = vrot.slane %v4486, %v4516
      %v4519 = vunpack.c.l.s4 1983009808
      %v4520 = vunpack.c.0.s8 %v4519
      %v4521 = vlaneseq
      %v4522 = vshrl.u32 %v4521, 7
      %v4523 = vsub.s32 %v4520, %v4522
      %v4524 = vrot.slane %v4510, %v4523
      %v4525 = vcombine.high %v4517, %v4517
      %v4526 = vcombine.high %v4524, %v4524
      %v4528 = vunpack.c.l.s4 1983009808
      %v4529 = vunpack.c.0.s8 %v4528
      %v4530 = vlaneseq
      %v4531 = vshrl.u32 %v4530, 7
      %v4532 = vsub.s32 %v4529, %v4531
      %v4533 = vrot.slane %v4487, %v4532
      %4534 = vrot.lane.b32.xlu0 %v4500, 94
      %v4535 = vpop.permute.xlu0 %4534
      %4536 = vrot.lane.b32.xlu0 %v4508, 94
      %v4537 = vpop.permute.xlu0 %4536
      %4538 = vrot.lane.b32.xlu0 %v4507, 94
      %v4539 = vpop.permute.xlu0 %4538
      %4540 = vrot.lane.b32.xlu0 %v4509, 94
      %v4541 = vpop.permute.xlu0 %4540
      %4542 = vrot.lane.b32.xlu0 %v4517, 94
      %v4543 = vpop.permute.xlu0 %4542
      %4544 = vrot.lane.b32.xlu0 %v4525, 94
      %v4545 = vpop.permute.xlu0 %4544
      %4546 = vrot.lane.b32.xlu0 %v4524, 94
      %v4547 = vpop.permute.xlu0 %4546
      %4548 = vrot.lane.b32.xlu0 %v4526, 94
      %v4549 = vpop.permute.xlu0 %4548
      %4550 = vrot.lane.b32.xlu0 %v4533, 94
      %v4551 = vpop.permute.xlu0 %4550
      %v4552 = vsel %vm3279, %v4535, %v4537
      %v4553 = vsel %vm3279, %v4537, %v4539
      %v4554 = vsel %vm3279, %v4539, %v4541
      %v4555 = vsel %vm3279, %v4541, %v4543
      %v4556 = vsel %vm3279, %v4543, %v4545
      %v4557 = vsel %vm3279, %v4545, %v4547
      %v4558 = vsel %vm3279, %v4547, %v4549
      %v4559 = vsel %vm3279, %v4549, %v4551
      %v4561 = vsel %vm199, %v4489, 0
      %v4564 = vand.u32 %v4552, %v206
      %v4567 = vand.u32 %v4553, %v206
      %v4570 = vand.u32 %v4554, %v206
      %v4573 = vand.u32 %v4555, %v206
      %v4576 = vand.u32 %v4556, %v206
      %v4579 = vand.u32 %v4557, %v206
      %v4582 = vand.u32 %v4558, %v206
      %v4585 = vand.u32 %v4559, %v206
      %v4588 = vand.u32 %v4551, %v206
      %4590 = vmatprep.subr.bf16.mxu0 0
      %4591 = vmatpush1.bf16.msra.mxu0 0
      %4592 = vmatprep.subr.bf16.mxu0 0
      %4593 = vmatpush1.bf16.msra.mxu0 0
      %4594 = vmatprep.subr.bf16.mxu0 0
      %4595 = vmatpush1.bf16.msra.mxu0 0
      %4596 = vmatprep.subr.bf16.mxu0 0
      %4597 = vmatpush1.bf16.msra.mxu0 0
      %4598 = vmatprep.subr.bf16.mxu0 0
      %4599 = vmatpush1.bf16.msra.mxu0 0
      %4600 = vmatprep.subr.bf16.mxu0 0
      %4601 = vmatpush1.bf16.msra.mxu0 0
      %4602 = vmatprep.subr.bf16.mxu0 0
      %4603 = vmatpush1.bf16.msra.mxu0 0
      %4604 = vmatprep.subr.bf16.mxu0 %v4567
      %4605 = vmatpush1.bf16.msra.mxu0 %v4564
      %4606 = vmatprep.subr.bf16.mxu0 0
      %4607 = vmatpush2.bf16.msra.mxu0 0
      %4608 = vmatprep.subr.bf16.mxu0 0
      %4609 = vmatpush2.bf16.msra.mxu0 0
      %4610 = vmatprep.subr.bf16.mxu0 0
      %4611 = vmatpush2.bf16.msra.mxu0 0
      %4612 = vmatprep.subr.bf16.mxu0 0
      %4613 = vmatpush2.bf16.msra.mxu0 0
      %4614 = vmatprep.subr.bf16.mxu0 0
      %4615 = vmatpush2.bf16.msra.mxu0 0
      %4616 = vmatprep.subr.bf16.mxu0 0
      %4617 = vmatpush2.bf16.msra.mxu0 0
      %4618 = vmatprep.subr.bf16.mxu0 0
      %4619 = vmatpush2.bf16.msra.mxu0 0
      %4620 = vmatprep.subr.bf16.mxu0 0
      %4621 = vmatpush2.bf16.msra.mxu0 0
      %4622 = vmatprep.mubr.bf16.mxu0 0
      %4623 = vmatmul.mubr.bf16.gmra.mxu0 %v4561
      %v4624 = vpop.f32.mrf.mxu0
      %v4625 = vadd.f32 0.0, %v4624
      %v4626 = vpop.f32.mrf.mxu0
      %v4627 = vadd.f32 0.0, %v4626
      %v4628 = vpop.f32.mrf.mxu0
      %v4629 = vpop.f32.mrf.mxu0
      %4630 = vdwg.mxu0
      %4631 = vmatprep.subr.bf16.mxu0 0
      %4632 = vmatpush1.bf16.msra.mxu0 0
      %4633 = vmatprep.subr.bf16.mxu0 0
      %4634 = vmatpush1.bf16.msra.mxu0 0
      %4635 = vmatprep.subr.bf16.mxu0 0
      %4636 = vmatpush1.bf16.msra.mxu0 0
      %4637 = vmatprep.subr.bf16.mxu0 0
      %4638 = vmatpush1.bf16.msra.mxu0 0
      %4639 = vmatprep.subr.bf16.mxu0 0
      %4640 = vmatpush1.bf16.msra.mxu0 0
      %4641 = vmatprep.subr.bf16.mxu0 0
      %4642 = vmatpush1.bf16.msra.mxu0 0
      %4643 = vmatprep.subr.bf16.mxu0 0
      %4644 = vmatpush1.bf16.msra.mxu0 0
      %4645 = vmatprep.subr.bf16.mxu0 %v4573
      %4646 = vmatpush1.bf16.msra.mxu0 %v4570
      %4647 = vmatprep.subr.bf16.mxu0 0
      %4648 = vmatpush2.bf16.msra.mxu0 0
      %4649 = vmatprep.subr.bf16.mxu0 0
      %4650 = vmatpush2.bf16.msra.mxu0 0
      %4651 = vmatprep.subr.bf16.mxu0 0
      %4652 = vmatpush2.bf16.msra.mxu0 0
      %4653 = vmatprep.subr.bf16.mxu0 0
      %4654 = vmatpush2.bf16.msra.mxu0 0
      %4655 = vmatprep.subr.bf16.mxu0 0
      %4656 = vmatpush2.bf16.msra.mxu0 0
      %4657 = vmatprep.subr.bf16.mxu0 0
      %4658 = vmatpush2.bf16.msra.mxu0 0
      %4659 = vmatprep.subr.bf16.mxu0 0
      %4660 = vmatpush2.bf16.msra.mxu0 0
      %4661 = vmatprep.subr.bf16.mxu0 0
      %4662 = vmatpush2.bf16.msra.mxu0 0
      %4663 = vmatprep.mubr.bf16.mxu0 0
      %4664 = vmatmul.mubr.bf16.gmra.mxu0 %v4561
      %v4665 = vpop.f32.mrf.mxu0
      %v4666 = vadd.f32 0.0, %v4665
      %v4667 = vpop.f32.mrf.mxu0
      %v4668 = vadd.f32 0.0, %v4667
      %v4669 = vpop.f32.mrf.mxu0
      %v4670 = vpop.f32.mrf.mxu0
      %4671 = vdwg.mxu0
      %4672 = vmatprep.subr.bf16.mxu0 0
      %4673 = vmatpush1.bf16.msra.mxu0 0
      %4674 = vmatprep.subr.bf16.mxu0 0
      %4675 = vmatpush1.bf16.msra.mxu0 0
      %4676 = vmatprep.subr.bf16.mxu0 0
      %4677 = vmatpush1.bf16.msra.mxu0 0
      %4678 = vmatprep.subr.bf16.mxu0 0
      %4679 = vmatpush1.bf16.msra.mxu0 0
      %4680 = vmatprep.subr.bf16.mxu0 0
      %4681 = vmatpush1.bf16.msra.mxu0 0
      %4682 = vmatprep.subr.bf16.mxu0 0
      %4683 = vmatpush1.bf16.msra.mxu0 0
      %4684 = vmatprep.subr.bf16.mxu0 0
      %4685 = vmatpush1.bf16.msra.mxu0 0
      %4686 = vmatprep.subr.bf16.mxu0 %v4579
      %4687 = vmatpush1.bf16.msra.mxu0 %v4576
      %4688 = vmatprep.subr.bf16.mxu0 0
      %4689 = vmatpush2.bf16.msra.mxu0 0
      %4690 = vmatprep.subr.bf16.mxu0 0
      %4691 = vmatpush2.bf16.msra.mxu0 0
      %4692 = vmatprep.subr.bf16.mxu0 0
      %4693 = vmatpush2.bf16.msra.mxu0 0
      %4694 = vmatprep.subr.bf16.mxu0 0
      %4695 = vmatpush2.bf16.msra.mxu0 0
      %4696 = vmatprep.subr.bf16.mxu0 0
      %4697 = vmatpush2.bf16.msra.mxu0 0
      %4698 = vmatprep.subr.bf16.mxu0 0
      %4699 = vmatpush2.bf16.msra.mxu0 0
      %4700 = vmatprep.subr.bf16.mxu0 0
      %4701 = vmatpush2.bf16.msra.mxu0 0
      %4702 = vmatprep.subr.bf16.mxu0 0
      %4703 = vmatpush2.bf16.msra.mxu0 0
      %4704 = vmatprep.mubr.bf16.mxu0 0
      %4705 = vmatmul.mubr.bf16.gmra.mxu0 %v4561
      %v4706 = vpop.f32.mrf.mxu0
      %v4707 = vadd.f32 0.0, %v4706
      %v4708 = vpop.f32.mrf.mxu0
      %v4709 = vadd.f32 0.0, %v4708
      %v4710 = vpop.f32.mrf.mxu0
      %v4711 = vpop.f32.mrf.mxu0
      %4712 = vdwg.mxu0
      %4713 = vmatprep.subr.bf16.mxu0 0
      %4714 = vmatpush1.bf16.msra.mxu0 0
      %4715 = vmatprep.subr.bf16.mxu0 0
      %4716 = vmatpush1.bf16.msra.mxu0 0
      %4717 = vmatprep.subr.bf16.mxu0 0
      %4718 = vmatpush1.bf16.msra.mxu0 0
      %4719 = vmatprep.subr.bf16.mxu0 0
      %4720 = vmatpush1.bf16.msra.mxu0 0
      %4721 = vmatprep.subr.bf16.mxu0 0
      %4722 = vmatpush1.bf16.msra.mxu0 0
      %4723 = vmatprep.subr.bf16.mxu0 0
      %4724 = vmatpush1.bf16.msra.mxu0 0
      %4725 = vmatprep.subr.bf16.mxu0 0
      %4726 = vmatpush1.bf16.msra.mxu0 0
      %4727 = vmatprep.subr.bf16.mxu0 %v4585
      %4728 = vmatpush1.bf16.msra.mxu0 %v4582
      %4729 = vmatprep.subr.bf16.mxu0 0
      %4730 = vmatpush2.bf16.msra.mxu0 0
      %4731 = vmatprep.subr.bf16.mxu0 0
      %4732 = vmatpush2.bf16.msra.mxu0 0
      %4733 = vmatprep.subr.bf16.mxu0 0
      %4734 = vmatpush2.bf16.msra.mxu0 0
      %4735 = vmatprep.subr.bf16.mxu0 0
      %4736 = vmatpush2.bf16.msra.mxu0 0
      %4737 = vmatprep.subr.bf16.mxu0 0
      %4738 = vmatpush2.bf16.msra.mxu0 0
      %4739 = vmatprep.subr.bf16.mxu0 0
      %4740 = vmatpush2.bf16.msra.mxu0 0
      %4741 = vmatprep.subr.bf16.mxu0 0
      %4742 = vmatpush2.bf16.msra.mxu0 0
      %4743 = vmatprep.subr.bf16.mxu0 0
      %4744 = vmatpush2.bf16.msra.mxu0 0
      %4745 = vmatprep.mubr.bf16.mxu0 0
      %4746 = vmatmul.mubr.bf16.gmra.mxu0 %v4561
      %v4747 = vpop.f32.mrf.mxu0
      %v4748 = vadd.f32 0.0, %v4747
      %v4749 = vpop.f32.mrf.mxu0
      %v4750 = vadd.f32 0.0, %v4749
      %v4751 = vpop.f32.mrf.mxu0
      %v4752 = vpop.f32.mrf.mxu0
      %4753 = vdwg.mxu0
      %4754 = vmatprep.subr.bf16.mxu0 0
      %4755 = vmatpush1.bf16.msra.mxu0 0
      %4756 = vmatprep.subr.bf16.mxu0 0
      %4757 = vmatpush1.bf16.msra.mxu0 0
      %4758 = vmatprep.subr.bf16.mxu0 0
      %4759 = vmatpush1.bf16.msra.mxu0 0
      %4760 = vmatprep.subr.bf16.mxu0 0
      %4761 = vmatpush1.bf16.msra.mxu0 0
      %4762 = vmatprep.subr.bf16.mxu0 0
      %4763 = vmatpush1.bf16.msra.mxu0 0
      %4764 = vmatprep.subr.bf16.mxu0 0
      %4765 = vmatpush1.bf16.msra.mxu0 0
      %4766 = vmatprep.subr.bf16.mxu0 0
      %4767 = vmatpush1.bf16.msra.mxu0 0
      %4768 = vmatprep.subr.bf16.mxu0 0
      %4769 = vmatpush1.bf16.msra.mxu0 %v4588
      %4770 = vmatprep.subr.bf16.mxu0 0
      %4771 = vmatpush2.bf16.msra.mxu0 0
      %4772 = vmatprep.subr.bf16.mxu0 0
      %4773 = vmatpush2.bf16.msra.mxu0 0
      %4774 = vmatprep.subr.bf16.mxu0 0
      %4775 = vmatpush2.bf16.msra.mxu0 0
      %4776 = vmatprep.subr.bf16.mxu0 0
      %4777 = vmatpush2.bf16.msra.mxu0 0
      %4778 = vmatprep.subr.bf16.mxu0 0
      %4779 = vmatpush2.bf16.msra.mxu0 0
      %4780 = vmatprep.subr.bf16.mxu0 0
      %4781 = vmatpush2.bf16.msra.mxu0 0
      %4782 = vmatprep.subr.bf16.mxu0 0
      %4783 = vmatpush2.bf16.msra.mxu0 0
      %4784 = vmatprep.subr.bf16.mxu0 0
      %4785 = vmatpush2.bf16.msra.mxu0 0
      %4786 = vmatprep.mubr.bf16.mxu0 0
      %4787 = vmatmul.mubr.bf16.gmra.mxu0 %v4561
      %v4788 = vpop.f32.mrf.mxu0
      %v4789 = vadd.f32 0.0, %v4788
      %v4790 = vpop.f32.mrf.mxu0
      %v4791 = vpop.f32.mrf.mxu0
      %v4792 = vpop.f32.mrf.mxu0
      %4793 = vdwg.mxu0
      %v4794 = vadd.f32 %v4476, %v4625
      %v4795 = vadd.f32 %v4477, %v4627
      %v4796 = vadd.f32 %v4478, %v4666
      %v4797 = vadd.f32 %v4479, %v4668
      %v4798 = vadd.f32 %v4480, %v4707
      %v4799 = vadd.f32 %v4481, %v4709
      %v4800 = vadd.f32 %v4482, %v4748
      %v4801 = vadd.f32 %v4483, %v4750
      %v4802 = vadd.f32 %v4484, %v4789
      %v4803 = vld [vmem:[%s1646] sm:$0xff]
      %v4804 = vld [vmem:[%s1646 + $0x8] sm:$0xff]
      %v4805 = vld [vmem:[%s1646 + $0x10] sm:$0x3]
      %s4806 = scalar_lea.vmem %s1, 60
      %v4807 = vld [vmem:[%s4806] sm:$0xf]
      %v4811 = vcombine.high %v4803, %v4803
      %v4813 = vunpack.c.l.s4 1983009808
      %v4814 = vunpack.c.0.s8 %v4813
      %v4815 = vlaneseq
      %v4816 = vshrl.u32 %v4815, 7
      %v4817 = vsub.s32 %v4814, %v4816
      %v4818 = vrot.slane %v4803, %v4817
      %v4820 = vunpack.c.l.s4 1983009808
      %v4821 = vunpack.c.0.s8 %v4820
      %v4822 = vlaneseq
      %v4823 = vshrl.u32 %v4822, 7
      %v4824 = vsub.s32 %v4821, %v4823
      %v4825 = vrot.slane %v4811, %v4824
      %v4826 = vcombine.high %v4818, %v4818
      %v4827 = vcombine.high %v4825, %v4825
      %v4828 = vcombine.high %v4804, %v4804
      %v4830 = vunpack.c.l.s4 1983009808
      %v4831 = vunpack.c.0.s8 %v4830
      %v4832 = vlaneseq
      %v4833 = vshrl.u32 %v4832, 7
      %v4834 = vsub.s32 %v4831, %v4833
      %v4835 = vrot.slane %v4804, %v4834
      %v4837 = vunpack.c.l.s4 1983009808
      %v4838 = vunpack.c.0.s8 %v4837
      %v4839 = vlaneseq
      %v4840 = vshrl.u32 %v4839, 7
      %v4841 = vsub.s32 %v4838, %v4840
      %v4842 = vrot.slane %v4828, %v4841
      %v4843 = vcombine.high %v4835, %v4835
      %v4844 = vcombine.high %v4842, %v4842
      %v4846 = vunpack.c.l.s4 1983009808
      %v4847 = vunpack.c.0.s8 %v4846
      %v4848 = vlaneseq
      %v4849 = vshrl.u32 %v4848, 7
      %v4850 = vsub.s32 %v4847, %v4849
      %v4851 = vrot.slane %v4805, %v4850
      %4852 = vrot.lane.b32.xlu0 %v4818, 94
      %v4853 = vpop.permute.xlu0 %4852
      %4854 = vrot.lane.b32.xlu0 %v4826, 94
      %v4855 = vpop.permute.xlu0 %4854
      %4856 = vrot.lane.b32.xlu0 %v4825, 94
      %v4857 = vpop.permute.xlu0 %4856
      %4858 = vrot.lane.b32.xlu0 %v4827, 94
      %v4859 = vpop.permute.xlu0 %4858
      %4860 = vrot.lane.b32.xlu0 %v4835, 94
      %v4861 = vpop.permute.xlu0 %4860
      %4862 = vrot.lane.b32.xlu0 %v4843, 94
      %v4863 = vpop.permute.xlu0 %4862
      %4864 = vrot.lane.b32.xlu0 %v4842, 94
      %v4865 = vpop.permute.xlu0 %4864
      %4866 = vrot.lane.b32.xlu0 %v4844, 94
      %v4867 = vpop.permute.xlu0 %4866
      %4868 = vrot.lane.b32.xlu0 %v4851, 94
      %v4869 = vpop.permute.xlu0 %4868
      %v4870 = vsel %vm3279, %v4853, %v4855
      %v4871 = vsel %vm3279, %v4855, %v4857
      %v4872 = vsel %vm3279, %v4857, %v4859
      %v4873 = vsel %vm3279, %v4859, %v4861
      %v4874 = vsel %vm3279, %v4861, %v4863
      %v4875 = vsel %vm3279, %v4863, %v4865
      %v4876 = vsel %vm3279, %v4865, %v4867
      %v4877 = vsel %vm3279, %v4867, %v4869
      %v4879 = vsel %vm199, %v4807, 0
      %v4882 = vand.u32 %v4870, %v206
      %v4885 = vand.u32 %v4871, %v206
      %v4888 = vand.u32 %v4872, %v206
      %v4891 = vand.u32 %v4873, %v206
      %v4894 = vand.u32 %v4874, %v206
      %v4897 = vand.u32 %v4875, %v206
      %v4900 = vand.u32 %v4876, %v206
      %v4903 = vand.u32 %v4877, %v206
      %v4906 = vand.u32 %v4869, %v206
      %4908 = vmatprep.subr.bf16.mxu0 0
      %4909 = vmatpush1.bf16.msra.mxu0 0
      %4910 = vmatprep.subr.bf16.mxu0 0
      %4911 = vmatpush1.bf16.msra.mxu0 0
      %4912 = vmatprep.subr.bf16.mxu0 0
      %4913 = vmatpush1.bf16.msra.mxu0 0
      %4914 = vmatprep.subr.bf16.mxu0 0
      %4915 = vmatpush1.bf16.msra.mxu0 0
      %4916 = vmatprep.subr.bf16.mxu0 0
      %4917 = vmatpush1.bf16.msra.mxu0 0
      %4918 = vmatprep.subr.bf16.mxu0 0
      %4919 = vmatpush1.bf16.msra.mxu0 0
      %4920 = vmatprep.subr.bf16.mxu0 0
      %4921 = vmatpush1.bf16.msra.mxu0 0
      %4922 = vmatprep.subr.bf16.mxu0 %v4885
      %4923 = vmatpush1.bf16.msra.mxu0 %v4882
      %4924 = vmatprep.subr.bf16.mxu0 0
      %4925 = vmatpush2.bf16.msra.mxu0 0
      %4926 = vmatprep.subr.bf16.mxu0 0
      %4927 = vmatpush2.bf16.msra.mxu0 0
      %4928 = vmatprep.subr.bf16.mxu0 0
      %4929 = vmatpush2.bf16.msra.mxu0 0
      %4930 = vmatprep.subr.bf16.mxu0 0
      %4931 = vmatpush2.bf16.msra.mxu0 0
      %4932 = vmatprep.subr.bf16.mxu0 0
      %4933 = vmatpush2.bf16.msra.mxu0 0
      %4934 = vmatprep.subr.bf16.mxu0 0
      %4935 = vmatpush2.bf16.msra.mxu0 0
      %4936 = vmatprep.subr.bf16.mxu0 0
      %4937 = vmatpush2.bf16.msra.mxu0 0
      %4938 = vmatprep.subr.bf16.mxu0 0
      %4939 = vmatpush2.bf16.msra.mxu0 0
      %4940 = vmatprep.mubr.bf16.mxu0 0
      %4941 = vmatmul.mubr.bf16.gmra.mxu0 %v4879
      %v4942 = vpop.f32.mrf.mxu0
      %v4943 = vadd.f32 0.0, %v4942
      %v4944 = vpop.f32.mrf.mxu0
      %v4945 = vadd.f32 0.0, %v4944
      %v4946 = vpop.f32.mrf.mxu0
      %v4947 = vpop.f32.mrf.mxu0
      %4948 = vdwg.mxu0
      %4949 = vmatprep.subr.bf16.mxu0 0
      %4950 = vmatpush1.bf16.msra.mxu0 0
      %4951 = vmatprep.subr.bf16.mxu0 0
      %4952 = vmatpush1.bf16.msra.mxu0 0
      %4953 = vmatprep.subr.bf16.mxu0 0
      %4954 = vmatpush1.bf16.msra.mxu0 0
      %4955 = vmatprep.subr.bf16.mxu0 0
      %4956 = vmatpush1.bf16.msra.mxu0 0
      %4957 = vmatprep.subr.bf16.mxu0 0
      %4958 = vmatpush1.bf16.msra.mxu0 0
      %4959 = vmatprep.subr.bf16.mxu0 0
      %4960 = vmatpush1.bf16.msra.mxu0 0
      %4961 = vmatprep.subr.bf16.mxu0 0
      %4962 = vmatpush1.bf16.msra.mxu0 0
      %4963 = vmatprep.subr.bf16.mxu0 %v4891
      %4964 = vmatpush1.bf16.msra.mxu0 %v4888
      %4965 = vmatprep.subr.bf16.mxu0 0
      %4966 = vmatpush2.bf16.msra.mxu0 0
      %4967 = vmatprep.subr.bf16.mxu0 0
      %4968 = vmatpush2.bf16.msra.mxu0 0
      %4969 = vmatprep.subr.bf16.mxu0 0
      %4970 = vmatpush2.bf16.msra.mxu0 0
      %4971 = vmatprep.subr.bf16.mxu0 0
      %4972 = vmatpush2.bf16.msra.mxu0 0
      %4973 = vmatprep.subr.bf16.mxu0 0
      %4974 = vmatpush2.bf16.msra.mxu0 0
      %4975 = vmatprep.subr.bf16.mxu0 0
      %4976 = vmatpush2.bf16.msra.mxu0 0
      %4977 = vmatprep.subr.bf16.mxu0 0
      %4978 = vmatpush2.bf16.msra.mxu0 0
      %4979 = vmatprep.subr.bf16.mxu0 0
      %4980 = vmatpush2.bf16.msra.mxu0 0
      %4981 = vmatprep.mubr.bf16.mxu0 0
      %4982 = vmatmul.mubr.bf16.gmra.mxu0 %v4879
      %v4983 = vpop.f32.mrf.mxu0
      %v4984 = vadd.f32 0.0, %v4983
      %v4985 = vpop.f32.mrf.mxu0
      %v4986 = vadd.f32 0.0, %v4985
      %v4987 = vpop.f32.mrf.mxu0
      %v4988 = vpop.f32.mrf.mxu0
      %4989 = vdwg.mxu0
      %4990 = vmatprep.subr.bf16.mxu0 0
      %4991 = vmatpush1.bf16.msra.mxu0 0
      %4992 = vmatprep.subr.bf16.mxu0 0
      %4993 = vmatpush1.bf16.msra.mxu0 0
      %4994 = vmatprep.subr.bf16.mxu0 0
      %4995 = vmatpush1.bf16.msra.mxu0 0
      %4996 = vmatprep.subr.bf16.mxu0 0
      %4997 = vmatpush1.bf16.msra.mxu0 0
      %4998 = vmatprep.subr.bf16.mxu0 0
      %4999 = vmatpush1.bf16.msra.mxu0 0
      %5000 = vmatprep.subr.bf16.mxu0 0
      %5001 = vmatpush1.bf16.msra.mxu0 0
      %5002 = vmatprep.subr.bf16.mxu0 0
      %5003 = vmatpush1.bf16.msra.mxu0 0
      %5004 = vmatprep.subr.bf16.mxu0 %v4897
      %5005 = vmatpush1.bf16.msra.mxu0 %v4894
      %5006 = vmatprep.subr.bf16.mxu0 0
      %5007 = vmatpush2.bf16.msra.mxu0 0
      %5008 = vmatprep.subr.bf16.mxu0 0
      %5009 = vmatpush2.bf16.msra.mxu0 0
      %5010 = vmatprep.subr.bf16.mxu0 0
      %5011 = vmatpush2.bf16.msra.mxu0 0
      %5012 = vmatprep.subr.bf16.mxu0 0
      %5013 = vmatpush2.bf16.msra.mxu0 0
      %5014 = vmatprep.subr.bf16.mxu0 0
      %5015 = vmatpush2.bf16.msra.mxu0 0
      %5016 = vmatprep.subr.bf16.mxu0 0
      %5017 = vmatpush2.bf16.msra.mxu0 0
      %5018 = vmatprep.subr.bf16.mxu0 0
      %5019 = vmatpush2.bf16.msra.mxu0 0
      %5020 = vmatprep.subr.bf16.mxu0 0
      %5021 = vmatpush2.bf16.msra.mxu0 0
      %5022 = vmatprep.mubr.bf16.mxu0 0
      %5023 = vmatmul.mubr.bf16.gmra.mxu0 %v4879
      %v5024 = vpop.f32.mrf.mxu0
      %v5025 = vadd.f32 0.0, %v5024
      %v5026 = vpop.f32.mrf.mxu0
      %v5027 = vadd.f32 0.0, %v5026
      %v5028 = vpop.f32.mrf.mxu0
      %v5029 = vpop.f32.mrf.mxu0
      %5030 = vdwg.mxu0
      %5031 = vmatprep.subr.bf16.mxu0 0
      %5032 = vmatpush1.bf16.msra.mxu0 0
      %5033 = vmatprep.subr.bf16.mxu0 0
      %5034 = vmatpush1.bf16.msra.mxu0 0
      %5035 = vmatprep.subr.bf16.mxu0 0
      %5036 = vmatpush1.bf16.msra.mxu0 0
      %5037 = vmatprep.subr.bf16.mxu0 0
      %5038 = vmatpush1.bf16.msra.mxu0 0
      %5039 = vmatprep.subr.bf16.mxu0 0
      %5040 = vmatpush1.bf16.msra.mxu0 0
      %5041 = vmatprep.subr.bf16.mxu0 0
      %5042 = vmatpush1.bf16.msra.mxu0 0
      %5043 = vmatprep.subr.bf16.mxu0 0
      %5044 = vmatpush1.bf16.msra.mxu0 0
      %5045 = vmatprep.subr.bf16.mxu0 %v4903
      %5046 = vmatpush1.bf16.msra.mxu0 %v4900
      %5047 = vmatprep.subr.bf16.mxu0 0
      %5048 = vmatpush2.bf16.msra.mxu0 0
      %5049 = vmatprep.subr.bf16.mxu0 0
      %5050 = vmatpush2.bf16.msra.mxu0 0
      %5051 = vmatprep.subr.bf16.mxu0 0
      %5052 = vmatpush2.bf16.msra.mxu0 0
      %5053 = vmatprep.subr.bf16.mxu0 0
      %5054 = vmatpush2.bf16.msra.mxu0 0
      %5055 = vmatprep.subr.bf16.mxu0 0
      %5056 = vmatpush2.bf16.msra.mxu0 0
      %5057 = vmatprep.subr.bf16.mxu0 0
      %5058 = vmatpush2.bf16.msra.mxu0 0
      %5059 = vmatprep.subr.bf16.mxu0 0
      %5060 = vmatpush2.bf16.msra.mxu0 0
      %5061 = vmatprep.subr.bf16.mxu0 0
      %5062 = vmatpush2.bf16.msra.mxu0 0
      %5063 = vmatprep.mubr.bf16.mxu0 0
      %5064 = vmatmul.mubr.bf16.gmra.mxu0 %v4879
      %v5065 = vpop.f32.mrf.mxu0
      %v5066 = vadd.f32 0.0, %v5065
      %v5067 = vpop.f32.mrf.mxu0
      %v5068 = vadd.f32 0.0, %v5067
      %v5069 = vpop.f32.mrf.mxu0
      %v5070 = vpop.f32.mrf.mxu0
      %5071 = vdwg.mxu0
      %5072 = vmatprep.subr.bf16.mxu0 0
      %5073 = vmatpush1.bf16.msra.mxu0 0
      %5074 = vmatprep.subr.bf16.mxu0 0
      %5075 = vmatpush1.bf16.msra.mxu0 0
      %5076 = vmatprep.subr.bf16.mxu0 0
      %5077 = vmatpush1.bf16.msra.mxu0 0
      %5078 = vmatprep.subr.bf16.mxu0 0
      %5079 = vmatpush1.bf16.msra.mxu0 0
      %5080 = vmatprep.subr.bf16.mxu0 0
      %5081 = vmatpush1.bf16.msra.mxu0 0
      %5082 = vmatprep.subr.bf16.mxu0 0
      %5083 = vmatpush1.bf16.msra.mxu0 0
      %5084 = vmatprep.subr.bf16.mxu0 0
      %5085 = vmatpush1.bf16.msra.mxu0 0
      %5086 = vmatprep.subr.bf16.mxu0 0
      %5087 = vmatpush1.bf16.msra.mxu0 %v4906
      %5088 = vmatprep.subr.bf16.mxu0 0
      %5089 = vmatpush2.bf16.msra.mxu0 0
      %5090 = vmatprep.subr.bf16.mxu0 0
      %5091 = vmatpush2.bf16.msra.mxu0 0
      %5092 = vmatprep.subr.bf16.mxu0 0
      %5093 = vmatpush2.bf16.msra.mxu0 0
      %5094 = vmatprep.subr.bf16.mxu0 0
      %5095 = vmatpush2.bf16.msra.mxu0 0
      %5096 = vmatprep.subr.bf16.mxu0 0
      %5097 = vmatpush2.bf16.msra.mxu0 0
      %5098 = vmatprep.subr.bf16.mxu0 0
      %5099 = vmatpush2.bf16.msra.mxu0 0
      %5100 = vmatprep.subr.bf16.mxu0 0
      %5101 = vmatpush2.bf16.msra.mxu0 0
      %5102 = vmatprep.subr.bf16.mxu0 0
      %5103 = vmatpush2.bf16.msra.mxu0 0
      %5104 = vmatprep.mubr.bf16.mxu0 0
      %5105 = vmatmul.mubr.bf16.gmra.mxu0 %v4879
      %v5106 = vpop.f32.mrf.mxu0
      %v5107 = vadd.f32 0.0, %v5106
      %v5108 = vpop.f32.mrf.mxu0
      %v5109 = vpop.f32.mrf.mxu0
      %v5110 = vpop.f32.mrf.mxu0
      %5111 = vdwg.mxu0
      %v5112 = vadd.f32 %v4794, %v4943
      %v5113 = vadd.f32 %v4795, %v4945
      %v5114 = vadd.f32 %v4796, %v4984
      %v5115 = vadd.f32 %v4797, %v4986
      %v5116 = vadd.f32 %v4798, %v5025
      %v5117 = vadd.f32 %v4799, %v5027
      %v5118 = vadd.f32 %v4800, %v5066
      %v5119 = vadd.f32 %v4801, %v5068
      %v5120 = vadd.f32 %v4802, %v5107
      %v5121 = vmul.f32 %v5112, 0.2
      %v5122 = vmul.f32 %v5113, 0.2
      %v5123 = vmul.f32 %v5114, 0.2
      %v5124 = vmul.f32 %v5115, 0.2
      %v5125 = vmul.f32 %v5116, 0.2
      %v5126 = vmul.f32 %v5117, 0.2
      %v5127 = vmul.f32 %v5118, 0.2
      %v5128 = vmul.f32 %v5119, 0.2
      %v5129 = vmul.f32 %v5120, 0.2
      %v5130 = vmax.f32 %v5112, %v5121
      %v5131 = vmax.f32 %v5113, %v5122
      %v5132 = vmax.f32 %v5114, %v5123
      %v5133 = vmax.f32 %v5115, %v5124
      %v5134 = vmax.f32 %v5116, %v5125
      %v5135 = vmax.f32 %v5117, %v5126
      %v5136 = vmax.f32 %v5118, %v5127
      %v5137 = vmax.f32 %v5119, %v5128
      %v5138 = vmax.f32 %v5120, %v5129
      %v5139 = vpack.c.bf16 %v5130, %v5130
      %v5140 = vpack.c.bf16 %v5131, %v5131
      %v5141 = vpack.c.bf16 %v5132, %v5132
      %v5142 = vpack.c.bf16 %v5133, %v5133
      %v5143 = vpack.c.bf16 %v5134, %v5134
      %v5144 = vpack.c.bf16 %v5135, %v5135
      %v5145 = vpack.c.bf16 %v5136, %v5136
      %v5146 = vpack.c.bf16 %v5137, %v5137
      %v5147 = vpack.c.bf16 %v5138, %v5138
      %v5157 = vunpack.c.l.b16 %v5139
      %v5158 = vunpack.c.l.b16 %v5140
      %v5159 = vunpack.c.l.b16 %v5141
      %v5160 = vunpack.c.l.b16 %v5142
      %v5161 = vunpack.c.l.b16 %v5143
      %v5162 = vunpack.c.l.b16 %v5144
      %v5163 = vunpack.c.l.b16 %v5145
      %v5164 = vunpack.c.l.b16 %v5146
      %v5165 = vunpack.c.l.b16 %v5147
      %v5166 = vpack.c.b16 %v5158, %v5157
      %v5167 = vpack.c.b16 %v5160, %v5159
      %v5168 = vpack.c.b16 %v5162, %v5161
      %v5169 = vpack.c.b16 %v5164, %v5163
      %v5170 = vpack.c.b16 %v5165, %v5165
      %5176 = vst [vmem:[%s143] sm:$0xff] %v5166
      %5177 = vst [vmem:[%s143 + $0x8] sm:$0xff] %v5167
      %5178 = vst [vmem:[%s143 + $0x10] sm:$0xff] %v5168
      %5179 = vst [vmem:[%s143 + $0x18] sm:$0xff] %v5169
      %vm5180 = vcmask 248832
      %5181 = vst.msk [vmem:[%s143 + $0x20] sm:$0xf] %vm5180, %v5170
      %p5182 = scmp.lt.s32.totalorder %s13, 1
      %s5183 = scalar_select %p5182, %s13, 1
      %s5184 = smul.addr %s5183, 9
      %s5185 = smul.addr %s5184, 4
      %s5186 = scalar_lea.vmem %s2, %s5185
      // Predicated region
      $region29: #{discriminator_forward.4} parent=27 // pred_check
        %p5187 = pneg %p78
      $region30: #{discriminator_forward.4} parent=27 // pred_check_branch
        %5189 = sbr.rel (%p5187) target = $region32
      $region31: #{discriminator_forward.4} parent=27 // pred_region
        _
      $region32: #{discriminator_forward.4} parent=27 // pred_fallthru
        _
    $region28: #{discriminator_forward.4} parent=5 // pred_fallthru
      _
    %p5190 = scmp.le.s32.totalorder 2, %s8
    // Predicated region
    $region33: #{discriminator_forward.4} parent=5 // pred_check
      %p5191 = pneg %p5190
    $region34: #{discriminator_forward.4} parent=5 // pred_check_branch
      %5193 = sbr.rel (%p5191) target = $region36
    $region35: #{discriminator_forward.4} parent=5 // pred_region
      %s5194 = ssub.s32 %s8, 2
      // Predicated region
      $region37: #{discriminator_forward.4} parent=35 // pred_check
        %p5195 = pneg %p84
      $region38: #{discriminator_forward.4} parent=35 // pred_check_branch
        %5197 = sbr.rel (%p5195) target = $region40
      $region39: #{discriminator_forward.4} parent=35 // pred_region
        %p5198 = scmp.lt.s32.totalorder %s14, 1
        %s5199 = scalar_select %p5198, %s14, 1
        %s5200 = smul.addr %s5199, 9
        %s5201 = smul.addr %s5200, 4
        %s5202 = scalar_lea.vmem %s2, %s5201
      $region40: #{discriminator_forward.4} parent=35 // pred_fallthru
        _
    $region36: #{discriminator_forward.4} parent=5 // pred_fallthru
      _
  $region6: #{discriminator_forward.4} parent=0 // loop_footer
    %s12 = sadd.s32 1, %s8
  $region7: #{discriminator_forward.4} parent=0 // loop_footer_branch
    %7 = sbr.rel target = $region3
  $region8: #{discriminator_forward.4} parent=0 // loop_exit
    _

// kernel: discriminator_forward.5
$region0: #{discriminator_forward.5}
  #allocation0 [shape = 'u32[]', space=smem, size = 0x4, offset = 0x4, fixed_abs, tag = 'smem constant byte address 0x4 - core index']
  #allocation1 [shape = 'u32[144,128]{1,0:T(1,128)}', space=vmem, size = 0x12000, scoped, tag = 'internal scratch']
  %s0 = inlined_call_operand.vmem [shape: bf16[4,8,578], index: 0, kind: input, shape index: {}]
  %s1 = inlined_call_operand.vmem [shape: bf16[16,16,8], index: 1, kind: input, shape index: {}]
  %s2 = inlined_call_operand.vmem [shape: f32[1,560], index: 2, kind: input, shape index: {}]
  %s3 = inlined_call_operand.vmem [shape: bf16[16,560], index: 3, kind: output, shape index: {}]
  %s4 = sld [smem:[#allocation0]]
  $region22: #{discriminator_forward.5} parent=0
    _
  %s6 = ssub.s32 1, %s4
  %s7 = scalar_select 0, %s6, %s4
  // Predicated region
  $region2: #{discriminator_forward.5} parent=0 // pred_check
    _
  $region3: #{discriminator_forward.5} parent=0 // pred_check_branch
    %9 = sbr.rel (0) target = $region5
  $region4: #{discriminator_forward.5} parent=0 // pred_region
    _
  $region5: #{discriminator_forward.5} parent=0 // pred_fallthru
    _
  // Predicated region
  $region6: #{discriminator_forward.5} parent=0 // pred_check
    _
  $region7: #{discriminator_forward.5} parent=0 // pred_check_branch
    %11 = sbr.rel (0) target = $region9
  $region8: #{discriminator_forward.5} parent=0 // pred_region
    _
  $region9: #{discriminator_forward.5} parent=0 // pred_fallthru
    _
  // Predicated region
  $region10: #{discriminator_forward.5} parent=0 // pred_check
    _
  $region11: #{discriminator_forward.5} parent=0 // pred_check_branch
    %13 = sbr.rel (0) target = $region13
  $region12: #{discriminator_forward.5} parent=0 // pred_region
    _
  $region13: #{discriminator_forward.5} parent=0 // pred_fallthru
    _
  %v15 = vld [vmem:[%s0] sm:$0xff]
  %v16 = vld [vmem:[%s0 + $0x8] sm:$0xff]
  %v17 = vld [vmem:[%s0 + $0x10] sm:$0xf]
  %v18 = vld [vmem:[%s1] sm:$0xf]
  %v19 = vld [vmem:[%s1 + $0x4] sm:$0xf]
  %s20 = scalar_lea.vmem %s0, 20
  %v21 = vld [vmem:[%s20] sm:$0xff]
  %v22 = vld [vmem:[%s20 + $0x8] sm:$0xff]
  %v23 = vld [vmem:[%s20 + $0x10] sm:$0xf]
  %s24 = scalar_lea.vmem %s1, 8
  %v25 = vld [vmem:[%s24] sm:$0xf]
  %v26 = vld [vmem:[%s24 + $0x4] sm:$0xf]
  %v29 = vunpack.c.l.b16 %v25
  %v30 = vunpack.c.l.b16 %v26
  %v31 = vpack.c.b16 %v30, %v29
  %v35 = vunpack.c.l.b16 %v21
  %v36 = vunpack.c.h.b16 %v21
  %v37 = vunpack.c.l.b16 %v22
  %v38 = vunpack.c.h.b16 %v22
  %v39 = vunpack.c.l.b16 %v23
  %v40 = vpack.c.b16 %v35, %v35
  %v41 = vpack.c.b16 %v36, %v36
  %v42 = vpack.c.b16 %v37, %v37
  %v43 = vpack.c.b16 %v38, %v38
  %v44 = vpack.c.b16 %v39, %v39
  %vm45 = vcmask 64512
  %v47 = vsel %vm45, %v31, 0
  %vm49 = vcmask 1043456
  %v51 = vsel %vm49, %v40, 0
  %v54 = vsel %vm49, %v41, 0
  %v57 = vsel %vm49, %v42, 0
  %v60 = vsel %vm49, %v43, 0
  %v63 = vsel %vm49, %v44, 0
  %65 = vmatprep.subr.bf16.mxu0 0
  %66 = vmatpush1.bf16.msra.mxu0 0
  %67 = vmatprep.subr.bf16.mxu0 0
  %68 = vmatpush1.bf16.msra.mxu0 0
  %69 = vmatprep.subr.bf16.mxu0 0
  %70 = vmatpush1.bf16.msra.mxu0 0
  %71 = vmatprep.subr.bf16.mxu0 0
  %72 = vmatpush1.bf16.msra.mxu0 0
  %73 = vmatprep.subr.bf16.mxu0 0
  %74 = vmatpush1.bf16.msra.mxu0 0
  %75 = vmatprep.subr.bf16.mxu0 0
  %76 = vmatpush1.bf16.msra.mxu0 0
  %77 = vmatprep.subr.bf16.mxu0 0
  %78 = vmatpush1.bf16.msra.mxu0 0
  %79 = vmatprep.subr.bf16.mxu0 %v54
  %80 = vmatpush1.bf16.msra.mxu0 %v51
  %81 = vmatprep.subr.bf16.mxu0 0
  %82 = vmatpush2.bf16.msra.mxu0 0
  %83 = vmatprep.subr.bf16.mxu0 0
  %84 = vmatpush2.bf16.msra.mxu0 0
  %85 = vmatprep.subr.bf16.mxu0 0
  %86 = vmatpush2.bf16.msra.mxu0 0
  %87 = vmatprep.subr.bf16.mxu0 0
  %88 = vmatpush2.bf16.msra.mxu0 0
  %89 = vmatprep.subr.bf16.mxu0 0
  %90 = vmatpush2.bf16.msra.mxu0 0
  %91 = vmatprep.subr.bf16.mxu0 0
  %92 = vmatpush2.bf16.msra.mxu0 0
  %93 = vmatprep.subr.bf16.mxu0 0
  %94 = vmatpush2.bf16.msra.mxu0 0
  %95 = vmatprep.subr.bf16.mxu0 0
  %96 = vmatpush2.bf16.msra.mxu0 0
  %97 = vmatprep.mubr.bf16.mxu0 0
  %98 = vmatmul.mubr.bf16.gmra.mxu0 %v47
  %v99 = vpop.f32.mrf.mxu0
  %v100 = vadd.f32 0.0, %v99
  %v101 = vpop.f32.mrf.mxu0
  %v102 = vadd.f32 0.0, %v101
  %v103 = vpop.f32.mrf.mxu0
  %v104 = vadd.f32 0.0, %v103
  %v105 = vpop.f32.mrf.mxu0
  %v106 = vadd.f32 0.0, %v105
  %107 = vdwg.mxu0
  %108 = vmatprep.subr.bf16.mxu0 0
  %109 = vmatpush1.bf16.msra.mxu0 0
  %110 = vmatprep.subr.bf16.mxu0 0
  %111 = vmatpush1.bf16.msra.mxu0 0
  %112 = vmatprep.subr.bf16.mxu0 0
  %113 = vmatpush1.bf16.msra.mxu0 0
  %114 = vmatprep.subr.bf16.mxu0 0
  %115 = vmatpush1.bf16.msra.mxu0 0
  %116 = vmatprep.subr.bf16.mxu0 0
  %117 = vmatpush1.bf16.msra.mxu0 0
  %118 = vmatprep.subr.bf16.mxu0 0
  %119 = vmatpush1.bf16.msra.mxu0 0
  %120 = vmatprep.subr.bf16.mxu0 0
  %121 = vmatpush1.bf16.msra.mxu0 0
  %122 = vmatprep.subr.bf16.mxu0 %v60
  %123 = vmatpush1.bf16.msra.mxu0 %v57
  %124 = vmatprep.subr.bf16.mxu0 0
  %125 = vmatpush2.bf16.msra.mxu0 0
  %126 = vmatprep.subr.bf16.mxu0 0
  %127 = vmatpush2.bf16.msra.mxu0 0
  %128 = vmatprep.subr.bf16.mxu0 0
  %129 = vmatpush2.bf16.msra.mxu0 0
  %130 = vmatprep.subr.bf16.mxu0 0
  %131 = vmatpush2.bf16.msra.mxu0 0
  %132 = vmatprep.subr.bf16.mxu0 0
  %133 = vmatpush2.bf16.msra.mxu0 0
  %134 = vmatprep.subr.bf16.mxu0 0
  %135 = vmatpush2.bf16.msra.mxu0 0
  %136 = vmatprep.subr.bf16.mxu0 0
  %137 = vmatpush2.bf16.msra.mxu0 0
  %138 = vmatprep.subr.bf16.mxu0 0
  %139 = vmatpush2.bf16.msra.mxu0 0
  %140 = vmatprep.mubr.bf16.mxu0 0
  %141 = vmatmul.mubr.bf16.gmra.mxu0 %v47
  %v142 = vpop.f32.mrf.mxu0
  %v143 = vadd.f32 0.0, %v142
  %v144 = vpop.f32.mrf.mxu0
  %v145 = vadd.f32 0.0, %v144
  %v146 = vpop.f32.mrf.mxu0
  %v147 = vadd.f32 0.0, %v146
  %v148 = vpop.f32.mrf.mxu0
  %v149 = vadd.f32 0.0, %v148
  %150 = vdwg.mxu0
  %151 = vmatprep.subr.bf16.mxu0 0
  %152 = vmatpush1.bf16.msra.mxu0 0
  %153 = vmatprep.subr.bf16.mxu0 0
  %154 = vmatpush1.bf16.msra.mxu0 0
  %155 = vmatprep.subr.bf16.mxu0 0
  %156 = vmatpush1.bf16.msra.mxu0 0
  %157 = vmatprep.subr.bf16.mxu0 0
  %158 = vmatpush1.bf16.msra.mxu0 0
  %159 = vmatprep.subr.bf16.mxu0 0
  %160 = vmatpush1.bf16.msra.mxu0 0
  %161 = vmatprep.subr.bf16.mxu0 0
  %162 = vmatpush1.bf16.msra.mxu0 0
  %163 = vmatprep.subr.bf16.mxu0 0
  %164 = vmatpush1.bf16.msra.mxu0 0
  %165 = vmatprep.subr.bf16.mxu0 0
  %166 = vmatpush1.bf16.msra.mxu0 %v63
  %167 = vmatprep.subr.bf16.mxu0 0
  %168 = vmatpush2.bf16.msra.mxu0 0
  %169 = vmatprep.subr.bf16.mxu0 0
  %170 = vmatpush2.bf16.msra.mxu0 0
  %171 = vmatprep.subr.bf16.mxu0 0
  %172 = vmatpush2.bf16.msra.mxu0 0
  %173 = vmatprep.subr.bf16.mxu0 0
  %174 = vmatpush2.bf16.msra.mxu0 0
  %175 = vmatprep.subr.bf16.mxu0 0
  %176 = vmatpush2.bf16.msra.mxu0 0
  %177 = vmatprep.subr.bf16.mxu0 0
  %178 = vmatpush2.bf16.msra.mxu0 0
  %179 = vmatprep.subr.bf16.mxu0 0
  %180 = vmatpush2.bf16.msra.mxu0 0
  %181 = vmatprep.subr.bf16.mxu0 0
  %182 = vmatpush2.bf16.msra.mxu0 0
  %183 = vmatprep.mubr.bf16.mxu0 0
  %184 = vmatmul.mubr.bf16.gmra.mxu0 %v47
  %v185 = vpop.f32.mrf.mxu0
  %v186 = vadd.f32 0.0, %v185
  %v187 = vpop.f32.mrf.mxu0
  %v188 = vpop.f32.mrf.mxu0
  %v189 = vadd.f32 0.0, %v188
  %v190 = vpop.f32.mrf.mxu0
  %191 = vdwg.mxu0
  %v194 = vunpack.c.l.b16 %v18
  %v195 = vunpack.c.l.b16 %v19
  %v196 = vpack.c.b16 %v195, %v194
  %v200 = vunpack.c.l.b16 %v15
  %v201 = vunpack.c.h.b16 %v15
  %v202 = vunpack.c.l.b16 %v16
  %v203 = vunpack.c.h.b16 %v16
  %v204 = vunpack.c.l.b16 %v17
  %v205 = vpack.c.b16 %v200, %v200
  %v206 = vpack.c.b16 %v201, %v201
  %v207 = vpack.c.b16 %v202, %v202
  %v208 = vpack.c.b16 %v203, %v203
  %v209 = vpack.c.b16 %v204, %v204
  %v211 = vsel %vm45, %v196, 0
  %v214 = vsel %vm49, %v205, 0
  %v217 = vsel %vm49, %v206, 0
  %v220 = vsel %vm49, %v207, 0
  %v223 = vsel %vm49, %v208, 0
  %v226 = vsel %vm49, %v209, 0
  %228 = vmatprep.subr.bf16.mxu0 0
  %229 = vmatpush1.bf16.msra.mxu0 0
  %230 = vmatprep.subr.bf16.mxu0 0
  %231 = vmatpush1.bf16.msra.mxu0 0
  %232 = vmatprep.subr.bf16.mxu0 0
  %233 = vmatpush1.bf16.msra.mxu0 0
  %234 = vmatprep.subr.bf16.mxu0 0
  %235 = vmatpush1.bf16.msra.mxu0 0
  %236 = vmatprep.subr.bf16.mxu0 0
  %237 = vmatpush1.bf16.msra.mxu0 0
  %238 = vmatprep.subr.bf16.mxu0 0
  %239 = vmatpush1.bf16.msra.mxu0 0
  %240 = vmatprep.subr.bf16.mxu0 0
  %241 = vmatpush1.bf16.msra.mxu0 0
  %242 = vmatprep.subr.bf16.mxu0 %v217
  %243 = vmatpush1.bf16.msra.mxu0 %v214
  %244 = vmatprep.subr.bf16.mxu0 0
  %245 = vmatpush2.bf16.msra.mxu0 0
  %246 = vmatprep.subr.bf16.mxu0 0
  %247 = vmatpush2.bf16.msra.mxu0 0
  %248 = vmatprep.subr.bf16.mxu0 0
  %249 = vmatpush2.bf16.msra.mxu0 0
  %250 = vmatprep.subr.bf16.mxu0 0
  %251 = vmatpush2.bf16.msra.mxu0 0
  %252 = vmatprep.subr.bf16.mxu0 0
  %253 = vmatpush2.bf16.msra.mxu0 0
  %254 = vmatprep.subr.bf16.mxu0 0
  %255 = vmatpush2.bf16.msra.mxu0 0
  %256 = vmatprep.subr.bf16.mxu0 0
  %257 = vmatpush2.bf16.msra.mxu0 0
  %258 = vmatprep.subr.bf16.mxu0 0
  %259 = vmatpush2.bf16.msra.mxu0 0
  %260 = vmatprep.mubr.bf16.mxu0 0
  %261 = vmatmul.mubr.bf16.gmra.mxu0 %v211
  %v262 = vpop.f32.mrf.mxu0
  %v263 = vadd.f32 %v100, %v262
  %v264 = vpop.f32.mrf.mxu0
  %v265 = vadd.f32 %v102, %v264
  %v266 = vpop.f32.mrf.mxu0
  %v267 = vadd.f32 %v104, %v266
  %v268 = vpop.f32.mrf.mxu0
  %v269 = vadd.f32 %v106, %v268
  %270 = vdwg.mxu0
  %271 = vmatprep.subr.bf16.mxu0 0
  %272 = vmatpush1.bf16.msra.mxu0 0
  %273 = vmatprep.subr.bf16.mxu0 0
  %274 = vmatpush1.bf16.msra.mxu0 0
  %275 = vmatprep.subr.bf16.mxu0 0
  %276 = vmatpush1.bf16.msra.mxu0 0
  %277 = vmatprep.subr.bf16.mxu0 0
  %278 = vmatpush1.bf16.msra.mxu0 0
  %279 = vmatprep.subr.bf16.mxu0 0
  %280 = vmatpush1.bf16.msra.mxu0 0
  %281 = vmatprep.subr.bf16.mxu0 0
  %282 = vmatpush1.bf16.msra.mxu0 0
  %283 = vmatprep.subr.bf16.mxu0 0
  %284 = vmatpush1.bf16.msra.mxu0 0
  %285 = vmatprep.subr.bf16.mxu0 %v223
  %286 = vmatpush1.bf16.msra.mxu0 %v220
  %287 = vmatprep.subr.bf16.mxu0 0
  %288 = vmatpush2.bf16.msra.mxu0 0
  %289 = vmatprep.subr.bf16.mxu0 0
  %290 = vmatpush2.bf16.msra.mxu0 0
  %291 = vmatprep.subr.bf16.mxu0 0
  %292 = vmatpush2.bf16.msra.mxu0 0
  %293 = vmatprep.subr.bf16.mxu0 0
  %294 = vmatpush2.bf16.msra.mxu0 0
  %295 = vmatprep.subr.bf16.mxu0 0
  %296 = vmatpush2.bf16.msra.mxu0 0
  %297 = vmatprep.subr.bf16.mxu0 0
  %298 = vmatpush2.bf16.msra.mxu0 0
  %299 = vmatprep.subr.bf16.mxu0 0
  %300 = vmatpush2.bf16.msra.mxu0 0
  %301 = vmatprep.subr.bf16.mxu0 0
  %302 = vmatpush2.bf16.msra.mxu0 0
  %303 = vmatprep.mubr.bf16.mxu0 0
  %304 = vmatmul.mubr.bf16.gmra.mxu0 %v211
  %v305 = vpop.f32.mrf.mxu0
  %v306 = vadd.f32 %v143, %v305
  %v307 = vpop.f32.mrf.mxu0
  %v308 = vadd.f32 %v145, %v307
  %v309 = vpop.f32.mrf.mxu0
  %v310 = vadd.f32 %v147, %v309
  %v311 = vpop.f32.mrf.mxu0
  %v312 = vadd.f32 %v149, %v311
  %313 = vdwg.mxu0
  %314 = vmatprep.subr.bf16.mxu0 0
  %315 = vmatpush1.bf16.msra.mxu0 0
  %316 = vmatprep.subr.bf16.mxu0 0
  %317 = vmatpush1.bf16.msra.mxu0 0
  %318 = vmatprep.subr.bf16.mxu0 0
  %319 = vmatpush1.bf16.msra.mxu0 0
  %320 = vmatprep.subr.bf16.mxu0 0
  %321 = vmatpush1.bf16.msra.mxu0 0
  %322 = vmatprep.subr.bf16.mxu0 0
  %323 = vmatpush1.bf16.msra.mxu0 0
  %324 = vmatprep.subr.bf16.mxu0 0
  %325 = vmatpush1.bf16.msra.mxu0 0
  %326 = vmatprep.subr.bf16.mxu0 0
  %327 = vmatpush1.bf16.msra.mxu0 0
  %328 = vmatprep.subr.bf16.mxu0 0
  %329 = vmatpush1.bf16.msra.mxu0 %v226
  %330 = vmatprep.subr.bf16.mxu0 0
  %331 = vmatpush2.bf16.msra.mxu0 0
  %332 = vmatprep.subr.bf16.mxu0 0
  %333 = vmatpush2.bf16.msra.mxu0 0
  %334 = vmatprep.subr.bf16.mxu0 0
  %335 = vmatpush2.bf16.msra.mxu0 0
  %336 = vmatprep.subr.bf16.mxu0 0
  %337 = vmatpush2.bf16.msra.mxu0 0
  %338 = vmatprep.subr.bf16.mxu0 0
  %339 = vmatpush2.bf16.msra.mxu0 0
  %340 = vmatprep.subr.bf16.mxu0 0
  %341 = vmatpush2.bf16.msra.mxu0 0
  %342 = vmatprep.subr.bf16.mxu0 0
  %343 = vmatpush2.bf16.msra.mxu0 0
  %344 = vmatprep.subr.bf16.mxu0 0
  %345 = vmatpush2.bf16.msra.mxu0 0
  %346 = vmatprep.mubr.bf16.mxu0 0
  %347 = vmatmul.mubr.bf16.gmra.mxu0 %v211
  %v348 = vpop.f32.mrf.mxu0
  %v349 = vadd.f32 %v186, %v348
  %v350 = vpop.f32.mrf.mxu0
  %v351 = vpop.f32.mrf.mxu0
  %v352 = vadd.f32 %v189, %v351
  %v353 = vpop.f32.mrf.mxu0
  %354 = vdwg.mxu0
  %s355 = scalar_lea.vmem %s1, 16
  %v356 = vld [vmem:[%s355] sm:$0xf]
  %v357 = vld [vmem:[%s355 + $0x4] sm:$0xf]
  %v360 = vunpack.c.l.b16 %v356
  %v361 = vunpack.c.l.b16 %v357
  %v362 = vpack.c.b16 %v361, %v360
  %363 = vrot.lane.b32.xlu0 %v205, 127
  %v364 = vpop.permute.xlu0 %363
  %365 = vrot.lane.b32.xlu0 %v206, 127
  %v366 = vpop.permute.xlu0 %365
  %367 = vrot.lane.b32.xlu0 %v207, 127
  %v368 = vpop.permute.xlu0 %367
  %369 = vrot.lane.b32.xlu0 %v208, 127
  %v370 = vpop.permute.xlu0 %369
  %371 = vrot.lane.b32.xlu0 %v209, 127
  %v372 = vpop.permute.xlu0 %371
  %vm373 = vcmask 1039360
  %v374 = vsel %vm373, %v364, %v366
  %v375 = vsel %vm373, %v366, %v368
  %v376 = vsel %vm373, %v368, %v370
  %v377 = vsel %vm373, %v370, %v372
  %v379 = vsel %vm45, %v362, 0
  %v382 = vsel %vm49, %v374, 0
  %v385 = vsel %vm49, %v375, 0
  %v388 = vsel %vm49, %v376, 0
  %v391 = vsel %vm49, %v377, 0
  %v394 = vsel %vm49, %v372, 0
  %396 = vmatprep.subr.bf16.mxu0 0
  %397 = vmatpush1.bf16.msra.mxu0 0
  %398 = vmatprep.subr.bf16.mxu0 0
  %399 = vmatpush1.bf16.msra.mxu0 0
  %400 = vmatprep.subr.bf16.mxu0 0
  %401 = vmatpush1.bf16.msra.mxu0 0
  %402 = vmatprep.subr.bf16.mxu0 0
  %403 = vmatpush1.bf16.msra.mxu0 0
  %404 = vmatprep.subr.bf16.mxu0 0
  %405 = vmatpush1.bf16.msra.mxu0 0
  %406 = vmatprep.subr.bf16.mxu0 0
  %407 = vmatpush1.bf16.msra.mxu0 0
  %408 = vmatprep.subr.bf16.mxu0 0
  %409 = vmatpush1.bf16.msra.mxu0 0
  %410 = vmatprep.subr.bf16.mxu0 %v385
  %411 = vmatpush1.bf16.msra.mxu0 %v382
  %412 = vmatprep.subr.bf16.mxu0 0
  %413 = vmatpush2.bf16.msra.mxu0 0
  %414 = vmatprep.subr.bf16.mxu0 0
  %415 = vmatpush2.bf16.msra.mxu0 0
  %416 = vmatprep.subr.bf16.mxu0 0
  %417 = vmatpush2.bf16.msra.mxu0 0
  %418 = vmatprep.subr.bf16.mxu0 0
  %419 = vmatpush2.bf16.msra.mxu0 0
  %420 = vmatprep.subr.bf16.mxu0 0
  %421 = vmatpush2.bf16.msra.mxu0 0
  %422 = vmatprep.subr.bf16.mxu0 0
  %423 = vmatpush2.bf16.msra.mxu0 0
  %424 = vmatprep.subr.bf16.mxu0 0
  %425 = vmatpush2.bf16.msra.mxu0 0
  %426 = vmatprep.subr.bf16.mxu0 0
  %427 = vmatpush2.bf16.msra.mxu0 0
  %428 = vmatprep.mubr.bf16.mxu0 0
  %429 = vmatmul.mubr.bf16.gmra.mxu0 %v379
  %v430 = vpop.f32.mrf.mxu0
  %v431 = vadd.f32 0.0, %v430
  %v432 = vpop.f32.mrf.mxu0
  %v433 = vadd.f32 0.0, %v432
  %v434 = vpop.f32.mrf.mxu0
  %v435 = vadd.f32 0.0, %v434
  %v436 = vpop.f32.mrf.mxu0
  %v437 = vadd.f32 0.0, %v436
  %438 = vdwg.mxu0
  %439 = vmatprep.subr.bf16.mxu0 0
  %440 = vmatpush1.bf16.msra.mxu0 0
  %441 = vmatprep.subr.bf16.mxu0 0
  %442 = vmatpush1.bf16.msra.mxu0 0
  %443 = vmatprep.subr.bf16.mxu0 0
  %444 = vmatpush1.bf16.msra.mxu0 0
  %445 = vmatprep.subr.bf16.mxu0 0
  %446 = vmatpush1.bf16.msra.mxu0 0
  %447 = vmatprep.subr.bf16.mxu0 0
  %448 = vmatpush1.bf16.msra.mxu0 0
  %449 = vmatprep.subr.bf16.mxu0 0
  %450 = vmatpush1.bf16.msra.mxu0 0
  %451 = vmatprep.subr.bf16.mxu0 0
  %452 = vmatpush1.bf16.msra.mxu0 0
  %453 = vmatprep.subr.bf16.mxu0 %v391
  %454 = vmatpush1.bf16.msra.mxu0 %v388
  %455 = vmatprep.subr.bf16.mxu0 0
  %456 = vmatpush2.bf16.msra.mxu0 0
  %457 = vmatprep.subr.bf16.mxu0 0
  %458 = vmatpush2.bf16.msra.mxu0 0
  %459 = vmatprep.subr.bf16.mxu0 0
  %460 = vmatpush2.bf16.msra.mxu0 0
  %461 = vmatprep.subr.bf16.mxu0 0
  %462 = vmatpush2.bf16.msra.mxu0 0
  %463 = vmatprep.subr.bf16.mxu0 0
  %464 = vmatpush2.bf16.msra.mxu0 0
  %465 = vmatprep.subr.bf16.mxu0 0
  %466 = vmatpush2.bf16.msra.mxu0 0
  %467 = vmatprep.subr.bf16.mxu0 0
  %468 = vmatpush2.bf16.msra.mxu0 0
  %469 = vmatprep.subr.bf16.mxu0 0
  %470 = vmatpush2.bf16.msra.mxu0 0
  %471 = vmatprep.mubr.bf16.mxu0 0
  %472 = vmatmul.mubr.bf16.gmra.mxu0 %v379
  %v473 = vpop.f32.mrf.mxu0
  %v474 = vadd.f32 0.0, %v473
  %v475 = vpop.f32.mrf.mxu0
  %v476 = vadd.f32 0.0, %v475
  %v477 = vpop.f32.mrf.mxu0
  %v478 = vadd.f32 0.0, %v477
  %v479 = vpop.f32.mrf.mxu0
  %v480 = vadd.f32 0.0, %v479
  %481 = vdwg.mxu0
  %482 = vmatprep.subr.bf16.mxu0 0
  %483 = vmatpush1.bf16.msra.mxu0 0
  %484 = vmatprep.subr.bf16.mxu0 0
  %485 = vmatpush1.bf16.msra.mxu0 0
  %486 = vmatprep.subr.bf16.mxu0 0
  %487 = vmatpush1.bf16.msra.mxu0 0
  %488 = vmatprep.subr.bf16.mxu0 0
  %489 = vmatpush1.bf16.msra.mxu0 0
  %490 = vmatprep.subr.bf16.mxu0 0
  %491 = vmatpush1.bf16.msra.mxu0 0
  %492 = vmatprep.subr.bf16.mxu0 0
  %493 = vmatpush1.bf16.msra.mxu0 0
  %494 = vmatprep.subr.bf16.mxu0 0
  %495 = vmatpush1.bf16.msra.mxu0 0
  %496 = vmatprep.subr.bf16.mxu0 0
  %497 = vmatpush1.bf16.msra.mxu0 %v394
  %498 = vmatprep.subr.bf16.mxu0 0
  %499 = vmatpush2.bf16.msra.mxu0 0
  %500 = vmatprep.subr.bf16.mxu0 0
  %501 = vmatpush2.bf16.msra.mxu0 0
  %502 = vmatprep.subr.bf16.mxu0 0
  %503 = vmatpush2.bf16.msra.mxu0 0
  %504 = vmatprep.subr.bf16.mxu0 0
  %505 = vmatpush2.bf16.msra.mxu0 0
  %506 = vmatprep.subr.bf16.mxu0 0
  %507 = vmatpush2.bf16.msra.mxu0 0
  %508 = vmatprep.subr.bf16.mxu0 0
  %509 = vmatpush2.bf16.msra.mxu0 0
  %510 = vmatprep.subr.bf16.mxu0 0
  %511 = vmatpush2.bf16.msra.mxu0 0
  %512 = vmatprep.subr.bf16.mxu0 0
  %513 = vmatpush2.bf16.msra.mxu0 0
  %514 = vmatprep.mubr.bf16.mxu0 0
  %515 = vmatmul.mubr.bf16.gmra.mxu0 %v379
  %v516 = vpop.f32.mrf.mxu0
  %v517 = vadd.f32 0.0, %v516
  %v518 = vpop.f32.mrf.mxu0
  %v519 = vpop.f32.mrf.mxu0
  %v520 = vadd.f32 0.0, %v519
  %v521 = vpop.f32.mrf.mxu0
  %522 = vdwg.mxu0
  %v523 = vadd.f32 %v263, %v431
  %v524 = vadd.f32 %v265, %v433
  %v525 = vadd.f32 %v306, %v474
  %v526 = vadd.f32 %v308, %v476
  %v527 = vadd.f32 %v349, %v517
  %v528 = vadd.f32 %v267, %v435
  %v529 = vadd.f32 %v269, %v437
  %v530 = vadd.f32 %v310, %v478
  %v531 = vadd.f32 %v312, %v480
  %v532 = vadd.f32 %v352, %v520
  %s533 = scalar_lea.vmem %s1, 24
  %v534 = vld [vmem:[%s533] sm:$0xf]
  %v535 = vld [vmem:[%s533 + $0x4] sm:$0xf]
  %v538 = vunpack.c.l.b16 %v534
  %v539 = vunpack.c.l.b16 %v535
  %v540 = vpack.c.b16 %v539, %v538
  %541 = vrot.lane.b32.xlu0 %v40, 127
  %v542 = vpop.permute.xlu0 %541
  %543 = vrot.lane.b32.xlu0 %v41, 127
  %v544 = vpop.permute.xlu0 %543
  %545 = vrot.lane.b32.xlu0 %v42, 127
  %v546 = vpop.permute.xlu0 %545
  %547 = vrot.lane.b32.xlu0 %v43, 127
  %v548 = vpop.permute.xlu0 %547
  %549 = vrot.lane.b32.xlu0 %v44, 127
  %v550 = vpop.permute.xlu0 %549
  %v551 = vsel %vm373, %v542, %v544
  %v552 = vsel %vm373, %v544, %v546
  %v553 = vsel %vm373, %v546, %v548
  %v554 = vsel %vm373, %v548, %v550
  %v556 = vsel %vm45, %v540, 0
  %v559 = vsel %vm49, %v551, 0
  %v562 = vsel %vm49, %v552, 0
  %v565 = vsel %vm49, %v553, 0
  %v568 = vsel %vm49, %v554, 0
  %v571 = vsel %vm49, %v550, 0
  %573 = vmatprep.subr.bf16.mxu0 0
  %574 = vmatpush1.bf16.msra.mxu0 0
  %575 = vmatprep.subr.bf16.mxu0 0
  %576 = vmatpush1.bf16.msra.mxu0 0
  %577 = vmatprep.subr.bf16.mxu0 0
  %578 = vmatpush1.bf16.msra.mxu0 0
  %579 = vmatprep.subr.bf16.mxu0 0
  %580 = vmatpush1.bf16.msra.mxu0 0
  %581 = vmatprep.subr.bf16.mxu0 0
  %582 = vmatpush1.bf16.msra.mxu0 0
  %583 = vmatprep.subr.bf16.mxu0 0
  %584 = vmatpush1.bf16.msra.mxu0 0
  %585 = vmatprep.subr.bf16.mxu0 0
  %586 = vmatpush1.bf16.msra.mxu0 0
  %587 = vmatprep.subr.bf16.mxu0 %v562
  %588 = vmatpush1.bf16.msra.mxu0 %v559
  %589 = vmatprep.subr.bf16.mxu0 0
  %590 = vmatpush2.bf16.msra.mxu0 0
  %591 = vmatprep.subr.bf16.mxu0 0
  %592 = vmatpush2.bf16.msra.mxu0 0
  %593 = vmatprep.subr.bf16.mxu0 0
  %594 = vmatpush2.bf16.msra.mxu0 0
  %595 = vmatprep.subr.bf16.mxu0 0
  %596 = vmatpush2.bf16.msra.mxu0 0
  %597 = vmatprep.subr.bf16.mxu0 0
  %598 = vmatpush2.bf16.msra.mxu0 0
  %599 = vmatprep.subr.bf16.mxu0 0
  %600 = vmatpush2.bf16.msra.mxu0 0
  %601 = vmatprep.subr.bf16.mxu0 0
  %602 = vmatpush2.bf16.msra.mxu0 0
  %603 = vmatprep.subr.bf16.mxu0 0
  %604 = vmatpush2.bf16.msra.mxu0 0
  %605 = vmatprep.mubr.bf16.mxu0 0
  %606 = vmatmul.mubr.bf16.gmra.mxu0 %v556
  %v607 = vpop.f32.mrf.mxu0
  %v608 = vadd.f32 0.0, %v607
  %v609 = vpop.f32.mrf.mxu0
  %v610 = vadd.f32 0.0, %v609
  %v611 = vpop.f32.mrf.mxu0
  %v612 = vadd.f32 0.0, %v611
  %v613 = vpop.f32.mrf.mxu0
  %v614 = vadd.f32 0.0, %v613
  %615 = vdwg.mxu0
  %616 = vmatprep.subr.bf16.mxu0 0
  %617 = vmatpush1.bf16.msra.mxu0 0
  %618 = vmatprep.subr.bf16.mxu0 0
  %619 = vmatpush1.bf16.msra.mxu0 0
  %620 = vmatprep.subr.bf16.mxu0 0
  %621 = vmatpush1.bf16.msra.mxu0 0
  %622 = vmatprep.subr.bf16.mxu0 0
  %623 = vmatpush1.bf16.msra.mxu0 0
  %624 = vmatprep.subr.bf16.mxu0 0
  %625 = vmatpush1.bf16.msra.mxu0 0
  %626 = vmatprep.subr.bf16.mxu0 0
  %627 = vmatpush1.bf16.msra.mxu0 0
  %628 = vmatprep.subr.bf16.mxu0 0
  %629 = vmatpush1.bf16.msra.mxu0 0
  %630 = vmatprep.subr.bf16.mxu0 %v568
  %631 = vmatpush1.bf16.msra.mxu0 %v565
  %632 = vmatprep.subr.bf16.mxu0 0
  %633 = vmatpush2.bf16.msra.mxu0 0
  %634 = vmatprep.subr.bf16.mxu0 0
  %635 = vmatpush2.bf16.msra.mxu0 0
  %636 = vmatprep.subr.bf16.mxu0 0
  %637 = vmatpush2.bf16.msra.mxu0 0
  %638 = vmatprep.subr.bf16.mxu0 0
  %639 = vmatpush2.bf16.msra.mxu0 0
  %640 = vmatprep.subr.bf16.mxu0 0
  %641 = vmatpush2.bf16.msra.mxu0 0
  %642 = vmatprep.subr.bf16.mxu0 0
  %643 = vmatpush2.bf16.msra.mxu0 0
  %644 = vmatprep.subr.bf16.mxu0 0
  %645 = vmatpush2.bf16.msra.mxu0 0
  %646 = vmatprep.subr.bf16.mxu0 0
  %647 = vmatpush2.bf16.msra.mxu0 0
  %648 = vmatprep.mubr.bf16.mxu0 0
  %649 = vmatmul.mubr.bf16.gmra.mxu0 %v556
  %v650 = vpop.f32.mrf.mxu0
  %v651 = vadd.f32 0.0, %v650
  %v652 = vpop.f32.mrf.mxu0
  %v653 = vadd.f32 0.0, %v652
  %v654 = vpop.f32.mrf.mxu0
  %v655 = vadd.f32 0.0, %v654
  %v656 = vpop.f32.mrf.mxu0
  %v657 = vadd.f32 0.0, %v656
  %658 = vdwg.mxu0
  %659 = vmatprep.subr.bf16.mxu0 0
  %660 = vmatpush1.bf16.msra.mxu0 0
  %661 = vmatprep.subr.bf16.mxu0 0
  %662 = vmatpush1.bf16.msra.mxu0 0
  %663 = vmatprep.subr.bf16.mxu0 0
  %664 = vmatpush1.bf16.msra.mxu0 0
  %665 = vmatprep.subr.bf16.mxu0 0
  %666 = vmatpush1.bf16.msra.mxu0 0
  %667 = vmatprep.subr.bf16.mxu0 0
  %668 = vmatpush1.bf16.msra.mxu0 0
  %669 = vmatprep.subr.bf16.mxu0 0
  %670 = vmatpush1.bf16.msra.mxu0 0
  %671 = vmatprep.subr.bf16.mxu0 0
  %672 = vmatpush1.bf16.msra.mxu0 0
  %673 = vmatprep.subr.bf16.mxu0 0
  %674 = vmatpush1.bf16.msra.mxu0 %v571
  %675 = vmatprep.subr.bf16.mxu0 0
  %676 = vmatpush2.bf16.msra.mxu0 0
  %677 = vmatprep.subr.bf16.mxu0 0
  %678 = vmatpush2.bf16.msra.mxu0 0
  %679 = vmatprep.subr.bf16.mxu0 0
  %680 = vmatpush2.bf16.msra.mxu0 0
  %681 = vmatprep.subr.bf16.mxu0 0
  %682 = vmatpush2.bf16.msra.mxu0 0
  %683 = vmatprep.subr.bf16.mxu0 0
  %684 = vmatpush2.bf16.msra.mxu0 0
  %685 = vmatprep.subr.bf16.mxu0 0
  %686 = vmatpush2.bf16.msra.mxu0 0
  %687 = vmatprep.subr.bf16.mxu0 0
  %688 = vmatpush2.bf16.msra.mxu0 0
  %689 = vmatprep.subr.bf16.mxu0 0
  %690 = vmatpush2.bf16.msra.mxu0 0
  %691 = vmatprep.mubr.bf16.mxu0 0
  %692 = vmatmul.mubr.bf16.gmra.mxu0 %v556
  %v693 = vpop.f32.mrf.mxu0
  %v694 = vadd.f32 0.0, %v693
  %v695 = vpop.f32.mrf.mxu0
  %v696 = vpop.f32.mrf.mxu0
  %v697 = vadd.f32 0.0, %v696
  %v698 = vpop.f32.mrf.mxu0
  %699 = vdwg.mxu0
  %v700 = vadd.f32 %v523, %v608
  %v701 = vadd.f32 %v524, %v610
  %v702 = vadd.f32 %v525, %v651
  %v703 = vadd.f32 %v526, %v653
  %v704 = vadd.f32 %v527, %v694
  %v705 = vadd.f32 %v528, %v612
  %v706 = vadd.f32 %v529, %v614
  %v707 = vadd.f32 %v530, %v655
  %v708 = vadd.f32 %v531, %v657
  %v709 = vadd.f32 %v532, %v697
  %s710 = scalar_lea.vmem %s0, 40
  %v711 = vld [vmem:[%s710] sm:$0xff]
  %v712 = vld [vmem:[%s710 + $0x8] sm:$0xff]
  %v713 = vld [vmem:[%s710 + $0x10] sm:$0xf]
  %s714 = scalar_lea.vmem %s1, 32
  %v715 = vld [vmem:[%s714] sm:$0xf]
  %v716 = vld [vmem:[%s714 + $0x4] sm:$0xf]
  %v719 = vunpack.c.l.b16 %v715
  %v720 = vunpack.c.l.b16 %v716
  %v721 = vpack.c.b16 %v720, %v719
  %v725 = vunpack.c.l.b16 %v711
  %v726 = vunpack.c.h.b16 %v711
  %v727 = vunpack.c.l.b16 %v712
  %v728 = vunpack.c.h.b16 %v712
  %v729 = vunpack.c.l.b16 %v713
  %v730 = vpack.c.b16 %v725, %v725
  %v731 = vpack.c.b16 %v726, %v726
  %v732 = vpack.c.b16 %v727, %v727
  %v733 = vpack.c.b16 %v728, %v728
  %v734 = vpack.c.b16 %v729, %v729
  %v736 = vsel %vm45, %v721, 0
  %v739 = vsel %vm49, %v730, 0
  %v742 = vsel %vm49, %v731, 0
  %v745 = vsel %vm49, %v732, 0
  %v748 = vsel %vm49, %v733, 0
  %v751 = vsel %vm49, %v734, 0
  %753 = vmatprep.subr.bf16.mxu0 0
  %754 = vmatpush1.bf16.msra.mxu0 0
  %755 = vmatprep.subr.bf16.mxu0 0
  %756 = vmatpush1.bf16.msra.mxu0 0
  %757 = vmatprep.subr.bf16.mxu0 0
  %758 = vmatpush1.bf16.msra.mxu0 0
  %759 = vmatprep.subr.bf16.mxu0 0
  %760 = vmatpush1.bf16.msra.mxu0 0
  %761 = vmatprep.subr.bf16.mxu0 0
  %762 = vmatpush1.bf16.msra.mxu0 0
  %763 = vmatprep.subr.bf16.mxu0 0
  %764 = vmatpush1.bf16.msra.mxu0 0
  %765 = vmatprep.subr.bf16.mxu0 0
  %766 = vmatpush1.bf16.msra.mxu0 0
  %767 = vmatprep.subr.bf16.mxu0 %v742
  %768 = vmatpush1.bf16.msra.mxu0 %v739
  %769 = vmatprep.subr.bf16.mxu0 0
  %770 = vmatpush2.bf16.msra.mxu0 0
  %771 = vmatprep.subr.bf16.mxu0 0
  %772 = vmatpush2.bf16.msra.mxu0 0
  %773 = vmatprep.subr.bf16.mxu0 0
  %774 = vmatpush2.bf16.msra.mxu0 0
  %775 = vmatprep.subr.bf16.mxu0 0
  %776 = vmatpush2.bf16.msra.mxu0 0
  %777 = vmatprep.subr.bf16.mxu0 0
  %778 = vmatpush2.bf16.msra.mxu0 0
  %779 = vmatprep.subr.bf16.mxu0 0
  %780 = vmatpush2.bf16.msra.mxu0 0
  %781 = vmatprep.subr.bf16.mxu0 0
  %782 = vmatpush2.bf16.msra.mxu0 0
  %783 = vmatprep.subr.bf16.mxu0 0
  %784 = vmatpush2.bf16.msra.mxu0 0
  %785 = vmatprep.mubr.bf16.mxu0 0
  %786 = vmatmul.mubr.bf16.gmra.mxu0 %v736
  %v787 = vpop.f32.mrf.mxu0
  %v788 = vadd.f32 0.0, %v787
  %v789 = vpop.f32.mrf.mxu0
  %v790 = vadd.f32 0.0, %v789
  %v791 = vpop.f32.mrf.mxu0
  %v792 = vadd.f32 0.0, %v791
  %v793 = vpop.f32.mrf.mxu0
  %v794 = vadd.f32 0.0, %v793
  %795 = vdwg.mxu0
  %796 = vmatprep.subr.bf16.mxu0 0
  %797 = vmatpush1.bf16.msra.mxu0 0
  %798 = vmatprep.subr.bf16.mxu0 0
  %799 = vmatpush1.bf16.msra.mxu0 0
  %800 = vmatprep.subr.bf16.mxu0 0
  %801 = vmatpush1.bf16.msra.mxu0 0
  %802 = vmatprep.subr.bf16.mxu0 0
  %803 = vmatpush1.bf16.msra.mxu0 0
  %804 = vmatprep.subr.bf16.mxu0 0
  %805 = vmatpush1.bf16.msra.mxu0 0
  %806 = vmatprep.subr.bf16.mxu0 0
  %807 = vmatpush1.bf16.msra.mxu0 0
  %808 = vmatprep.subr.bf16.mxu0 0
  %809 = vmatpush1.bf16.msra.mxu0 0
  %810 = vmatprep.subr.bf16.mxu0 %v748
  %811 = vmatpush1.bf16.msra.mxu0 %v745
  %812 = vmatprep.subr.bf16.mxu0 0
  %813 = vmatpush2.bf16.msra.mxu0 0
  %814 = vmatprep.subr.bf16.mxu0 0
  %815 = vmatpush2.bf16.msra.mxu0 0
  %816 = vmatprep.subr.bf16.mxu0 0
  %817 = vmatpush2.bf16.msra.mxu0 0
  %818 = vmatprep.subr.bf16.mxu0 0
  %819 = vmatpush2.bf16.msra.mxu0 0
  %820 = vmatprep.subr.bf16.mxu0 0
  %821 = vmatpush2.bf16.msra.mxu0 0
  %822 = vmatprep.subr.bf16.mxu0 0
  %823 = vmatpush2.bf16.msra.mxu0 0
  %824 = vmatprep.subr.bf16.mxu0 0
  %825 = vmatpush2.bf16.msra.mxu0 0
  %826 = vmatprep.subr.bf16.mxu0 0
  %827 = vmatpush2.bf16.msra.mxu0 0
  %828 = vmatprep.mubr.bf16.mxu0 0
  %829 = vmatmul.mubr.bf16.gmra.mxu0 %v736
  %v830 = vpop.f32.mrf.mxu0
  %v831 = vadd.f32 0.0, %v830
  %v832 = vpop.f32.mrf.mxu0
  %v833 = vadd.f32 0.0, %v832
  %v834 = vpop.f32.mrf.mxu0
  %v835 = vadd.f32 0.0, %v834
  %v836 = vpop.f32.mrf.mxu0
  %v837 = vadd.f32 0.0, %v836
  %838 = vdwg.mxu0
  %839 = vmatprep.subr.bf16.mxu0 0
  %840 = vmatpush1.bf16.msra.mxu0 0
  %841 = vmatprep.subr.bf16.mxu0 0
  %842 = vmatpush1.bf16.msra.mxu0 0
  %843 = vmatprep.subr.bf16.mxu0 0
  %844 = vmatpush1.bf16.msra.mxu0 0
  %845 = vmatprep.subr.bf16.mxu0 0
  %846 = vmatpush1.bf16.msra.mxu0 0
  %847 = vmatprep.subr.bf16.mxu0 0
  %848 = vmatpush1.bf16.msra.mxu0 0
  %849 = vmatprep.subr.bf16.mxu0 0
  %850 = vmatpush1.bf16.msra.mxu0 0
  %851 = vmatprep.subr.bf16.mxu0 0
  %852 = vmatpush1.bf16.msra.mxu0 0
  %853 = vmatprep.subr.bf16.mxu0 0
  %854 = vmatpush1.bf16.msra.mxu0 %v751
  %855 = vmatprep.subr.bf16.mxu0 0
  %856 = vmatpush2.bf16.msra.mxu0 0
  %857 = vmatprep.subr.bf16.mxu0 0
  %858 = vmatpush2.bf16.msra.mxu0 0
  %859 = vmatprep.subr.bf16.mxu0 0
  %860 = vmatpush2.bf16.msra.mxu0 0
  %861 = vmatprep.subr.bf16.mxu0 0
  %862 = vmatpush2.bf16.msra.mxu0 0
  %863 = vmatprep.subr.bf16.mxu0 0
  %864 = vmatpush2.bf16.msra.mxu0 0
  %865 = vmatprep.subr.bf16.mxu0 0
  %866 = vmatpush2.bf16.msra.mxu0 0
  %867 = vmatprep.subr.bf16.mxu0 0
  %868 = vmatpush2.bf16.msra.mxu0 0
  %869 = vmatprep.subr.bf16.mxu0 0
  %870 = vmatpush2.bf16.msra.mxu0 0
  %871 = vmatprep.mubr.bf16.mxu0 0
  %872 = vmatmul.mubr.bf16.gmra.mxu0 %v736
  %v873 = vpop.f32.mrf.mxu0
  %v874 = vadd.f32 0.0, %v873
  %v875 = vpop.f32.mrf.mxu0
  %v876 = vpop.f32.mrf.mxu0
  %v877 = vadd.f32 0.0, %v876
  %v878 = vpop.f32.mrf.mxu0
  %879 = vdwg.mxu0
  %v880 = vadd.f32 %v700, %v788
  %v881 = vadd.f32 %v701, %v790
  %v882 = vadd.f32 %v702, %v831
  %v883 = vadd.f32 %v703, %v833
  %v884 = vadd.f32 %v704, %v874
  %v885 = vadd.f32 %v705, %v792
  %v886 = vadd.f32 %v706, %v794
  %v887 = vadd.f32 %v707, %v835
  %v888 = vadd.f32 %v708, %v837
  %v889 = vadd.f32 %v709, %v877
  %s890 = scalar_lea.vmem %s0, 60
  %v891 = vld [vmem:[%s890] sm:$0xff]
  %v892 = vld [vmem:[%s890 + $0x8] sm:$0xff]
  %v893 = vld [vmem:[%s890 + $0x10] sm:$0xf]
  %s894 = scalar_lea.vmem %s1, 40
  %v895 = vld [vmem:[%s894] sm:$0xf]
  %v896 = vld [vmem:[%s894 + $0x4] sm:$0xf]
  %v899 = vunpack.c.l.b16 %v895
  %v900 = vunpack.c.l.b16 %v896
  %v901 = vpack.c.b16 %v900, %v899
  %v905 = vunpack.c.l.b16 %v891
  %v906 = vunpack.c.h.b16 %v891
  %v907 = vunpack.c.l.b16 %v892
  %v908 = vunpack.c.h.b16 %v892
  %v909 = vunpack.c.l.b16 %v893
  %v910 = vpack.c.b16 %v905, %v905
  %v911 = vpack.c.b16 %v906, %v906
  %v912 = vpack.c.b16 %v907, %v907
  %v913 = vpack.c.b16 %v908, %v908
  %v914 = vpack.c.b16 %v909, %v909
  %v916 = vsel %vm45, %v901, 0
  %v919 = vsel %vm49, %v910, 0
  %v922 = vsel %vm49, %v911, 0
  %v925 = vsel %vm49, %v912, 0
  %v928 = vsel %vm49, %v913, 0
  %v931 = vsel %vm49, %v914, 0
  %933 = vmatprep.subr.bf16.mxu0 0
  %934 = vmatpush1.bf16.msra.mxu0 0
  %935 = vmatprep.subr.bf16.mxu0 0
  %936 = vmatpush1.bf16.msra.mxu0 0
  %937 = vmatprep.subr.bf16.mxu0 0
  %938 = vmatpush1.bf16.msra.mxu0 0
  %939 = vmatprep.subr.bf16.mxu0 0
  %940 = vmatpush1.bf16.msra.mxu0 0
  %941 = vmatprep.subr.bf16.mxu0 0
  %942 = vmatpush1.bf16.msra.mxu0 0
  %943 = vmatprep.subr.bf16.mxu0 0
  %944 = vmatpush1.bf16.msra.mxu0 0
  %945 = vmatprep.subr.bf16.mxu0 0
  %946 = vmatpush1.bf16.msra.mxu0 0
  %947 = vmatprep.subr.bf16.mxu0 %v922
  %948 = vmatpush1.bf16.msra.mxu0 %v919
  %949 = vmatprep.subr.bf16.mxu0 0
  %950 = vmatpush2.bf16.msra.mxu0 0
  %951 = vmatprep.subr.bf16.mxu0 0
  %952 = vmatpush2.bf16.msra.mxu0 0
  %953 = vmatprep.subr.bf16.mxu0 0
  %954 = vmatpush2.bf16.msra.mxu0 0
  %955 = vmatprep.subr.bf16.mxu0 0
  %956 = vmatpush2.bf16.msra.mxu0 0
  %957 = vmatprep.subr.bf16.mxu0 0
  %958 = vmatpush2.bf16.msra.mxu0 0
  %959 = vmatprep.subr.bf16.mxu0 0
  %960 = vmatpush2.bf16.msra.mxu0 0
  %961 = vmatprep.subr.bf16.mxu0 0
  %962 = vmatpush2.bf16.msra.mxu0 0
  %963 = vmatprep.subr.bf16.mxu0 0
  %964 = vmatpush2.bf16.msra.mxu0 0
  %965 = vmatprep.mubr.bf16.mxu0 0
  %966 = vmatmul.mubr.bf16.gmra.mxu0 %v916
  %v967 = vpop.f32.mrf.mxu0
  %v968 = vadd.f32 0.0, %v967
  %v969 = vpop.f32.mrf.mxu0
  %v970 = vadd.f32 0.0, %v969
  %v971 = vpop.f32.mrf.mxu0
  %v972 = vadd.f32 0.0, %v971
  %v973 = vpop.f32.mrf.mxu0
  %v974 = vadd.f32 0.0, %v973
  %975 = vdwg.mxu0
  %976 = vmatprep.subr.bf16.mxu0 0
  %977 = vmatpush1.bf16.msra.mxu0 0
  %978 = vmatprep.subr.bf16.mxu0 0
  %979 = vmatpush1.bf16.msra.mxu0 0
  %980 = vmatprep.subr.bf16.mxu0 0
  %981 = vmatpush1.bf16.msra.mxu0 0
  %982 = vmatprep.subr.bf16.mxu0 0
  %983 = vmatpush1.bf16.msra.mxu0 0
  %984 = vmatprep.subr.bf16.mxu0 0
  %985 = vmatpush1.bf16.msra.mxu0 0
  %986 = vmatprep.subr.bf16.mxu0 0
  %987 = vmatpush1.bf16.msra.mxu0 0
  %988 = vmatprep.subr.bf16.mxu0 0
  %989 = vmatpush1.bf16.msra.mxu0 0
  %990 = vmatprep.subr.bf16.mxu0 %v928
  %991 = vmatpush1.bf16.msra.mxu0 %v925
  %992 = vmatprep.subr.bf16.mxu0 0
  %993 = vmatpush2.bf16.msra.mxu0 0
  %994 = vmatprep.subr.bf16.mxu0 0
  %995 = vmatpush2.bf16.msra.mxu0 0
  %996 = vmatprep.subr.bf16.mxu0 0
  %997 = vmatpush2.bf16.msra.mxu0 0
  %998 = vmatprep.subr.bf16.mxu0 0
  %999 = vmatpush2.bf16.msra.mxu0 0
  %1000 = vmatprep.subr.bf16.mxu0 0
  %1001 = vmatpush2.bf16.msra.mxu0 0
  %1002 = vmatprep.subr.bf16.mxu0 0
  %1003 = vmatpush2.bf16.msra.mxu0 0
  %1004 = vmatprep.subr.bf16.mxu0 0
  %1005 = vmatpush2.bf16.msra.mxu0 0
  %1006 = vmatprep.subr.bf16.mxu0 0
  %1007 = vmatpush2.bf16.msra.mxu0 0
  %1008 = vmatprep.mubr.bf16.mxu0 0
  %1009 = vmatmul.mubr.bf16.gmra.mxu0 %v916
  %v1010 = vpop.f32.mrf.mxu0
  %v1011 = vadd.f32 0.0, %v1010
  %v1012 = vpop.f32.mrf.mxu0
  %v1013 = vadd.f32 0.0, %v1012
  %v1014 = vpop.f32.mrf.mxu0
  %v1015 = vadd.f32 0.0, %v1014
  %v1016 = vpop.f32.mrf.mxu0
  %v1017 = vadd.f32 0.0, %v1016
  %1018 = vdwg.mxu0
  %1019 = vmatprep.subr.bf16.mxu0 0
  %1020 = vmatpush1.bf16.msra.mxu0 0
  %1021 = vmatprep.subr.bf16.mxu0 0
  %1022 = vmatpush1.bf16.msra.mxu0 0
  %1023 = vmatprep.subr.bf16.mxu0 0
  %1024 = vmatpush1.bf16.msra.mxu0 0
  %1025 = vmatprep.subr.bf16.mxu0 0
  %1026 = vmatpush1.bf16.msra.mxu0 0
  %1027 = vmatprep.subr.bf16.mxu0 0
  %1028 = vmatpush1.bf16.msra.mxu0 0
  %1029 = vmatprep.subr.bf16.mxu0 0
  %1030 = vmatpush1.bf16.msra.mxu0 0
  %1031 = vmatprep.subr.bf16.mxu0 0
  %1032 = vmatpush1.bf16.msra.mxu0 0
  %1033 = vmatprep.subr.bf16.mxu0 0
  %1034 = vmatpush1.bf16.msra.mxu0 %v931
  %1035 = vmatprep.subr.bf16.mxu0 0
  %1036 = vmatpush2.bf16.msra.mxu0 0
  %1037 = vmatprep.subr.bf16.mxu0 0
  %1038 = vmatpush2.bf16.msra.mxu0 0
  %1039 = vmatprep.subr.bf16.mxu0 0
  %1040 = vmatpush2.bf16.msra.mxu0 0
  %1041 = vmatprep.subr.bf16.mxu0 0
  %1042 = vmatpush2.bf16.msra.mxu0 0
  %1043 = vmatprep.subr.bf16.mxu0 0
  %1044 = vmatpush2.bf16.msra.mxu0 0
  %1045 = vmatprep.subr.bf16.mxu0 0
  %1046 = vmatpush2.bf16.msra.mxu0 0
  %1047 = vmatprep.subr.bf16.mxu0 0
  %1048 = vmatpush2.bf16.msra.mxu0 0
  %1049 = vmatprep.subr.bf16.mxu0 0
  %1050 = vmatpush2.bf16.msra.mxu0 0
  %1051 = vmatprep.mubr.bf16.mxu0 0
  %1052 = vmatmul.mubr.bf16.gmra.mxu0 %v916
  %v1053 = vpop.f32.mrf.mxu0
  %v1054 = vadd.f32 0.0, %v1053
  %v1055 = vpop.f32.mrf.mxu0
  %v1056 = vpop.f32.mrf.mxu0
  %v1057 = vadd.f32 0.0, %v1056
  %v1058 = vpop.f32.mrf.mxu0
  %1059 = vdwg.mxu0
  %v1060 = vadd.f32 %v880, %v968
  %v1061 = vadd.f32 %v881, %v970
  %v1062 = vadd.f32 %v882, %v1011
  %v1063 = vadd.f32 %v883, %v1013
  %v1064 = vadd.f32 %v884, %v1054
  %v1065 = vadd.f32 %v885, %v972
  %v1066 = vadd.f32 %v886, %v974
  %v1067 = vadd.f32 %v887, %v1015
  %v1068 = vadd.f32 %v888, %v1017
  %v1069 = vadd.f32 %v889, %v1057
  %s1070 = scalar_lea.vmem %s1, 48
  %v1071 = vld [vmem:[%s1070] sm:$0xf]
  %v1072 = vld [vmem:[%s1070 + $0x4] sm:$0xf]
  %v1075 = vunpack.c.l.b16 %v1071
  %v1076 = vunpack.c.l.b16 %v1072
  %v1077 = vpack.c.b16 %v1076, %v1075
  %1078 = vrot.lane.b32.xlu0 %v730, 127
  %v1079 = vpop.permute.xlu0 %1078
  %1080 = vrot.lane.b32.xlu0 %v731, 127
  %v1081 = vpop.permute.xlu0 %1080
  %1082 = vrot.lane.b32.xlu0 %v732, 127
  %v1083 = vpop.permute.xlu0 %1082
  %1084 = vrot.lane.b32.xlu0 %v733, 127
  %v1085 = vpop.permute.xlu0 %1084
  %1086 = vrot.lane.b32.xlu0 %v734, 127
  %v1087 = vpop.permute.xlu0 %1086
  %v1088 = vsel %vm373, %v1079, %v1081
  %v1089 = vsel %vm373, %v1081, %v1083
  %v1090 = vsel %vm373, %v1083, %v1085
  %v1091 = vsel %vm373, %v1085, %v1087
  %v1093 = vsel %vm45, %v1077, 0
  %v1096 = vsel %vm49, %v1088, 0
  %v1099 = vsel %vm49, %v1089, 0
  %v1102 = vsel %vm49, %v1090, 0
  %v1105 = vsel %vm49, %v1091, 0
  %v1108 = vsel %vm49, %v1087, 0
  %1110 = vmatprep.subr.bf16.mxu0 0
  %1111 = vmatpush1.bf16.msra.mxu0 0
  %1112 = vmatprep.subr.bf16.mxu0 0
  %1113 = vmatpush1.bf16.msra.mxu0 0
  %1114 = vmatprep.subr.bf16.mxu0 0
  %1115 = vmatpush1.bf16.msra.mxu0 0
  %1116 = vmatprep.subr.bf16.mxu0 0
  %1117 = vmatpush1.bf16.msra.mxu0 0
  %1118 = vmatprep.subr.bf16.mxu0 0
  %1119 = vmatpush1.bf16.msra.mxu0 0
  %1120 = vmatprep.subr.bf16.mxu0 0
  %1121 = vmatpush1.bf16.msra.mxu0 0
  %1122 = vmatprep.subr.bf16.mxu0 0
  %1123 = vmatpush1.bf16.msra.mxu0 0
  %1124 = vmatprep.subr.bf16.mxu0 %v1099
  %1125 = vmatpush1.bf16.msra.mxu0 %v1096
  %1126 = vmatprep.subr.bf16.mxu0 0
  %1127 = vmatpush2.bf16.msra.mxu0 0
  %1128 = vmatprep.subr.bf16.mxu0 0
  %1129 = vmatpush2.bf16.msra.mxu0 0
  %1130 = vmatprep.subr.bf16.mxu0 0
  %1131 = vmatpush2.bf16.msra.mxu0 0
  %1132 = vmatprep.subr.bf16.mxu0 0
  %1133 = vmatpush2.bf16.msra.mxu0 0
  %1134 = vmatprep.subr.bf16.mxu0 0
  %1135 = vmatpush2.bf16.msra.mxu0 0
  %1136 = vmatprep.subr.bf16.mxu0 0
  %1137 = vmatpush2.bf16.msra.mxu0 0
  %1138 = vmatprep.subr.bf16.mxu0 0
  %1139 = vmatpush2.bf16.msra.mxu0 0
  %1140 = vmatprep.subr.bf16.mxu0 0
  %1141 = vmatpush2.bf16.msra.mxu0 0
  %1142 = vmatprep.mubr.bf16.mxu0 0
  %1143 = vmatmul.mubr.bf16.gmra.mxu0 %v1093
  %v1144 = vpop.f32.mrf.mxu0
  %v1145 = vadd.f32 0.0, %v1144
  %v1146 = vpop.f32.mrf.mxu0
  %v1147 = vadd.f32 0.0, %v1146
  %v1148 = vpop.f32.mrf.mxu0
  %v1149 = vadd.f32 0.0, %v1148
  %v1150 = vpop.f32.mrf.mxu0
  %v1151 = vadd.f32 0.0, %v1150
  %1152 = vdwg.mxu0
  %1153 = vmatprep.subr.bf16.mxu0 0
  %1154 = vmatpush1.bf16.msra.mxu0 0
  %1155 = vmatprep.subr.bf16.mxu0 0
  %1156 = vmatpush1.bf16.msra.mxu0 0
  %1157 = vmatprep.subr.bf16.mxu0 0
  %1158 = vmatpush1.bf16.msra.mxu0 0
  %1159 = vmatprep.subr.bf16.mxu0 0
  %1160 = vmatpush1.bf16.msra.mxu0 0
  %1161 = vmatprep.subr.bf16.mxu0 0
  %1162 = vmatpush1.bf16.msra.mxu0 0
  %1163 = vmatprep.subr.bf16.mxu0 0
  %1164 = vmatpush1.bf16.msra.mxu0 0
  %1165 = vmatprep.subr.bf16.mxu0 0
  %1166 = vmatpush1.bf16.msra.mxu0 0
  %1167 = vmatprep.subr.bf16.mxu0 %v1105
  %1168 = vmatpush1.bf16.msra.mxu0 %v1102
  %1169 = vmatprep.subr.bf16.mxu0 0
  %1170 = vmatpush2.bf16.msra.mxu0 0
  %1171 = vmatprep.subr.bf16.mxu0 0
  %1172 = vmatpush2.bf16.msra.mxu0 0
  %1173 = vmatprep.subr.bf16.mxu0 0
  %1174 = vmatpush2.bf16.msra.mxu0 0
  %1175 = vmatprep.subr.bf16.mxu0 0
  %1176 = vmatpush2.bf16.msra.mxu0 0
  %1177 = vmatprep.subr.bf16.mxu0 0
  %1178 = vmatpush2.bf16.msra.mxu0 0
  %1179 = vmatprep.subr.bf16.mxu0 0
  %1180 = vmatpush2.bf16.msra.mxu0 0
  %1181 = vmatprep.subr.bf16.mxu0 0
  %1182 = vmatpush2.bf16.msra.mxu0 0
  %1183 = vmatprep.subr.bf16.mxu0 0
  %1184 = vmatpush2.bf16.msra.mxu0 0
  %1185 = vmatprep.mubr.bf16.mxu0 0
  %1186 = vmatmul.mubr.bf16.gmra.mxu0 %v1093
  %v1187 = vpop.f32.mrf.mxu0
  %v1188 = vadd.f32 0.0, %v1187
  %v1189 = vpop.f32.mrf.mxu0
  %v1190 = vadd.f32 0.0, %v1189
  %v1191 = vpop.f32.mrf.mxu0
  %v1192 = vadd.f32 0.0, %v1191
  %v1193 = vpop.f32.mrf.mxu0
  %v1194 = vadd.f32 0.0, %v1193
  %1195 = vdwg.mxu0
  %1196 = vmatprep.subr.bf16.mxu0 0
  %1197 = vmatpush1.bf16.msra.mxu0 0
  %1198 = vmatprep.subr.bf16.mxu0 0
  %1199 = vmatpush1.bf16.msra.mxu0 0
  %1200 = vmatprep.subr.bf16.mxu0 0
  %1201 = vmatpush1.bf16.msra.mxu0 0
  %1202 = vmatprep.subr.bf16.mxu0 0
  %1203 = vmatpush1.bf16.msra.mxu0 0
  %1204 = vmatprep.subr.bf16.mxu0 0
  %1205 = vmatpush1.bf16.msra.mxu0 0
  %1206 = vmatprep.subr.bf16.mxu0 0
  %1207 = vmatpush1.bf16.msra.mxu0 0
  %1208 = vmatprep.subr.bf16.mxu0 0
  %1209 = vmatpush1.bf16.msra.mxu0 0
  %1210 = vmatprep.subr.bf16.mxu0 0
  %1211 = vmatpush1.bf16.msra.mxu0 %v1108
  %1212 = vmatprep.subr.bf16.mxu0 0
  %1213 = vmatpush2.bf16.msra.mxu0 0
  %1214 = vmatprep.subr.bf16.mxu0 0
  %1215 = vmatpush2.bf16.msra.mxu0 0
  %1216 = vmatprep.subr.bf16.mxu0 0
  %1217 = vmatpush2.bf16.msra.mxu0 0
  %1218 = vmatprep.subr.bf16.mxu0 0
  %1219 = vmatpush2.bf16.msra.mxu0 0
  %1220 = vmatprep.subr.bf16.mxu0 0
  %1221 = vmatpush2.bf16.msra.mxu0 0
  %1222 = vmatprep.subr.bf16.mxu0 0
  %1223 = vmatpush2.bf16.msra.mxu0 0
  %1224 = vmatprep.subr.bf16.mxu0 0
  %1225 = vmatpush2.bf16.msra.mxu0 0
  %1226 = vmatprep.subr.bf16.mxu0 0
  %1227 = vmatpush2.bf16.msra.mxu0 0
  %1228 = vmatprep.mubr.bf16.mxu0 0
  %1229 = vmatmul.mubr.bf16.gmra.mxu0 %v1093
  %v1230 = vpop.f32.mrf.mxu0
  %v1231 = vadd.f32 0.0, %v1230
  %v1232 = vpop.f32.mrf.mxu0
  %v1233 = vpop.f32.mrf.mxu0
  %v1234 = vadd.f32 0.0, %v1233
  %v1235 = vpop.f32.mrf.mxu0
  %1236 = vdwg.mxu0
  %v1237 = vadd.f32 %v1060, %v1145
  %v1238 = vadd.f32 %v1061, %v1147
  %v1239 = vadd.f32 %v1062, %v1188
  %v1240 = vadd.f32 %v1063, %v1190
  %v1241 = vadd.f32 %v1064, %v1231
  %v1242 = vadd.f32 %v1065, %v1149
  %v1243 = vadd.f32 %v1066, %v1151
  %v1244 = vadd.f32 %v1067, %v1192
  %v1245 = vadd.f32 %v1068, %v1194
  %v1246 = vadd.f32 %v1069, %v1234
  %s1247 = scalar_lea.vmem %s1, 56
  %v1248 = vld [vmem:[%s1247] sm:$0xf]
  %v1249 = vld [vmem:[%s1247 + $0x4] sm:$0xf]
  %v1252 = vunpack.c.l.b16 %v1248
  %v1253 = vunpack.c.l.b16 %v1249
  %v1254 = vpack.c.b16 %v1253, %v1252
  %1255 = vrot.lane.b32.xlu0 %v910, 127
  %v1256 = vpop.permute.xlu0 %1255
  %1257 = vrot.lane.b32.xlu0 %v911, 127
  %v1258 = vpop.permute.xlu0 %1257
  %1259 = vrot.lane.b32.xlu0 %v912, 127
  %v1260 = vpop.permute.xlu0 %1259
  %1261 = vrot.lane.b32.xlu0 %v913, 127
  %v1262 = vpop.permute.xlu0 %1261
  %1263 = vrot.lane.b32.xlu0 %v914, 127
  %v1264 = vpop.permute.xlu0 %1263
  %v1265 = vsel %vm373, %v1256, %v1258
  %v1266 = vsel %vm373, %v1258, %v1260
  %v1267 = vsel %vm373, %v1260, %v1262
  %v1268 = vsel %vm373, %v1262, %v1264
  %v1270 = vsel %vm45, %v1254, 0
  %v1273 = vsel %vm49, %v1265, 0
  %v1276 = vsel %vm49, %v1266, 0
  %v1279 = vsel %vm49, %v1267, 0
  %v1282 = vsel %vm49, %v1268, 0
  %v1285 = vsel %vm49, %v1264, 0
  %1287 = vmatprep.subr.bf16.mxu0 0
  %1288 = vmatpush1.bf16.msra.mxu0 0
  %1289 = vmatprep.subr.bf16.mxu0 0
  %1290 = vmatpush1.bf16.msra.mxu0 0
  %1291 = vmatprep.subr.bf16.mxu0 0
  %1292 = vmatpush1.bf16.msra.mxu0 0
  %1293 = vmatprep.subr.bf16.mxu0 0
  %1294 = vmatpush1.bf16.msra.mxu0 0
  %1295 = vmatprep.subr.bf16.mxu0 0
  %1296 = vmatpush1.bf16.msra.mxu0 0
  %1297 = vmatprep.subr.bf16.mxu0 0
  %1298 = vmatpush1.bf16.msra.mxu0 0
  %1299 = vmatprep.subr.bf16.mxu0 0
  %1300 = vmatpush1.bf16.msra.mxu0 0
  %1301 = vmatprep.subr.bf16.mxu0 %v1276
  %1302 = vmatpush1.bf16.msra.mxu0 %v1273
  %1303 = vmatprep.subr.bf16.mxu0 0
  %1304 = vmatpush2.bf16.msra.mxu0 0
  %1305 = vmatprep.subr.bf16.mxu0 0
  %1306 = vmatpush2.bf16.msra.mxu0 0
  %1307 = vmatprep.subr.bf16.mxu0 0
  %1308 = vmatpush2.bf16.msra.mxu0 0
  %1309 = vmatprep.subr.bf16.mxu0 0
  %1310 = vmatpush2.bf16.msra.mxu0 0
  %1311 = vmatprep.subr.bf16.mxu0 0
  %1312 = vmatpush2.bf16.msra.mxu0 0
  %1313 = vmatprep.subr.bf16.mxu0 0
  %1314 = vmatpush2.bf16.msra.mxu0 0
  %1315 = vmatprep.subr.bf16.mxu0 0
  %1316 = vmatpush2.bf16.msra.mxu0 0
  %1317 = vmatprep.subr.bf16.mxu0 0
  %1318 = vmatpush2.bf16.msra.mxu0 0
  %1319 = vmatprep.mubr.bf16.mxu0 0
  %1320 = vmatmul.mubr.bf16.gmra.mxu0 %v1270
  %v1321 = vpop.f32.mrf.mxu0
  %v1322 = vadd.f32 0.0, %v1321
  %v1323 = vpop.f32.mrf.mxu0
  %v1324 = vadd.f32 0.0, %v1323
  %v1325 = vpop.f32.mrf.mxu0
  %v1326 = vadd.f32 0.0, %v1325
  %v1327 = vpop.f32.mrf.mxu0
  %v1328 = vadd.f32 0.0, %v1327
  %1329 = vdwg.mxu0
  %1330 = vmatprep.subr.bf16.mxu0 0
  %1331 = vmatpush1.bf16.msra.mxu0 0
  %1332 = vmatprep.subr.bf16.mxu0 0
  %1333 = vmatpush1.bf16.msra.mxu0 0
  %1334 = vmatprep.subr.bf16.mxu0 0
  %1335 = vmatpush1.bf16.msra.mxu0 0
  %1336 = vmatprep.subr.bf16.mxu0 0
  %1337 = vmatpush1.bf16.msra.mxu0 0
  %1338 = vmatprep.subr.bf16.mxu0 0
  %1339 = vmatpush1.bf16.msra.mxu0 0
  %1340 = vmatprep.subr.bf16.mxu0 0
  %1341 = vmatpush1.bf16.msra.mxu0 0
  %1342 = vmatprep.subr.bf16.mxu0 0
  %1343 = vmatpush1.bf16.msra.mxu0 0
  %1344 = vmatprep.subr.bf16.mxu0 %v1282
  %1345 = vmatpush1.bf16.msra.mxu0 %v1279
  %1346 = vmatprep.subr.bf16.mxu0 0
  %1347 = vmatpush2.bf16.msra.mxu0 0
  %1348 = vmatprep.subr.bf16.mxu0 0
  %1349 = vmatpush2.bf16.msra.mxu0 0
  %1350 = vmatprep.subr.bf16.mxu0 0
  %1351 = vmatpush2.bf16.msra.mxu0 0
  %1352 = vmatprep.subr.bf16.mxu0 0
  %1353 = vmatpush2.bf16.msra.mxu0 0
  %1354 = vmatprep.subr.bf16.mxu0 0
  %1355 = vmatpush2.bf16.msra.mxu0 0
  %1356 = vmatprep.subr.bf16.mxu0 0
  %1357 = vmatpush2.bf16.msra.mxu0 0
  %1358 = vmatprep.subr.bf16.mxu0 0
  %1359 = vmatpush2.bf16.msra.mxu0 0
  %1360 = vmatprep.subr.bf16.mxu0 0
  %1361 = vmatpush2.bf16.msra.mxu0 0
  %1362 = vmatprep.mubr.bf16.mxu0 0
  %1363 = vmatmul.mubr.bf16.gmra.mxu0 %v1270
  %v1364 = vpop.f32.mrf.mxu0
  %v1365 = vadd.f32 0.0, %v1364
  %v1366 = vpop.f32.mrf.mxu0
  %v1367 = vadd.f32 0.0, %v1366
  %v1368 = vpop.f32.mrf.mxu0
  %v1369 = vadd.f32 0.0, %v1368
  %v1370 = vpop.f32.mrf.mxu0
  %v1371 = vadd.f32 0.0, %v1370
  %1372 = vdwg.mxu0
  %1373 = vmatprep.subr.bf16.mxu0 0
  %1374 = vmatpush1.bf16.msra.mxu0 0
  %1375 = vmatprep.subr.bf16.mxu0 0
  %1376 = vmatpush1.bf16.msra.mxu0 0
  %1377 = vmatprep.subr.bf16.mxu0 0
  %1378 = vmatpush1.bf16.msra.mxu0 0
  %1379 = vmatprep.subr.bf16.mxu0 0
  %1380 = vmatpush1.bf16.msra.mxu0 0
  %1381 = vmatprep.subr.bf16.mxu0 0
  %1382 = vmatpush1.bf16.msra.mxu0 0
  %1383 = vmatprep.subr.bf16.mxu0 0
  %1384 = vmatpush1.bf16.msra.mxu0 0
  %1385 = vmatprep.subr.bf16.mxu0 0
  %1386 = vmatpush1.bf16.msra.mxu0 0
  %1387 = vmatprep.subr.bf16.mxu0 0
  %1388 = vmatpush1.bf16.msra.mxu0 %v1285
  %1389 = vmatprep.subr.bf16.mxu0 0
  %1390 = vmatpush2.bf16.msra.mxu0 0
  %1391 = vmatprep.subr.bf16.mxu0 0
  %1392 = vmatpush2.bf16.msra.mxu0 0
  %1393 = vmatprep.subr.bf16.mxu0 0
  %1394 = vmatpush2.bf16.msra.mxu0 0
  %1395 = vmatprep.subr.bf16.mxu0 0
  %1396 = vmatpush2.bf16.msra.mxu0 0
  %1397 = vmatprep.subr.bf16.mxu0 0
  %1398 = vmatpush2.bf16.msra.mxu0 0
  %1399 = vmatprep.subr.bf16.mxu0 0
  %1400 = vmatpush2.bf16.msra.mxu0 0
  %1401 = vmatprep.subr.bf16.mxu0 0
  %1402 = vmatpush2.bf16.msra.mxu0 0
  %1403 = vmatprep.subr.bf16.mxu0 0
  %1404 = vmatpush2.bf16.msra.mxu0 0
  %1405 = vmatprep.mubr.bf16.mxu0 0
  %1406 = vmatmul.mubr.bf16.gmra.mxu0 %v1270
  %v1407 = vpop.f32.mrf.mxu0
  %v1408 = vadd.f32 0.0, %v1407
  %v1409 = vpop.f32.mrf.mxu0
  %v1410 = vpop.f32.mrf.mxu0
  %v1411 = vadd.f32 0.0, %v1410
  %v1412 = vpop.f32.mrf.mxu0
  %1413 = vdwg.mxu0
  %v1414 = vadd.f32 %v1237, %v1322
  %v1415 = vadd.f32 %v1238, %v1324
  %v1416 = vadd.f32 %v1239, %v1365
  %v1417 = vadd.f32 %v1240, %v1367
  %v1418 = vadd.f32 %v1241, %v1408
  %v1419 = vadd.f32 %v1242, %v1326
  %v1420 = vadd.f32 %v1243, %v1328
  %v1421 = vadd.f32 %v1244, %v1369
  %v1422 = vadd.f32 %v1245, %v1371
  %v1423 = vadd.f32 %v1246, %v1411
  %s1424 = scalar_lea.vmem %s1, 64
  %v1425 = vld [vmem:[%s1424] sm:$0xf]
  %v1426 = vld [vmem:[%s1424 + $0x4] sm:$0xf]
  %v1429 = vunpack.c.l.b16 %v1425
  %v1430 = vunpack.c.l.b16 %v1426
  %v1431 = vpack.c.b16 %v1430, %v1429
  %1432 = vrot.lane.b32.xlu0 %v205, 111
  %v1433 = vpop.permute.xlu0 %1432
  %1434 = vrot.lane.b32.xlu0 %v206, 111
  %v1435 = vpop.permute.xlu0 %1434
  %1436 = vrot.lane.b32.xlu0 %v207, 111
  %v1437 = vpop.permute.xlu0 %1436
  %1438 = vrot.lane.b32.xlu0 %v208, 111
  %v1439 = vpop.permute.xlu0 %1438
  %1440 = vrot.lane.b32.xlu0 %v209, 111
  %v1441 = vpop.permute.xlu0 %1440
  %vm1442 = vcmask 908288
  %v1443 = vsel %vm1442, %v1433, %v1435
  %v1444 = vsel %vm1442, %v1435, %v1437
  %v1445 = vsel %vm1442, %v1437, %v1439
  %v1446 = vsel %vm1442, %v1439, %v1441
  %v1448 = vsel %vm45, %v1431, 0
  %v1451 = vsel %vm49, %v1443, 0
  %v1454 = vsel %vm49, %v1444, 0
  %v1457 = vsel %vm49, %v1445, 0
  %v1460 = vsel %vm49, %v1446, 0
  %v1463 = vsel %vm49, %v1441, 0
  %1465 = vmatprep.subr.bf16.mxu0 0
  %1466 = vmatpush1.bf16.msra.mxu0 0
  %1467 = vmatprep.subr.bf16.mxu0 0
  %1468 = vmatpush1.bf16.msra.mxu0 0
  %1469 = vmatprep.subr.bf16.mxu0 0
  %1470 = vmatpush1.bf16.msra.mxu0 0
  %1471 = vmatprep.subr.bf16.mxu0 0
  %1472 = vmatpush1.bf16.msra.mxu0 0
  %1473 = vmatprep.subr.bf16.mxu0 0
  %1474 = vmatpush1.bf16.msra.mxu0 0
  %1475 = vmatprep.subr.bf16.mxu0 0
  %1476 = vmatpush1.bf16.msra.mxu0 0
  %1477 = vmatprep.subr.bf16.mxu0 0
  %1478 = vmatpush1.bf16.msra.mxu0 0
  %1479 = vmatprep.subr.bf16.mxu0 %v1454
  %1480 = vmatpush1.bf16.msra.mxu0 %v1451
  %1481 = vmatprep.subr.bf16.mxu0 0
  %1482 = vmatpush2.bf16.msra.mxu0 0
  %1483 = vmatprep.subr.bf16.mxu0 0
  %1484 = vmatpush2.bf16.msra.mxu0 0
  %1485 = vmatprep.subr.bf16.mxu0 0
  %1486 = vmatpush2.bf16.msra.mxu0 0
  %1487 = vmatprep.subr.bf16.mxu0 0
  %1488 = vmatpush2.bf16.msra.mxu0 0
  %1489 = vmatprep.subr.bf16.mxu0 0
  %1490 = vmatpush2.bf16.msra.mxu0 0
  %1491 = vmatprep.subr.bf16.mxu0 0
  %1492 = vmatpush2.bf16.msra.mxu0 0
  %1493 = vmatprep.subr.bf16.mxu0 0
  %1494 = vmatpush2.bf16.msra.mxu0 0
  %1495 = vmatprep.subr.bf16.mxu0 0
  %1496 = vmatpush2.bf16.msra.mxu0 0
  %1497 = vmatprep.mubr.bf16.mxu0 0
  %1498 = vmatmul.mubr.bf16.gmra.mxu0 %v1448
  %v1499 = vpop.f32.mrf.mxu0
  %v1500 = vadd.f32 0.0, %v1499
  %v1501 = vpop.f32.mrf.mxu0
  %v1502 = vadd.f32 0.0, %v1501
  %v1503 = vpop.f32.mrf.mxu0
  %v1504 = vadd.f32 0.0, %v1503
  %v1505 = vpop.f32.mrf.mxu0
  %v1506 = vadd.f32 0.0, %v1505
  %1507 = vdwg.mxu0
  %1508 = vmatprep.subr.bf16.mxu0 0
  %1509 = vmatpush1.bf16.msra.mxu0 0
  %1510 = vmatprep.subr.bf16.mxu0 0
  %1511 = vmatpush1.bf16.msra.mxu0 0
  %1512 = vmatprep.subr.bf16.mxu0 0
  %1513 = vmatpush1.bf16.msra.mxu0 0
  %1514 = vmatprep.subr.bf16.mxu0 0
  %1515 = vmatpush1.bf16.msra.mxu0 0
  %1516 = vmatprep.subr.bf16.mxu0 0
  %1517 = vmatpush1.bf16.msra.mxu0 0
  %1518 = vmatprep.subr.bf16.mxu0 0
  %1519 = vmatpush1.bf16.msra.mxu0 0
  %1520 = vmatprep.subr.bf16.mxu0 0
  %1521 = vmatpush1.bf16.msra.mxu0 0
  %1522 = vmatprep.subr.bf16.mxu0 %v1460
  %1523 = vmatpush1.bf16.msra.mxu0 %v1457
  %1524 = vmatprep.subr.bf16.mxu0 0
  %1525 = vmatpush2.bf16.msra.mxu0 0
  %1526 = vmatprep.subr.bf16.mxu0 0
  %1527 = vmatpush2.bf16.msra.mxu0 0
  %1528 = vmatprep.subr.bf16.mxu0 0
  %1529 = vmatpush2.bf16.msra.mxu0 0
  %1530 = vmatprep.subr.bf16.mxu0 0
  %1531 = vmatpush2.bf16.msra.mxu0 0
  %1532 = vmatprep.subr.bf16.mxu0 0
  %1533 = vmatpush2.bf16.msra.mxu0 0
  %1534 = vmatprep.subr.bf16.mxu0 0
  %1535 = vmatpush2.bf16.msra.mxu0 0
  %1536 = vmatprep.subr.bf16.mxu0 0
  %1537 = vmatpush2.bf16.msra.mxu0 0
  %1538 = vmatprep.subr.bf16.mxu0 0
  %1539 = vmatpush2.bf16.msra.mxu0 0
  %1540 = vmatprep.mubr.bf16.mxu0 0
  %1541 = vmatmul.mubr.bf16.gmra.mxu0 %v1448
  %v1542 = vpop.f32.mrf.mxu0
  %v1543 = vadd.f32 0.0, %v1542
  %v1544 = vpop.f32.mrf.mxu0
  %v1545 = vadd.f32 0.0, %v1544
  %v1546 = vpop.f32.mrf.mxu0
  %v1547 = vadd.f32 0.0, %v1546
  %v1548 = vpop.f32.mrf.mxu0
  %v1549 = vadd.f32 0.0, %v1548
  %1550 = vdwg.mxu0
  %1551 = vmatprep.subr.bf16.mxu0 0
  %1552 = vmatpush1.bf16.msra.mxu0 0
  %1553 = vmatprep.subr.bf16.mxu0 0
  %1554 = vmatpush1.bf16.msra.mxu0 0
  %1555 = vmatprep.subr.bf16.mxu0 0
  %1556 = vmatpush1.bf16.msra.mxu0 0
  %1557 = vmatprep.subr.bf16.mxu0 0
  %1558 = vmatpush1.bf16.msra.mxu0 0
  %1559 = vmatprep.subr.bf16.mxu0 0
  %1560 = vmatpush1.bf16.msra.mxu0 0
  %1561 = vmatprep.subr.bf16.mxu0 0
  %1562 = vmatpush1.bf16.msra.mxu0 0
  %1563 = vmatprep.subr.bf16.mxu0 0
  %1564 = vmatpush1.bf16.msra.mxu0 0
  %1565 = vmatprep.subr.bf16.mxu0 0
  %1566 = vmatpush1.bf16.msra.mxu0 %v1463
  %1567 = vmatprep.subr.bf16.mxu0 0
  %1568 = vmatpush2.bf16.msra.mxu0 0
  %1569 = vmatprep.subr.bf16.mxu0 0
  %1570 = vmatpush2.bf16.msra.mxu0 0
  %1571 = vmatprep.subr.bf16.mxu0 0
  %1572 = vmatpush2.bf16.msra.mxu0 0
  %1573 = vmatprep.subr.bf16.mxu0 0
  %1574 = vmatpush2.bf16.msra.mxu0 0
  %1575 = vmatprep.subr.bf16.mxu0 0
  %1576 = vmatpush2.bf16.msra.mxu0 0
  %1577 = vmatprep.subr.bf16.mxu0 0
  %1578 = vmatpush2.bf16.msra.mxu0 0
  %1579 = vmatprep.subr.bf16.mxu0 0
  %1580 = vmatpush2.bf16.msra.mxu0 0
  %1581 = vmatprep.subr.bf16.mxu0 0
  %1582 = vmatpush2.bf16.msra.mxu0 0
  %1583 = vmatprep.mubr.bf16.mxu0 0
  %1584 = vmatmul.mubr.bf16.gmra.mxu0 %v1448
  %v1585 = vpop.f32.mrf.mxu0
  %v1586 = vadd.f32 0.0, %v1585
  %v1587 = vpop.f32.mrf.mxu0
  %v1588 = vpop.f32.mrf.mxu0
  %v1589 = vadd.f32 0.0, %v1588
  %v1590 = vpop.f32.mrf.mxu0
  %1591 = vdwg.mxu0
  %v1592 = vadd.f32 %v1414, %v1500
  %v1593 = vadd.f32 %v1415, %v1502
  %v1594 = vadd.f32 %v1416, %v1543
  %v1595 = vadd.f32 %v1417, %v1545
  %v1596 = vadd.f32 %v1418, %v1586
  %v1597 = vadd.f32 %v1419, %v1504
  %v1598 = vadd.f32 %v1420, %v1506
  %v1599 = vadd.f32 %v1421, %v1547
  %v1600 = vadd.f32 %v1422, %v1549
  %v1601 = vadd.f32 %v1423, %v1589
  %s1602 = scalar_lea.vmem %s1, 72
  %v1603 = vld [vmem:[%s1602] sm:$0xf]
  %v1604 = vld [vmem:[%s1602 + $0x4] sm:$0xf]
  %v1607 = vunpack.c.l.b16 %v1603
  %v1608 = vunpack.c.l.b16 %v1604
  %v1609 = vpack.c.b16 %v1608, %v1607
  %1610 = vrot.lane.b32.xlu0 %v40, 111
  %v1611 = vpop.permute.xlu0 %1610
  %1612 = vrot.lane.b32.xlu0 %v41, 111
  %v1613 = vpop.permute.xlu0 %1612
  %1614 = vrot.lane.b32.xlu0 %v42, 111
  %v1615 = vpop.permute.xlu0 %1614
  %1616 = vrot.lane.b32.xlu0 %v43, 111
  %v1617 = vpop.permute.xlu0 %1616
  %1618 = vrot.lane.b32.xlu0 %v44, 111
  %v1619 = vpop.permute.xlu0 %1618
  %v1620 = vsel %vm1442, %v1611, %v1613
  %v1621 = vsel %vm1442, %v1613, %v1615
  %v1622 = vsel %vm1442, %v1615, %v1617
  %v1623 = vsel %vm1442, %v1617, %v1619
  %v1625 = vsel %vm45, %v1609, 0
  %v1628 = vsel %vm49, %v1620, 0
  %v1631 = vsel %vm49, %v1621, 0
  %v1634 = vsel %vm49, %v1622, 0
  %v1637 = vsel %vm49, %v1623, 0
  %v1640 = vsel %vm49, %v1619, 0
  %1642 = vmatprep.subr.bf16.mxu0 0
  %1643 = vmatpush1.bf16.msra.mxu0 0
  %1644 = vmatprep.subr.bf16.mxu0 0
  %1645 = vmatpush1.bf16.msra.mxu0 0
  %1646 = vmatprep.subr.bf16.mxu0 0
  %1647 = vmatpush1.bf16.msra.mxu0 0
  %1648 = vmatprep.subr.bf16.mxu0 0
  %1649 = vmatpush1.bf16.msra.mxu0 0
  %1650 = vmatprep.subr.bf16.mxu0 0
  %1651 = vmatpush1.bf16.msra.mxu0 0
  %1652 = vmatprep.subr.bf16.mxu0 0
  %1653 = vmatpush1.bf16.msra.mxu0 0
  %1654 = vmatprep.subr.bf16.mxu0 0
  %1655 = vmatpush1.bf16.msra.mxu0 0
  %1656 = vmatprep.subr.bf16.mxu0 %v1631
  %1657 = vmatpush1.bf16.msra.mxu0 %v1628
  %1658 = vmatprep.subr.bf16.mxu0 0
  %1659 = vmatpush2.bf16.msra.mxu0 0
  %1660 = vmatprep.subr.bf16.mxu0 0
  %1661 = vmatpush2.bf16.msra.mxu0 0
  %1662 = vmatprep.subr.bf16.mxu0 0
  %1663 = vmatpush2.bf16.msra.mxu0 0
  %1664 = vmatprep.subr.bf16.mxu0 0
  %1665 = vmatpush2.bf16.msra.mxu0 0
  %1666 = vmatprep.subr.bf16.mxu0 0
  %1667 = vmatpush2.bf16.msra.mxu0 0
  %1668 = vmatprep.subr.bf16.mxu0 0
  %1669 = vmatpush2.bf16.msra.mxu0 0
  %1670 = vmatprep.subr.bf16.mxu0 0
  %1671 = vmatpush2.bf16.msra.mxu0 0
  %1672 = vmatprep.subr.bf16.mxu0 0
  %1673 = vmatpush2.bf16.msra.mxu0 0
  %1674 = vmatprep.mubr.bf16.mxu0 0
  %1675 = vmatmul.mubr.bf16.gmra.mxu0 %v1625
  %v1676 = vpop.f32.mrf.mxu0
  %v1677 = vadd.f32 0.0, %v1676
  %v1678 = vpop.f32.mrf.mxu0
  %v1679 = vadd.f32 0.0, %v1678
  %v1680 = vpop.f32.mrf.mxu0
  %v1681 = vadd.f32 0.0, %v1680
  %v1682 = vpop.f32.mrf.mxu0
  %v1683 = vadd.f32 0.0, %v1682
  %1684 = vdwg.mxu0
  %1685 = vmatprep.subr.bf16.mxu0 0
  %1686 = vmatpush1.bf16.msra.mxu0 0
  %1687 = vmatprep.subr.bf16.mxu0 0
  %1688 = vmatpush1.bf16.msra.mxu0 0
  %1689 = vmatprep.subr.bf16.mxu0 0
  %1690 = vmatpush1.bf16.msra.mxu0 0
  %1691 = vmatprep.subr.bf16.mxu0 0
  %1692 = vmatpush1.bf16.msra.mxu0 0
  %1693 = vmatprep.subr.bf16.mxu0 0
  %1694 = vmatpush1.bf16.msra.mxu0 0
  %1695 = vmatprep.subr.bf16.mxu0 0
  %1696 = vmatpush1.bf16.msra.mxu0 0
  %1697 = vmatprep.subr.bf16.mxu0 0
  %1698 = vmatpush1.bf16.msra.mxu0 0
  %1699 = vmatprep.subr.bf16.mxu0 %v1637
  %1700 = vmatpush1.bf16.msra.mxu0 %v1634
  %1701 = vmatprep.subr.bf16.mxu0 0
  %1702 = vmatpush2.bf16.msra.mxu0 0
  %1703 = vmatprep.subr.bf16.mxu0 0
  %1704 = vmatpush2.bf16.msra.mxu0 0
  %1705 = vmatprep.subr.bf16.mxu0 0
  %1706 = vmatpush2.bf16.msra.mxu0 0
  %1707 = vmatprep.subr.bf16.mxu0 0
  %1708 = vmatpush2.bf16.msra.mxu0 0
  %1709 = vmatprep.subr.bf16.mxu0 0
  %1710 = vmatpush2.bf16.msra.mxu0 0
  %1711 = vmatprep.subr.bf16.mxu0 0
  %1712 = vmatpush2.bf16.msra.mxu0 0
  %1713 = vmatprep.subr.bf16.mxu0 0
  %1714 = vmatpush2.bf16.msra.mxu0 0
  %1715 = vmatprep.subr.bf16.mxu0 0
  %1716 = vmatpush2.bf16.msra.mxu0 0
  %1717 = vmatprep.mubr.bf16.mxu0 0
  %1718 = vmatmul.mubr.bf16.gmra.mxu0 %v1625
  %v1719 = vpop.f32.mrf.mxu0
  %v1720 = vadd.f32 0.0, %v1719
  %v1721 = vpop.f32.mrf.mxu0
  %v1722 = vadd.f32 0.0, %v1721
  %v1723 = vpop.f32.mrf.mxu0
  %v1724 = vadd.f32 0.0, %v1723
  %v1725 = vpop.f32.mrf.mxu0
  %v1726 = vadd.f32 0.0, %v1725
  %1727 = vdwg.mxu0
  %1728 = vmatprep.subr.bf16.mxu0 0
  %1729 = vmatpush1.bf16.msra.mxu0 0
  %1730 = vmatprep.subr.bf16.mxu0 0
  %1731 = vmatpush1.bf16.msra.mxu0 0
  %1732 = vmatprep.subr.bf16.mxu0 0
  %1733 = vmatpush1.bf16.msra.mxu0 0
  %1734 = vmatprep.subr.bf16.mxu0 0
  %1735 = vmatpush1.bf16.msra.mxu0 0
  %1736 = vmatprep.subr.bf16.mxu0 0
  %1737 = vmatpush1.bf16.msra.mxu0 0
  %1738 = vmatprep.subr.bf16.mxu0 0
  %1739 = vmatpush1.bf16.msra.mxu0 0
  %1740 = vmatprep.subr.bf16.mxu0 0
  %1741 = vmatpush1.bf16.msra.mxu0 0
  %1742 = vmatprep.subr.bf16.mxu0 0
  %1743 = vmatpush1.bf16.msra.mxu0 %v1640
  %1744 = vmatprep.subr.bf16.mxu0 0
  %1745 = vmatpush2.bf16.msra.mxu0 0
  %1746 = vmatprep.subr.bf16.mxu0 0
  %1747 = vmatpush2.bf16.msra.mxu0 0
  %1748 = vmatprep.subr.bf16.mxu0 0
  %1749 = vmatpush2.bf16.msra.mxu0 0
  %1750 = vmatprep.subr.bf16.mxu0 0
  %1751 = vmatpush2.bf16.msra.mxu0 0
  %1752 = vmatprep.subr.bf16.mxu0 0
  %1753 = vmatpush2.bf16.msra.mxu0 0
  %1754 = vmatprep.subr.bf16.mxu0 0
  %1755 = vmatpush2.bf16.msra.mxu0 0
  %1756 = vmatprep.subr.bf16.mxu0 0
  %1757 = vmatpush2.bf16.msra.mxu0 0
  %1758 = vmatprep.subr.bf16.mxu0 0
  %1759 = vmatpush2.bf16.msra.mxu0 0
  %1760 = vmatprep.mubr.bf16.mxu0 0
  %1761 = vmatmul.mubr.bf16.gmra.mxu0 %v1625
  %v1762 = vpop.f32.mrf.mxu0
  %v1763 = vadd.f32 0.0, %v1762
  %v1764 = vpop.f32.mrf.mxu0
  %v1765 = vpop.f32.mrf.mxu0
  %v1766 = vadd.f32 0.0, %v1765
  %v1767 = vpop.f32.mrf.mxu0
  %1768 = vdwg.mxu0
  %v1769 = vadd.f32 %v1592, %v1677
  %v1770 = vadd.f32 %v1593, %v1679
  %v1771 = vadd.f32 %v1594, %v1720
  %v1772 = vadd.f32 %v1595, %v1722
  %v1773 = vadd.f32 %v1596, %v1763
  %v1774 = vadd.f32 %v1597, %v1681
  %v1775 = vadd.f32 %v1598, %v1683
  %v1776 = vadd.f32 %v1599, %v1724
  %v1777 = vadd.f32 %v1600, %v1726
  %v1778 = vadd.f32 %v1601, %v1766
  %s1779 = scalar_lea.vmem %s1, 80
  %v1780 = vld [vmem:[%s1779] sm:$0xf]
  %v1781 = vld [vmem:[%s1779 + $0x4] sm:$0xf]
  %v1784 = vunpack.c.l.b16 %v1780
  %v1785 = vunpack.c.l.b16 %v1781
  %v1786 = vpack.c.b16 %v1785, %v1784
  %1787 = vrot.lane.b32.xlu0 %v205, 110
  %v1788 = vpop.permute.xlu0 %1787
  %1789 = vrot.lane.b32.xlu0 %v206, 110
  %v1790 = vpop.permute.xlu0 %1789
  %1791 = vrot.lane.b32.xlu0 %v207, 110
  %v1792 = vpop.permute.xlu0 %1791
  %1793 = vrot.lane.b32.xlu0 %v208, 110
  %v1794 = vpop.permute.xlu0 %1793
  %1795 = vrot.lane.b32.xlu0 %v209, 110
  %v1796 = vpop.permute.xlu0 %1795
  %vm1797 = vcmask 900096
  %v1798 = vsel %vm1797, %v1788, %v1790
  %v1799 = vsel %vm1797, %v1790, %v1792
  %v1800 = vsel %vm1797, %v1792, %v1794
  %v1801 = vsel %vm1797, %v1794, %v1796
  %v1803 = vsel %vm45, %v1786, 0
  %v1806 = vsel %vm49, %v1798, 0
  %v1809 = vsel %vm49, %v1799, 0
  %v1812 = vsel %vm49, %v1800, 0
  %v1815 = vsel %vm49, %v1801, 0
  %v1818 = vsel %vm49, %v1796, 0
  %1820 = vmatprep.subr.bf16.mxu0 0
  %1821 = vmatpush1.bf16.msra.mxu0 0
  %1822 = vmatprep.subr.bf16.mxu0 0
  %1823 = vmatpush1.bf16.msra.mxu0 0
  %1824 = vmatprep.subr.bf16.mxu0 0
  %1825 = vmatpush1.bf16.msra.mxu0 0
  %1826 = vmatprep.subr.bf16.mxu0 0
  %1827 = vmatpush1.bf16.msra.mxu0 0
  %1828 = vmatprep.subr.bf16.mxu0 0
  %1829 = vmatpush1.bf16.msra.mxu0 0
  %1830 = vmatprep.subr.bf16.mxu0 0
  %1831 = vmatpush1.bf16.msra.mxu0 0
  %1832 = vmatprep.subr.bf16.mxu0 0
  %1833 = vmatpush1.bf16.msra.mxu0 0
  %1834 = vmatprep.subr.bf16.mxu0 %v1809
  %1835 = vmatpush1.bf16.msra.mxu0 %v1806
  %1836 = vmatprep.subr.bf16.mxu0 0
  %1837 = vmatpush2.bf16.msra.mxu0 0
  %1838 = vmatprep.subr.bf16.mxu0 0
  %1839 = vmatpush2.bf16.msra.mxu0 0
  %1840 = vmatprep.subr.bf16.mxu0 0
  %1841 = vmatpush2.bf16.msra.mxu0 0
  %1842 = vmatprep.subr.bf16.mxu0 0
  %1843 = vmatpush2.bf16.msra.mxu0 0
  %1844 = vmatprep.subr.bf16.mxu0 0
  %1845 = vmatpush2.bf16.msra.mxu0 0
  %1846 = vmatprep.subr.bf16.mxu0 0
  %1847 = vmatpush2.bf16.msra.mxu0 0
  %1848 = vmatprep.subr.bf16.mxu0 0
  %1849 = vmatpush2.bf16.msra.mxu0 0
  %1850 = vmatprep.subr.bf16.mxu0 0
  %1851 = vmatpush2.bf16.msra.mxu0 0
  %1852 = vmatprep.mubr.bf16.mxu0 0
  %1853 = vmatmul.mubr.bf16.gmra.mxu0 %v1803
  %v1854 = vpop.f32.mrf.mxu0
  %v1855 = vadd.f32 0.0, %v1854
  %v1856 = vpop.f32.mrf.mxu0
  %v1857 = vadd.f32 0.0, %v1856
  %v1858 = vpop.f32.mrf.mxu0
  %v1859 = vadd.f32 0.0, %v1858
  %v1860 = vpop.f32.mrf.mxu0
  %v1861 = vadd.f32 0.0, %v1860
  %1862 = vdwg.mxu0
  %1863 = vmatprep.subr.bf16.mxu0 0
  %1864 = vmatpush1.bf16.msra.mxu0 0
  %1865 = vmatprep.subr.bf16.mxu0 0
  %1866 = vmatpush1.bf16.msra.mxu0 0
  %1867 = vmatprep.subr.bf16.mxu0 0
  %1868 = vmatpush1.bf16.msra.mxu0 0
  %1869 = vmatprep.subr.bf16.mxu0 0
  %1870 = vmatpush1.bf16.msra.mxu0 0
  %1871 = vmatprep.subr.bf16.mxu0 0
  %1872 = vmatpush1.bf16.msra.mxu0 0
  %1873 = vmatprep.subr.bf16.mxu0 0
  %1874 = vmatpush1.bf16.msra.mxu0 0
  %1875 = vmatprep.subr.bf16.mxu0 0
  %1876 = vmatpush1.bf16.msra.mxu0 0
  %1877 = vmatprep.subr.bf16.mxu0 %v1815
  %1878 = vmatpush1.bf16.msra.mxu0 %v1812
  %1879 = vmatprep.subr.bf16.mxu0 0
  %1880 = vmatpush2.bf16.msra.mxu0 0
  %1881 = vmatprep.subr.bf16.mxu0 0
  %1882 = vmatpush2.bf16.msra.mxu0 0
  %1883 = vmatprep.subr.bf16.mxu0 0
  %1884 = vmatpush2.bf16.msra.mxu0 0
  %1885 = vmatprep.subr.bf16.mxu0 0
  %1886 = vmatpush2.bf16.msra.mxu0 0
  %1887 = vmatprep.subr.bf16.mxu0 0
  %1888 = vmatpush2.bf16.msra.mxu0 0
  %1889 = vmatprep.subr.bf16.mxu0 0
  %1890 = vmatpush2.bf16.msra.mxu0 0
  %1891 = vmatprep.subr.bf16.mxu0 0
  %1892 = vmatpush2.bf16.msra.mxu0 0
  %1893 = vmatprep.subr.bf16.mxu0 0
  %1894 = vmatpush2.bf16.msra.mxu0 0
  %1895 = vmatprep.mubr.bf16.mxu0 0
  %1896 = vmatmul.mubr.bf16.gmra.mxu0 %v1803
  %v1897 = vpop.f32.mrf.mxu0
  %v1898 = vadd.f32 0.0, %v1897
  %v1899 = vpop.f32.mrf.mxu0
  %v1900 = vadd.f32 0.0, %v1899
  %v1901 = vpop.f32.mrf.mxu0
  %v1902 = vadd.f32 0.0, %v1901
  %v1903 = vpop.f32.mrf.mxu0
  %v1904 = vadd.f32 0.0, %v1903
  %1905 = vdwg.mxu0
  %1906 = vmatprep.subr.bf16.mxu0 0
  %1907 = vmatpush1.bf16.msra.mxu0 0
  %1908 = vmatprep.subr.bf16.mxu0 0
  %1909 = vmatpush1.bf16.msra.mxu0 0
  %1910 = vmatprep.subr.bf16.mxu0 0
  %1911 = vmatpush1.bf16.msra.mxu0 0
  %1912 = vmatprep.subr.bf16.mxu0 0
  %1913 = vmatpush1.bf16.msra.mxu0 0
  %1914 = vmatprep.subr.bf16.mxu0 0
  %1915 = vmatpush1.bf16.msra.mxu0 0
  %1916 = vmatprep.subr.bf16.mxu0 0
  %1917 = vmatpush1.bf16.msra.mxu0 0
  %1918 = vmatprep.subr.bf16.mxu0 0
  %1919 = vmatpush1.bf16.msra.mxu0 0
  %1920 = vmatprep.subr.bf16.mxu0 0
  %1921 = vmatpush1.bf16.msra.mxu0 %v1818
  %1922 = vmatprep.subr.bf16.mxu0 0
  %1923 = vmatpush2.bf16.msra.mxu0 0
  %1924 = vmatprep.subr.bf16.mxu0 0
  %1925 = vmatpush2.bf16.msra.mxu0 0
  %1926 = vmatprep.subr.bf16.mxu0 0
  %1927 = vmatpush2.bf16.msra.mxu0 0
  %1928 = vmatprep.subr.bf16.mxu0 0
  %1929 = vmatpush2.bf16.msra.mxu0 0
  %1930 = vmatprep.subr.bf16.mxu0 0
  %1931 = vmatpush2.bf16.msra.mxu0 0
  %1932 = vmatprep.subr.bf16.mxu0 0
  %1933 = vmatpush2.bf16.msra.mxu0 0
  %1934 = vmatprep.subr.bf16.mxu0 0
  %1935 = vmatpush2.bf16.msra.mxu0 0
  %1936 = vmatprep.subr.bf16.mxu0 0
  %1937 = vmatpush2.bf16.msra.mxu0 0
  %1938 = vmatprep.mubr.bf16.mxu0 0
  %1939 = vmatmul.mubr.bf16.gmra.mxu0 %v1803
  %v1940 = vpop.f32.mrf.mxu0
  %v1941 = vadd.f32 0.0, %v1940
  %v1942 = vpop.f32.mrf.mxu0
  %v1943 = vpop.f32.mrf.mxu0
  %v1944 = vadd.f32 0.0, %v1943
  %v1945 = vpop.f32.mrf.mxu0
  %1946 = vdwg.mxu0
  %v1947 = vadd.f32 %v1769, %v1855
  %v1948 = vadd.f32 %v1770, %v1857
  %v1949 = vadd.f32 %v1771, %v1898
  %v1950 = vadd.f32 %v1772, %v1900
  %v1951 = vadd.f32 %v1773, %v1941
  %v1952 = vadd.f32 %v1774, %v1859
  %v1953 = vadd.f32 %v1775, %v1861
  %v1954 = vadd.f32 %v1776, %v1902
  %v1955 = vadd.f32 %v1777, %v1904
  %v1956 = vadd.f32 %v1778, %v1944
  %s1957 = scalar_lea.vmem %s1, 88
  %v1958 = vld [vmem:[%s1957] sm:$0xf]
  %v1959 = vld [vmem:[%s1957 + $0x4] sm:$0xf]
  %v1962 = vunpack.c.l.b16 %v1958
  %v1963 = vunpack.c.l.b16 %v1959
  %v1964 = vpack.c.b16 %v1963, %v1962
  %1965 = vrot.lane.b32.xlu0 %v40, 110
  %v1966 = vpop.permute.xlu0 %1965
  %1967 = vrot.lane.b32.xlu0 %v41, 110
  %v1968 = vpop.permute.xlu0 %1967
  %1969 = vrot.lane.b32.xlu0 %v42, 110
  %v1970 = vpop.permute.xlu0 %1969
  %1971 = vrot.lane.b32.xlu0 %v43, 110
  %v1972 = vpop.permute.xlu0 %1971
  %1973 = vrot.lane.b32.xlu0 %v44, 110
  %v1974 = vpop.permute.xlu0 %1973
  %v1975 = vsel %vm1797, %v1966, %v1968
  %v1976 = vsel %vm1797, %v1968, %v1970
  %v1977 = vsel %vm1797, %v1970, %v1972
  %v1978 = vsel %vm1797, %v1972, %v1974
  %v1980 = vsel %vm45, %v1964, 0
  %v1983 = vsel %vm49, %v1975, 0
  %v1986 = vsel %vm49, %v1976, 0
  %v1989 = vsel %vm49, %v1977, 0
  %v1992 = vsel %vm49, %v1978, 0
  %v1995 = vsel %vm49, %v1974, 0
  %1997 = vmatprep.subr.bf16.mxu0 0
  %1998 = vmatpush1.bf16.msra.mxu0 0
  %1999 = vmatprep.subr.bf16.mxu0 0
  %2000 = vmatpush1.bf16.msra.mxu0 0
  %2001 = vmatprep.subr.bf16.mxu0 0
  %2002 = vmatpush1.bf16.msra.mxu0 0
  %2003 = vmatprep.subr.bf16.mxu0 0
  %2004 = vmatpush1.bf16.msra.mxu0 0
  %2005 = vmatprep.subr.bf16.mxu0 0
  %2006 = vmatpush1.bf16.msra.mxu0 0
  %2007 = vmatprep.subr.bf16.mxu0 0
  %2008 = vmatpush1.bf16.msra.mxu0 0
  %2009 = vmatprep.subr.bf16.mxu0 0
  %2010 = vmatpush1.bf16.msra.mxu0 0
  %2011 = vmatprep.subr.bf16.mxu0 %v1986
  %2012 = vmatpush1.bf16.msra.mxu0 %v1983
  %2013 = vmatprep.subr.bf16.mxu0 0
  %2014 = vmatpush2.bf16.msra.mxu0 0
  %2015 = vmatprep.subr.bf16.mxu0 0
  %2016 = vmatpush2.bf16.msra.mxu0 0
  %2017 = vmatprep.subr.bf16.mxu0 0
  %2018 = vmatpush2.bf16.msra.mxu0 0
  %2019 = vmatprep.subr.bf16.mxu0 0
  %2020 = vmatpush2.bf16.msra.mxu0 0
  %2021 = vmatprep.subr.bf16.mxu0 0
  %2022 = vmatpush2.bf16.msra.mxu0 0
  %2023 = vmatprep.subr.bf16.mxu0 0
  %2024 = vmatpush2.bf16.msra.mxu0 0
  %2025 = vmatprep.subr.bf16.mxu0 0
  %2026 = vmatpush2.bf16.msra.mxu0 0
  %2027 = vmatprep.subr.bf16.mxu0 0
  %2028 = vmatpush2.bf16.msra.mxu0 0
  %2029 = vmatprep.mubr.bf16.mxu0 0
  %2030 = vmatmul.mubr.bf16.gmra.mxu0 %v1980
  %v2031 = vpop.f32.mrf.mxu0
  %v2032 = vadd.f32 0.0, %v2031
  %v2033 = vpop.f32.mrf.mxu0
  %v2034 = vadd.f32 0.0, %v2033
  %v2035 = vpop.f32.mrf.mxu0
  %v2036 = vadd.f32 0.0, %v2035
  %v2037 = vpop.f32.mrf.mxu0
  %v2038 = vadd.f32 0.0, %v2037
  %2039 = vdwg.mxu0
  %2040 = vmatprep.subr.bf16.mxu0 0
  %2041 = vmatpush1.bf16.msra.mxu0 0
  %2042 = vmatprep.subr.bf16.mxu0 0
  %2043 = vmatpush1.bf16.msra.mxu0 0
  %2044 = vmatprep.subr.bf16.mxu0 0
  %2045 = vmatpush1.bf16.msra.mxu0 0
  %2046 = vmatprep.subr.bf16.mxu0 0
  %2047 = vmatpush1.bf16.msra.mxu0 0
  %2048 = vmatprep.subr.bf16.mxu0 0
  %2049 = vmatpush1.bf16.msra.mxu0 0
  %2050 = vmatprep.subr.bf16.mxu0 0
  %2051 = vmatpush1.bf16.msra.mxu0 0
  %2052 = vmatprep.subr.bf16.mxu0 0
  %2053 = vmatpush1.bf16.msra.mxu0 0
  %2054 = vmatprep.subr.bf16.mxu0 %v1992
  %2055 = vmatpush1.bf16.msra.mxu0 %v1989
  %2056 = vmatprep.subr.bf16.mxu0 0
  %2057 = vmatpush2.bf16.msra.mxu0 0
  %2058 = vmatprep.subr.bf16.mxu0 0
  %2059 = vmatpush2.bf16.msra.mxu0 0
  %2060 = vmatprep.subr.bf16.mxu0 0
  %2061 = vmatpush2.bf16.msra.mxu0 0
  %2062 = vmatprep.subr.bf16.mxu0 0
  %2063 = vmatpush2.bf16.msra.mxu0 0
  %2064 = vmatprep.subr.bf16.mxu0 0
  %2065 = vmatpush2.bf16.msra.mxu0 0
  %2066 = vmatprep.subr.bf16.mxu0 0
  %2067 = vmatpush2.bf16.msra.mxu0 0
  %2068 = vmatprep.subr.bf16.mxu0 0
  %2069 = vmatpush2.bf16.msra.mxu0 0
  %2070 = vmatprep.subr.bf16.mxu0 0
  %2071 = vmatpush2.bf16.msra.mxu0 0
  %2072 = vmatprep.mubr.bf16.mxu0 0
  %2073 = vmatmul.mubr.bf16.gmra.mxu0 %v1980
  %v2074 = vpop.f32.mrf.mxu0
  %v2075 = vadd.f32 0.0, %v2074
  %v2076 = vpop.f32.mrf.mxu0
  %v2077 = vadd.f32 0.0, %v2076
  %v2078 = vpop.f32.mrf.mxu0
  %v2079 = vadd.f32 0.0, %v2078
  %v2080 = vpop.f32.mrf.mxu0
  %v2081 = vadd.f32 0.0, %v2080
  %2082 = vdwg.mxu0
  %2083 = vmatprep.subr.bf16.mxu0 0
  %2084 = vmatpush1.bf16.msra.mxu0 0
  %2085 = vmatprep.subr.bf16.mxu0 0
  %2086 = vmatpush1.bf16.msra.mxu0 0
  %2087 = vmatprep.subr.bf16.mxu0 0
  %2088 = vmatpush1.bf16.msra.mxu0 0
  %2089 = vmatprep.subr.bf16.mxu0 0
  %2090 = vmatpush1.bf16.msra.mxu0 0
  %2091 = vmatprep.subr.bf16.mxu0 0
  %2092 = vmatpush1.bf16.msra.mxu0 0
  %2093 = vmatprep.subr.bf16.mxu0 0
  %2094 = vmatpush1.bf16.msra.mxu0 0
  %2095 = vmatprep.subr.bf16.mxu0 0
  %2096 = vmatpush1.bf16.msra.mxu0 0
  %2097 = vmatprep.subr.bf16.mxu0 0
  %2098 = vmatpush1.bf16.msra.mxu0 %v1995
  %2099 = vmatprep.subr.bf16.mxu0 0
  %2100 = vmatpush2.bf16.msra.mxu0 0
  %2101 = vmatprep.subr.bf16.mxu0 0
  %2102 = vmatpush2.bf16.msra.mxu0 0
  %2103 = vmatprep.subr.bf16.mxu0 0
  %2104 = vmatpush2.bf16.msra.mxu0 0
  %2105 = vmatprep.subr.bf16.mxu0 0
  %2106 = vmatpush2.bf16.msra.mxu0 0
  %2107 = vmatprep.subr.bf16.mxu0 0
  %2108 = vmatpush2.bf16.msra.mxu0 0
  %2109 = vmatprep.subr.bf16.mxu0 0
  %2110 = vmatpush2.bf16.msra.mxu0 0
  %2111 = vmatprep.subr.bf16.mxu0 0
  %2112 = vmatpush2.bf16.msra.mxu0 0
  %2113 = vmatprep.subr.bf16.mxu0 0
  %2114 = vmatpush2.bf16.msra.mxu0 0
  %2115 = vmatprep.mubr.bf16.mxu0 0
  %2116 = vmatmul.mubr.bf16.gmra.mxu0 %v1980
  %v2117 = vpop.f32.mrf.mxu0
  %v2118 = vadd.f32 0.0, %v2117
  %v2119 = vpop.f32.mrf.mxu0
  %v2120 = vpop.f32.mrf.mxu0
  %v2121 = vadd.f32 0.0, %v2120
  %v2122 = vpop.f32.mrf.mxu0
  %2123 = vdwg.mxu0
  %v2124 = vadd.f32 %v1947, %v2032
  %v2125 = vadd.f32 %v1948, %v2034
  %v2126 = vadd.f32 %v1949, %v2075
  %v2127 = vadd.f32 %v1950, %v2077
  %v2128 = vadd.f32 %v1951, %v2118
  %v2129 = vadd.f32 %v1952, %v2036
  %v2130 = vadd.f32 %v1953, %v2038
  %v2131 = vadd.f32 %v1954, %v2079
  %v2132 = vadd.f32 %v1955, %v2081
  %v2133 = vadd.f32 %v1956, %v2121
  %s2134 = scalar_lea.vmem %s1, 96
  %v2135 = vld [vmem:[%s2134] sm:$0xf]
  %v2136 = vld [vmem:[%s2134 + $0x4] sm:$0xf]
  %v2139 = vunpack.c.l.b16 %v2135
  %v2140 = vunpack.c.l.b16 %v2136
  %v2141 = vpack.c.b16 %v2140, %v2139
  %2142 = vrot.lane.b32.xlu0 %v730, 111
  %v2143 = vpop.permute.xlu0 %2142
  %2144 = vrot.lane.b32.xlu0 %v731, 111
  %v2145 = vpop.permute.xlu0 %2144
  %2146 = vrot.lane.b32.xlu0 %v732, 111
  %v2147 = vpop.permute.xlu0 %2146
  %2148 = vrot.lane.b32.xlu0 %v733, 111
  %v2149 = vpop.permute.xlu0 %2148
  %2150 = vrot.lane.b32.xlu0 %v734, 111
  %v2151 = vpop.permute.xlu0 %2150
  %v2152 = vsel %vm1442, %v2143, %v2145
  %v2153 = vsel %vm1442, %v2145, %v2147
  %v2154 = vsel %vm1442, %v2147, %v2149
  %v2155 = vsel %vm1442, %v2149, %v2151
  %v2157 = vsel %vm45, %v2141, 0
  %v2160 = vsel %vm49, %v2152, 0
  %v2163 = vsel %vm49, %v2153, 0
  %v2166 = vsel %vm49, %v2154, 0
  %v2169 = vsel %vm49, %v2155, 0
  %v2172 = vsel %vm49, %v2151, 0
  %2174 = vmatprep.subr.bf16.mxu0 0
  %2175 = vmatpush1.bf16.msra.mxu0 0
  %2176 = vmatprep.subr.bf16.mxu0 0
  %2177 = vmatpush1.bf16.msra.mxu0 0
  %2178 = vmatprep.subr.bf16.mxu0 0
  %2179 = vmatpush1.bf16.msra.mxu0 0
  %2180 = vmatprep.subr.bf16.mxu0 0
  %2181 = vmatpush1.bf16.msra.mxu0 0
  %2182 = vmatprep.subr.bf16.mxu0 0
  %2183 = vmatpush1.bf16.msra.mxu0 0
  %2184 = vmatprep.subr.bf16.mxu0 0
  %2185 = vmatpush1.bf16.msra.mxu0 0
  %2186 = vmatprep.subr.bf16.mxu0 0
  %2187 = vmatpush1.bf16.msra.mxu0 0
  %2188 = vmatprep.subr.bf16.mxu0 %v2163
  %2189 = vmatpush1.bf16.msra.mxu0 %v2160
  %2190 = vmatprep.subr.bf16.mxu0 0
  %2191 = vmatpush2.bf16.msra.mxu0 0
  %2192 = vmatprep.subr.bf16.mxu0 0
  %2193 = vmatpush2.bf16.msra.mxu0 0
  %2194 = vmatprep.subr.bf16.mxu0 0
  %2195 = vmatpush2.bf16.msra.mxu0 0
  %2196 = vmatprep.subr.bf16.mxu0 0
  %2197 = vmatpush2.bf16.msra.mxu0 0
  %2198 = vmatprep.subr.bf16.mxu0 0
  %2199 = vmatpush2.bf16.msra.mxu0 0
  %2200 = vmatprep.subr.bf16.mxu0 0
  %2201 = vmatpush2.bf16.msra.mxu0 0
  %2202 = vmatprep.subr.bf16.mxu0 0
  %2203 = vmatpush2.bf16.msra.mxu0 0
  %2204 = vmatprep.subr.bf16.mxu0 0
  %2205 = vmatpush2.bf16.msra.mxu0 0
  %2206 = vmatprep.mubr.bf16.mxu0 0
  %2207 = vmatmul.mubr.bf16.gmra.mxu0 %v2157
  %v2208 = vpop.f32.mrf.mxu0
  %v2209 = vadd.f32 0.0, %v2208
  %v2210 = vpop.f32.mrf.mxu0
  %v2211 = vadd.f32 0.0, %v2210
  %v2212 = vpop.f32.mrf.mxu0
  %v2213 = vadd.f32 0.0, %v2212
  %v2214 = vpop.f32.mrf.mxu0
  %v2215 = vadd.f32 0.0, %v2214
  %2216 = vdwg.mxu0
  %2217 = vmatprep.subr.bf16.mxu0 0
  %2218 = vmatpush1.bf16.msra.mxu0 0
  %2219 = vmatprep.subr.bf16.mxu0 0
  %2220 = vmatpush1.bf16.msra.mxu0 0
  %2221 = vmatprep.subr.bf16.mxu0 0
  %2222 = vmatpush1.bf16.msra.mxu0 0
  %2223 = vmatprep.subr.bf16.mxu0 0
  %2224 = vmatpush1.bf16.msra.mxu0 0
  %2225 = vmatprep.subr.bf16.mxu0 0
  %2226 = vmatpush1.bf16.msra.mxu0 0
  %2227 = vmatprep.subr.bf16.mxu0 0
  %2228 = vmatpush1.bf16.msra.mxu0 0
  %2229 = vmatprep.subr.bf16.mxu0 0
  %2230 = vmatpush1.bf16.msra.mxu0 0
  %2231 = vmatprep.subr.bf16.mxu0 %v2169
  %2232 = vmatpush1.bf16.msra.mxu0 %v2166
  %2233 = vmatprep.subr.bf16.mxu0 0
  %2234 = vmatpush2.bf16.msra.mxu0 0
  %2235 = vmatprep.subr.bf16.mxu0 0
  %2236 = vmatpush2.bf16.msra.mxu0 0
  %2237 = vmatprep.subr.bf16.mxu0 0
  %2238 = vmatpush2.bf16.msra.mxu0 0
  %2239 = vmatprep.subr.bf16.mxu0 0
  %2240 = vmatpush2.bf16.msra.mxu0 0
  %2241 = vmatprep.subr.bf16.mxu0 0
  %2242 = vmatpush2.bf16.msra.mxu0 0
  %2243 = vmatprep.subr.bf16.mxu0 0
  %2244 = vmatpush2.bf16.msra.mxu0 0
  %2245 = vmatprep.subr.bf16.mxu0 0
  %2246 = vmatpush2.bf16.msra.mxu0 0
  %2247 = vmatprep.subr.bf16.mxu0 0
  %2248 = vmatpush2.bf16.msra.mxu0 0
  %2249 = vmatprep.mubr.bf16.mxu0 0
  %2250 = vmatmul.mubr.bf16.gmra.mxu0 %v2157
  %v2251 = vpop.f32.mrf.mxu0
  %v2252 = vadd.f32 0.0, %v2251
  %v2253 = vpop.f32.mrf.mxu0
  %v2254 = vadd.f32 0.0, %v2253
  %v2255 = vpop.f32.mrf.mxu0
  %v2256 = vadd.f32 0.0, %v2255
  %v2257 = vpop.f32.mrf.mxu0
  %v2258 = vadd.f32 0.0, %v2257
  %2259 = vdwg.mxu0
  %2260 = vmatprep.subr.bf16.mxu0 0
  %2261 = vmatpush1.bf16.msra.mxu0 0
  %2262 = vmatprep.subr.bf16.mxu0 0
  %2263 = vmatpush1.bf16.msra.mxu0 0
  %2264 = vmatprep.subr.bf16.mxu0 0
  %2265 = vmatpush1.bf16.msra.mxu0 0
  %2266 = vmatprep.subr.bf16.mxu0 0
  %2267 = vmatpush1.bf16.msra.mxu0 0
  %2268 = vmatprep.subr.bf16.mxu0 0
  %2269 = vmatpush1.bf16.msra.mxu0 0
  %2270 = vmatprep.subr.bf16.mxu0 0
  %2271 = vmatpush1.bf16.msra.mxu0 0
  %2272 = vmatprep.subr.bf16.mxu0 0
  %2273 = vmatpush1.bf16.msra.mxu0 0
  %2274 = vmatprep.subr.bf16.mxu0 0
  %2275 = vmatpush1.bf16.msra.mxu0 %v2172
  %2276 = vmatprep.subr.bf16.mxu0 0
  %2277 = vmatpush2.bf16.msra.mxu0 0
  %2278 = vmatprep.subr.bf16.mxu0 0
  %2279 = vmatpush2.bf16.msra.mxu0 0
  %2280 = vmatprep.subr.bf16.mxu0 0
  %2281 = vmatpush2.bf16.msra.mxu0 0
  %2282 = vmatprep.subr.bf16.mxu0 0
  %2283 = vmatpush2.bf16.msra.mxu0 0
  %2284 = vmatprep.subr.bf16.mxu0 0
  %2285 = vmatpush2.bf16.msra.mxu0 0
  %2286 = vmatprep.subr.bf16.mxu0 0
  %2287 = vmatpush2.bf16.msra.mxu0 0
  %2288 = vmatprep.subr.bf16.mxu0 0
  %2289 = vmatpush2.bf16.msra.mxu0 0
  %2290 = vmatprep.subr.bf16.mxu0 0
  %2291 = vmatpush2.bf16.msra.mxu0 0
  %2292 = vmatprep.mubr.bf16.mxu0 0
  %2293 = vmatmul.mubr.bf16.gmra.mxu0 %v2157
  %v2294 = vpop.f32.mrf.mxu0
  %v2295 = vadd.f32 0.0, %v2294
  %v2296 = vpop.f32.mrf.mxu0
  %v2297 = vpop.f32.mrf.mxu0
  %v2298 = vadd.f32 0.0, %v2297
  %v2299 = vpop.f32.mrf.mxu0
  %2300 = vdwg.mxu0
  %v2301 = vadd.f32 %v2124, %v2209
  %v2302 = vadd.f32 %v2125, %v2211
  %v2303 = vadd.f32 %v2126, %v2252
  %v2304 = vadd.f32 %v2127, %v2254
  %v2305 = vadd.f32 %v2128, %v2295
  %v2306 = vadd.f32 %v2129, %v2213
  %v2307 = vadd.f32 %v2130, %v2215
  %v2308 = vadd.f32 %v2131, %v2256
  %v2309 = vadd.f32 %v2132, %v2258
  %v2310 = vadd.f32 %v2133, %v2298
  %s2311 = scalar_lea.vmem %s1, 104
  %v2312 = vld [vmem:[%s2311] sm:$0xf]
  %v2313 = vld [vmem:[%s2311 + $0x4] sm:$0xf]
  %v2316 = vunpack.c.l.b16 %v2312
  %v2317 = vunpack.c.l.b16 %v2313
  %v2318 = vpack.c.b16 %v2317, %v2316
  %2319 = vrot.lane.b32.xlu0 %v910, 111
  %v2320 = vpop.permute.xlu0 %2319
  %2321 = vrot.lane.b32.xlu0 %v911, 111
  %v2322 = vpop.permute.xlu0 %2321
  %2323 = vrot.lane.b32.xlu0 %v912, 111
  %v2324 = vpop.permute.xlu0 %2323
  %2325 = vrot.lane.b32.xlu0 %v913, 111
  %v2326 = vpop.permute.xlu0 %2325
  %2327 = vrot.lane.b32.xlu0 %v914, 111
  %v2328 = vpop.permute.xlu0 %2327
  %v2329 = vsel %vm1442, %v2320, %v2322
  %v2330 = vsel %vm1442, %v2322, %v2324
  %v2331 = vsel %vm1442, %v2324, %v2326
  %v2332 = vsel %vm1442, %v2326, %v2328
  %v2334 = vsel %vm45, %v2318, 0
  %v2337 = vsel %vm49, %v2329, 0
  %v2340 = vsel %vm49, %v2330, 0
  %v2343 = vsel %vm49, %v2331, 0
  %v2346 = vsel %vm49, %v2332, 0
  %v2349 = vsel %vm49, %v2328, 0
  %2351 = vmatprep.subr.bf16.mxu0 0
  %2352 = vmatpush1.bf16.msra.mxu0 0
  %2353 = vmatprep.subr.bf16.mxu0 0
  %2354 = vmatpush1.bf16.msra.mxu0 0
  %2355 = vmatprep.subr.bf16.mxu0 0
  %2356 = vmatpush1.bf16.msra.mxu0 0
  %2357 = vmatprep.subr.bf16.mxu0 0
  %2358 = vmatpush1.bf16.msra.mxu0 0
  %2359 = vmatprep.subr.bf16.mxu0 0
  %2360 = vmatpush1.bf16.msra.mxu0 0
  %2361 = vmatprep.subr.bf16.mxu0 0
  %2362 = vmatpush1.bf16.msra.mxu0 0
  %2363 = vmatprep.subr.bf16.mxu0 0
  %2364 = vmatpush1.bf16.msra.mxu0 0
  %2365 = vmatprep.subr.bf16.mxu0 %v2340
  %2366 = vmatpush1.bf16.msra.mxu0 %v2337
  %2367 = vmatprep.subr.bf16.mxu0 0
  %2368 = vmatpush2.bf16.msra.mxu0 0
  %2369 = vmatprep.subr.bf16.mxu0 0
  %2370 = vmatpush2.bf16.msra.mxu0 0
  %2371 = vmatprep.subr.bf16.mxu0 0
  %2372 = vmatpush2.bf16.msra.mxu0 0
  %2373 = vmatprep.subr.bf16.mxu0 0
  %2374 = vmatpush2.bf16.msra.mxu0 0
  %2375 = vmatprep.subr.bf16.mxu0 0
  %2376 = vmatpush2.bf16.msra.mxu0 0
  %2377 = vmatprep.subr.bf16.mxu0 0
  %2378 = vmatpush2.bf16.msra.mxu0 0
  %2379 = vmatprep.subr.bf16.mxu0 0
  %2380 = vmatpush2.bf16.msra.mxu0 0
  %2381 = vmatprep.subr.bf16.mxu0 0
  %2382 = vmatpush2.bf16.msra.mxu0 0
  %2383 = vmatprep.mubr.bf16.mxu0 0
  %2384 = vmatmul.mubr.bf16.gmra.mxu0 %v2334
  %v2385 = vpop.f32.mrf.mxu0
  %v2386 = vadd.f32 0.0, %v2385
  %v2387 = vpop.f32.mrf.mxu0
  %v2388 = vadd.f32 0.0, %v2387
  %v2389 = vpop.f32.mrf.mxu0
  %v2390 = vadd.f32 0.0, %v2389
  %v2391 = vpop.f32.mrf.mxu0
  %v2392 = vadd.f32 0.0, %v2391
  %2393 = vdwg.mxu0
  %2394 = vmatprep.subr.bf16.mxu0 0
  %2395 = vmatpush1.bf16.msra.mxu0 0
  %2396 = vmatprep.subr.bf16.mxu0 0
  %2397 = vmatpush1.bf16.msra.mxu0 0
  %2398 = vmatprep.subr.bf16.mxu0 0
  %2399 = vmatpush1.bf16.msra.mxu0 0
  %2400 = vmatprep.subr.bf16.mxu0 0
  %2401 = vmatpush1.bf16.msra.mxu0 0
  %2402 = vmatprep.subr.bf16.mxu0 0
  %2403 = vmatpush1.bf16.msra.mxu0 0
  %2404 = vmatprep.subr.bf16.mxu0 0
  %2405 = vmatpush1.bf16.msra.mxu0 0
  %2406 = vmatprep.subr.bf16.mxu0 0
  %2407 = vmatpush1.bf16.msra.mxu0 0
  %2408 = vmatprep.subr.bf16.mxu0 %v2346
  %2409 = vmatpush1.bf16.msra.mxu0 %v2343
  %2410 = vmatprep.subr.bf16.mxu0 0
  %2411 = vmatpush2.bf16.msra.mxu0 0
  %2412 = vmatprep.subr.bf16.mxu0 0
  %2413 = vmatpush2.bf16.msra.mxu0 0
  %2414 = vmatprep.subr.bf16.mxu0 0
  %2415 = vmatpush2.bf16.msra.mxu0 0
  %2416 = vmatprep.subr.bf16.mxu0 0
  %2417 = vmatpush2.bf16.msra.mxu0 0
  %2418 = vmatprep.subr.bf16.mxu0 0
  %2419 = vmatpush2.bf16.msra.mxu0 0
  %2420 = vmatprep.subr.bf16.mxu0 0
  %2421 = vmatpush2.bf16.msra.mxu0 0
  %2422 = vmatprep.subr.bf16.mxu0 0
  %2423 = vmatpush2.bf16.msra.mxu0 0
  %2424 = vmatprep.subr.bf16.mxu0 0
  %2425 = vmatpush2.bf16.msra.mxu0 0
  %2426 = vmatprep.mubr.bf16.mxu0 0
  %2427 = vmatmul.mubr.bf16.gmra.mxu0 %v2334
  %v2428 = vpop.f32.mrf.mxu0
  %v2429 = vadd.f32 0.0, %v2428
  %v2430 = vpop.f32.mrf.mxu0
  %v2431 = vadd.f32 0.0, %v2430
  %v2432 = vpop.f32.mrf.mxu0
  %v2433 = vadd.f32 0.0, %v2432
  %v2434 = vpop.f32.mrf.mxu0
  %v2435 = vadd.f32 0.0, %v2434
  %2436 = vdwg.mxu0
  %2437 = vmatprep.subr.bf16.mxu0 0
  %2438 = vmatpush1.bf16.msra.mxu0 0
  %2439 = vmatprep.subr.bf16.mxu0 0
  %2440 = vmatpush1.bf16.msra.mxu0 0
  %2441 = vmatprep.subr.bf16.mxu0 0
  %2442 = vmatpush1.bf16.msra.mxu0 0
  %2443 = vmatprep.subr.bf16.mxu0 0
  %2444 = vmatpush1.bf16.msra.mxu0 0
  %2445 = vmatprep.subr.bf16.mxu0 0
  %2446 = vmatpush1.bf16.msra.mxu0 0
  %2447 = vmatprep.subr.bf16.mxu0 0
  %2448 = vmatpush1.bf16.msra.mxu0 0
  %2449 = vmatprep.subr.bf16.mxu0 0
  %2450 = vmatpush1.bf16.msra.mxu0 0
  %2451 = vmatprep.subr.bf16.mxu0 0
  %2452 = vmatpush1.bf16.msra.mxu0 %v2349
  %2453 = vmatprep.subr.bf16.mxu0 0
  %2454 = vmatpush2.bf16.msra.mxu0 0
  %2455 = vmatprep.subr.bf16.mxu0 0
  %2456 = vmatpush2.bf16.msra.mxu0 0
  %2457 = vmatprep.subr.bf16.mxu0 0
  %2458 = vmatpush2.bf16.msra.mxu0 0
  %2459 = vmatprep.subr.bf16.mxu0 0
  %2460 = vmatpush2.bf16.msra.mxu0 0
  %2461 = vmatprep.subr.bf16.mxu0 0
  %2462 = vmatpush2.bf16.msra.mxu0 0
  %2463 = vmatprep.subr.bf16.mxu0 0
  %2464 = vmatpush2.bf16.msra.mxu0 0
  %2465 = vmatprep.subr.bf16.mxu0 0
  %2466 = vmatpush2.bf16.msra.mxu0 0
  %2467 = vmatprep.subr.bf16.mxu0 0
  %2468 = vmatpush2.bf16.msra.mxu0 0
  %2469 = vmatprep.mubr.bf16.mxu0 0
  %2470 = vmatmul.mubr.bf16.gmra.mxu0 %v2334
  %v2471 = vpop.f32.mrf.mxu0
  %v2472 = vadd.f32 0.0, %v2471
  %v2473 = vpop.f32.mrf.mxu0
  %v2474 = vpop.f32.mrf.mxu0
  %v2475 = vadd.f32 0.0, %v2474
  %v2476 = vpop.f32.mrf.mxu0
  %2477 = vdwg.mxu0
  %v2478 = vadd.f32 %v2301, %v2386
  %v2479 = vadd.f32 %v2302, %v2388
  %v2480 = vadd.f32 %v2303, %v2429
  %v2481 = vadd.f32 %v2304, %v2431
  %v2482 = vadd.f32 %v2305, %v2472
  %v2483 = vadd.f32 %v2306, %v2390
  %v2484 = vadd.f32 %v2307, %v2392
  %v2485 = vadd.f32 %v2308, %v2433
  %v2486 = vadd.f32 %v2309, %v2435
  %v2487 = vadd.f32 %v2310, %v2475
  %s2488 = scalar_lea.vmem %s1, 112
  %v2489 = vld [vmem:[%s2488] sm:$0xf]
  %v2490 = vld [vmem:[%s2488 + $0x4] sm:$0xf]
  %v2493 = vunpack.c.l.b16 %v2489
  %v2494 = vunpack.c.l.b16 %v2490
  %v2495 = vpack.c.b16 %v2494, %v2493
  %2496 = vrot.lane.b32.xlu0 %v730, 110
  %v2497 = vpop.permute.xlu0 %2496
  %2498 = vrot.lane.b32.xlu0 %v731, 110
  %v2499 = vpop.permute.xlu0 %2498
  %2500 = vrot.lane.b32.xlu0 %v732, 110
  %v2501 = vpop.permute.xlu0 %2500
  %2502 = vrot.lane.b32.xlu0 %v733, 110
  %v2503 = vpop.permute.xlu0 %2502
  %2504 = vrot.lane.b32.xlu0 %v734, 110
  %v2505 = vpop.permute.xlu0 %2504
  %v2506 = vsel %vm1797, %v2497, %v2499
  %v2507 = vsel %vm1797, %v2499, %v2501
  %v2508 = vsel %vm1797, %v2501, %v2503
  %v2509 = vsel %vm1797, %v2503, %v2505
  %v2511 = vsel %vm45, %v2495, 0
  %v2514 = vsel %vm49, %v2506, 0
  %v2517 = vsel %vm49, %v2507, 0
  %v2520 = vsel %vm49, %v2508, 0
  %v2523 = vsel %vm49, %v2509, 0
  %v2526 = vsel %vm49, %v2505, 0
  %2528 = vmatprep.subr.bf16.mxu0 0
  %2529 = vmatpush1.bf16.msra.mxu0 0
  %2530 = vmatprep.subr.bf16.mxu0 0
  %2531 = vmatpush1.bf16.msra.mxu0 0
  %2532 = vmatprep.subr.bf16.mxu0 0
  %2533 = vmatpush1.bf16.msra.mxu0 0
  %2534 = vmatprep.subr.bf16.mxu0 0
  %2535 = vmatpush1.bf16.msra.mxu0 0
  %2536 = vmatprep.subr.bf16.mxu0 0
  %2537 = vmatpush1.bf16.msra.mxu0 0
  %2538 = vmatprep.subr.bf16.mxu0 0
  %2539 = vmatpush1.bf16.msra.mxu0 0
  %2540 = vmatprep.subr.bf16.mxu0 0
  %2541 = vmatpush1.bf16.msra.mxu0 0
  %2542 = vmatprep.subr.bf16.mxu0 %v2517
  %2543 = vmatpush1.bf16.msra.mxu0 %v2514
  %2544 = vmatprep.subr.bf16.mxu0 0
  %2545 = vmatpush2.bf16.msra.mxu0 0
  %2546 = vmatprep.subr.bf16.mxu0 0
  %2547 = vmatpush2.bf16.msra.mxu0 0
  %2548 = vmatprep.subr.bf16.mxu0 0
  %2549 = vmatpush2.bf16.msra.mxu0 0
  %2550 = vmatprep.subr.bf16.mxu0 0
  %2551 = vmatpush2.bf16.msra.mxu0 0
  %2552 = vmatprep.subr.bf16.mxu0 0
  %2553 = vmatpush2.bf16.msra.mxu0 0
  %2554 = vmatprep.subr.bf16.mxu0 0
  %2555 = vmatpush2.bf16.msra.mxu0 0
  %2556 = vmatprep.subr.bf16.mxu0 0
  %2557 = vmatpush2.bf16.msra.mxu0 0
  %2558 = vmatprep.subr.bf16.mxu0 0
  %2559 = vmatpush2.bf16.msra.mxu0 0
  %2560 = vmatprep.mubr.bf16.mxu0 0
  %2561 = vmatmul.mubr.bf16.gmra.mxu0 %v2511
  %v2562 = vpop.f32.mrf.mxu0
  %v2563 = vadd.f32 0.0, %v2562
  %v2564 = vpop.f32.mrf.mxu0
  %v2565 = vadd.f32 0.0, %v2564
  %v2566 = vpop.f32.mrf.mxu0
  %v2567 = vadd.f32 0.0, %v2566
  %v2568 = vpop.f32.mrf.mxu0
  %v2569 = vadd.f32 0.0, %v2568
  %2570 = vdwg.mxu0
  %2571 = vmatprep.subr.bf16.mxu0 0
  %2572 = vmatpush1.bf16.msra.mxu0 0
  %2573 = vmatprep.subr.bf16.mxu0 0
  %2574 = vmatpush1.bf16.msra.mxu0 0
  %2575 = vmatprep.subr.bf16.mxu0 0
  %2576 = vmatpush1.bf16.msra.mxu0 0
  %2577 = vmatprep.subr.bf16.mxu0 0
  %2578 = vmatpush1.bf16.msra.mxu0 0
  %2579 = vmatprep.subr.bf16.mxu0 0
  %2580 = vmatpush1.bf16.msra.mxu0 0
  %2581 = vmatprep.subr.bf16.mxu0 0
  %2582 = vmatpush1.bf16.msra.mxu0 0
  %2583 = vmatprep.subr.bf16.mxu0 0
  %2584 = vmatpush1.bf16.msra.mxu0 0
  %2585 = vmatprep.subr.bf16.mxu0 %v2523
  %2586 = vmatpush1.bf16.msra.mxu0 %v2520
  %2587 = vmatprep.subr.bf16.mxu0 0
  %2588 = vmatpush2.bf16.msra.mxu0 0
  %2589 = vmatprep.subr.bf16.mxu0 0
  %2590 = vmatpush2.bf16.msra.mxu0 0
  %2591 = vmatprep.subr.bf16.mxu0 0
  %2592 = vmatpush2.bf16.msra.mxu0 0
  %2593 = vmatprep.subr.bf16.mxu0 0
  %2594 = vmatpush2.bf16.msra.mxu0 0
  %2595 = vmatprep.subr.bf16.mxu0 0
  %2596 = vmatpush2.bf16.msra.mxu0 0
  %2597 = vmatprep.subr.bf16.mxu0 0
  %2598 = vmatpush2.bf16.msra.mxu0 0
  %2599 = vmatprep.subr.bf16.mxu0 0
  %2600 = vmatpush2.bf16.msra.mxu0 0
  %2601 = vmatprep.subr.bf16.mxu0 0
  %2602 = vmatpush2.bf16.msra.mxu0 0
  %2603 = vmatprep.mubr.bf16.mxu0 0
  %2604 = vmatmul.mubr.bf16.gmra.mxu0 %v2511
  %v2605 = vpop.f32.mrf.mxu0
  %v2606 = vadd.f32 0.0, %v2605
  %v2607 = vpop.f32.mrf.mxu0
  %v2608 = vadd.f32 0.0, %v2607
  %v2609 = vpop.f32.mrf.mxu0
  %v2610 = vadd.f32 0.0, %v2609
  %v2611 = vpop.f32.mrf.mxu0
  %v2612 = vadd.f32 0.0, %v2611
  %2613 = vdwg.mxu0
  %2614 = vmatprep.subr.bf16.mxu0 0
  %2615 = vmatpush1.bf16.msra.mxu0 0
  %2616 = vmatprep.subr.bf16.mxu0 0
  %2617 = vmatpush1.bf16.msra.mxu0 0
  %2618 = vmatprep.subr.bf16.mxu0 0
  %2619 = vmatpush1.bf16.msra.mxu0 0
  %2620 = vmatprep.subr.bf16.mxu0 0
  %2621 = vmatpush1.bf16.msra.mxu0 0
  %2622 = vmatprep.subr.bf16.mxu0 0
  %2623 = vmatpush1.bf16.msra.mxu0 0
  %2624 = vmatprep.subr.bf16.mxu0 0
  %2625 = vmatpush1.bf16.msra.mxu0 0
  %2626 = vmatprep.subr.bf16.mxu0 0
  %2627 = vmatpush1.bf16.msra.mxu0 0
  %2628 = vmatprep.subr.bf16.mxu0 0
  %2629 = vmatpush1.bf16.msra.mxu0 %v2526
  %2630 = vmatprep.subr.bf16.mxu0 0
  %2631 = vmatpush2.bf16.msra.mxu0 0
  %2632 = vmatprep.subr.bf16.mxu0 0
  %2633 = vmatpush2.bf16.msra.mxu0 0
  %2634 = vmatprep.subr.bf16.mxu0 0
  %2635 = vmatpush2.bf16.msra.mxu0 0
  %2636 = vmatprep.subr.bf16.mxu0 0
  %2637 = vmatpush2.bf16.msra.mxu0 0
  %2638 = vmatprep.subr.bf16.mxu0 0
  %2639 = vmatpush2.bf16.msra.mxu0 0
  %2640 = vmatprep.subr.bf16.mxu0 0
  %2641 = vmatpush2.bf16.msra.mxu0 0
  %2642 = vmatprep.subr.bf16.mxu0 0
  %2643 = vmatpush2.bf16.msra.mxu0 0
  %2644 = vmatprep.subr.bf16.mxu0 0
  %2645 = vmatpush2.bf16.msra.mxu0 0
  %2646 = vmatprep.mubr.bf16.mxu0 0
  %2647 = vmatmul.mubr.bf16.gmra.mxu0 %v2511
  %v2648 = vpop.f32.mrf.mxu0
  %v2649 = vadd.f32 0.0, %v2648
  %v2650 = vpop.f32.mrf.mxu0
  %v2651 = vpop.f32.mrf.mxu0
  %v2652 = vadd.f32 0.0, %v2651
  %v2653 = vpop.f32.mrf.mxu0
  %2654 = vdwg.mxu0
  %v2655 = vadd.f32 %v2478, %v2563
  %v2656 = vadd.f32 %v2479, %v2565
  %v2657 = vadd.f32 %v2480, %v2606
  %v2658 = vadd.f32 %v2481, %v2608
  %v2659 = vadd.f32 %v2482, %v2649
  %v2660 = vadd.f32 %v2483, %v2567
  %v2661 = vadd.f32 %v2484, %v2569
  %v2662 = vadd.f32 %v2485, %v2610
  %v2663 = vadd.f32 %v2486, %v2612
  %v2664 = vadd.f32 %v2487, %v2652
  %s2665 = scalar_lea.vmem %s1, 120
  %v2666 = vld [vmem:[%s2665] sm:$0xf]
  %v2667 = vld [vmem:[%s2665 + $0x4] sm:$0xf]
  %v2670 = vunpack.c.l.b16 %v2666
  %v2671 = vunpack.c.l.b16 %v2667
  %v2672 = vpack.c.b16 %v2671, %v2670
  %2673 = vrot.lane.b32.xlu0 %v910, 110
  %v2674 = vpop.permute.xlu0 %2673
  %2675 = vrot.lane.b32.xlu0 %v911, 110
  %v2676 = vpop.permute.xlu0 %2675
  %2677 = vrot.lane.b32.xlu0 %v912, 110
  %v2678 = vpop.permute.xlu0 %2677
  %2679 = vrot.lane.b32.xlu0 %v913, 110
  %v2680 = vpop.permute.xlu0 %2679
  %2681 = vrot.lane.b32.xlu0 %v914, 110
  %v2682 = vpop.permute.xlu0 %2681
  %v2683 = vsel %vm1797, %v2674, %v2676
  %v2684 = vsel %vm1797, %v2676, %v2678
  %v2685 = vsel %vm1797, %v2678, %v2680
  %v2686 = vsel %vm1797, %v2680, %v2682
  %v2688 = vsel %vm45, %v2672, 0
  %v2691 = vsel %vm49, %v2683, 0
  %v2694 = vsel %vm49, %v2684, 0
  %v2697 = vsel %vm49, %v2685, 0
  %v2700 = vsel %vm49, %v2686, 0
  %v2703 = vsel %vm49, %v2682, 0
  %2705 = vmatprep.subr.bf16.mxu0 0
  %2706 = vmatpush1.bf16.msra.mxu0 0
  %2707 = vmatprep.subr.bf16.mxu0 0
  %2708 = vmatpush1.bf16.msra.mxu0 0
  %2709 = vmatprep.subr.bf16.mxu0 0
  %2710 = vmatpush1.bf16.msra.mxu0 0
  %2711 = vmatprep.subr.bf16.mxu0 0
  %2712 = vmatpush1.bf16.msra.mxu0 0
  %2713 = vmatprep.subr.bf16.mxu0 0
  %2714 = vmatpush1.bf16.msra.mxu0 0
  %2715 = vmatprep.subr.bf16.mxu0 0
  %2716 = vmatpush1.bf16.msra.mxu0 0
  %2717 = vmatprep.subr.bf16.mxu0 0
  %2718 = vmatpush1.bf16.msra.mxu0 0
  %2719 = vmatprep.subr.bf16.mxu0 %v2694
  %2720 = vmatpush1.bf16.msra.mxu0 %v2691
  %2721 = vmatprep.subr.bf16.mxu0 0
  %2722 = vmatpush2.bf16.msra.mxu0 0
  %2723 = vmatprep.subr.bf16.mxu0 0
  %2724 = vmatpush2.bf16.msra.mxu0 0
  %2725 = vmatprep.subr.bf16.mxu0 0
  %2726 = vmatpush2.bf16.msra.mxu0 0
  %2727 = vmatprep.subr.bf16.mxu0 0
  %2728 = vmatpush2.bf16.msra.mxu0 0
  %2729 = vmatprep.subr.bf16.mxu0 0
  %2730 = vmatpush2.bf16.msra.mxu0 0
  %2731 = vmatprep.subr.bf16.mxu0 0
  %2732 = vmatpush2.bf16.msra.mxu0 0
  %2733 = vmatprep.subr.bf16.mxu0 0
  %2734 = vmatpush2.bf16.msra.mxu0 0
  %2735 = vmatprep.subr.bf16.mxu0 0
  %2736 = vmatpush2.bf16.msra.mxu0 0
  %2737 = vmatprep.mubr.bf16.mxu0 0
  %2738 = vmatmul.mubr.bf16.gmra.mxu0 %v2688
  %v2739 = vpop.f32.mrf.mxu0
  %v2740 = vadd.f32 0.0, %v2739
  %v2741 = vpop.f32.mrf.mxu0
  %v2742 = vadd.f32 0.0, %v2741
  %v2743 = vpop.f32.mrf.mxu0
  %v2744 = vadd.f32 0.0, %v2743
  %v2745 = vpop.f32.mrf.mxu0
  %v2746 = vadd.f32 0.0, %v2745
  %2747 = vdwg.mxu0
  %2748 = vmatprep.subr.bf16.mxu0 0
  %2749 = vmatpush1.bf16.msra.mxu0 0
  %2750 = vmatprep.subr.bf16.mxu0 0
  %2751 = vmatpush1.bf16.msra.mxu0 0
  %2752 = vmatprep.subr.bf16.mxu0 0
  %2753 = vmatpush1.bf16.msra.mxu0 0
  %2754 = vmatprep.subr.bf16.mxu0 0
  %2755 = vmatpush1.bf16.msra.mxu0 0
  %2756 = vmatprep.subr.bf16.mxu0 0
  %2757 = vmatpush1.bf16.msra.mxu0 0
  %2758 = vmatprep.subr.bf16.mxu0 0
  %2759 = vmatpush1.bf16.msra.mxu0 0
  %2760 = vmatprep.subr.bf16.mxu0 0
  %2761 = vmatpush1.bf16.msra.mxu0 0
  %2762 = vmatprep.subr.bf16.mxu0 %v2700
  %2763 = vmatpush1.bf16.msra.mxu0 %v2697
  %2764 = vmatprep.subr.bf16.mxu0 0
  %2765 = vmatpush2.bf16.msra.mxu0 0
  %2766 = vmatprep.subr.bf16.mxu0 0
  %2767 = vmatpush2.bf16.msra.mxu0 0
  %2768 = vmatprep.subr.bf16.mxu0 0
  %2769 = vmatpush2.bf16.msra.mxu0 0
  %2770 = vmatprep.subr.bf16.mxu0 0
  %2771 = vmatpush2.bf16.msra.mxu0 0
  %2772 = vmatprep.subr.bf16.mxu0 0
  %2773 = vmatpush2.bf16.msra.mxu0 0
  %2774 = vmatprep.subr.bf16.mxu0 0
  %2775 = vmatpush2.bf16.msra.mxu0 0
  %2776 = vmatprep.subr.bf16.mxu0 0
  %2777 = vmatpush2.bf16.msra.mxu0 0
  %2778 = vmatprep.subr.bf16.mxu0 0
  %2779 = vmatpush2.bf16.msra.mxu0 0
  %2780 = vmatprep.mubr.bf16.mxu0 0
  %2781 = vmatmul.mubr.bf16.gmra.mxu0 %v2688
  %v2782 = vpop.f32.mrf.mxu0
  %v2783 = vadd.f32 0.0, %v2782
  %v2784 = vpop.f32.mrf.mxu0
  %v2785 = vadd.f32 0.0, %v2784
  %v2786 = vpop.f32.mrf.mxu0
  %v2787 = vadd.f32 0.0, %v2786
  %v2788 = vpop.f32.mrf.mxu0
  %v2789 = vadd.f32 0.0, %v2788
  %2790 = vdwg.mxu0
  %2791 = vmatprep.subr.bf16.mxu0 0
  %2792 = vmatpush1.bf16.msra.mxu0 0
  %2793 = vmatprep.subr.bf16.mxu0 0
  %2794 = vmatpush1.bf16.msra.mxu0 0
  %2795 = vmatprep.subr.bf16.mxu0 0
  %2796 = vmatpush1.bf16.msra.mxu0 0
  %2797 = vmatprep.subr.bf16.mxu0 0
  %2798 = vmatpush1.bf16.msra.mxu0 0
  %2799 = vmatprep.subr.bf16.mxu0 0
  %2800 = vmatpush1.bf16.msra.mxu0 0
  %2801 = vmatprep.subr.bf16.mxu0 0
  %2802 = vmatpush1.bf16.msra.mxu0 0
  %2803 = vmatprep.subr.bf16.mxu0 0
  %2804 = vmatpush1.bf16.msra.mxu0 0
  %2805 = vmatprep.subr.bf16.mxu0 0
  %2806 = vmatpush1.bf16.msra.mxu0 %v2703
  %2807 = vmatprep.subr.bf16.mxu0 0
  %2808 = vmatpush2.bf16.msra.mxu0 0
  %2809 = vmatprep.subr.bf16.mxu0 0
  %2810 = vmatpush2.bf16.msra.mxu0 0
  %2811 = vmatprep.subr.bf16.mxu0 0
  %2812 = vmatpush2.bf16.msra.mxu0 0
  %2813 = vmatprep.subr.bf16.mxu0 0
  %2814 = vmatpush2.bf16.msra.mxu0 0
  %2815 = vmatprep.subr.bf16.mxu0 0
  %2816 = vmatpush2.bf16.msra.mxu0 0
  %2817 = vmatprep.subr.bf16.mxu0 0
  %2818 = vmatpush2.bf16.msra.mxu0 0
  %2819 = vmatprep.subr.bf16.mxu0 0
  %2820 = vmatpush2.bf16.msra.mxu0 0
  %2821 = vmatprep.subr.bf16.mxu0 0
  %2822 = vmatpush2.bf16.msra.mxu0 0
  %2823 = vmatprep.mubr.bf16.mxu0 0
  %2824 = vmatmul.mubr.bf16.gmra.mxu0 %v2688
  %v2825 = vpop.f32.mrf.mxu0
  %v2826 = vadd.f32 0.0, %v2825
  %v2827 = vpop.f32.mrf.mxu0
  %v2828 = vpop.f32.mrf.mxu0
  %v2829 = vadd.f32 0.0, %v2828
  %v2830 = vpop.f32.mrf.mxu0
  %2831 = vdwg.mxu0
  %v2832 = vadd.f32 %v2655, %v2740
  %v2833 = vadd.f32 %v2656, %v2742
  %v2834 = vadd.f32 %v2657, %v2783
  %v2835 = vadd.f32 %v2658, %v2785
  %v2836 = vadd.f32 %v2659, %v2826
  %v2837 = vadd.f32 %v2660, %v2744
  %v2838 = vadd.f32 %v2661, %v2746
  %v2839 = vadd.f32 %v2662, %v2787
  %v2840 = vadd.f32 %v2663, %v2789
  %v2841 = vadd.f32 %v2664, %v2829
  %v2842 = vld [vmem:[%s2] sm:$0x1f]
  %v2844 = vlaneseq
  %v2845 = vshrl.u32 %v2844, 7
  %v2846 = vsub.s32 0, %v2845
  %v2847 = vrot.slane %v2842, %v2846
  %v2848 = vlaneseq
  %v2849 = vshrl.u32 %v2848, 7
  %v2850 = vsub.s32 1, %v2849
  %v2851 = vrot.slane %v2842, %v2850
  %v2852 = vlaneseq
  %v2853 = vshrl.u32 %v2852, 7
  %v2854 = vsub.s32 2, %v2853
  %v2855 = vrot.slane %v2842, %v2854
  %v2856 = vlaneseq
  %v2857 = vshrl.u32 %v2856, 7
  %v2858 = vsub.s32 3, %v2857
  %v2859 = vrot.slane %v2842, %v2858
  %v2860 = vlaneseq
  %v2861 = vshrl.u32 %v2860, 7
  %v2862 = vsub.s32 4, %v2861
  %v2863 = vrot.slane %v2842, %v2862
  %v2869 = vmul.f32 %v2832, %v2847
  %v2870 = vmul.f32 %v2833, %v2851
  %v2871 = vmul.f32 %v2834, %v2855
  %v2872 = vmul.f32 %v2835, %v2859
  %v2873 = vmul.f32 %v2836, %v2863
  %v2874 = vmul.f32 %v2837, %v2847
  %v2875 = vmul.f32 %v2838, %v2851
  %v2876 = vmul.f32 %v2839, %v2855
  %v2877 = vmul.f32 %v2840, %v2859
  %v2878 = vmul.f32 %v2841, %v2863
  %v2879 = vadd.f32 %v2869, %v2870
  %v2880 = vadd.f32 %v2879, %v2871
  %v2881 = vadd.f32 %v2880, %v2872
  %vm2882 = vcmask 392192
  %v2883 = vsel %vm2882, %v2873, 0.0
  %v2884 = vadd.f32 %v2881, %v2883
  %2885 = vadd.xlane.f32.xlu0 %v2884
  %v2886 = vpop.xlane.xlu0 %2885
  %v2887 = vadd.f32 %v2874, %v2875
  %v2888 = vadd.f32 %v2887, %v2876
  %v2889 = vadd.f32 %v2888, %v2877
  %v2890 = vsel %vm2882, %v2878, 0.0
  %v2891 = vadd.f32 %v2889, %v2890
  %2892 = vadd.xlane.f32.xlu0 %v2891
  %v2893 = vpop.xlane.xlu0 %2892
  %v2894 = vmul.f32 %v2886, 0.001953125
  %v2895 = vmul.f32 %v2893, 0.001953125
  %v2896 = vsub.f32 %v2832, %v2894
  %v2897 = vsub.f32 %v2833, %v2894
  %v2898 = vsub.f32 %v2834, %v2894
  %v2899 = vsub.f32 %v2835, %v2894
  %v2900 = vsub.f32 %v2836, %v2894
  %v2901 = vsub.f32 %v2837, %v2895
  %v2902 = vsub.f32 %v2838, %v2895
  %v2903 = vsub.f32 %v2839, %v2895
  %v2904 = vsub.f32 %v2840, %v2895
  %v2905 = vsub.f32 %v2841, %v2895
  %v2906 = vmul.f32 %v2896, %v2847
  %v2907 = vmul.f32 %v2897, %v2851
  %v2908 = vmul.f32 %v2898, %v2855
  %v2909 = vmul.f32 %v2899, %v2859
  %v2910 = vmul.f32 %v2900, %v2863
  %v2911 = vmul.f32 %v2901, %v2847
  %v2912 = vmul.f32 %v2902, %v2851
  %v2913 = vmul.f32 %v2903, %v2855
  %v2914 = vmul.f32 %v2904, %v2859
  %v2915 = vmul.f32 %v2905, %v2863
  %v2916 = vmul.f32 %v2906, %v2906
  %v2917 = vmul.f32 %v2907, %v2907
  %v2918 = vmul.f32 %v2908, %v2908
  %v2919 = vmul.f32 %v2909, %v2909
  %v2920 = vmul.f32 %v2910, %v2910
  %v2921 = vmul.f32 %v2911, %v2911
  %v2922 = vmul.f32 %v2912, %v2912
  %v2923 = vmul.f32 %v2913, %v2913
  %v2924 = vmul.f32 %v2914, %v2914
  %v2925 = vmul.f32 %v2915, %v2915
  %v2926 = vadd.f32 %v2916, %v2917
  %v2927 = vadd.f32 %v2926, %v2918
  %v2928 = vadd.f32 %v2927, %v2919
  %v2929 = vsel %vm2882, %v2920, 0.0
  %v2930 = vadd.f32 %v2928, %v2929
  %2931 = vadd.xlane.f32.xlu0 %v2930
  %v2932 = vpop.xlane.xlu0 %2931
  %v2933 = vadd.f32 %v2921, %v2922
  %v2934 = vadd.f32 %v2933, %v2923
  %v2935 = vadd.f32 %v2934, %v2924
  %v2936 = vsel %vm2882, %v2925, 0.0
  %v2937 = vadd.f32 %v2935, %v2936
  %2938 = vadd.xlane.f32.xlu0 %v2937
  %v2939 = vpop.xlane.xlu0 %2938
  %v2940 = vmul.f32 %v2932, 0.001953125
  %v2941 = vmul.f32 %v2939, 0.001953125
  %v2942 = vadd.f32 %v2940, 1e-05
  %v2943 = vadd.f32 %v2941, 1e-05
  %v2944 = vrsqrt.pop %v2942
  %v2945 = vrsqrt.pop %v2943
  %v2946 = vmul.f32 %v2896, %v2944
  %v2947 = vmul.f32 %v2897, %v2944
  %v2948 = vmul.f32 %v2898, %v2944
  %v2949 = vmul.f32 %v2899, %v2944
  %v2950 = vmul.f32 %v2900, %v2944
  %v2951 = vmul.f32 %v2901, %v2945
  %v2952 = vmul.f32 %v2902, %v2945
  %v2953 = vmul.f32 %v2903, %v2945
  %v2954 = vmul.f32 %v2904, %v2945
  %v2955 = vmul.f32 %v2905, %v2945
  %v2956 = vmul.f32 %v2946, 0.2
  %v2957 = vmul.f32 %v2947, 0.2
  %v2958 = vmul.f32 %v2948, 0.2
  %v2959 = vmul.f32 %v2949, 0.2
  %v2960 = vmul.f32 %v2950, 0.2
  %v2961 = vmul.f32 %v2951, 0.2
  %v2962 = vmul.f32 %v2952, 0.2
  %v2963 = vmul.f32 %v2953, 0.2
  %v2964 = vmul.f32 %v2954, 0.2
  %v2965 = vmul.f32 %v2955, 0.2
  %v2966 = vmax.f32 %v2946, %v2956
  %v2967 = vmax.f32 %v2947, %v2957
  %v2968 = vmax.f32 %v2948, %v2958
  %v2969 = vmax.f32 %v2949, %v2959
  %v2970 = vmax.f32 %v2950, %v2960
  %v2971 = vmax.f32 %v2951, %v2961
  %v2972 = vmax.f32 %v2952, %v2962
  %v2973 = vmax.f32 %v2953, %v2963
  %v2974 = vmax.f32 %v2954, %v2964
  %v2975 = vmax.f32 %v2955, %v2965
  %v2976 = vpack.c.bf16 %v2971, %v2966
  %v2977 = vpack.c.bf16 %v2972, %v2967
  %v2978 = vpack.c.bf16 %v2973, %v2968
  %v2979 = vpack.c.bf16 %v2974, %v2969
  %v2980 = vpack.c.bf16 %v2975, %v2970
  %v2986 = vunpack.c.l.b16 %v2976
  %v2987 = vunpack.c.l.b16 %v2977
  %v2988 = vunpack.c.l.b16 %v2978
  %v2989 = vunpack.c.l.b16 %v2979
  %v2990 = vunpack.c.l.b16 %v2980
  %v2991 = vunpack.c.h.b16 %v2976
  %v2992 = vunpack.c.h.b16 %v2977
  %v2993 = vunpack.c.h.b16 %v2978
  %v2994 = vunpack.c.h.b16 %v2979
  %v2995 = vunpack.c.h.b16 %v2980
  %v2996 = vpack.c.b16 %v2987, %v2986
  %v2997 = vpack.c.b16 %v2989, %v2988
  %v2998 = vpack.c.b16 %v2990, %v2990
  %v2999 = vpack.c.b16 %v2992, %v2991
  %v3000 = vpack.c.b16 %v2994, %v2993
  %v3001 = vpack.c.b16 %v2995, %v2995
  %3008 = vst [vmem:[%s3] sm:$0xff] %v2996
  %3009 = vst [vmem:[%s3 + $0x8] sm:$0xff] %v2997
  %vm3010 = vcmask 388096
  %3011 = vst.msk [vmem:[%s3 + $0x10] sm:$0xf] %vm3010, %v2998
  %3012 = vst [vmem:[%s3 + $0x14] sm:$0xff] %v2999
  %3013 = vst [vmem:[%s3 + $0x1c] sm:$0xff] %v3000
  %3014 = vst.msk [vmem:[%s3 + $0x24] sm:$0xf] %vm3010, %v3001
  // Predicated region
  $region14: #{discriminator_forward.5} parent=0 // pred_check
    _
  $region15: #{discriminator_forward.5} parent=0 // pred_check_branch
    %3016 = sbr.rel (0) target = $region17
  $region16: #{discriminator_forward.5} parent=0 // pred_region
    _
  $region17: #{discriminator_forward.5} parent=0 // pred_fallthru
    _
  // Predicated region
  $region18: #{discriminator_forward.5} parent=0 // pred_check
    _
  $region19: #{discriminator_forward.5} parent=0 // pred_check_branch
    %3018 = sbr.rel (0) target = $region21
  $region20: #{discriminator_forward.5} parent=0 // pred_region
    _
  $region21: #{discriminator_forward.5} parent=0 // pred_fallthru
    _

// kernel: discriminator_forward.6
$region0: #{discriminator_forward.6}
  #allocation0 [shape = 'u32[]', space=smem, size = 0x4, offset = 0x4, fixed_abs, tag = 'smem constant byte address 0x4 - core index']
  #allocation1 [shape = 'u32[144,128]{1,0:T(1,128)}', space=vmem, size = 0x12000, scoped, tag = 'internal scratch']
  %s0 = inlined_call_operand.vmem [shape: bf16[4,16,162], index: 0, kind: input, shape index: {}]
  %s1 = inlined_call_operand.vmem [shape: bf16[16,32,16], index: 1, kind: input, shape index: {}]
  %s2 = inlined_call_operand.vmem [shape: f32[1,152], index: 2, kind: input, shape index: {}]
  %s3 = inlined_call_operand.vmem [shape: bf16[32,152], index: 3, kind: output, shape index: {}]
  %s4 = sld [smem:[#allocation0]]
  $region22: #{discriminator_forward.6} parent=0
    _
  %s6 = ssub.s32 1, %s4
  %s7 = scalar_select 0, %s6, %s4
  // Predicated region
  $region2: #{discriminator_forward.6} parent=0 // pred_check
    _
  $region3: #{discriminator_forward.6} parent=0 // pred_check_branch
    %9 = sbr.rel (0) target = $region5
  $region4: #{discriminator_forward.6} parent=0 // pred_region
    _
  $region5: #{discriminator_forward.6} parent=0 // pred_fallthru
    _
  // Predicated region
  $region6: #{discriminator_forward.6} parent=0 // pred_check
    _
  $region7: #{discriminator_forward.6} parent=0 // pred_check_branch
    %11 = sbr.rel (0) target = $region9
  $region8: #{discriminator_forward.6} parent=0 // pred_region
    _
  $region9: #{discriminator_forward.6} parent=0 // pred_fallthru
    _
  // Predicated region
  $region10: #{discriminator_forward.6} parent=0 // pred_check
    _
  $region11: #{discriminator_forward.6} parent=0 // pred_check_branch
    %13 = sbr.rel (0) target = $region13
  $region12: #{discriminator_forward.6} parent=0 // pred_region
    _
  $region13: #{discriminator_forward.6} parent=0 // pred_fallthru
    _
  %v15 = vld [vmem:[%s0] sm:$0xff]
  %v16 = vld [vmem:[%s0 + $0x8] sm:$0xff]
  %v17 = vld [vmem:[%s1] sm:$0xf]
  %v18 = vld [vmem:[%s1 + $0x4] sm:$0xf]
  %v19 = vld [vmem:[%s1 + $0x8] sm:$0xf]
  %v20 = vld [vmem:[%s1 + $0xc] sm:$0xf]
  %s21 = scalar_lea.vmem %s0, 16
  %v22 = vld [vmem:[%s21] sm:$0xff]
  %v23 = vld [vmem:[%s21 + $0x8] sm:$0xff]
  %s24 = scalar_lea.vmem %s1, 16
  %v25 = vld [vmem:[%s24] sm:$0xf]
  %v26 = vld [vmem:[%s24 + $0x4] sm:$0xf]
  %v27 = vld [vmem:[%s24 + $0x8] sm:$0xf]
  %v28 = vld [vmem:[%s24 + $0xc] sm:$0xf]
  %v33 = vunpack.c.l.b16 %v25
  %v34 = vunpack.c.l.b16 %v26
  %v35 = vunpack.c.l.b16 %v27
  %v36 = vunpack.c.l.b16 %v28
  %v37 = vpack.c.b16 %v34, %v33
  %v38 = vpack.c.b16 %v36, %v35
  %v41 = vunpack.c.l.b16 %v22
  %v42 = vunpack.c.h.b16 %v22
  %v43 = vunpack.c.l.b16 %v23
  %v44 = vunpack.c.h.b16 %v23
  %v45 = vpack.c.b16 %v43, %v41
  %v46 = vpack.c.b16 %v44, %v42
  %vm49 = vcmask 130048
  %v51 = vsel %vm49, %v37, 0
  %v54 = vsel %vm49, %v38, 0
  %56 = vmatprep.subr.bf16.mxu0 0
  %57 = vmatpush1.bf16.msra.mxu0 0
  %58 = vmatprep.subr.bf16.mxu0 0
  %59 = vmatpush1.bf16.msra.mxu0 0
  %60 = vmatprep.subr.bf16.mxu0 0
  %61 = vmatpush1.bf16.msra.mxu0 0
  %62 = vmatprep.subr.bf16.mxu0 0
  %63 = vmatpush1.bf16.msra.mxu0 0
  %64 = vmatprep.subr.bf16.mxu0 0
  %65 = vmatpush1.bf16.msra.mxu0 0
  %66 = vmatprep.subr.bf16.mxu0 0
  %67 = vmatpush1.bf16.msra.mxu0 0
  %68 = vmatprep.subr.bf16.mxu0 0
  %69 = vmatpush1.bf16.msra.mxu0 0
  %70 = vmatprep.subr.bf16.mxu0 %v46
  %71 = vmatpush1.bf16.msra.mxu0 %v45
  %72 = vmatprep.subr.bf16.mxu0 0
  %73 = vmatpush2.bf16.msra.mxu0 0
  %74 = vmatprep.subr.bf16.mxu0 0
  %75 = vmatpush2.bf16.msra.mxu0 0
  %76 = vmatprep.subr.bf16.mxu0 0
  %77 = vmatpush2.bf16.msra.mxu0 0
  %78 = vmatprep.subr.bf16.mxu0 0
  %79 = vmatpush2.bf16.msra.mxu0 0
  %80 = vmatprep.subr.bf16.mxu0 0
  %81 = vmatpush2.bf16.msra.mxu0 0
  %82 = vmatprep.subr.bf16.mxu0 0
  %83 = vmatpush2.bf16.msra.mxu0 0
  %84 = vmatprep.subr.bf16.mxu0 0
  %85 = vmatpush2.bf16.msra.mxu0 0
  %86 = vmatprep.subr.bf16.mxu0 0
  %87 = vmatpush2.bf16.msra.mxu0 0
  %88 = vmatprep.mubr.bf16.mxu0 0
  %89 = vmatmul.mubr.bf16.gmra.mxu0 %v51
  %v90 = vpop.f32.mrf.mxu0
  %v91 = vadd.f32 0.0, %v90
  %v92 = vpop.f32.mrf.mxu0
  %v93 = vadd.f32 0.0, %v92
  %v94 = vpop.f32.mrf.mxu0
  %v95 = vadd.f32 0.0, %v94
  %v96 = vpop.f32.mrf.mxu0
  %v97 = vadd.f32 0.0, %v96
  %98 = vmatprep.mubr.bf16.mxu0 0
  %99 = vmatmul.mubr.bf16.gmra.mxu0 %v54
  %v100 = vpop.f32.mrf.mxu0
  %v101 = vadd.f32 0.0, %v100
  %v102 = vpop.f32.mrf.mxu0
  %v103 = vadd.f32 0.0, %v102
  %v104 = vpop.f32.mrf.mxu0
  %v105 = vadd.f32 0.0, %v104
  %v106 = vpop.f32.mrf.mxu0
  %v107 = vadd.f32 0.0, %v106
  %108 = vdwg.mxu0
  %v113 = vunpack.c.l.b16 %v17
  %v114 = vunpack.c.l.b16 %v18
  %v115 = vunpack.c.l.b16 %v19
  %v116 = vunpack.c.l.b16 %v20
  %v117 = vpack.c.b16 %v114, %v113
  %v118 = vpack.c.b16 %v116, %v115
  %v121 = vunpack.c.l.b16 %v15
  %v122 = vunpack.c.h.b16 %v15
  %v123 = vunpack.c.l.b16 %v16
  %v124 = vunpack.c.h.b16 %v16
  %v125 = vpack.c.b16 %v123, %v121
  %v126 = vpack.c.b16 %v124, %v122
  %v130 = vsel %vm49, %v117, 0
  %v133 = vsel %vm49, %v118, 0
  %135 = vmatprep.subr.bf16.mxu0 0
  %136 = vmatpush1.bf16.msra.mxu0 0
  %137 = vmatprep.subr.bf16.mxu0 0
  %138 = vmatpush1.bf16.msra.mxu0 0
  %139 = vmatprep.subr.bf16.mxu0 0
  %140 = vmatpush1.bf16.msra.mxu0 0
  %141 = vmatprep.subr.bf16.mxu0 0
  %142 = vmatpush1.bf16.msra.mxu0 0
  %143 = vmatprep.subr.bf16.mxu0 0
  %144 = vmatpush1.bf16.msra.mxu0 0
  %145 = vmatprep.subr.bf16.mxu0 0
  %146 = vmatpush1.bf16.msra.mxu0 0
  %147 = vmatprep.subr.bf16.mxu0 0
  %148 = vmatpush1.bf16.msra.mxu0 0
  %149 = vmatprep.subr.bf16.mxu0 %v126
  %150 = vmatpush1.bf16.msra.mxu0 %v125
  %151 = vmatprep.subr.bf16.mxu0 0
  %152 = vmatpush2.bf16.msra.mxu0 0
  %153 = vmatprep.subr.bf16.mxu0 0
  %154 = vmatpush2.bf16.msra.mxu0 0
  %155 = vmatprep.subr.bf16.mxu0 0
  %156 = vmatpush2.bf16.msra.mxu0 0
  %157 = vmatprep.subr.bf16.mxu0 0
  %158 = vmatpush2.bf16.msra.mxu0 0
  %159 = vmatprep.subr.bf16.mxu0 0
  %160 = vmatpush2.bf16.msra.mxu0 0
  %161 = vmatprep.subr.bf16.mxu0 0
  %162 = vmatpush2.bf16.msra.mxu0 0
  %163 = vmatprep.subr.bf16.mxu0 0
  %164 = vmatpush2.bf16.msra.mxu0 0
  %165 = vmatprep.subr.bf16.mxu0 0
  %166 = vmatpush2.bf16.msra.mxu0 0
  %167 = vmatprep.mubr.bf16.mxu0 0
  %168 = vmatmul.mubr.bf16.gmra.mxu0 %v130
  %v169 = vpop.f32.mrf.mxu0
  %v170 = vadd.f32 %v91, %v169
  %v171 = vpop.f32.mrf.mxu0
  %v172 = vadd.f32 %v93, %v171
  %v173 = vpop.f32.mrf.mxu0
  %v174 = vadd.f32 %v95, %v173
  %v175 = vpop.f32.mrf.mxu0
  %v176 = vadd.f32 %v97, %v175
  %177 = vmatprep.mubr.bf16.mxu0 0
  %178 = vmatmul.mubr.bf16.gmra.mxu0 %v133
  %v179 = vpop.f32.mrf.mxu0
  %v180 = vadd.f32 %v101, %v179
  %v181 = vpop.f32.mrf.mxu0
  %v182 = vadd.f32 %v103, %v181
  %v183 = vpop.f32.mrf.mxu0
  %v184 = vadd.f32 %v105, %v183
  %v185 = vpop.f32.mrf.mxu0
  %v186 = vadd.f32 %v107, %v185
  %187 = vdwg.mxu0
  %s188 = scalar_lea.vmem %s1, 32
  %v189 = vld [vmem:[%s188] sm:$0xf]
  %v190 = vld [vmem:[%s188 + $0x4] sm:$0xf]
  %v191 = vld [vmem:[%s188 + $0x8] sm:$0xf]
  %v192 = vld [vmem:[%s188 + $0xc] sm:$0xf]
  %v197 = vunpack.c.l.b16 %v189
  %v198 = vunpack.c.l.b16 %v190
  %v199 = vunpack.c.l.b16 %v191
  %v200 = vunpack.c.l.b16 %v192
  %v201 = vpack.c.b16 %v198, %v197
  %v202 = vpack.c.b16 %v200, %v199
  %203 = vrot.lane.b32.xlu0 %v125, 127
  %v204 = vpop.permute.xlu0 %203
  %205 = vrot.lane.b32.xlu0 %v126, 127
  %v206 = vpop.permute.xlu0 %205
  %vm207 = vcmask 1039360
  %v208 = vsel %vm207, %v204, %v206
  %v212 = vsel %vm49, %v201, 0
  %v215 = vsel %vm49, %v202, 0
  %217 = vmatprep.subr.bf16.mxu0 0
  %218 = vmatpush1.bf16.msra.mxu0 0
  %219 = vmatprep.subr.bf16.mxu0 0
  %220 = vmatpush1.bf16.msra.mxu0 0
  %221 = vmatprep.subr.bf16.mxu0 0
  %222 = vmatpush1.bf16.msra.mxu0 0
  %223 = vmatprep.subr.bf16.mxu0 0
  %224 = vmatpush1.bf16.msra.mxu0 0
  %225 = vmatprep.subr.bf16.mxu0 0
  %226 = vmatpush1.bf16.msra.mxu0 0
  %227 = vmatprep.subr.bf16.mxu0 0
  %228 = vmatpush1.bf16.msra.mxu0 0
  %229 = vmatprep.subr.bf16.mxu0 0
  %230 = vmatpush1.bf16.msra.mxu0 0
  %231 = vmatprep.subr.bf16.mxu0 %v206
  %232 = vmatpush1.bf16.msra.mxu0 %v208
  %233 = vmatprep.subr.bf16.mxu0 0
  %234 = vmatpush2.bf16.msra.mxu0 0
  %235 = vmatprep.subr.bf16.mxu0 0
  %236 = vmatpush2.bf16.msra.mxu0 0
  %237 = vmatprep.subr.bf16.mxu0 0
  %238 = vmatpush2.bf16.msra.mxu0 0
  %239 = vmatprep.subr.bf16.mxu0 0
  %240 = vmatpush2.bf16.msra.mxu0 0
  %241 = vmatprep.subr.bf16.mxu0 0
  %242 = vmatpush2.bf16.msra.mxu0 0
  %243 = vmatprep.subr.bf16.mxu0 0
  %244 = vmatpush2.bf16.msra.mxu0 0
  %245 = vmatprep.subr.bf16.mxu0 0
  %246 = vmatpush2.bf16.msra.mxu0 0
  %247 = vmatprep.subr.bf16.mxu0 0
  %248 = vmatpush2.bf16.msra.mxu0 0
  %249 = vmatprep.mubr.bf16.mxu0 0
  %250 = vmatmul.mubr.bf16.gmra.mxu0 %v212
  %v251 = vpop.f32.mrf.mxu0
  %v252 = vadd.f32 0.0, %v251
  %v253 = vpop.f32.mrf.mxu0
  %v254 = vadd.f32 0.0, %v253
  %v255 = vpop.f32.mrf.mxu0
  %v256 = vadd.f32 0.0, %v255
  %v257 = vpop.f32.mrf.mxu0
  %v258 = vadd.f32 0.0, %v257
  %259 = vmatprep.mubr.bf16.mxu0 0
  %260 = vmatmul.mubr.bf16.gmra.mxu0 %v215
  %v261 = vpop.f32.mrf.mxu0
  %v262 = vadd.f32 0.0, %v261
  %v263 = vpop.f32.mrf.mxu0
  %v264 = vadd.f32 0.0, %v263
  %v265 = vpop.f32.mrf.mxu0
  %v266 = vadd.f32 0.0, %v265
  %v267 = vpop.f32.mrf.mxu0
  %v268 = vadd.f32 0.0, %v267
  %269 = vdwg.mxu0
  %v270 = vadd.f32 %v170, %v252
  %v271 = vadd.f32 %v172, %v254
  %v272 = vadd.f32 %v174, %v256
  %v273 = vadd.f32 %v176, %v258
  %v274 = vadd.f32 %v180, %v262
  %v275 = vadd.f32 %v182, %v264
  %v276 = vadd.f32 %v184, %v266
  %v277 = vadd.f32 %v186, %v268
  %s278 = scalar_lea.vmem %s1, 48
  %v279 = vld [vmem:[%s278] sm:$0xf]
  %v280 = vld [vmem:[%s278 + $0x4] sm:$0xf]
  %v281 = vld [vmem:[%s278 + $0x8] sm:$0xf]
  %v282 = vld [vmem:[%s278 + $0xc] sm:$0xf]
  %v287 = vunpack.c.l.b16 %v279
  %v288 = vunpack.c.l.b16 %v280
  %v289 = vunpack.c.l.b16 %v281
  %v290 = vunpack.c.l.b16 %v282
  %v291 = vpack.c.b16 %v288, %v287
  %v292 = vpack.c.b16 %v290, %v289
  %293 = vrot.lane.b32.xlu0 %v45, 127
  %v294 = vpop.permute.xlu0 %293
  %295 = vrot.lane.b32.xlu0 %v46, 127
  %v296 = vpop.permute.xlu0 %295
  %v297 = vsel %vm207, %v294, %v296
  %v301 = vsel %vm49, %v291, 0
  %v304 = vsel %vm49, %v292, 0
  %306 = vmatprep.subr.bf16.mxu0 0
  %307 = vmatpush1.bf16.msra.mxu0 0
  %308 = vmatprep.subr.bf16.mxu0 0
  %309 = vmatpush1.bf16.msra.mxu0 0
  %310 = vmatprep.subr.bf16.mxu0 0
  %311 = vmatpush1.bf16.msra.mxu0 0
  %312 = vmatprep.subr.bf16.mxu0 0
  %313 = vmatpush1.bf16.msra.mxu0 0
  %314 = vmatprep.subr.bf16.mxu0 0
  %315 = vmatpush1.bf16.msra.mxu0 0
  %316 = vmatprep.subr.bf16.mxu0 0
  %317 = vmatpush1.bf16.msra.mxu0 0
  %318 = vmatprep.subr.bf16.mxu0 0
  %319 = vmatpush1.bf16.msra.mxu0 0
  %320 = vmatprep.subr.bf16.mxu0 %v296
  %321 = vmatpush1.bf16.msra.mxu0 %v297
  %322 = vmatprep.subr.bf16.mxu0 0
  %323 = vmatpush2.bf16.msra.mxu0 0
  %324 = vmatprep.subr.bf16.mxu0 0
  %325 = vmatpush2.bf16.msra.mxu0 0
  %326 = vmatprep.subr.bf16.mxu0 0
  %327 = vmatpush2.bf16.msra.mxu0 0
  %328 = vmatprep.subr.bf16.mxu0 0
  %329 = vmatpush2.bf16.msra.mxu0 0
  %330 = vmatprep.subr.bf16.mxu0 0
  %331 = vmatpush2.bf16.msra.mxu0 0
  %332 = vmatprep.subr.bf16.mxu0 0
  %333 = vmatpush2.bf16.msra.mxu0 0
  %334 = vmatprep.subr.bf16.mxu0 0
  %335 = vmatpush2.bf16.msra.mxu0 0
  %336 = vmatprep.subr.bf16.mxu0 0
  %337 = vmatpush2.bf16.msra.mxu0 0
  %338 = vmatprep.mubr.bf16.mxu0 0
  %339 = vmatmul.mubr.bf16.gmra.mxu0 %v301
  %v340 = vpop.f32.mrf.mxu0
  %v341 = vadd.f32 0.0, %v340
  %v342 = vpop.f32.mrf.mxu0
  %v343 = vadd.f32 0.0, %v342
  %v344 = vpop.f32.mrf.mxu0
  %v345 = vadd.f32 0.0, %v344
  %v346 = vpop.f32.mrf.mxu0
  %v347 = vadd.f32 0.0, %v346
  %348 = vmatprep.mubr.bf16.mxu0 0
  %349 = vmatmul.mubr.bf16.gmra.mxu0 %v304
  %v350 = vpop.f32.mrf.mxu0
  %v351 = vadd.f32 0.0, %v350
  %v352 = vpop.f32.mrf.mxu0
  %v353 = vadd.f32 0.0, %v352
  %v354 = vpop.f32.mrf.mxu0
  %v355 = vadd.f32 0.0, %v354
  %v356 = vpop.f32.mrf.mxu0
  %v357 = vadd.f32 0.0, %v356
  %358 = vdwg.mxu0
  %v359 = vadd.f32 %v270, %v341
  %v360 = vadd.f32 %v271, %v343
  %v361 = vadd.f32 %v272, %v345
  %v362 = vadd.f32 %v273, %v347
  %v363 = vadd.f32 %v274, %v351
  %v364 = vadd.f32 %v275, %v353
  %v365 = vadd.f32 %v276, %v355
  %v366 = vadd.f32 %v277, %v357
  %s367 = scalar_lea.vmem %s0, 32
  %v368 = vld [vmem:[%s367] sm:$0xff]
  %v369 = vld [vmem:[%s367 + $0x8] sm:$0xff]
  %s370 = scalar_lea.vmem %s1, 64
  %v371 = vld [vmem:[%s370] sm:$0xf]
  %v372 = vld [vmem:[%s370 + $0x4] sm:$0xf]
  %v373 = vld [vmem:[%s370 + $0x8] sm:$0xf]
  %v374 = vld [vmem:[%s370 + $0xc] sm:$0xf]
  %v379 = vunpack.c.l.b16 %v371
  %v380 = vunpack.c.l.b16 %v372
  %v381 = vunpack.c.l.b16 %v373
  %v382 = vunpack.c.l.b16 %v374
  %v383 = vpack.c.b16 %v380, %v379
  %v384 = vpack.c.b16 %v382, %v381
  %v387 = vunpack.c.l.b16 %v368
  %v388 = vunpack.c.h.b16 %v368
  %v389 = vunpack.c.l.b16 %v369
  %v390 = vunpack.c.h.b16 %v369
  %v391 = vpack.c.b16 %v389, %v387
  %v392 = vpack.c.b16 %v390, %v388
  %v396 = vsel %vm49, %v383, 0
  %v399 = vsel %vm49, %v384, 0
  %401 = vmatprep.subr.bf16.mxu0 0
  %402 = vmatpush1.bf16.msra.mxu0 0
  %403 = vmatprep.subr.bf16.mxu0 0
  %404 = vmatpush1.bf16.msra.mxu0 0
  %405 = vmatprep.subr.bf16.mxu0 0
  %406 = vmatpush1.bf16.msra.mxu0 0
  %407 = vmatprep.subr.bf16.mxu0 0
  %408 = vmatpush1.bf16.msra.mxu0 0
  %409 = vmatprep.subr.bf16.mxu0 0
  %410 = vmatpush1.bf16.msra.mxu0 0
  %411 = vmatprep.subr.bf16.mxu0 0
  %412 = vmatpush1.bf16.msra.mxu0 0
  %413 = vmatprep.subr.bf16.mxu0 0
  %414 = vmatpush1.bf16.msra.mxu0 0
  %415 = vmatprep.subr.bf16.mxu0 %v392
  %416 = vmatpush1.bf16.msra.mxu0 %v391
  %417 = vmatprep.subr.bf16.mxu0 0
  %418 = vmatpush2.bf16.msra.mxu0 0
  %419 = vmatprep.subr.bf16.mxu0 0
  %420 = vmatpush2.bf16.msra.mxu0 0
  %421 = vmatprep.subr.bf16.mxu0 0
  %422 = vmatpush2.bf16.msra.mxu0 0
  %423 = vmatprep.subr.bf16.mxu0 0
  %424 = vmatpush2.bf16.msra.mxu0 0
  %425 = vmatprep.subr.bf16.mxu0 0
  %426 = vmatpush2.bf16.msra.mxu0 0
  %427 = vmatprep.subr.bf16.mxu0 0
  %428 = vmatpush2.bf16.msra.mxu0 0
  %429 = vmatprep.subr.bf16.mxu0 0
  %430 = vmatpush2.bf16.msra.mxu0 0
  %431 = vmatprep.subr.bf16.mxu0 0
  %432 = vmatpush2.bf16.msra.mxu0 0
  %433 = vmatprep.mubr.bf16.mxu0 0
  %434 = vmatmul.mubr.bf16.gmra.mxu0 %v396
  %v435 = vpop.f32.mrf.mxu0
  %v436 = vadd.f32 0.0, %v435
  %v437 = vpop.f32.mrf.mxu0
  %v438 = vadd.f32 0.0, %v437
  %v439 = vpop.f32.mrf.mxu0
  %v440 = vadd.f32 0.0, %v439
  %v441 = vpop.f32.mrf.mxu0
  %v442 = vadd.f32 0.0, %v441
  %443 = vmatprep.mubr.bf16.mxu0 0
  %444 = vmatmul.mubr.bf16.gmra.mxu0 %v399
  %v445 = vpop.f32.mrf.mxu0
  %v446 = vadd.f32 0.0, %v445
  %v447 = vpop.f32.mrf.mxu0
  %v448 = vadd.f32 0.0, %v447
  %v449 = vpop.f32.mrf.mxu0
  %v450 = vadd.f32 0.0, %v449
  %v451 = vpop.f32.mrf.mxu0
  %v452 = vadd.f32 0.0, %v451
  %453 = vdwg.mxu0
  %v454 = vadd.f32 %v359, %v436
  %v455 = vadd.f32 %v360, %v438
  %v456 = vadd.f32 %v361, %v440
  %v457 = vadd.f32 %v362, %v442
  %v458 = vadd.f32 %v363, %v446
  %v459 = vadd.f32 %v364, %v448
  %v460 = vadd.f32 %v365, %v450
  %v461 = vadd.f32 %v366, %v452
  %s462 = scalar_lea.vmem %s0, 48
  %v463 = vld [vmem:[%s462] sm:$0xff]
  %v464 = vld [vmem:[%s462 + $0x8] sm:$0xff]
  %s465 = scalar_lea.vmem %s1, 80
  %v466 = vld [vmem:[%s465] sm:$0xf]
  %v467 = vld [vmem:[%s465 + $0x4] sm:$0xf]
  %v468 = vld [vmem:[%s465 + $0x8] sm:$0xf]
  %v469 = vld [vmem:[%s465 + $0xc] sm:$0xf]
  %v474 = vunpack.c.l.b16 %v466
  %v475 = vunpack.c.l.b16 %v467
  %v476 = vunpack.c.l.b16 %v468
  %v477 = vunpack.c.l.b16 %v469
  %v478 = vpack.c.b16 %v475, %v474
  %v479 = vpack.c.b16 %v477, %v476
  %v482 = vunpack.c.l.b16 %v463
  %v483 = vunpack.c.h.b16 %v463
  %v484 = vunpack.c.l.b16 %v464
  %v485 = vunpack.c.h.b16 %v464
  %v486 = vpack.c.b16 %v484, %v482
  %v487 = vpack.c.b16 %v485, %v483
  %v491 = vsel %vm49, %v478, 0
  %v494 = vsel %vm49, %v479, 0
  %496 = vmatprep.subr.bf16.mxu0 0
  %497 = vmatpush1.bf16.msra.mxu0 0
  %498 = vmatprep.subr.bf16.mxu0 0
  %499 = vmatpush1.bf16.msra.mxu0 0
  %500 = vmatprep.subr.bf16.mxu0 0
  %501 = vmatpush1.bf16.msra.mxu0 0
  %502 = vmatprep.subr.bf16.mxu0 0
  %503 = vmatpush1.bf16.msra.mxu0 0
  %504 = vmatprep.subr.bf16.mxu0 0
  %505 = vmatpush1.bf16.msra.mxu0 0
  %506 = vmatprep.subr.bf16.mxu0 0
  %507 = vmatpush1.bf16.msra.mxu0 0
  %508 = vmatprep.subr.bf16.mxu0 0
  %509 = vmatpush1.bf16.msra.mxu0 0
  %510 = vmatprep.subr.bf16.mxu0 %v487
  %511 = vmatpush1.bf16.msra.mxu0 %v486
  %512 = vmatprep.subr.bf16.mxu0 0
  %513 = vmatpush2.bf16.msra.mxu0 0
  %514 = vmatprep.subr.bf16.mxu0 0
  %515 = vmatpush2.bf16.msra.mxu0 0
  %516 = vmatprep.subr.bf16.mxu0 0
  %517 = vmatpush2.bf16.msra.mxu0 0
  %518 = vmatprep.subr.bf16.mxu0 0
  %519 = vmatpush2.bf16.msra.mxu0 0
  %520 = vmatprep.subr.bf16.mxu0 0
  %521 = vmatpush2.bf16.msra.mxu0 0
  %522 = vmatprep.subr.bf16.mxu0 0
  %523 = vmatpush2.bf16.msra.mxu0 0
  %524 = vmatprep.subr.bf16.mxu0 0
  %525 = vmatpush2.bf16.msra.mxu0 0
  %526 = vmatprep.subr.bf16.mxu0 0
  %527 = vmatpush2.bf16.msra.mxu0 0
  %528 = vmatprep.mubr.bf16.mxu0 0
  %529 = vmatmul.mubr.bf16.gmra.mxu0 %v491
  %v530 = vpop.f32.mrf.mxu0
  %v531 = vadd.f32 0.0, %v530
  %v532 = vpop.f32.mrf.mxu0
  %v533 = vadd.f32 0.0, %v532
  %v534 = vpop.f32.mrf.mxu0
  %v535 = vadd.f32 0.0, %v534
  %v536 = vpop.f32.mrf.mxu0
  %v537 = vadd.f32 0.0, %v536
  %538 = vmatprep.mubr.bf16.mxu0 0
  %539 = vmatmul.mubr.bf16.gmra.mxu0 %v494
  %v540 = vpop.f32.mrf.mxu0
  %v541 = vadd.f32 0.0, %v540
  %v542 = vpop.f32.mrf.mxu0
  %v543 = vadd.f32 0.0, %v542
  %v544 = vpop.f32.mrf.mxu0
  %v545 = vadd.f32 0.0, %v544
  %v546 = vpop.f32.mrf.mxu0
  %v547 = vadd.f32 0.0, %v546
  %548 = vdwg.mxu0
  %v549 = vadd.f32 %v454, %v531
  %v550 = vadd.f32 %v455, %v533
  %v551 = vadd.f32 %v456, %v535
  %v552 = vadd.f32 %v457, %v537
  %v553 = vadd.f32 %v458, %v541
  %v554 = vadd.f32 %v459, %v543
  %v555 = vadd.f32 %v460, %v545
  %v556 = vadd.f32 %v461, %v547
  %s557 = scalar_lea.vmem %s1, 96
  %v558 = vld [vmem:[%s557] sm:$0xf]
  %v559 = vld [vmem:[%s557 + $0x4] sm:$0xf]
  %v560 = vld [vmem:[%s557 + $0x8] sm:$0xf]
  %v561 = vld [vmem:[%s557 + $0xc] sm:$0xf]
  %v566 = vunpack.c.l.b16 %v558
  %v567 = vunpack.c.l.b16 %v559
  %v568 = vunpack.c.l.b16 %v560
  %v569 = vunpack.c.l.b16 %v561
  %v570 = vpack.c.b16 %v567, %v566
  %v571 = vpack.c.b16 %v569, %v568
  %572 = vrot.lane.b32.xlu0 %v391, 127
  %v573 = vpop.permute.xlu0 %572
  %574 = vrot.lane.b32.xlu0 %v392, 127
  %v575 = vpop.permute.xlu0 %574
  %v576 = vsel %vm207, %v573, %v575
  %v580 = vsel %vm49, %v570, 0
  %v583 = vsel %vm49, %v571, 0
  %585 = vmatprep.subr.bf16.mxu0 0
  %586 = vmatpush1.bf16.msra.mxu0 0
  %587 = vmatprep.subr.bf16.mxu0 0
  %588 = vmatpush1.bf16.msra.mxu0 0
  %589 = vmatprep.subr.bf16.mxu0 0
  %590 = vmatpush1.bf16.msra.mxu0 0
  %591 = vmatprep.subr.bf16.mxu0 0
  %592 = vmatpush1.bf16.msra.mxu0 0
  %593 = vmatprep.subr.bf16.mxu0 0
  %594 = vmatpush1.bf16.msra.mxu0 0
  %595 = vmatprep.subr.bf16.mxu0 0
  %596 = vmatpush1.bf16.msra.mxu0 0
  %597 = vmatprep.subr.bf16.mxu0 0
  %598 = vmatpush1.bf16.msra.mxu0 0
  %599 = vmatprep.subr.bf16.mxu0 %v575
  %600 = vmatpush1.bf16.msra.mxu0 %v576
  %601 = vmatprep.subr.bf16.mxu0 0
  %602 = vmatpush2.bf16.msra.mxu0 0
  %603 = vmatprep.subr.bf16.mxu0 0
  %604 = vmatpush2.bf16.msra.mxu0 0
  %605 = vmatprep.subr.bf16.mxu0 0
  %606 = vmatpush2.bf16.msra.mxu0 0
  %607 = vmatprep.subr.bf16.mxu0 0
  %608 = vmatpush2.bf16.msra.mxu0 0
  %609 = vmatprep.subr.bf16.mxu0 0
  %610 = vmatpush2.bf16.msra.mxu0 0
  %611 = vmatprep.subr.bf16.mxu0 0
  %612 = vmatpush2.bf16.msra.mxu0 0
  %613 = vmatprep.subr.bf16.mxu0 0
  %614 = vmatpush2.bf16.msra.mxu0 0
  %615 = vmatprep.subr.bf16.mxu0 0
  %616 = vmatpush2.bf16.msra.mxu0 0
  %617 = vmatprep.mubr.bf16.mxu0 0
  %618 = vmatmul.mubr.bf16.gmra.mxu0 %v580
  %v619 = vpop.f32.mrf.mxu0
  %v620 = vadd.f32 0.0, %v619
  %v621 = vpop.f32.mrf.mxu0
  %v622 = vadd.f32 0.0, %v621
  %v623 = vpop.f32.mrf.mxu0
  %v624 = vadd.f32 0.0, %v623
  %v625 = vpop.f32.mrf.mxu0
  %v626 = vadd.f32 0.0, %v625
  %627 = vmatprep.mubr.bf16.mxu0 0
  %628 = vmatmul.mubr.bf16.gmra.mxu0 %v583
  %v629 = vpop.f32.mrf.mxu0
  %v630 = vadd.f32 0.0, %v629
  %v631 = vpop.f32.mrf.mxu0
  %v632 = vadd.f32 0.0, %v631
  %v633 = vpop.f32.mrf.mxu0
  %v634 = vadd.f32 0.0, %v633
  %v635 = vpop.f32.mrf.mxu0
  %v636 = vadd.f32 0.0, %v635
  %637 = vdwg.mxu0
  %v638 = vadd.f32 %v549, %v620
  %v639 = vadd.f32 %v550, %v622
  %v640 = vadd.f32 %v551, %v624
  %v641 = vadd.f32 %v552, %v626
  %v642 = vadd.f32 %v553, %v630
  %v643 = vadd.f32 %v554, %v632
  %v644 = vadd.f32 %v555, %v634
  %v645 = vadd.f32 %v556, %v636
  %s646 = scalar_lea.vmem %s1, 112
  %v647 = vld [vmem:[%s646] sm:$0xf]
  %v648 = vld [vmem:[%s646 + $0x4] sm:$0xf]
  %v649 = vld [vmem:[%s646 + $0x8] sm:$0xf]
  %v650 = vld [vmem:[%s646 + $0xc] sm:$0xf]
  %v655 = vunpack.c.l.b16 %v647
  %v656 = vunpack.c.l.b16 %v648
  %v657 = vunpack.c.l.b16 %v649
  %v658 = vunpack.c.l.b16 %v650
  %v659 = vpack.c.b16 %v656, %v655
  %v660 = vpack.c.b16 %v658, %v657
  %661 = vrot.lane.b32.xlu0 %v486, 127
  %v662 = vpop.permute.xlu0 %661
  %663 = vrot.lane.b32.xlu0 %v487, 127
  %v664 = vpop.permute.xlu0 %663
  %v665 = vsel %vm207, %v662, %v664
  %v669 = vsel %vm49, %v659, 0
  %v672 = vsel %vm49, %v660, 0
  %674 = vmatprep.subr.bf16.mxu0 0
  %675 = vmatpush1.bf16.msra.mxu0 0
  %676 = vmatprep.subr.bf16.mxu0 0
  %677 = vmatpush1.bf16.msra.mxu0 0
  %678 = vmatprep.subr.bf16.mxu0 0
  %679 = vmatpush1.bf16.msra.mxu0 0
  %680 = vmatprep.subr.bf16.mxu0 0
  %681 = vmatpush1.bf16.msra.mxu0 0
  %682 = vmatprep.subr.bf16.mxu0 0
  %683 = vmatpush1.bf16.msra.mxu0 0
  %684 = vmatprep.subr.bf16.mxu0 0
  %685 = vmatpush1.bf16.msra.mxu0 0
  %686 = vmatprep.subr.bf16.mxu0 0
  %687 = vmatpush1.bf16.msra.mxu0 0
  %688 = vmatprep.subr.bf16.mxu0 %v664
  %689 = vmatpush1.bf16.msra.mxu0 %v665
  %690 = vmatprep.subr.bf16.mxu0 0
  %691 = vmatpush2.bf16.msra.mxu0 0
  %692 = vmatprep.subr.bf16.mxu0 0
  %693 = vmatpush2.bf16.msra.mxu0 0
  %694 = vmatprep.subr.bf16.mxu0 0
  %695 = vmatpush2.bf16.msra.mxu0 0
  %696 = vmatprep.subr.bf16.mxu0 0
  %697 = vmatpush2.bf16.msra.mxu0 0
  %698 = vmatprep.subr.bf16.mxu0 0
  %699 = vmatpush2.bf16.msra.mxu0 0
  %700 = vmatprep.subr.bf16.mxu0 0
  %701 = vmatpush2.bf16.msra.mxu0 0
  %702 = vmatprep.subr.bf16.mxu0 0
  %703 = vmatpush2.bf16.msra.mxu0 0
  %704 = vmatprep.subr.bf16.mxu0 0
  %705 = vmatpush2.bf16.msra.mxu0 0
  %706 = vmatprep.mubr.bf16.mxu0 0
  %707 = vmatmul.mubr.bf16.gmra.mxu0 %v669
  %v708 = vpop.f32.mrf.mxu0
  %v709 = vadd.f32 0.0, %v708
  %v710 = vpop.f32.mrf.mxu0
  %v711 = vadd.f32 0.0, %v710
  %v712 = vpop.f32.mrf.mxu0
  %v713 = vadd.f32 0.0, %v712
  %v714 = vpop.f32.mrf.mxu0
  %v715 = vadd.f32 0.0, %v714
  %716 = vmatprep.mubr.bf16.mxu0 0
  %717 = vmatmul.mubr.bf16.gmra.mxu0 %v672
  %v718 = vpop.f32.mrf.mxu0
  %v719 = vadd.f32 0.0, %v718
  %v720 = vpop.f32.mrf.mxu0
  %v721 = vadd.f32 0.0, %v720
  %v722 = vpop.f32.mrf.mxu0
  %v723 = vadd.f32 0.0, %v722
  %v724 = vpop.f32.mrf.mxu0
  %v725 = vadd.f32 0.0, %v724
  %726 = vdwg.mxu0
  %v727 = vadd.f32 %v638, %v709
  %v728 = vadd.f32 %v639, %v711
  %v729 = vadd.f32 %v640, %v713
  %v730 = vadd.f32 %v641, %v715
  %v731 = vadd.f32 %v642, %v719
  %v732 = vadd.f32 %v643, %v721
  %v733 = vadd.f32 %v644, %v723
  %v734 = vadd.f32 %v645, %v725
  %s735 = scalar_lea.vmem %s1, 128
  %v736 = vld [vmem:[%s735] sm:$0xf]
  %v737 = vld [vmem:[%s735 + $0x4] sm:$0xf]
  %v738 = vld [vmem:[%s735 + $0x8] sm:$0xf]
  %v739 = vld [vmem:[%s735 + $0xc] sm:$0xf]
  %v744 = vunpack.c.l.b16 %v736
  %v745 = vunpack.c.l.b16 %v737
  %v746 = vunpack.c.l.b16 %v738
  %v747 = vunpack.c.l.b16 %v739
  %v748 = vpack.c.b16 %v745, %v744
  %v749 = vpack.c.b16 %v747, %v746
  %750 = vrot.lane.b32.xlu0 %v125, 119
  %v751 = vpop.permute.xlu0 %750
  %752 = vrot.lane.b32.xlu0 %v126, 119
  %v753 = vpop.permute.xlu0 %752
  %vm754 = vcmask 973824
  %v755 = vsel %vm754, %v751, %v753
  %v759 = vsel %vm49, %v748, 0
  %v762 = vsel %vm49, %v749, 0
  %764 = vmatprep.subr.bf16.mxu0 0
  %765 = vmatpush1.bf16.msra.mxu0 0
  %766 = vmatprep.subr.bf16.mxu0 0
  %767 = vmatpush1.bf16.msra.mxu0 0
  %768 = vmatprep.subr.bf16.mxu0 0
  %769 = vmatpush1.bf16.msra.mxu0 0
  %770 = vmatprep.subr.bf16.mxu0 0
  %771 = vmatpush1.bf16.msra.mxu0 0
  %772 = vmatprep.subr.bf16.mxu0 0
  %773 = vmatpush1.bf16.msra.mxu0 0
  %774 = vmatprep.subr.bf16.mxu0 0
  %775 = vmatpush1.bf16.msra.mxu0 0
  %776 = vmatprep.subr.bf16.mxu0 0
  %777 = vmatpush1.bf16.msra.mxu0 0
  %778 = vmatprep.subr.bf16.mxu0 %v753
  %779 = vmatpush1.bf16.msra.mxu0 %v755
  %780 = vmatprep.subr.bf16.mxu0 0
  %781 = vmatpush2.bf16.msra.mxu0 0
  %782 = vmatprep.subr.bf16.mxu0 0
  %783 = vmatpush2.bf16.msra.mxu0 0
  %784 = vmatprep.subr.bf16.mxu0 0
  %785 = vmatpush2.bf16.msra.mxu0 0
  %786 = vmatprep.subr.bf16.mxu0 0
  %787 = vmatpush2.bf16.msra.mxu0 0
  %788 = vmatprep.subr.bf16.mxu0 0
  %789 = vmatpush2.bf16.msra.mxu0 0
  %790 = vmatprep.subr.bf16.mxu0 0
  %791 = vmatpush2.bf16.msra.mxu0 0
  %792 = vmatprep.subr.bf16.mxu0 0
  %793 = vmatpush2.bf16.msra.mxu0 0
  %794 = vmatprep.subr.bf16.mxu0 0
  %795 = vmatpush2.bf16.msra.mxu0 0
  %796 = vmatprep.mubr.bf16.mxu0 0
  %797 = vmatmul.mubr.bf16.gmra.mxu0 %v759
  %v798 = vpop.f32.mrf.mxu0
  %v799 = vadd.f32 0.0, %v798
  %v800 = vpop.f32.mrf.mxu0
  %v801 = vadd.f32 0.0, %v800
  %v802 = vpop.f32.mrf.mxu0
  %v803 = vadd.f32 0.0, %v802
  %v804 = vpop.f32.mrf.mxu0
  %v805 = vadd.f32 0.0, %v804
  %806 = vmatprep.mubr.bf16.mxu0 0
  %807 = vmatmul.mubr.bf16.gmra.mxu0 %v762
  %v808 = vpop.f32.mrf.mxu0
  %v809 = vadd.f32 0.0, %v808
  %v810 = vpop.f32.mrf.mxu0
  %v811 = vadd.f32 0.0, %v810
  %v812 = vpop.f32.mrf.mxu0
  %v813 = vadd.f32 0.0, %v812
  %v814 = vpop.f32.mrf.mxu0
  %v815 = vadd.f32 0.0, %v814
  %816 = vdwg.mxu0
  %v817 = vadd.f32 %v727, %v799
  %v818 = vadd.f32 %v728, %v801
  %v819 = vadd.f32 %v729, %v803
  %v820 = vadd.f32 %v730, %v805
  %v821 = vadd.f32 %v731, %v809
  %v822 = vadd.f32 %v732, %v811
  %v823 = vadd.f32 %v733, %v813
  %v824 = vadd.f32 %v734, %v815
  %s825 = scalar_lea.vmem %s1, 144
  %v826 = vld [vmem:[%s825] sm:$0xf]
  %v827 = vld [vmem:[%s825 + $0x4] sm:$0xf]
  %v828 = vld [vmem:[%s825 + $0x8] sm:$0xf]
  %v829 = vld [vmem:[%s825 + $0xc] sm:$0xf]
  %v834 = vunpack.c.l.b16 %v826
  %v835 = vunpack.c.l.b16 %v827
  %v836 = vunpack.c.l.b16 %v828
  %v837 = vunpack.c.l.b16 %v829
  %v838 = vpack.c.b16 %v835, %v834
  %v839 = vpack.c.b16 %v837, %v836
  %840 = vrot.lane.b32.xlu0 %v45, 119
  %v841 = vpop.permute.xlu0 %840
  %842 = vrot.lane.b32.xlu0 %v46, 119
  %v843 = vpop.permute.xlu0 %842
  %v844 = vsel %vm754, %v841, %v843
  %v848 = vsel %vm49, %v838, 0
  %v851 = vsel %vm49, %v839, 0
  %853 = vmatprep.subr.bf16.mxu0 0
  %854 = vmatpush1.bf16.msra.mxu0 0
  %855 = vmatprep.subr.bf16.mxu0 0
  %856 = vmatpush1.bf16.msra.mxu0 0
  %857 = vmatprep.subr.bf16.mxu0 0
  %858 = vmatpush1.bf16.msra.mxu0 0
  %859 = vmatprep.subr.bf16.mxu0 0
  %860 = vmatpush1.bf16.msra.mxu0 0
  %861 = vmatprep.subr.bf16.mxu0 0
  %862 = vmatpush1.bf16.msra.mxu0 0
  %863 = vmatprep.subr.bf16.mxu0 0
  %864 = vmatpush1.bf16.msra.mxu0 0
  %865 = vmatprep.subr.bf16.mxu0 0
  %866 = vmatpush1.bf16.msra.mxu0 0
  %867 = vmatprep.subr.bf16.mxu0 %v843
  %868 = vmatpush1.bf16.msra.mxu0 %v844
  %869 = vmatprep.subr.bf16.mxu0 0
  %870 = vmatpush2.bf16.msra.mxu0 0
  %871 = vmatprep.subr.bf16.mxu0 0
  %872 = vmatpush2.bf16.msra.mxu0 0
  %873 = vmatprep.subr.bf16.mxu0 0
  %874 = vmatpush2.bf16.msra.mxu0 0
  %875 = vmatprep.subr.bf16.mxu0 0
  %876 = vmatpush2.bf16.msra.mxu0 0
  %877 = vmatprep.subr.bf16.mxu0 0
  %878 = vmatpush2.bf16.msra.mxu0 0
  %879 = vmatprep.subr.bf16.mxu0 0
  %880 = vmatpush2.bf16.msra.mxu0 0
  %881 = vmatprep.subr.bf16.mxu0 0
  %882 = vmatpush2.bf16.msra.mxu0 0
  %883 = vmatprep.subr.bf16.mxu0 0
  %884 = vmatpush2.bf16.msra.mxu0 0
  %885 = vmatprep.mubr.bf16.mxu0 0
  %886 = vmatmul.mubr.bf16.gmra.mxu0 %v848
  %v887 = vpop.f32.mrf.mxu0
  %v888 = vadd.f32 0.0, %v887
  %v889 = vpop.f32.mrf.mxu0
  %v890 = vadd.f32 0.0, %v889
  %v891 = vpop.f32.mrf.mxu0
  %v892 = vadd.f32 0.0, %v891
  %v893 = vpop.f32.mrf.mxu0
  %v894 = vadd.f32 0.0, %v893
  %895 = vmatprep.mubr.bf16.mxu0 0
  %896 = vmatmul.mubr.bf16.gmra.mxu0 %v851
  %v897 = vpop.f32.mrf.mxu0
  %v898 = vadd.f32 0.0, %v897
  %v899 = vpop.f32.mrf.mxu0
  %v900 = vadd.f32 0.0, %v899
  %v901 = vpop.f32.mrf.mxu0
  %v902 = vadd.f32 0.0, %v901
  %v903 = vpop.f32.mrf.mxu0
  %v904 = vadd.f32 0.0, %v903
  %905 = vdwg.mxu0
  %v906 = vadd.f32 %v817, %v888
  %v907 = vadd.f32 %v818, %v890
  %v908 = vadd.f32 %v819, %v892
  %v909 = vadd.f32 %v820, %v894
  %v910 = vadd.f32 %v821, %v898
  %v911 = vadd.f32 %v822, %v900
  %v912 = vadd.f32 %v823, %v902
  %v913 = vadd.f32 %v824, %v904
  %s914 = scalar_lea.vmem %s1, 160
  %v915 = vld [vmem:[%s914] sm:$0xf]
  %v916 = vld [vmem:[%s914 + $0x4] sm:$0xf]
  %v917 = vld [vmem:[%s914 + $0x8] sm:$0xf]
  %v918 = vld [vmem:[%s914 + $0xc] sm:$0xf]
  %v923 = vunpack.c.l.b16 %v915
  %v924 = vunpack.c.l.b16 %v916
  %v925 = vunpack.c.l.b16 %v917
  %v926 = vunpack.c.l.b16 %v918
  %v927 = vpack.c.b16 %v924, %v923
  %v928 = vpack.c.b16 %v926, %v925
  %929 = vrot.lane.b32.xlu0 %v125, 118
  %v930 = vpop.permute.xlu0 %929
  %931 = vrot.lane.b32.xlu0 %v126, 118
  %v932 = vpop.permute.xlu0 %931
  %vm933 = vcmask 965632
  %v934 = vsel %vm933, %v930, %v932
  %v938 = vsel %vm49, %v927, 0
  %v941 = vsel %vm49, %v928, 0
  %943 = vmatprep.subr.bf16.mxu0 0
  %944 = vmatpush1.bf16.msra.mxu0 0
  %945 = vmatprep.subr.bf16.mxu0 0
  %946 = vmatpush1.bf16.msra.mxu0 0
  %947 = vmatprep.subr.bf16.mxu0 0
  %948 = vmatpush1.bf16.msra.mxu0 0
  %949 = vmatprep.subr.bf16.mxu0 0
  %950 = vmatpush1.bf16.msra.mxu0 0
  %951 = vmatprep.subr.bf16.mxu0 0
  %952 = vmatpush1.bf16.msra.mxu0 0
  %953 = vmatprep.subr.bf16.mxu0 0
  %954 = vmatpush1.bf16.msra.mxu0 0
  %955 = vmatprep.subr.bf16.mxu0 0
  %956 = vmatpush1.bf16.msra.mxu0 0
  %957 = vmatprep.subr.bf16.mxu0 %v932
  %958 = vmatpush1.bf16.msra.mxu0 %v934
  %959 = vmatprep.subr.bf16.mxu0 0
  %960 = vmatpush2.bf16.msra.mxu0 0
  %961 = vmatprep.subr.bf16.mxu0 0
  %962 = vmatpush2.bf16.msra.mxu0 0
  %963 = vmatprep.subr.bf16.mxu0 0
  %964 = vmatpush2.bf16.msra.mxu0 0
  %965 = vmatprep.subr.bf16.mxu0 0
  %966 = vmatpush2.bf16.msra.mxu0 0
  %967 = vmatprep.subr.bf16.mxu0 0
  %968 = vmatpush2.bf16.msra.mxu0 0
  %969 = vmatprep.subr.bf16.mxu0 0
  %970 = vmatpush2.bf16.msra.mxu0 0
  %971 = vmatprep.subr.bf16.mxu0 0
  %972 = vmatpush2.bf16.msra.mxu0 0
  %973 = vmatprep.subr.bf16.mxu0 0
  %974 = vmatpush2.bf16.msra.mxu0 0
  %975 = vmatprep.mubr.bf16.mxu0 0
  %976 = vmatmul.mubr.bf16.gmra.mxu0 %v938
  %v977 = vpop.f32.mrf.mxu0
  %v978 = vadd.f32 0.0, %v977
  %v979 = vpop.f32.mrf.mxu0
  %v980 = vadd.f32 0.0, %v979
  %v981 = vpop.f32.mrf.mxu0
  %v982 = vadd.f32 0.0, %v981
  %v983 = vpop.f32.mrf.mxu0
  %v984 = vadd.f32 0.0, %v983
  %985 = vmatprep.mubr.bf16.mxu0 0
  %986 = vmatmul.mubr.bf16.gmra.mxu0 %v941
  %v987 = vpop.f32.mrf.mxu0
  %v988 = vadd.f32 0.0, %v987
  %v989 = vpop.f32.mrf.mxu0
  %v990 = vadd.f32 0.0, %v989
  %v991 = vpop.f32.mrf.mxu0
  %v992 = vadd.f32 0.0, %v991
  %v993 = vpop.f32.mrf.mxu0
  %v994 = vadd.f32 0.0, %v993
  %995 = vdwg.mxu0
  %v996 = vadd.f32 %v906, %v978
  %v997 = vadd.f32 %v907, %v980
  %v998 = vadd.f32 %v908, %v982
  %v999 = vadd.f32 %v909, %v984
  %v1000 = vadd.f32 %v910, %v988
  %v1001 = vadd.f32 %v911, %v990
  %v1002 = vadd.f32 %v912, %v992
  %v1003 = vadd.f32 %v913, %v994
  %s1004 = scalar_lea.vmem %s1, 176
  %v1005 = vld [vmem:[%s1004] sm:$0xf]
  %v1006 = vld [vmem:[%s1004 + $0x4] sm:$0xf]
  %v1007 = vld [vmem:[%s1004 + $0x8] sm:$0xf]
  %v1008 = vld [vmem:[%s1004 + $0xc] sm:$0xf]
  %v1013 = vunpack.c.l.b16 %v1005
  %v1014 = vunpack.c.l.b16 %v1006
  %v1015 = vunpack.c.l.b16 %v1007
  %v1016 = vunpack.c.l.b16 %v1008
  %v1017 = vpack.c.b16 %v1014, %v1013
  %v1018 = vpack.c.b16 %v1016, %v1015
  %1019 = vrot.lane.b32.xlu0 %v45, 118
  %v1020 = vpop.permute.xlu0 %1019
  %1021 = vrot.lane.b32.xlu0 %v46, 118
  %v1022 = vpop.permute.xlu0 %1021
  %v1023 = vsel %vm933, %v1020, %v1022
  %v1027 = vsel %vm49, %v1017, 0
  %v1030 = vsel %vm49, %v1018, 0
  %1032 = vmatprep.subr.bf16.mxu0 0
  %1033 = vmatpush1.bf16.msra.mxu0 0
  %1034 = vmatprep.subr.bf16.mxu0 0
  %1035 = vmatpush1.bf16.msra.mxu0 0
  %1036 = vmatprep.subr.bf16.mxu0 0
  %1037 = vmatpush1.bf16.msra.mxu0 0
  %1038 = vmatprep.subr.bf16.mxu0 0
  %1039 = vmatpush1.bf16.msra.mxu0 0
  %1040 = vmatprep.subr.bf16.mxu0 0
  %1041 = vmatpush1.bf16.msra.mxu0 0
  %1042 = vmatprep.subr.bf16.mxu0 0
  %1043 = vmatpush1.bf16.msra.mxu0 0
  %1044 = vmatprep.subr.bf16.mxu0 0
  %1045 = vmatpush1.bf16.msra.mxu0 0
  %1046 = vmatprep.subr.bf16.mxu0 %v1022
  %1047 = vmatpush1.bf16.msra.mxu0 %v1023
  %1048 = vmatprep.subr.bf16.mxu0 0
  %1049 = vmatpush2.bf16.msra.mxu0 0
  %1050 = vmatprep.subr.bf16.mxu0 0
  %1051 = vmatpush2.bf16.msra.mxu0 0
  %1052 = vmatprep.subr.bf16.mxu0 0
  %1053 = vmatpush2.bf16.msra.mxu0 0
  %1054 = vmatprep.subr.bf16.mxu0 0
  %1055 = vmatpush2.bf16.msra.mxu0 0
  %1056 = vmatprep.subr.bf16.mxu0 0
  %1057 = vmatpush2.bf16.msra.mxu0 0
  %1058 = vmatprep.subr.bf16.mxu0 0
  %1059 = vmatpush2.bf16.msra.mxu0 0
  %1060 = vmatprep.subr.bf16.mxu0 0
  %1061 = vmatpush2.bf16.msra.mxu0 0
  %1062 = vmatprep.subr.bf16.mxu0 0
  %1063 = vmatpush2.bf16.msra.mxu0 0
  %1064 = vmatprep.mubr.bf16.mxu0 0
  %1065 = vmatmul.mubr.bf16.gmra.mxu0 %v1027
  %v1066 = vpop.f32.mrf.mxu0
  %v1067 = vadd.f32 0.0, %v1066
  %v1068 = vpop.f32.mrf.mxu0
  %v1069 = vadd.f32 0.0, %v1068
  %v1070 = vpop.f32.mrf.mxu0
  %v1071 = vadd.f32 0.0, %v1070
  %v1072 = vpop.f32.mrf.mxu0
  %v1073 = vadd.f32 0.0, %v1072
  %1074 = vmatprep.mubr.bf16.mxu0 0
  %1075 = vmatmul.mubr.bf16.gmra.mxu0 %v1030
  %v1076 = vpop.f32.mrf.mxu0
  %v1077 = vadd.f32 0.0, %v1076
  %v1078 = vpop.f32.mrf.mxu0
  %v1079 = vadd.f32 0.0, %v1078
  %v1080 = vpop.f32.mrf.mxu0
  %v1081 = vadd.f32 0.0, %v1080
  %v1082 = vpop.f32.mrf.mxu0
  %v1083 = vadd.f32 0.0, %v1082
  %1084 = vdwg.mxu0
  %v1085 = vadd.f32 %v996, %v1067
  %v1086 = vadd.f32 %v997, %v1069
  %v1087 = vadd.f32 %v998, %v1071
  %v1088 = vadd.f32 %v999, %v1073
  %v1089 = vadd.f32 %v1000, %v1077
  %v1090 = vadd.f32 %v1001, %v1079
  %v1091 = vadd.f32 %v1002, %v1081
  %v1092 = vadd.f32 %v1003, %v1083
  %s1093 = scalar_lea.vmem %s1, 192
  %v1094 = vld [vmem:[%s1093] sm:$0xf]
  %v1095 = vld [vmem:[%s1093 + $0x4] sm:$0xf]
  %v1096 = vld [vmem:[%s1093 + $0x8] sm:$0xf]
  %v1097 = vld [vmem:[%s1093 + $0xc] sm:$0xf]
  %v1102 = vunpack.c.l.b16 %v1094
  %v1103 = vunpack.c.l.b16 %v1095
  %v1104 = vunpack.c.l.b16 %v1096
  %v1105 = vunpack.c.l.b16 %v1097
  %v1106 = vpack.c.b16 %v1103, %v1102
  %v1107 = vpack.c.b16 %v1105, %v1104
  %1108 = vrot.lane.b32.xlu0 %v391, 119
  %v1109 = vpop.permute.xlu0 %1108
  %1110 = vrot.lane.b32.xlu0 %v392, 119
  %v1111 = vpop.permute.xlu0 %1110
  %v1112 = vsel %vm754, %v1109, %v1111
  %v1116 = vsel %vm49, %v1106, 0
  %v1119 = vsel %vm49, %v1107, 0
  %1121 = vmatprep.subr.bf16.mxu0 0
  %1122 = vmatpush1.bf16.msra.mxu0 0
  %1123 = vmatprep.subr.bf16.mxu0 0
  %1124 = vmatpush1.bf16.msra.mxu0 0
  %1125 = vmatprep.subr.bf16.mxu0 0
  %1126 = vmatpush1.bf16.msra.mxu0 0
  %1127 = vmatprep.subr.bf16.mxu0 0
  %1128 = vmatpush1.bf16.msra.mxu0 0
  %1129 = vmatprep.subr.bf16.mxu0 0
  %1130 = vmatpush1.bf16.msra.mxu0 0
  %1131 = vmatprep.subr.bf16.mxu0 0
  %1132 = vmatpush1.bf16.msra.mxu0 0
  %1133 = vmatprep.subr.bf16.mxu0 0
  %1134 = vmatpush1.bf16.msra.mxu0 0
  %1135 = vmatprep.subr.bf16.mxu0 %v1111
  %1136 = vmatpush1.bf16.msra.mxu0 %v1112
  %1137 = vmatprep.subr.bf16.mxu0 0
  %1138 = vmatpush2.bf16.msra.mxu0 0
  %1139 = vmatprep.subr.bf16.mxu0 0
  %1140 = vmatpush2.bf16.msra.mxu0 0
  %1141 = vmatprep.subr.bf16.mxu0 0
  %1142 = vmatpush2.bf16.msra.mxu0 0
  %1143 = vmatprep.subr.bf16.mxu0 0
  %1144 = vmatpush2.bf16.msra.mxu0 0
  %1145 = vmatprep.subr.bf16.mxu0 0
  %1146 = vmatpush2.bf16.msra.mxu0 0
  %1147 = vmatprep.subr.bf16.mxu0 0
  %1148 = vmatpush2.bf16.msra.mxu0 0
  %1149 = vmatprep.subr.bf16.mxu0 0
  %1150 = vmatpush2.bf16.msra.mxu0 0
  %1151 = vmatprep.subr.bf16.mxu0 0
  %1152 = vmatpush2.bf16.msra.mxu0 0
  %1153 = vmatprep.mubr.bf16.mxu0 0
  %1154 = vmatmul.mubr.bf16.gmra.mxu0 %v1116
  %v1155 = vpop.f32.mrf.mxu0
  %v1156 = vadd.f32 0.0, %v1155
  %v1157 = vpop.f32.mrf.mxu0
  %v1158 = vadd.f32 0.0, %v1157
  %v1159 = vpop.f32.mrf.mxu0
  %v1160 = vadd.f32 0.0, %v1159
  %v1161 = vpop.f32.mrf.mxu0
  %v1162 = vadd.f32 0.0, %v1161
  %1163 = vmatprep.mubr.bf16.mxu0 0
  %1164 = vmatmul.mubr.bf16.gmra.mxu0 %v1119
  %v1165 = vpop.f32.mrf.mxu0
  %v1166 = vadd.f32 0.0, %v1165
  %v1167 = vpop.f32.mrf.mxu0
  %v1168 = vadd.f32 0.0, %v1167
  %v1169 = vpop.f32.mrf.mxu0
  %v1170 = vadd.f32 0.0, %v1169
  %v1171 = vpop.f32.mrf.mxu0
  %v1172 = vadd.f32 0.0, %v1171
  %1173 = vdwg.mxu0
  %v1174 = vadd.f32 %v1085, %v1156
  %v1175 = vadd.f32 %v1086, %v1158
  %v1176 = vadd.f32 %v1087, %v1160
  %v1177 = vadd.f32 %v1088, %v1162
  %v1178 = vadd.f32 %v1089, %v1166
  %v1179 = vadd.f32 %v1090, %v1168
  %v1180 = vadd.f32 %v1091, %v1170
  %v1181 = vadd.f32 %v1092, %v1172
  %s1182 = scalar_lea.vmem %s1, 208
  %v1183 = vld [vmem:[%s1182] sm:$0xf]
  %v1184 = vld [vmem:[%s1182 + $0x4] sm:$0xf]
  %v1185 = vld [vmem:[%s1182 + $0x8] sm:$0xf]
  %v1186 = vld [vmem:[%s1182 + $0xc] sm:$0xf]
  %v1191 = vunpack.c.l.b16 %v1183
  %v1192 = vunpack.c.l.b16 %v1184
  %v1193 = vunpack.c.l.b16 %v1185
  %v1194 = vunpack.c.l.b16 %v1186
  %v1195 = vpack.c.b16 %v1192, %v1191
  %v1196 = vpack.c.b16 %v1194, %v1193
  %1197 = vrot.lane.b32.xlu0 %v486, 119
  %v1198 = vpop.permute.xlu0 %1197
  %1199 = vrot.lane.b32.xlu0 %v487, 119
  %v1200 = vpop.permute.xlu0 %1199
  %v1201 = vsel %vm754, %v1198, %v1200
  %v1205 = vsel %vm49, %v1195, 0
  %v1208 = vsel %vm49, %v1196, 0
  %1210 = vmatprep.subr.bf16.mxu0 0
  %1211 = vmatpush1.bf16.msra.mxu0 0
  %1212 = vmatprep.subr.bf16.mxu0 0
  %1213 = vmatpush1.bf16.msra.mxu0 0
  %1214 = vmatprep.subr.bf16.mxu0 0
  %1215 = vmatpush1.bf16.msra.mxu0 0
  %1216 = vmatprep.subr.bf16.mxu0 0
  %1217 = vmatpush1.bf16.msra.mxu0 0
  %1218 = vmatprep.subr.bf16.mxu0 0
  %1219 = vmatpush1.bf16.msra.mxu0 0
  %1220 = vmatprep.subr.bf16.mxu0 0
  %1221 = vmatpush1.bf16.msra.mxu0 0
  %1222 = vmatprep.subr.bf16.mxu0 0
  %1223 = vmatpush1.bf16.msra.mxu0 0
  %1224 = vmatprep.subr.bf16.mxu0 %v1200
  %1225 = vmatpush1.bf16.msra.mxu0 %v1201
  %1226 = vmatprep.subr.bf16.mxu0 0
  %1227 = vmatpush2.bf16.msra.mxu0 0
  %1228 = vmatprep.subr.bf16.mxu0 0
  %1229 = vmatpush2.bf16.msra.mxu0 0
  %1230 = vmatprep.subr.bf16.mxu0 0
  %1231 = vmatpush2.bf16.msra.mxu0 0
  %1232 = vmatprep.subr.bf16.mxu0 0
  %1233 = vmatpush2.bf16.msra.mxu0 0
  %1234 = vmatprep.subr.bf16.mxu0 0
  %1235 = vmatpush2.bf16.msra.mxu0 0
  %1236 = vmatprep.subr.bf16.mxu0 0
  %1237 = vmatpush2.bf16.msra.mxu0 0
  %1238 = vmatprep.subr.bf16.mxu0 0
  %1239 = vmatpush2.bf16.msra.mxu0 0
  %1240 = vmatprep.subr.bf16.mxu0 0
  %1241 = vmatpush2.bf16.msra.mxu0 0
  %1242 = vmatprep.mubr.bf16.mxu0 0
  %1243 = vmatmul.mubr.bf16.gmra.mxu0 %v1205
  %v1244 = vpop.f32.mrf.mxu0
  %v1245 = vadd.f32 0.0, %v1244
  %v1246 = vpop.f32.mrf.mxu0
  %v1247 = vadd.f32 0.0, %v1246
  %v1248 = vpop.f32.mrf.mxu0
  %v1249 = vadd.f32 0.0, %v1248
  %v1250 = vpop.f32.mrf.mxu0
  %v1251 = vadd.f32 0.0, %v1250
  %1252 = vmatprep.mubr.bf16.mxu0 0
  %1253 = vmatmul.mubr.bf16.gmra.mxu0 %v1208
  %v1254 = vpop.f32.mrf.mxu0
  %v1255 = vadd.f32 0.0, %v1254
  %v1256 = vpop.f32.mrf.mxu0
  %v1257 = vadd.f32 0.0, %v1256
  %v1258 = vpop.f32.mrf.mxu0
  %v1259 = vadd.f32 0.0, %v1258
  %v1260 = vpop.f32.mrf.mxu0
  %v1261 = vadd.f32 0.0, %v1260
  %1262 = vdwg.mxu0
  %v1263 = vadd.f32 %v1174, %v1245
  %v1264 = vadd.f32 %v1175, %v1247
  %v1265 = vadd.f32 %v1176, %v1249
  %v1266 = vadd.f32 %v1177, %v1251
  %v1267 = vadd.f32 %v1178, %v1255
  %v1268 = vadd.f32 %v1179, %v1257
  %v1269 = vadd.f32 %v1180, %v1259
  %v1270 = vadd.f32 %v1181, %v1261
  %s1271 = scalar_lea.vmem %s1, 224
  %v1272 = vld [vmem:[%s1271] sm:$0xf]
  %v1273 = vld [vmem:[%s1271 + $0x4] sm:$0xf]
  %v1274 = vld [vmem:[%s1271 + $0x8] sm:$0xf]
  %v1275 = vld [vmem:[%s1271 + $0xc] sm:$0xf]
  %v1280 = vunpack.c.l.b16 %v1272
  %v1281 = vunpack.c.l.b16 %v1273
  %v1282 = vunpack.c.l.b16 %v1274
  %v1283 = vunpack.c.l.b16 %v1275
  %v1284 = vpack.c.b16 %v1281, %v1280
  %v1285 = vpack.c.b16 %v1283, %v1282
  %1286 = vrot.lane.b32.xlu0 %v391, 118
  %v1287 = vpop.permute.xlu0 %1286
  %1288 = vrot.lane.b32.xlu0 %v392, 118
  %v1289 = vpop.permute.xlu0 %1288
  %v1290 = vsel %vm933, %v1287, %v1289
  %v1294 = vsel %vm49, %v1284, 0
  %v1297 = vsel %vm49, %v1285, 0
  %1299 = vmatprep.subr.bf16.mxu0 0
  %1300 = vmatpush1.bf16.msra.mxu0 0
  %1301 = vmatprep.subr.bf16.mxu0 0
  %1302 = vmatpush1.bf16.msra.mxu0 0
  %1303 = vmatprep.subr.bf16.mxu0 0
  %1304 = vmatpush1.bf16.msra.mxu0 0
  %1305 = vmatprep.subr.bf16.mxu0 0
  %1306 = vmatpush1.bf16.msra.mxu0 0
  %1307 = vmatprep.subr.bf16.mxu0 0
  %1308 = vmatpush1.bf16.msra.mxu0 0
  %1309 = vmatprep.subr.bf16.mxu0 0
  %1310 = vmatpush1.bf16.msra.mxu0 0
  %1311 = vmatprep.subr.bf16.mxu0 0
  %1312 = vmatpush1.bf16.msra.mxu0 0
  %1313 = vmatprep.subr.bf16.mxu0 %v1289
  %1314 = vmatpush1.bf16.msra.mxu0 %v1290
  %1315 = vmatprep.subr.bf16.mxu0 0
  %1316 = vmatpush2.bf16.msra.mxu0 0
  %1317 = vmatprep.subr.bf16.mxu0 0
  %1318 = vmatpush2.bf16.msra.mxu0 0
  %1319 = vmatprep.subr.bf16.mxu0 0
  %1320 = vmatpush2.bf16.msra.mxu0 0
  %1321 = vmatprep.subr.bf16.mxu0 0
  %1322 = vmatpush2.bf16.msra.mxu0 0
  %1323 = vmatprep.subr.bf16.mxu0 0
  %1324 = vmatpush2.bf16.msra.mxu0 0
  %1325 = vmatprep.subr.bf16.mxu0 0
  %1326 = vmatpush2.bf16.msra.mxu0 0
  %1327 = vmatprep.subr.bf16.mxu0 0
  %1328 = vmatpush2.bf16.msra.mxu0 0
  %1329 = vmatprep.subr.bf16.mxu0 0
  %1330 = vmatpush2.bf16.msra.mxu0 0
  %1331 = vmatprep.mubr.bf16.mxu0 0
  %1332 = vmatmul.mubr.bf16.gmra.mxu0 %v1294
  %v1333 = vpop.f32.mrf.mxu0
  %v1334 = vadd.f32 0.0, %v1333
  %v1335 = vpop.f32.mrf.mxu0
  %v1336 = vadd.f32 0.0, %v1335
  %v1337 = vpop.f32.mrf.mxu0
  %v1338 = vadd.f32 0.0, %v1337
  %v1339 = vpop.f32.mrf.mxu0
  %v1340 = vadd.f32 0.0, %v1339
  %1341 = vmatprep.mubr.bf16.mxu0 0
  %1342 = vmatmul.mubr.bf16.gmra.mxu0 %v1297
  %v1343 = vpop.f32.mrf.mxu0
  %v1344 = vadd.f32 0.0, %v1343
  %v1345 = vpop.f32.mrf.mxu0
  %v1346 = vadd.f32 0.0, %v1345
  %v1347 = vpop.f32.mrf.mxu0
  %v1348 = vadd.f32 0.0, %v1347
  %v1349 = vpop.f32.mrf.mxu0
  %v1350 = vadd.f32 0.0, %v1349
  %1351 = vdwg.mxu0
  %v1352 = vadd.f32 %v1263, %v1334
  %v1353 = vadd.f32 %v1264, %v1336
  %v1354 = vadd.f32 %v1265, %v1338
  %v1355 = vadd.f32 %v1266, %v1340
  %v1356 = vadd.f32 %v1267, %v1344
  %v1357 = vadd.f32 %v1268, %v1346
  %v1358 = vadd.f32 %v1269, %v1348
  %v1359 = vadd.f32 %v1270, %v1350
  %s1360 = scalar_lea.vmem %s1, 240
  %v1361 = vld [vmem:[%s1360] sm:$0xf]
  %v1362 = vld [vmem:[%s1360 + $0x4] sm:$0xf]
  %v1363 = vld [vmem:[%s1360 + $0x8] sm:$0xf]
  %v1364 = vld [vmem:[%s1360 + $0xc] sm:$0xf]
  %v1369 = vunpack.c.l.b16 %v1361
  %v1370 = vunpack.c.l.b16 %v1362
  %v1371 = vunpack.c.l.b16 %v1363
  %v1372 = vunpack.c.l.b16 %v1364
  %v1373 = vpack.c.b16 %v1370, %v1369
  %v1374 = vpack.c.b16 %v1372, %v1371
  %1375 = vrot.lane.b32.xlu0 %v486, 118
  %v1376 = vpop.permute.xlu0 %1375
  %1377 = vrot.lane.b32.xlu0 %v487, 118
  %v1378 = vpop.permute.xlu0 %1377
  %v1379 = vsel %vm933, %v1376, %v1378
  %v1383 = vsel %vm49, %v1373, 0
  %v1386 = vsel %vm49, %v1374, 0
  %1388 = vmatprep.subr.bf16.mxu0 0
  %1389 = vmatpush1.bf16.msra.mxu0 0
  %1390 = vmatprep.subr.bf16.mxu0 0
  %1391 = vmatpush1.bf16.msra.mxu0 0
  %1392 = vmatprep.subr.bf16.mxu0 0
  %1393 = vmatpush1.bf16.msra.mxu0 0
  %1394 = vmatprep.subr.bf16.mxu0 0
  %1395 = vmatpush1.bf16.msra.mxu0 0
  %1396 = vmatprep.subr.bf16.mxu0 0
  %1397 = vmatpush1.bf16.msra.mxu0 0
  %1398 = vmatprep.subr.bf16.mxu0 0
  %1399 = vmatpush1.bf16.msra.mxu0 0
  %1400 = vmatprep.subr.bf16.mxu0 0
  %1401 = vmatpush1.bf16.msra.mxu0 0
  %1402 = vmatprep.subr.bf16.mxu0 %v1378
  %1403 = vmatpush1.bf16.msra.mxu0 %v1379
  %1404 = vmatprep.subr.bf16.mxu0 0
  %1405 = vmatpush2.bf16.msra.mxu0 0
  %1406 = vmatprep.subr.bf16.mxu0 0
  %1407 = vmatpush2.bf16.msra.mxu0 0
  %1408 = vmatprep.subr.bf16.mxu0 0
  %1409 = vmatpush2.bf16.msra.mxu0 0
  %1410 = vmatprep.subr.bf16.mxu0 0
  %1411 = vmatpush2.bf16.msra.mxu0 0
  %1412 = vmatprep.subr.bf16.mxu0 0
  %1413 = vmatpush2.bf16.msra.mxu0 0
  %1414 = vmatprep.subr.bf16.mxu0 0
  %1415 = vmatpush2.bf16.msra.mxu0 0
  %1416 = vmatprep.subr.bf16.mxu0 0
  %1417 = vmatpush2.bf16.msra.mxu0 0
  %1418 = vmatprep.subr.bf16.mxu0 0
  %1419 = vmatpush2.bf16.msra.mxu0 0
  %1420 = vmatprep.mubr.bf16.mxu0 0
  %1421 = vmatmul.mubr.bf16.gmra.mxu0 %v1383
  %v1422 = vpop.f32.mrf.mxu0
  %v1423 = vadd.f32 0.0, %v1422
  %v1424 = vpop.f32.mrf.mxu0
  %v1425 = vadd.f32 0.0, %v1424
  %v1426 = vpop.f32.mrf.mxu0
  %v1427 = vadd.f32 0.0, %v1426
  %v1428 = vpop.f32.mrf.mxu0
  %v1429 = vadd.f32 0.0, %v1428
  %1430 = vmatprep.mubr.bf16.mxu0 0
  %1431 = vmatmul.mubr.bf16.gmra.mxu0 %v1386
  %v1432 = vpop.f32.mrf.mxu0
  %v1433 = vadd.f32 0.0, %v1432
  %v1434 = vpop.f32.mrf.mxu0
  %v1435 = vadd.f32 0.0, %v1434
  %v1436 = vpop.f32.mrf.mxu0
  %v1437 = vadd.f32 0.0, %v1436
  %v1438 = vpop.f32.mrf.mxu0
  %v1439 = vadd.f32 0.0, %v1438
  %1440 = vdwg.mxu0
  %v1441 = vadd.f32 %v1352, %v1423
  %v1442 = vadd.f32 %v1353, %v1425
  %v1443 = vadd.f32 %v1354, %v1427
  %v1444 = vadd.f32 %v1355, %v1429
  %v1445 = vadd.f32 %v1356, %v1433
  %v1446 = vadd.f32 %v1357, %v1435
  %v1447 = vadd.f32 %v1358, %v1437
  %v1448 = vadd.f32 %v1359, %v1439
  %v1449 = vld [vmem:[%s2] sm:$0x3]
  %v1451 = vlaneseq
  %v1452 = vshrl.u32 %v1451, 7
  %v1453 = vsub.s32 0, %v1452
  %v1454 = vrot.slane %v1449, %v1453
  %v1455 = vlaneseq
  %v1456 = vshrl.u32 %v1455, 7
  %v1457 = vsub.s32 1, %v1456
  %v1458 = vrot.slane %v1449, %v1457
  %v1461 = vmul.f32 %v1441, %v1454
  %v1462 = vmul.f32 %v1442, %v1458
  %v1463 = vmul.f32 %v1443, %v1454
  %v1464 = vmul.f32 %v1444, %v1458
  %v1465 = vmul.f32 %v1445, %v1454
  %v1466 = vmul.f32 %v1446, %v1458
  %v1467 = vmul.f32 %v1447, %v1454
  %v1468 = vmul.f32 %v1448, %v1458
  %vm1469 = vcmask 195584
  %v1470 = vsel %vm1469, %v1462, 0.0
  %v1471 = vadd.f32 %v1461, %v1470
  %1472 = vadd.xlane.f32.xlu0 %v1471
  %v1473 = vpop.xlane.xlu0 %1472
  %v1474 = vsel %vm1469, %v1464, 0.0
  %v1475 = vadd.f32 %v1463, %v1474
  %1476 = vadd.xlane.f32.xlu0 %v1475
  %v1477 = vpop.xlane.xlu0 %1476
  %v1478 = vsel %vm1469, %v1466, 0.0
  %v1479 = vadd.f32 %v1465, %v1478
  %1480 = vadd.xlane.f32.xlu0 %v1479
  %v1481 = vpop.xlane.xlu0 %1480
  %v1482 = vsel %vm1469, %v1468, 0.0
  %v1483 = vadd.f32 %v1467, %v1482
  %1484 = vadd.xlane.f32.xlu0 %v1483
  %v1485 = vpop.xlane.xlu0 %1484
  %v1486 = vmul.f32 %v1473, 0.0078125
  %v1487 = vmul.f32 %v1477, 0.0078125
  %v1488 = vmul.f32 %v1481, 0.0078125
  %v1489 = vmul.f32 %v1485, 0.0078125
  %v1490 = vsub.f32 %v1441, %v1486
  %v1491 = vsub.f32 %v1442, %v1486
  %v1492 = vsub.f32 %v1443, %v1487
  %v1493 = vsub.f32 %v1444, %v1487
  %v1494 = vsub.f32 %v1445, %v1488
  %v1495 = vsub.f32 %v1446, %v1488
  %v1496 = vsub.f32 %v1447, %v1489
  %v1497 = vsub.f32 %v1448, %v1489
  %v1498 = vmul.f32 %v1490, %v1454
  %v1499 = vmul.f32 %v1491, %v1458
  %v1500 = vmul.f32 %v1492, %v1454
  %v1501 = vmul.f32 %v1493, %v1458
  %v1502 = vmul.f32 %v1494, %v1454
  %v1503 = vmul.f32 %v1495, %v1458
  %v1504 = vmul.f32 %v1496, %v1454
  %v1505 = vmul.f32 %v1497, %v1458
  %v1506 = vmul.f32 %v1498, %v1498
  %v1507 = vmul.f32 %v1499, %v1499
  %v1508 = vmul.f32 %v1500, %v1500
  %v1509 = vmul.f32 %v1501, %v1501
  %v1510 = vmul.f32 %v1502, %v1502
  %v1511 = vmul.f32 %v1503, %v1503
  %v1512 = vmul.f32 %v1504, %v1504
  %v1513 = vmul.f32 %v1505, %v1505
  %v1514 = vsel %vm1469, %v1507, 0.0
  %v1515 = vadd.f32 %v1506, %v1514
  %1516 = vadd.xlane.f32.xlu0 %v1515
  %v1517 = vpop.xlane.xlu0 %1516
  %v1518 = vsel %vm1469, %v1509, 0.0
  %v1519 = vadd.f32 %v1508, %v1518
  %1520 = vadd.xlane.f32.xlu0 %v1519
  %v1521 = vpop.xlane.xlu0 %1520
  %v1522 = vsel %vm1469, %v1511, 0.0
  %v1523 = vadd.f32 %v1510, %v1522
  %1524 = vadd.xlane.f32.xlu0 %v1523
  %v1525 = vpop.xlane.xlu0 %1524
  %v1526 = vsel %vm1469, %v1513, 0.0
  %v1527 = vadd.f32 %v1512, %v1526
  %1528 = vadd.xlane.f32.xlu0 %v1527
  %v1529 = vpop.xlane.xlu0 %1528
  %v1530 = vmul.f32 %v1517, 0.0078125
  %v1531 = vmul.f32 %v1521, 0.0078125
  %v1532 = vmul.f32 %v1525, 0.0078125
  %v1533 = vmul.f32 %v1529, 0.0078125
  %v1534 = vadd.f32 %v1530, 1e-05
  %v1535 = vadd.f32 %v1531, 1e-05
  %v1536 = vadd.f32 %v1532, 1e-05
  %v1537 = vadd.f32 %v1533, 1e-05
  %v1538 = vrsqrt.pop %v1534
  %v1539 = vrsqrt.pop %v1535
  %v1540 = vrsqrt.pop %v1536
  %v1541 = vrsqrt.pop %v1537
  %v1542 = vmul.f32 %v1490, %v1538
  %v1543 = vmul.f32 %v1491, %v1538
  %v1544 = vmul.f32 %v1492, %v1539
  %v1545 = vmul.f32 %v1493, %v1539
  %v1546 = vmul.f32 %v1494, %v1540
  %v1547 = vmul.f32 %v1495, %v1540
  %v1548 = vmul.f32 %v1496, %v1541
  %v1549 = vmul.f32 %v1497, %v1541
  %v1550 = vmul.f32 %v1542, 0.2
  %v1551 = vmul.f32 %v1543, 0.2
  %v1552 = vmul.f32 %v1544, 0.2
  %v1553 = vmul.f32 %v1545, 0.2
  %v1554 = vmul.f32 %v1546, 0.2
  %v1555 = vmul.f32 %v1547, 0.2
  %v1556 = vmul.f32 %v1548, 0.2
  %v1557 = vmul.f32 %v1549, 0.2
  %v1558 = vmax.f32 %v1542, %v1550
  %v1559 = vmax.f32 %v1543, %v1551
  %v1560 = vmax.f32 %v1544, %v1552
  %v1561 = vmax.f32 %v1545, %v1553
  %v1562 = vmax.f32 %v1546, %v1554
  %v1563 = vmax.f32 %v1547, %v1555
  %v1564 = vmax.f32 %v1548, %v1556
  %v1565 = vmax.f32 %v1549, %v1557
  %v1566 = vpack.c.bf16 %v1560, %v1558
  %v1567 = vpack.c.bf16 %v1561, %v1559
  %v1568 = vpack.c.bf16 %v1564, %v1562
  %v1569 = vpack.c.bf16 %v1565, %v1563
  %v1574 = vunpack.c.l.b16 %v1566
  %v1575 = vunpack.c.l.b16 %v1567
  %v1576 = vunpack.c.h.b16 %v1566
  %v1577 = vunpack.c.h.b16 %v1567
  %v1578 = vunpack.c.l.b16 %v1568
  %v1579 = vunpack.c.l.b16 %v1569
  %v1580 = vunpack.c.h.b16 %v1568
  %v1581 = vunpack.c.h.b16 %v1569
  %v1582 = vpack.c.b16 %v1575, %v1574
  %v1583 = vpack.c.b16 %v1577, %v1576
  %v1584 = vpack.c.b16 %v1579, %v1578
  %v1585 = vpack.c.b16 %v1581, %v1580
  %vm1590 = vcmask 1043456
  %vm1591 = vcmask 195588
  %vm1592 = vmor %vm1591, %vm1590
  %1593 = vst.msk [vmem:[%s3] sm:$0xff] %vm1592, %v1582
  %1594 = vst.msk [vmem:[%s3 + $0x8] sm:$0xff] %vm1592, %v1583
  %1595 = vst.msk [vmem:[%s3 + $0x10] sm:$0xff] %vm1592, %v1584
  %1596 = vst.msk [vmem:[%s3 + $0x18] sm:$0xff] %vm1592, %v1585
  // Predicated region
  $region14: #{discriminator_forward.6} parent=0 // pred_check
    _
  $region15: #{discriminator_forward.6} parent=0 // pred_check_branch
    %1598 = sbr.rel (0) target = $region17
  $region16: #{discriminator_forward.6} parent=0 // pred_region
    _
  $region17: #{discriminator_forward.6} parent=0 // pred_fallthru
    _
  // Predicated region
  $region18: #{discriminator_forward.6} parent=0 // pred_check
    _
  $region19: #{discriminator_forward.6} parent=0 // pred_check_branch
    %1600 = sbr.rel (0) target = $region21
  $region20: #{discriminator_forward.6} parent=0 // pred_region
    _
  $region21: #{discriminator_forward.6} parent=0 // pred_fallthru
    _

// kernel: discriminator_forward.7
$region0: #{discriminator_forward.7}
  #allocation0 [shape = 'u32[]', space=smem, size = 0x4, offset = 0x4, fixed_abs, tag = 'smem constant byte address 0x4 - core index']
  #allocation1 [shape = 'u32[144,128]{1,0:T(1,128)}', space=vmem, size = 0x12000, scoped, tag = 'internal scratch']
  %s0 = inlined_call_operand.vmem [shape: bf16[4,32,50], index: 0, kind: input, shape index: {}]
  %s1 = inlined_call_operand.vmem [shape: bf16[16,64,32], index: 1, kind: input, shape index: {}]
  %s2 = inlined_call_operand.vmem [shape: f32[1,44], index: 2, kind: input, shape index: {}]
  %s3 = inlined_call_operand.vmem [shape: bf16[64,44], index: 3, kind: output, shape index: {}]
  %s4 = sld [smem:[#allocation0]]
  $region22: #{discriminator_forward.7} parent=0
    _
  %s6 = ssub.s32 1, %s4
  %s7 = scalar_select 0, %s6, %s4
  // Predicated region
  $region2: #{discriminator_forward.7} parent=0 // pred_check
    _
  $region3: #{discriminator_forward.7} parent=0 // pred_check_branch
    %9 = sbr.rel (0) target = $region5
  $region4: #{discriminator_forward.7} parent=0 // pred_region
    _
  $region5: #{discriminator_forward.7} parent=0 // pred_fallthru
    _
  // Predicated region
  $region6: #{discriminator_forward.7} parent=0 // pred_check
    _
  $region7: #{discriminator_forward.7} parent=0 // pred_check_branch
    %11 = sbr.rel (0) target = $region9
  $region8: #{discriminator_forward.7} parent=0 // pred_region
    _
  $region9: #{discriminator_forward.7} parent=0 // pred_fallthru
    _
  // Predicated region
  $region10: #{discriminator_forward.7} parent=0 // pred_check
    _
  $region11: #{discriminator_forward.7} parent=0 // pred_check_branch
    %13 = sbr.rel (0) target = $region13
  $region12: #{discriminator_forward.7} parent=0 // pred_region
    _
  $region13: #{discriminator_forward.7} parent=0 // pred_fallthru
    _
  %v15 = vld [vmem:[%s0] sm:$0xf]
  %v16 = vld [vmem:[%s0 + $0x4] sm:$0xf]
  %v17 = vld [vmem:[%s0 + $0x8] sm:$0xf]
  %v18 = vld [vmem:[%s0 + $0xc] sm:$0xf]
  %v19 = vld [vmem:[%s1] sm:$0xf]
  %v20 = vld [vmem:[%s1 + $0x4] sm:$0xf]
  %v21 = vld [vmem:[%s1 + $0x8] sm:$0xf]
  %v22 = vld [vmem:[%s1 + $0xc] sm:$0xf]
  %v23 = vld [vmem:[%s1 + $0x10] sm:$0xf]
  %v24 = vld [vmem:[%s1 + $0x14] sm:$0xf]
  %v25 = vld [vmem:[%s1 + $0x18] sm:$0xf]
  %v26 = vld [vmem:[%s1 + $0x1c] sm:$0xf]
  %s27 = scalar_lea.vmem %s0, 16
  %v28 = vld [vmem:[%s27] sm:$0xf]
  %v29 = vld [vmem:[%s27 + $0x4] sm:$0xf]
  %v30 = vld [vmem:[%s27 + $0x8] sm:$0xf]
  %v31 = vld [vmem:[%s27 + $0xc] sm:$0xf]
  %s32 = scalar_lea.vmem %s1, 32
  %v33 = vld [vmem:[%s32] sm:$0xf]
  %v34 = vld [vmem:[%s32 + $0x4] sm:$0xf]
  %v35 = vld [vmem:[%s32 + $0x8] sm:$0xf]
  %v36 = vld [vmem:[%s32 + $0xc] sm:$0xf]
  %v37 = vld [vmem:[%s32 + $0x10] sm:$0xf]
  %v38 = vld [vmem:[%s32 + $0x14] sm:$0xf]
  %v39 = vld [vmem:[%s32 + $0x18] sm:$0xf]
  %v40 = vld [vmem:[%s32 + $0x1c] sm:$0xf]
  %v49 = vunpack.c.l.b16 %v33
  %v50 = vunpack.c.l.b16 %v34
  %v51 = vunpack.c.l.b16 %v35
  %v52 = vunpack.c.l.b16 %v36
  %v53 = vunpack.c.l.b16 %v37
  %v54 = vunpack.c.l.b16 %v38
  %v55 = vunpack.c.l.b16 %v39
  %v56 = vunpack.c.l.b16 %v40
  %v57 = vpack.c.b16 %v50, %v49
  %v58 = vpack.c.b16 %v52, %v51
  %v59 = vpack.c.b16 %v54, %v53
  %v60 = vpack.c.b16 %v56, %v55
  %v65 = vunpack.c.l.b16 %v28
  %v66 = vunpack.c.l.b16 %v29
  %v67 = vunpack.c.l.b16 %v30
  %v68 = vunpack.c.l.b16 %v31
  %v69 = vpack.c.b16 %v66, %v65
  %v70 = vpack.c.b16 %v68, %v67
  %vm73 = vcmask 261120
  %v75 = vsel %vm73, %v57, 0
  %v78 = vsel %vm73, %v58, 0
  %v81 = vsel %vm73, %v59, 0
  %v84 = vsel %vm73, %v60, 0
  %86 = vmatprep.subr.bf16.mxu0 0
  %87 = vmatpush1.bf16.msra.mxu0 0
  %88 = vmatprep.subr.bf16.mxu0 0
  %89 = vmatpush1.bf16.msra.mxu0 0
  %90 = vmatprep.subr.bf16.mxu0 0
  %91 = vmatpush1.bf16.msra.mxu0 0
  %92 = vmatprep.subr.bf16.mxu0 0
  %93 = vmatpush1.bf16.msra.mxu0 0
  %94 = vmatprep.subr.bf16.mxu0 0
  %95 = vmatpush1.bf16.msra.mxu0 0
  %96 = vmatprep.subr.bf16.mxu0 0
  %97 = vmatpush1.bf16.msra.mxu0 0
  %98 = vmatprep.subr.bf16.mxu0 0
  %99 = vmatpush1.bf16.msra.mxu0 %v70
  %100 = vmatprep.subr.bf16.mxu0 0
  %101 = vmatpush1.bf16.msra.mxu0 %v69
  %102 = vmatprep.subr.bf16.mxu0 0
  %103 = vmatpush2.bf16.msra.mxu0 0
  %104 = vmatprep.subr.bf16.mxu0 0
  %105 = vmatpush2.bf16.msra.mxu0 0
  %106 = vmatprep.subr.bf16.mxu0 0
  %107 = vmatpush2.bf16.msra.mxu0 0
  %108 = vmatprep.subr.bf16.mxu0 0
  %109 = vmatpush2.bf16.msra.mxu0 0
  %110 = vmatprep.subr.bf16.mxu0 0
  %111 = vmatpush2.bf16.msra.mxu0 0
  %112 = vmatprep.subr.bf16.mxu0 0
  %113 = vmatpush2.bf16.msra.mxu0 0
  %114 = vmatprep.subr.bf16.mxu0 0
  %115 = vmatpush2.bf16.msra.mxu0 0
  %116 = vmatprep.subr.bf16.mxu0 0
  %117 = vmatpush2.bf16.msra.mxu0 0
  %118 = vmatprep.mubr.bf16.mxu0 0
  %119 = vmatmul.mubr.bf16.gmra.mxu0 %v75
  %v120 = vpop.f32.mrf.mxu0
  %v121 = vadd.f32 0.0, %v120
  %v122 = vpop.f32.mrf.mxu0
  %v123 = vpop.f32.mrf.mxu0
  %v124 = vadd.f32 0.0, %v123
  %v125 = vpop.f32.mrf.mxu0
  %126 = vmatprep.mubr.bf16.mxu0 0
  %127 = vmatmul.mubr.bf16.gmra.mxu0 %v78
  %v128 = vpop.f32.mrf.mxu0
  %v129 = vadd.f32 0.0, %v128
  %v130 = vpop.f32.mrf.mxu0
  %v131 = vpop.f32.mrf.mxu0
  %v132 = vadd.f32 0.0, %v131
  %v133 = vpop.f32.mrf.mxu0
  %134 = vmatprep.mubr.bf16.mxu0 0
  %135 = vmatmul.mubr.bf16.gmra.mxu0 %v81
  %v136 = vpop.f32.mrf.mxu0
  %v137 = vadd.f32 0.0, %v136
  %v138 = vpop.f32.mrf.mxu0
  %v139 = vpop.f32.mrf.mxu0
  %v140 = vadd.f32 0.0, %v139
  %v141 = vpop.f32.mrf.mxu0
  %142 = vmatprep.mubr.bf16.mxu0 0
  %143 = vmatmul.mubr.bf16.gmra.mxu0 %v84
  %v144 = vpop.f32.mrf.mxu0
  %v145 = vadd.f32 0.0, %v144
  %v146 = vpop.f32.mrf.mxu0
  %v147 = vpop.f32.mrf.mxu0
  %v148 = vadd.f32 0.0, %v147
  %v149 = vpop.f32.mrf.mxu0
  %150 = vdwg.mxu0
  %v159 = vunpack.c.l.b16 %v19
  %v160 = vunpack.c.l.b16 %v20
  %v161 = vunpack.c.l.b16 %v21
  %v162 = vunpack.c.l.b16 %v22
  %v163 = vunpack.c.l.b16 %v23
  %v164 = vunpack.c.l.b16 %v24
  %v165 = vunpack.c.l.b16 %v25
  %v166 = vunpack.c.l.b16 %v26
  %v167 = vpack.c.b16 %v160, %v159
  %v168 = vpack.c.b16 %v162, %v161
  %v169 = vpack.c.b16 %v164, %v163
  %v170 = vpack.c.b16 %v166, %v165
  %v175 = vunpack.c.l.b16 %v15
  %v176 = vunpack.c.l.b16 %v16
  %v177 = vunpack.c.l.b16 %v17
  %v178 = vunpack.c.l.b16 %v18
  %v179 = vpack.c.b16 %v176, %v175
  %v180 = vpack.c.b16 %v178, %v177
  %v184 = vsel %vm73, %v167, 0
  %v187 = vsel %vm73, %v168, 0
  %v190 = vsel %vm73, %v169, 0
  %v193 = vsel %vm73, %v170, 0
  %195 = vmatprep.subr.bf16.mxu0 0
  %196 = vmatpush1.bf16.msra.mxu0 0
  %197 = vmatprep.subr.bf16.mxu0 0
  %198 = vmatpush1.bf16.msra.mxu0 0
  %199 = vmatprep.subr.bf16.mxu0 0
  %200 = vmatpush1.bf16.msra.mxu0 0
  %201 = vmatprep.subr.bf16.mxu0 0
  %202 = vmatpush1.bf16.msra.mxu0 0
  %203 = vmatprep.subr.bf16.mxu0 0
  %204 = vmatpush1.bf16.msra.mxu0 0
  %205 = vmatprep.subr.bf16.mxu0 0
  %206 = vmatpush1.bf16.msra.mxu0 0
  %207 = vmatprep.subr.bf16.mxu0 0
  %208 = vmatpush1.bf16.msra.mxu0 %v180
  %209 = vmatprep.subr.bf16.mxu0 0
  %210 = vmatpush1.bf16.msra.mxu0 %v179
  %211 = vmatprep.subr.bf16.mxu0 0
  %212 = vmatpush2.bf16.msra.mxu0 0
  %213 = vmatprep.subr.bf16.mxu0 0
  %214 = vmatpush2.bf16.msra.mxu0 0
  %215 = vmatprep.subr.bf16.mxu0 0
  %216 = vmatpush2.bf16.msra.mxu0 0
  %217 = vmatprep.subr.bf16.mxu0 0
  %218 = vmatpush2.bf16.msra.mxu0 0
  %219 = vmatprep.subr.bf16.mxu0 0
  %220 = vmatpush2.bf16.msra.mxu0 0
  %221 = vmatprep.subr.bf16.mxu0 0
  %222 = vmatpush2.bf16.msra.mxu0 0
  %223 = vmatprep.subr.bf16.mxu0 0
  %224 = vmatpush2.bf16.msra.mxu0 0
  %225 = vmatprep.subr.bf16.mxu0 0
  %226 = vmatpush2.bf16.msra.mxu0 0
  %227 = vmatprep.mubr.bf16.mxu0 0
  %228 = vmatmul.mubr.bf16.gmra.mxu0 %v184
  %v229 = vpop.f32.mrf.mxu0
  %v230 = vadd.f32 %v121, %v229
  %v231 = vpop.f32.mrf.mxu0
  %v232 = vpop.f32.mrf.mxu0
  %v233 = vadd.f32 %v124, %v232
  %v234 = vpop.f32.mrf.mxu0
  %235 = vmatprep.mubr.bf16.mxu0 0
  %236 = vmatmul.mubr.bf16.gmra.mxu0 %v187
  %v237 = vpop.f32.mrf.mxu0
  %v238 = vadd.f32 %v129, %v237
  %v239 = vpop.f32.mrf.mxu0
  %v240 = vpop.f32.mrf.mxu0
  %v241 = vadd.f32 %v132, %v240
  %v242 = vpop.f32.mrf.mxu0
  %243 = vmatprep.mubr.bf16.mxu0 0
  %244 = vmatmul.mubr.bf16.gmra.mxu0 %v190
  %v245 = vpop.f32.mrf.mxu0
  %v246 = vadd.f32 %v137, %v245
  %v247 = vpop.f32.mrf.mxu0
  %v248 = vpop.f32.mrf.mxu0
  %v249 = vadd.f32 %v140, %v248
  %v250 = vpop.f32.mrf.mxu0
  %251 = vmatprep.mubr.bf16.mxu0 0
  %252 = vmatmul.mubr.bf16.gmra.mxu0 %v193
  %v253 = vpop.f32.mrf.mxu0
  %v254 = vadd.f32 %v145, %v253
  %v255 = vpop.f32.mrf.mxu0
  %v256 = vpop.f32.mrf.mxu0
  %v257 = vadd.f32 %v148, %v256
  %v258 = vpop.f32.mrf.mxu0
  %259 = vdwg.mxu0
  %s260 = scalar_lea.vmem %s1, 64
  %v261 = vld [vmem:[%s260] sm:$0xf]
  %v262 = vld [vmem:[%s260 + $0x4] sm:$0xf]
  %v263 = vld [vmem:[%s260 + $0x8] sm:$0xf]
  %v264 = vld [vmem:[%s260 + $0xc] sm:$0xf]
  %v265 = vld [vmem:[%s260 + $0x10] sm:$0xf]
  %v266 = vld [vmem:[%s260 + $0x14] sm:$0xf]
  %v267 = vld [vmem:[%s260 + $0x18] sm:$0xf]
  %v268 = vld [vmem:[%s260 + $0x1c] sm:$0xf]
  %v277 = vunpack.c.l.b16 %v261
  %v278 = vunpack.c.l.b16 %v262
  %v279 = vunpack.c.l.b16 %v263
  %v280 = vunpack.c.l.b16 %v264
  %v281 = vunpack.c.l.b16 %v265
  %v282 = vunpack.c.l.b16 %v266
  %v283 = vunpack.c.l.b16 %v267
  %v284 = vunpack.c.l.b16 %v268
  %v285 = vpack.c.b16 %v278, %v277
  %v286 = vpack.c.b16 %v280, %v279
  %v287 = vpack.c.b16 %v282, %v281
  %v288 = vpack.c.b16 %v284, %v283
  %289 = vrot.lane.b32.xlu0 %v179, 127
  %v290 = vpop.permute.xlu0 %289
  %291 = vrot.lane.b32.xlu0 %v180, 127
  %v292 = vpop.permute.xlu0 %291
  %v296 = vsel %vm73, %v285, 0
  %v299 = vsel %vm73, %v286, 0
  %v302 = vsel %vm73, %v287, 0
  %v305 = vsel %vm73, %v288, 0
  %307 = vmatprep.subr.bf16.mxu0 0
  %308 = vmatpush1.bf16.msra.mxu0 0
  %309 = vmatprep.subr.bf16.mxu0 0
  %310 = vmatpush1.bf16.msra.mxu0 0
  %311 = vmatprep.subr.bf16.mxu0 0
  %312 = vmatpush1.bf16.msra.mxu0 0
  %313 = vmatprep.subr.bf16.mxu0 0
  %314 = vmatpush1.bf16.msra.mxu0 0
  %315 = vmatprep.subr.bf16.mxu0 0
  %316 = vmatpush1.bf16.msra.mxu0 0
  %317 = vmatprep.subr.bf16.mxu0 0
  %318 = vmatpush1.bf16.msra.mxu0 0
  %319 = vmatprep.subr.bf16.mxu0 0
  %320 = vmatpush1.bf16.msra.mxu0 %v292
  %321 = vmatprep.subr.bf16.mxu0 0
  %322 = vmatpush1.bf16.msra.mxu0 %v290
  %323 = vmatprep.subr.bf16.mxu0 0
  %324 = vmatpush2.bf16.msra.mxu0 0
  %325 = vmatprep.subr.bf16.mxu0 0
  %326 = vmatpush2.bf16.msra.mxu0 0
  %327 = vmatprep.subr.bf16.mxu0 0
  %328 = vmatpush2.bf16.msra.mxu0 0
  %329 = vmatprep.subr.bf16.mxu0 0
  %330 = vmatpush2.bf16.msra.mxu0 0
  %331 = vmatprep.subr.bf16.mxu0 0
  %332 = vmatpush2.bf16.msra.mxu0 0
  %333 = vmatprep.subr.bf16.mxu0 0
  %334 = vmatpush2.bf16.msra.mxu0 0
  %335 = vmatprep.subr.bf16.mxu0 0
  %336 = vmatpush2.bf16.msra.mxu0 0
  %337 = vmatprep.subr.bf16.mxu0 0
  %338 = vmatpush2.bf16.msra.mxu0 0
  %339 = vmatprep.mubr.bf16.mxu0 0
  %340 = vmatmul.mubr.bf16.gmra.mxu0 %v296
  %v341 = vpop.f32.mrf.mxu0
  %v342 = vadd.f32 0.0, %v341
  %v343 = vpop.f32.mrf.mxu0
  %v344 = vpop.f32.mrf.mxu0
  %v345 = vadd.f32 0.0, %v344
  %v346 = vpop.f32.mrf.mxu0
  %347 = vmatprep.mubr.bf16.mxu0 0
  %348 = vmatmul.mubr.bf16.gmra.mxu0 %v299
  %v349 = vpop.f32.mrf.mxu0
  %v350 = vadd.f32 0.0, %v349
  %v351 = vpop.f32.mrf.mxu0
  %v352 = vpop.f32.mrf.mxu0
  %v353 = vadd.f32 0.0, %v352
  %v354 = vpop.f32.mrf.mxu0
  %355 = vmatprep.mubr.bf16.mxu0 0
  %356 = vmatmul.mubr.bf16.gmra.mxu0 %v302
  %v357 = vpop.f32.mrf.mxu0
  %v358 = vadd.f32 0.0, %v357
  %v359 = vpop.f32.mrf.mxu0
  %v360 = vpop.f32.mrf.mxu0
  %v361 = vadd.f32 0.0, %v360
  %v362 = vpop.f32.mrf.mxu0
  %363 = vmatprep.mubr.bf16.mxu0 0
  %364 = vmatmul.mubr.bf16.gmra.mxu0 %v305
  %v365 = vpop.f32.mrf.mxu0
  %v366 = vadd.f32 0.0, %v365
  %v367 = vpop.f32.mrf.mxu0
  %v368 = vpop.f32.mrf.mxu0
  %v369 = vadd.f32 0.0, %v368
  %v370 = vpop.f32.mrf.mxu0
  %371 = vdwg.mxu0
  %v372 = vadd.f32 %v230, %v342
  %v373 = vadd.f32 %v233, %v345
  %v374 = vadd.f32 %v238, %v350
  %v375 = vadd.f32 %v241, %v353
  %v376 = vadd.f32 %v246, %v358
  %v377 = vadd.f32 %v249, %v361
  %v378 = vadd.f32 %v254, %v366
  %v379 = vadd.f32 %v257, %v369
  %s380 = scalar_lea.vmem %s1, 96
  %v381 = vld [vmem:[%s380] sm:$0xf]
  %v382 = vld [vmem:[%s380 + $0x4] sm:$0xf]
  %v383 = vld [vmem:[%s380 + $0x8] sm:$0xf]
  %v384 = vld [vmem:[%s380 + $0xc] sm:$0xf]
  %v385 = vld [vmem:[%s380 + $0x10] sm:$0xf]
  %v386 = vld [vmem:[%s380 + $0x14] sm:$0xf]
  %v387 = vld [vmem:[%s380 + $0x18] sm:$0xf]
  %v388 = vld [vmem:[%s380 + $0x1c] sm:$0xf]
  %v397 = vunpack.c.l.b16 %v381
  %v398 = vunpack.c.l.b16 %v382
  %v399 = vunpack.c.l.b16 %v383
  %v400 = vunpack.c.l.b16 %v384
  %v401 = vunpack.c.l.b16 %v385
  %v402 = vunpack.c.l.b16 %v386
  %v403 = vunpack.c.l.b16 %v387
  %v404 = vunpack.c.l.b16 %v388
  %v405 = vpack.c.b16 %v398, %v397
  %v406 = vpack.c.b16 %v400, %v399
  %v407 = vpack.c.b16 %v402, %v401
  %v408 = vpack.c.b16 %v404, %v403
  %409 = vrot.lane.b32.xlu0 %v69, 127
  %v410 = vpop.permute.xlu0 %409
  %411 = vrot.lane.b32.xlu0 %v70, 127
  %v412 = vpop.permute.xlu0 %411
  %v416 = vsel %vm73, %v405, 0
  %v419 = vsel %vm73, %v406, 0
  %v422 = vsel %vm73, %v407, 0
  %v425 = vsel %vm73, %v408, 0
  %427 = vmatprep.subr.bf16.mxu0 0
  %428 = vmatpush1.bf16.msra.mxu0 0
  %429 = vmatprep.subr.bf16.mxu0 0
  %430 = vmatpush1.bf16.msra.mxu0 0
  %431 = vmatprep.subr.bf16.mxu0 0
  %432 = vmatpush1.bf16.msra.mxu0 0
  %433 = vmatprep.subr.bf16.mxu0 0
  %434 = vmatpush1.bf16.msra.mxu0 0
  %435 = vmatprep.subr.bf16.mxu0 0
  %436 = vmatpush1.bf16.msra.mxu0 0
  %437 = vmatprep.subr.bf16.mxu0 0
  %438 = vmatpush1.bf16.msra.mxu0 0
  %439 = vmatprep.subr.bf16.mxu0 0
  %440 = vmatpush1.bf16.msra.mxu0 %v412
  %441 = vmatprep.subr.bf16.mxu0 0
  %442 = vmatpush1.bf16.msra.mxu0 %v410
  %443 = vmatprep.subr.bf16.mxu0 0
  %444 = vmatpush2.bf16.msra.mxu0 0
  %445 = vmatprep.subr.bf16.mxu0 0
  %446 = vmatpush2.bf16.msra.mxu0 0
  %447 = vmatprep.subr.bf16.mxu0 0
  %448 = vmatpush2.bf16.msra.mxu0 0
  %449 = vmatprep.subr.bf16.mxu0 0
  %450 = vmatpush2.bf16.msra.mxu0 0
  %451 = vmatprep.subr.bf16.mxu0 0
  %452 = vmatpush2.bf16.msra.mxu0 0
  %453 = vmatprep.subr.bf16.mxu0 0
  %454 = vmatpush2.bf16.msra.mxu0 0
  %455 = vmatprep.subr.bf16.mxu0 0
  %456 = vmatpush2.bf16.msra.mxu0 0
  %457 = vmatprep.subr.bf16.mxu0 0
  %458 = vmatpush2.bf16.msra.mxu0 0
  %459 = vmatprep.mubr.bf16.mxu0 0
  %460 = vmatmul.mubr.bf16.gmra.mxu0 %v416
  %v461 = vpop.f32.mrf.mxu0
  %v462 = vadd.f32 0.0, %v461
  %v463 = vpop.f32.mrf.mxu0
  %v464 = vpop.f32.mrf.mxu0
  %v465 = vadd.f32 0.0, %v464
  %v466 = vpop.f32.mrf.mxu0
  %467 = vmatprep.mubr.bf16.mxu0 0
  %468 = vmatmul.mubr.bf16.gmra.mxu0 %v419
  %v469 = vpop.f32.mrf.mxu0
  %v470 = vadd.f32 0.0, %v469
  %v471 = vpop.f32.mrf.mxu0
  %v472 = vpop.f32.mrf.mxu0
  %v473 = vadd.f32 0.0, %v472
  %v474 = vpop.f32.mrf.mxu0
  %475 = vmatprep.mubr.bf16.mxu0 0
  %476 = vmatmul.mubr.bf16.gmra.mxu0 %v422
  %v477 = vpop.f32.mrf.mxu0
  %v478 = vadd.f32 0.0, %v477
  %v479 = vpop.f32.mrf.mxu0
  %v480 = vpop.f32.mrf.mxu0
  %v481 = vadd.f32 0.0, %v480
  %v482 = vpop.f32.mrf.mxu0
  %483 = vmatprep.mubr.bf16.mxu0 0
  %484 = vmatmul.mubr.bf16.gmra.mxu0 %v425
  %v485 = vpop.f32.mrf.mxu0
  %v486 = vadd.f32 0.0, %v485
  %v487 = vpop.f32.mrf.mxu0
  %v488 = vpop.f32.mrf.mxu0
  %v489 = vadd.f32 0.0, %v488
  %v490 = vpop.f32.mrf.mxu0
  %491 = vdwg.mxu0
  %v492 = vadd.f32 %v372, %v462
  %v493 = vadd.f32 %v373, %v465
  %v494 = vadd.f32 %v374, %v470
  %v495 = vadd.f32 %v375, %v473
  %v496 = vadd.f32 %v376, %v478
  %v497 = vadd.f32 %v377, %v481
  %v498 = vadd.f32 %v378, %v486
  %v499 = vadd.f32 %v379, %v489
  %s500 = scalar_lea.vmem %s0, 32
  %v501 = vld [vmem:[%s500] sm:$0xf]
  %v502 = vld [vmem:[%s500 + $0x4] sm:$0xf]
  %v503 = vld [vmem:[%s500 + $0x8] sm:$0xf]
  %v504 = vld [vmem:[%s500 + $0xc] sm:$0xf]
  %s505 = scalar_lea.vmem %s1, 128
  %v506 = vld [vmem:[%s505] sm:$0xf]
  %v507 = vld [vmem:[%s505 + $0x4] sm:$0xf]
  %v508 = vld [vmem:[%s505 + $0x8] sm:$0xf]
  %v509 = vld [vmem:[%s505 + $0xc] sm:$0xf]
  %v510 = vld [vmem:[%s505 + $0x10] sm:$0xf]
  %v511 = vld [vmem:[%s505 + $0x14] sm:$0xf]
  %v512 = vld [vmem:[%s505 + $0x18] sm:$0xf]
  %v513 = vld [vmem:[%s505 + $0x1c] sm:$0xf]
  %v522 = vunpack.c.l.b16 %v506
  %v523 = vunpack.c.l.b16 %v507
  %v524 = vunpack.c.l.b16 %v508
  %v525 = vunpack.c.l.b16 %v509
  %v526 = vunpack.c.l.b16 %v510
  %v527 = vunpack.c.l.b16 %v511
  %v528 = vunpack.c.l.b16 %v512
  %v529 = vunpack.c.l.b16 %v513
  %v530 = vpack.c.b16 %v523, %v522
  %v531 = vpack.c.b16 %v525, %v524
  %v532 = vpack.c.b16 %v527, %v526
  %v533 = vpack.c.b16 %v529, %v528
  %v538 = vunpack.c.l.b16 %v501
  %v539 = vunpack.c.l.b16 %v502
  %v540 = vunpack.c.l.b16 %v503
  %v541 = vunpack.c.l.b16 %v504
  %v542 = vpack.c.b16 %v539, %v538
  %v543 = vpack.c.b16 %v541, %v540
  %v547 = vsel %vm73, %v530, 0
  %v550 = vsel %vm73, %v531, 0
  %v553 = vsel %vm73, %v532, 0
  %v556 = vsel %vm73, %v533, 0
  %558 = vmatprep.subr.bf16.mxu0 0
  %559 = vmatpush1.bf16.msra.mxu0 0
  %560 = vmatprep.subr.bf16.mxu0 0
  %561 = vmatpush1.bf16.msra.mxu0 0
  %562 = vmatprep.subr.bf16.mxu0 0
  %563 = vmatpush1.bf16.msra.mxu0 0
  %564 = vmatprep.subr.bf16.mxu0 0
  %565 = vmatpush1.bf16.msra.mxu0 0
  %566 = vmatprep.subr.bf16.mxu0 0
  %567 = vmatpush1.bf16.msra.mxu0 0
  %568 = vmatprep.subr.bf16.mxu0 0
  %569 = vmatpush1.bf16.msra.mxu0 0
  %570 = vmatprep.subr.bf16.mxu0 0
  %571 = vmatpush1.bf16.msra.mxu0 %v543
  %572 = vmatprep.subr.bf16.mxu0 0
  %573 = vmatpush1.bf16.msra.mxu0 %v542
  %574 = vmatprep.subr.bf16.mxu0 0
  %575 = vmatpush2.bf16.msra.mxu0 0
  %576 = vmatprep.subr.bf16.mxu0 0
  %577 = vmatpush2.bf16.msra.mxu0 0
  %578 = vmatprep.subr.bf16.mxu0 0
  %579 = vmatpush2.bf16.msra.mxu0 0
  %580 = vmatprep.subr.bf16.mxu0 0
  %581 = vmatpush2.bf16.msra.mxu0 0
  %582 = vmatprep.subr.bf16.mxu0 0
  %583 = vmatpush2.bf16.msra.mxu0 0
  %584 = vmatprep.subr.bf16.mxu0 0
  %585 = vmatpush2.bf16.msra.mxu0 0
  %586 = vmatprep.subr.bf16.mxu0 0
  %587 = vmatpush2.bf16.msra.mxu0 0
  %588 = vmatprep.subr.bf16.mxu0 0
  %589 = vmatpush2.bf16.msra.mxu0 0
  %590 = vmatprep.mubr.bf16.mxu0 0
  %591 = vmatmul.mubr.bf16.gmra.mxu0 %v547
  %v592 = vpop.f32.mrf.mxu0
  %v593 = vadd.f32 0.0, %v592
  %v594 = vpop.f32.mrf.mxu0
  %v595 = vpop.f32.mrf.mxu0
  %v596 = vadd.f32 0.0, %v595
  %v597 = vpop.f32.mrf.mxu0
  %598 = vmatprep.mubr.bf16.mxu0 0
  %599 = vmatmul.mubr.bf16.gmra.mxu0 %v550
  %v600 = vpop.f32.mrf.mxu0
  %v601 = vadd.f32 0.0, %v600
  %v602 = vpop.f32.mrf.mxu0
  %v603 = vpop.f32.mrf.mxu0
  %v604 = vadd.f32 0.0, %v603
  %v605 = vpop.f32.mrf.mxu0
  %606 = vmatprep.mubr.bf16.mxu0 0
  %607 = vmatmul.mubr.bf16.gmra.mxu0 %v553
  %v608 = vpop.f32.mrf.mxu0
  %v609 = vadd.f32 0.0, %v608
  %v610 = vpop.f32.mrf.mxu0
  %v611 = vpop.f32.mrf.mxu0
  %v612 = vadd.f32 0.0, %v611
  %v613 = vpop.f32.mrf.mxu0
  %614 = vmatprep.mubr.bf16.mxu0 0
  %615 = vmatmul.mubr.bf16.gmra.mxu0 %v556
  %v616 = vpop.f32.mrf.mxu0
  %v617 = vadd.f32 0.0, %v616
  %v618 = vpop.f32.mrf.mxu0
  %v619 = vpop.f32.mrf.mxu0
  %v620 = vadd.f32 0.0, %v619
  %v621 = vpop.f32.mrf.mxu0
  %622 = vdwg.mxu0
  %v623 = vadd.f32 %v492, %v593
  %v624 = vadd.f32 %v493, %v596
  %v625 = vadd.f32 %v494, %v601
  %v626 = vadd.f32 %v495, %v604
  %v627 = vadd.f32 %v496, %v609
  %v628 = vadd.f32 %v497, %v612
  %v629 = vadd.f32 %v498, %v617
  %v630 = vadd.f32 %v499, %v620
  %s631 = scalar_lea.vmem %s0, 48
  %v632 = vld [vmem:[%s631] sm:$0xf]
  %v633 = vld [vmem:[%s631 + $0x4] sm:$0xf]
  %v634 = vld [vmem:[%s631 + $0x8] sm:$0xf]
  %v635 = vld [vmem:[%s631 + $0xc] sm:$0xf]
  %s636 = scalar_lea.vmem %s1, 160
  %v637 = vld [vmem:[%s636] sm:$0xf]
  %v638 = vld [vmem:[%s636 + $0x4] sm:$0xf]
  %v639 = vld [vmem:[%s636 + $0x8] sm:$0xf]
  %v640 = vld [vmem:[%s636 + $0xc] sm:$0xf]
  %v641 = vld [vmem:[%s636 + $0x10] sm:$0xf]
  %v642 = vld [vmem:[%s636 + $0x14] sm:$0xf]
  %v643 = vld [vmem:[%s636 + $0x18] sm:$0xf]
  %v644 = vld [vmem:[%s636 + $0x1c] sm:$0xf]
  %v653 = vunpack.c.l.b16 %v637
  %v654 = vunpack.c.l.b16 %v638
  %v655 = vunpack.c.l.b16 %v639
  %v656 = vunpack.c.l.b16 %v640
  %v657 = vunpack.c.l.b16 %v641
  %v658 = vunpack.c.l.b16 %v642
  %v659 = vunpack.c.l.b16 %v643
  %v660 = vunpack.c.l.b16 %v644
  %v661 = vpack.c.b16 %v654, %v653
  %v662 = vpack.c.b16 %v656, %v655
  %v663 = vpack.c.b16 %v658, %v657
  %v664 = vpack.c.b16 %v660, %v659
  %v669 = vunpack.c.l.b16 %v632
  %v670 = vunpack.c.l.b16 %v633
  %v671 = vunpack.c.l.b16 %v634
  %v672 = vunpack.c.l.b16 %v635
  %v673 = vpack.c.b16 %v670, %v669
  %v674 = vpack.c.b16 %v672, %v671
  %v678 = vsel %vm73, %v661, 0
  %v681 = vsel %vm73, %v662, 0
  %v684 = vsel %vm73, %v663, 0
  %v687 = vsel %vm73, %v664, 0
  %689 = vmatprep.subr.bf16.mxu0 0
  %690 = vmatpush1.bf16.msra.mxu0 0
  %691 = vmatprep.subr.bf16.mxu0 0
  %692 = vmatpush1.bf16.msra.mxu0 0
  %693 = vmatprep.subr.bf16.mxu0 0
  %694 = vmatpush1.bf16.msra.mxu0 0
  %695 = vmatprep.subr.bf16.mxu0 0
  %696 = vmatpush1.bf16.msra.mxu0 0
  %697 = vmatprep.subr.bf16.mxu0 0
  %698 = vmatpush1.bf16.msra.mxu0 0
  %699 = vmatprep.subr.bf16.mxu0 0
  %700 = vmatpush1.bf16.msra.mxu0 0
  %701 = vmatprep.subr.bf16.mxu0 0
  %702 = vmatpush1.bf16.msra.mxu0 %v674
  %703 = vmatprep.subr.bf16.mxu0 0
  %704 = vmatpush1.bf16.msra.mxu0 %v673
  %705 = vmatprep.subr.bf16.mxu0 0
  %706 = vmatpush2.bf16.msra.mxu0 0
  %707 = vmatprep.subr.bf16.mxu0 0
  %708 = vmatpush2.bf16.msra.mxu0 0
  %709 = vmatprep.subr.bf16.mxu0 0
  %710 = vmatpush2.bf16.msra.mxu0 0
  %711 = vmatprep.subr.bf16.mxu0 0
  %712 = vmatpush2.bf16.msra.mxu0 0
  %713 = vmatprep.subr.bf16.mxu0 0
  %714 = vmatpush2.bf16.msra.mxu0 0
  %715 = vmatprep.subr.bf16.mxu0 0
  %716 = vmatpush2.bf16.msra.mxu0 0
  %717 = vmatprep.subr.bf16.mxu0 0
  %718 = vmatpush2.bf16.msra.mxu0 0
  %719 = vmatprep.subr.bf16.mxu0 0
  %720 = vmatpush2.bf16.msra.mxu0 0
  %721 = vmatprep.mubr.bf16.mxu0 0
  %722 = vmatmul.mubr.bf16.gmra.mxu0 %v678
  %v723 = vpop.f32.mrf.mxu0
  %v724 = vadd.f32 0.0, %v723
  %v725 = vpop.f32.mrf.mxu0
  %v726 = vpop.f32.mrf.mxu0
  %v727 = vadd.f32 0.0, %v726
  %v728 = vpop.f32.mrf.mxu0
  %729 = vmatprep.mubr.bf16.mxu0 0
  %730 = vmatmul.mubr.bf16.gmra.mxu0 %v681
  %v731 = vpop.f32.mrf.mxu0
  %v732 = vadd.f32 0.0, %v731
  %v733 = vpop.f32.mrf.mxu0
  %v734 = vpop.f32.mrf.mxu0
  %v735 = vadd.f32 0.0, %v734
  %v736 = vpop.f32.mrf.mxu0
  %737 = vmatprep.mubr.bf16.mxu0 0
  %738 = vmatmul.mubr.bf16.gmra.mxu0 %v684
  %v739 = vpop.f32.mrf.mxu0
  %v740 = vadd.f32 0.0, %v739
  %v741 = vpop.f32.mrf.mxu0
  %v742 = vpop.f32.mrf.mxu0
  %v743 = vadd.f32 0.0, %v742
  %v744 = vpop.f32.mrf.mxu0
  %745 = vmatprep.mubr.bf16.mxu0 0
  %746 = vmatmul.mubr.bf16.gmra.mxu0 %v687
  %v747 = vpop.f32.mrf.mxu0
  %v748 = vadd.f32 0.0, %v747
  %v749 = vpop.f32.mrf.mxu0
  %v750 = vpop.f32.mrf.mxu0
  %v751 = vadd.f32 0.0, %v750
  %v752 = vpop.f32.mrf.mxu0
  %753 = vdwg.mxu0
  %v754 = vadd.f32 %v623, %v724
  %v755 = vadd.f32 %v624, %v727
  %v756 = vadd.f32 %v625, %v732
  %v757 = vadd.f32 %v626, %v735
  %v758 = vadd.f32 %v627, %v740
  %v759 = vadd.f32 %v628, %v743
  %v760 = vadd.f32 %v629, %v748
  %v761 = vadd.f32 %v630, %v751
  %s762 = scalar_lea.vmem %s1, 192
  %v763 = vld [vmem:[%s762] sm:$0xf]
  %v764 = vld [vmem:[%s762 + $0x4] sm:$0xf]
  %v765 = vld [vmem:[%s762 + $0x8] sm:$0xf]
  %v766 = vld [vmem:[%s762 + $0xc] sm:$0xf]
  %v767 = vld [vmem:[%s762 + $0x10] sm:$0xf]
  %v768 = vld [vmem:[%s762 + $0x14] sm:$0xf]
  %v769 = vld [vmem:[%s762 + $0x18] sm:$0xf]
  %v770 = vld [vmem:[%s762 + $0x1c] sm:$0xf]
  %v779 = vunpack.c.l.b16 %v763
  %v780 = vunpack.c.l.b16 %v764
  %v781 = vunpack.c.l.b16 %v765
  %v782 = vunpack.c.l.b16 %v766
  %v783 = vunpack.c.l.b16 %v767
  %v784 = vunpack.c.l.b16 %v768
  %v785 = vunpack.c.l.b16 %v769
  %v786 = vunpack.c.l.b16 %v770
  %v787 = vpack.c.b16 %v780, %v779
  %v788 = vpack.c.b16 %v782, %v781
  %v789 = vpack.c.b16 %v784, %v783
  %v790 = vpack.c.b16 %v786, %v785
  %791 = vrot.lane.b32.xlu0 %v542, 127
  %v792 = vpop.permute.xlu0 %791
  %793 = vrot.lane.b32.xlu0 %v543, 127
  %v794 = vpop.permute.xlu0 %793
  %v798 = vsel %vm73, %v787, 0
  %v801 = vsel %vm73, %v788, 0
  %v804 = vsel %vm73, %v789, 0
  %v807 = vsel %vm73, %v790, 0
  %809 = vmatprep.subr.bf16.mxu0 0
  %810 = vmatpush1.bf16.msra.mxu0 0
  %811 = vmatprep.subr.bf16.mxu0 0
  %812 = vmatpush1.bf16.msra.mxu0 0
  %813 = vmatprep.subr.bf16.mxu0 0
  %814 = vmatpush1.bf16.msra.mxu0 0
  %815 = vmatprep.subr.bf16.mxu0 0
  %816 = vmatpush1.bf16.msra.mxu0 0
  %817 = vmatprep.subr.bf16.mxu0 0
  %818 = vmatpush1.bf16.msra.mxu0 0
  %819 = vmatprep.subr.bf16.mxu0 0
  %820 = vmatpush1.bf16.msra.mxu0 0
  %821 = vmatprep.subr.bf16.mxu0 0
  %822 = vmatpush1.bf16.msra.mxu0 %v794
  %823 = vmatprep.subr.bf16.mxu0 0
  %824 = vmatpush1.bf16.msra.mxu0 %v792
  %825 = vmatprep.subr.bf16.mxu0 0
  %826 = vmatpush2.bf16.msra.mxu0 0
  %827 = vmatprep.subr.bf16.mxu0 0
  %828 = vmatpush2.bf16.msra.mxu0 0
  %829 = vmatprep.subr.bf16.mxu0 0
  %830 = vmatpush2.bf16.msra.mxu0 0
  %831 = vmatprep.subr.bf16.mxu0 0
  %832 = vmatpush2.bf16.msra.mxu0 0
  %833 = vmatprep.subr.bf16.mxu0 0
  %834 = vmatpush2.bf16.msra.mxu0 0
  %835 = vmatprep.subr.bf16.mxu0 0
  %836 = vmatpush2.bf16.msra.mxu0 0
  %837 = vmatprep.subr.bf16.mxu0 0
  %838 = vmatpush2.bf16.msra.mxu0 0
  %839 = vmatprep.subr.bf16.mxu0 0
  %840 = vmatpush2.bf16.msra.mxu0 0
  %841 = vmatprep.mubr.bf16.mxu0 0
  %842 = vmatmul.mubr.bf16.gmra.mxu0 %v798
  %v843 = vpop.f32.mrf.mxu0
  %v844 = vadd.f32 0.0, %v843
  %v845 = vpop.f32.mrf.mxu0
  %v846 = vpop.f32.mrf.mxu0
  %v847 = vadd.f32 0.0, %v846
  %v848 = vpop.f32.mrf.mxu0
  %849 = vmatprep.mubr.bf16.mxu0 0
  %850 = vmatmul.mubr.bf16.gmra.mxu0 %v801
  %v851 = vpop.f32.mrf.mxu0
  %v852 = vadd.f32 0.0, %v851
  %v853 = vpop.f32.mrf.mxu0
  %v854 = vpop.f32.mrf.mxu0
  %v855 = vadd.f32 0.0, %v854
  %v856 = vpop.f32.mrf.mxu0
  %857 = vmatprep.mubr.bf16.mxu0 0
  %858 = vmatmul.mubr.bf16.gmra.mxu0 %v804
  %v859 = vpop.f32.mrf.mxu0
  %v860 = vadd.f32 0.0, %v859
  %v861 = vpop.f32.mrf.mxu0
  %v862 = vpop.f32.mrf.mxu0
  %v863 = vadd.f32 0.0, %v862
  %v864 = vpop.f32.mrf.mxu0
  %865 = vmatprep.mubr.bf16.mxu0 0
  %866 = vmatmul.mubr.bf16.gmra.mxu0 %v807
  %v867 = vpop.f32.mrf.mxu0
  %v868 = vadd.f32 0.0, %v867
  %v869 = vpop.f32.mrf.mxu0
  %v870 = vpop.f32.mrf.mxu0
  %v871 = vadd.f32 0.0, %v870
  %v872 = vpop.f32.mrf.mxu0
  %873 = vdwg.mxu0
  %v874 = vadd.f32 %v754, %v844
  %v875 = vadd.f32 %v755, %v847
  %v876 = vadd.f32 %v756, %v852
  %v877 = vadd.f32 %v757, %v855
  %v878 = vadd.f32 %v758, %v860
  %v879 = vadd.f32 %v759, %v863
  %v880 = vadd.f32 %v760, %v868
  %v881 = vadd.f32 %v761, %v871
  %s882 = scalar_lea.vmem %s1, 224
  %v883 = vld [vmem:[%s882] sm:$0xf]
  %v884 = vld [vmem:[%s882 + $0x4] sm:$0xf]
  %v885 = vld [vmem:[%s882 + $0x8] sm:$0xf]
  %v886 = vld [vmem:[%s882 + $0xc] sm:$0xf]
  %v887 = vld [vmem:[%s882 + $0x10] sm:$0xf]
  %v888 = vld [vmem:[%s882 + $0x14] sm:$0xf]
  %v889 = vld [vmem:[%s882 + $0x18] sm:$0xf]
  %v890 = vld [vmem:[%s882 + $0x1c] sm:$0xf]
  %v899 = vunpack.c.l.b16 %v883
  %v900 = vunpack.c.l.b16 %v884
  %v901 = vunpack.c.l.b16 %v885
  %v902 = vunpack.c.l.b16 %v886
  %v903 = vunpack.c.l.b16 %v887
  %v904 = vunpack.c.l.b16 %v888
  %v905 = vunpack.c.l.b16 %v889
  %v906 = vunpack.c.l.b16 %v890
  %v907 = vpack.c.b16 %v900, %v899
  %v908 = vpack.c.b16 %v902, %v901
  %v909 = vpack.c.b16 %v904, %v903
  %v910 = vpack.c.b16 %v906, %v905
  %911 = vrot.lane.b32.xlu0 %v673, 127
  %v912 = vpop.permute.xlu0 %911
  %913 = vrot.lane.b32.xlu0 %v674, 127
  %v914 = vpop.permute.xlu0 %913
  %v918 = vsel %vm73, %v907, 0
  %v921 = vsel %vm73, %v908, 0
  %v924 = vsel %vm73, %v909, 0
  %v927 = vsel %vm73, %v910, 0
  %929 = vmatprep.subr.bf16.mxu0 0
  %930 = vmatpush1.bf16.msra.mxu0 0
  %931 = vmatprep.subr.bf16.mxu0 0
  %932 = vmatpush1.bf16.msra.mxu0 0
  %933 = vmatprep.subr.bf16.mxu0 0
  %934 = vmatpush1.bf16.msra.mxu0 0
  %935 = vmatprep.subr.bf16.mxu0 0
  %936 = vmatpush1.bf16.msra.mxu0 0
  %937 = vmatprep.subr.bf16.mxu0 0
  %938 = vmatpush1.bf16.msra.mxu0 0
  %939 = vmatprep.subr.bf16.mxu0 0
  %940 = vmatpush1.bf16.msra.mxu0 0
  %941 = vmatprep.subr.bf16.mxu0 0
  %942 = vmatpush1.bf16.msra.mxu0 %v914
  %943 = vmatprep.subr.bf16.mxu0 0
  %944 = vmatpush1.bf16.msra.mxu0 %v912
  %945 = vmatprep.subr.bf16.mxu0 0
  %946 = vmatpush2.bf16.msra.mxu0 0
  %947 = vmatprep.subr.bf16.mxu0 0
  %948 = vmatpush2.bf16.msra.mxu0 0
  %949 = vmatprep.subr.bf16.mxu0 0
  %950 = vmatpush2.bf16.msra.mxu0 0
  %951 = vmatprep.subr.bf16.mxu0 0
  %952 = vmatpush2.bf16.msra.mxu0 0
  %953 = vmatprep.subr.bf16.mxu0 0
  %954 = vmatpush2.bf16.msra.mxu0 0
  %955 = vmatprep.subr.bf16.mxu0 0
  %956 = vmatpush2.bf16.msra.mxu0 0
  %957 = vmatprep.subr.bf16.mxu0 0
  %958 = vmatpush2.bf16.msra.mxu0 0
  %959 = vmatprep.subr.bf16.mxu0 0
  %960 = vmatpush2.bf16.msra.mxu0 0
  %961 = vmatprep.mubr.bf16.mxu0 0
  %962 = vmatmul.mubr.bf16.gmra.mxu0 %v918
  %v963 = vpop.f32.mrf.mxu0
  %v964 = vadd.f32 0.0, %v963
  %v965 = vpop.f32.mrf.mxu0
  %v966 = vpop.f32.mrf.mxu0
  %v967 = vadd.f32 0.0, %v966
  %v968 = vpop.f32.mrf.mxu0
  %969 = vmatprep.mubr.bf16.mxu0 0
  %970 = vmatmul.mubr.bf16.gmra.mxu0 %v921
  %v971 = vpop.f32.mrf.mxu0
  %v972 = vadd.f32 0.0, %v971
  %v973 = vpop.f32.mrf.mxu0
  %v974 = vpop.f32.mrf.mxu0
  %v975 = vadd.f32 0.0, %v974
  %v976 = vpop.f32.mrf.mxu0
  %977 = vmatprep.mubr.bf16.mxu0 0
  %978 = vmatmul.mubr.bf16.gmra.mxu0 %v924
  %v979 = vpop.f32.mrf.mxu0
  %v980 = vadd.f32 0.0, %v979
  %v981 = vpop.f32.mrf.mxu0
  %v982 = vpop.f32.mrf.mxu0
  %v983 = vadd.f32 0.0, %v982
  %v984 = vpop.f32.mrf.mxu0
  %985 = vmatprep.mubr.bf16.mxu0 0
  %986 = vmatmul.mubr.bf16.gmra.mxu0 %v927
  %v987 = vpop.f32.mrf.mxu0
  %v988 = vadd.f32 0.0, %v987
  %v989 = vpop.f32.mrf.mxu0
  %v990 = vpop.f32.mrf.mxu0
  %v991 = vadd.f32 0.0, %v990
  %v992 = vpop.f32.mrf.mxu0
  %993 = vdwg.mxu0
  %v994 = vadd.f32 %v874, %v964
  %v995 = vadd.f32 %v875, %v967
  %v996 = vadd.f32 %v876, %v972
  %v997 = vadd.f32 %v877, %v975
  %v998 = vadd.f32 %v878, %v980
  %v999 = vadd.f32 %v879, %v983
  %v1000 = vadd.f32 %v880, %v988
  %v1001 = vadd.f32 %v881, %v991
  %s1002 = scalar_lea.vmem %s1, 256
  %v1003 = vld [vmem:[%s1002] sm:$0xf]
  %v1004 = vld [vmem:[%s1002 + $0x4] sm:$0xf]
  %v1005 = vld [vmem:[%s1002 + $0x8] sm:$0xf]
  %v1006 = vld [vmem:[%s1002 + $0xc] sm:$0xf]
  %v1007 = vld [vmem:[%s1002 + $0x10] sm:$0xf]
  %v1008 = vld [vmem:[%s1002 + $0x14] sm:$0xf]
  %v1009 = vld [vmem:[%s1002 + $0x18] sm:$0xf]
  %v1010 = vld [vmem:[%s1002 + $0x1c] sm:$0xf]
  %v1019 = vunpack.c.l.b16 %v1003
  %v1020 = vunpack.c.l.b16 %v1004
  %v1021 = vunpack.c.l.b16 %v1005
  %v1022 = vunpack.c.l.b16 %v1006
  %v1023 = vunpack.c.l.b16 %v1007
  %v1024 = vunpack.c.l.b16 %v1008
  %v1025 = vunpack.c.l.b16 %v1009
  %v1026 = vunpack.c.l.b16 %v1010
  %v1027 = vpack.c.b16 %v1020, %v1019
  %v1028 = vpack.c.b16 %v1022, %v1021
  %v1029 = vpack.c.b16 %v1024, %v1023
  %v1030 = vpack.c.b16 %v1026, %v1025
  %1031 = vrot.lane.b32.xlu0 %v179, 123
  %v1032 = vpop.permute.xlu0 %1031
  %1033 = vrot.lane.b32.xlu0 %v180, 123
  %v1034 = vpop.permute.xlu0 %1033
  %v1038 = vsel %vm73, %v1027, 0
  %v1041 = vsel %vm73, %v1028, 0
  %v1044 = vsel %vm73, %v1029, 0
  %v1047 = vsel %vm73, %v1030, 0
  %1049 = vmatprep.subr.bf16.mxu0 0
  %1050 = vmatpush1.bf16.msra.mxu0 0
  %1051 = vmatprep.subr.bf16.mxu0 0
  %1052 = vmatpush1.bf16.msra.mxu0 0
  %1053 = vmatprep.subr.bf16.mxu0 0
  %1054 = vmatpush1.bf16.msra.mxu0 0
  %1055 = vmatprep.subr.bf16.mxu0 0
  %1056 = vmatpush1.bf16.msra.mxu0 0
  %1057 = vmatprep.subr.bf16.mxu0 0
  %1058 = vmatpush1.bf16.msra.mxu0 0
  %1059 = vmatprep.subr.bf16.mxu0 0
  %1060 = vmatpush1.bf16.msra.mxu0 0
  %1061 = vmatprep.subr.bf16.mxu0 0
  %1062 = vmatpush1.bf16.msra.mxu0 %v1034
  %1063 = vmatprep.subr.bf16.mxu0 0
  %1064 = vmatpush1.bf16.msra.mxu0 %v1032
  %1065 = vmatprep.subr.bf16.mxu0 0
  %1066 = vmatpush2.bf16.msra.mxu0 0
  %1067 = vmatprep.subr.bf16.mxu0 0
  %1068 = vmatpush2.bf16.msra.mxu0 0
  %1069 = vmatprep.subr.bf16.mxu0 0
  %1070 = vmatpush2.bf16.msra.mxu0 0
  %1071 = vmatprep.subr.bf16.mxu0 0
  %1072 = vmatpush2.bf16.msra.mxu0 0
  %1073 = vmatprep.subr.bf16.mxu0 0
  %1074 = vmatpush2.bf16.msra.mxu0 0
  %1075 = vmatprep.subr.bf16.mxu0 0
  %1076 = vmatpush2.bf16.msra.mxu0 0
  %1077 = vmatprep.subr.bf16.mxu0 0
  %1078 = vmatpush2.bf16.msra.mxu0 0
  %1079 = vmatprep.subr.bf16.mxu0 0
  %1080 = vmatpush2.bf16.msra.mxu0 0
  %1081 = vmatprep.mubr.bf16.mxu0 0
  %1082 = vmatmul.mubr.bf16.gmra.mxu0 %v1038
  %v1083 = vpop.f32.mrf.mxu0
  %v1084 = vadd.f32 0.0, %v1083
  %v1085 = vpop.f32.mrf.mxu0
  %v1086 = vpop.f32.mrf.mxu0
  %v1087 = vadd.f32 0.0, %v1086
  %v1088 = vpop.f32.mrf.mxu0
  %1089 = vmatprep.mubr.bf16.mxu0 0
  %1090 = vmatmul.mubr.bf16.gmra.mxu0 %v1041
  %v1091 = vpop.f32.mrf.mxu0
  %v1092 = vadd.f32 0.0, %v1091
  %v1093 = vpop.f32.mrf.mxu0
  %v1094 = vpop.f32.mrf.mxu0
  %v1095 = vadd.f32 0.0, %v1094
  %v1096 = vpop.f32.mrf.mxu0
  %1097 = vmatprep.mubr.bf16.mxu0 0
  %1098 = vmatmul.mubr.bf16.gmra.mxu0 %v1044
  %v1099 = vpop.f32.mrf.mxu0
  %v1100 = vadd.f32 0.0, %v1099
  %v1101 = vpop.f32.mrf.mxu0
  %v1102 = vpop.f32.mrf.mxu0
  %v1103 = vadd.f32 0.0, %v1102
  %v1104 = vpop.f32.mrf.mxu0
  %1105 = vmatprep.mubr.bf16.mxu0 0
  %1106 = vmatmul.mubr.bf16.gmra.mxu0 %v1047
  %v1107 = vpop.f32.mrf.mxu0
  %v1108 = vadd.f32 0.0, %v1107
  %v1109 = vpop.f32.mrf.mxu0
  %v1110 = vpop.f32.mrf.mxu0
  %v1111 = vadd.f32 0.0, %v1110
  %v1112 = vpop.f32.mrf.mxu0
  %1113 = vdwg.mxu0
  %v1114 = vadd.f32 %v994, %v1084
  %v1115 = vadd.f32 %v995, %v1087
  %v1116 = vadd.f32 %v996, %v1092
  %v1117 = vadd.f32 %v997, %v1095
  %v1118 = vadd.f32 %v998, %v1100
  %v1119 = vadd.f32 %v999, %v1103
  %v1120 = vadd.f32 %v1000, %v1108
  %v1121 = vadd.f32 %v1001, %v1111
  %s1122 = scalar_lea.vmem %s1, 288
  %v1123 = vld [vmem:[%s1122] sm:$0xf]
  %v1124 = vld [vmem:[%s1122 + $0x4] sm:$0xf]
  %v1125 = vld [vmem:[%s1122 + $0x8] sm:$0xf]
  %v1126 = vld [vmem:[%s1122 + $0xc] sm:$0xf]
  %v1127 = vld [vmem:[%s1122 + $0x10] sm:$0xf]
  %v1128 = vld [vmem:[%s1122 + $0x14] sm:$0xf]
  %v1129 = vld [vmem:[%s1122 + $0x18] sm:$0xf]
  %v1130 = vld [vmem:[%s1122 + $0x1c] sm:$0xf]
  %v1139 = vunpack.c.l.b16 %v1123
  %v1140 = vunpack.c.l.b16 %v1124
  %v1141 = vunpack.c.l.b16 %v1125
  %v1142 = vunpack.c.l.b16 %v1126
  %v1143 = vunpack.c.l.b16 %v1127
  %v1144 = vunpack.c.l.b16 %v1128
  %v1145 = vunpack.c.l.b16 %v1129
  %v1146 = vunpack.c.l.b16 %v1130
  %v1147 = vpack.c.b16 %v1140, %v1139
  %v1148 = vpack.c.b16 %v1142, %v1141
  %v1149 = vpack.c.b16 %v1144, %v1143
  %v1150 = vpack.c.b16 %v1146, %v1145
  %1151 = vrot.lane.b32.xlu0 %v69, 123
  %v1152 = vpop.permute.xlu0 %1151
  %1153 = vrot.lane.b32.xlu0 %v70, 123
  %v1154 = vpop.permute.xlu0 %1153
  %v1158 = vsel %vm73, %v1147, 0
  %v1161 = vsel %vm73, %v1148, 0
  %v1164 = vsel %vm73, %v1149, 0
  %v1167 = vsel %vm73, %v1150, 0
  %1169 = vmatprep.subr.bf16.mxu0 0
  %1170 = vmatpush1.bf16.msra.mxu0 0
  %1171 = vmatprep.subr.bf16.mxu0 0
  %1172 = vmatpush1.bf16.msra.mxu0 0
  %1173 = vmatprep.subr.bf16.mxu0 0
  %1174 = vmatpush1.bf16.msra.mxu0 0
  %1175 = vmatprep.subr.bf16.mxu0 0
  %1176 = vmatpush1.bf16.msra.mxu0 0
  %1177 = vmatprep.subr.bf16.mxu0 0
  %1178 = vmatpush1.bf16.msra.mxu0 0
  %1179 = vmatprep.subr.bf16.mxu0 0
  %1180 = vmatpush1.bf16.msra.mxu0 0
  %1181 = vmatprep.subr.bf16.mxu0 0
  %1182 = vmatpush1.bf16.msra.mxu0 %v1154
  %1183 = vmatprep.subr.bf16.mxu0 0
  %1184 = vmatpush1.bf16.msra.mxu0 %v1152
  %1185 = vmatprep.subr.bf16.mxu0 0
  %1186 = vmatpush2.bf16.msra.mxu0 0
  %1187 = vmatprep.subr.bf16.mxu0 0
  %1188 = vmatpush2.bf16.msra.mxu0 0
  %1189 = vmatprep.subr.bf16.mxu0 0
  %1190 = vmatpush2.bf16.msra.mxu0 0
  %1191 = vmatprep.subr.bf16.mxu0 0
  %1192 = vmatpush2.bf16.msra.mxu0 0
  %1193 = vmatprep.subr.bf16.mxu0 0
  %1194 = vmatpush2.bf16.msra.mxu0 0
  %1195 = vmatprep.subr.bf16.mxu0 0
  %1196 = vmatpush2.bf16.msra.mxu0 0
  %1197 = vmatprep.subr.bf16.mxu0 0
  %1198 = vmatpush2.bf16.msra.mxu0 0
  %1199 = vmatprep.subr.bf16.mxu0 0
  %1200 = vmatpush2.bf16.msra.mxu0 0
  %1201 = vmatprep.mubr.bf16.mxu0 0
  %1202 = vmatmul.mubr.bf16.gmra.mxu0 %v1158
  %v1203 = vpop.f32.mrf.mxu0
  %v1204 = vadd.f32 0.0, %v1203
  %v1205 = vpop.f32.mrf.mxu0
  %v1206 = vpop.f32.mrf.mxu0
  %v1207 = vadd.f32 0.0, %v1206
  %v1208 = vpop.f32.mrf.mxu0
  %1209 = vmatprep.mubr.bf16.mxu0 0
  %1210 = vmatmul.mubr.bf16.gmra.mxu0 %v1161
  %v1211 = vpop.f32.mrf.mxu0
  %v1212 = vadd.f32 0.0, %v1211
  %v1213 = vpop.f32.mrf.mxu0
  %v1214 = vpop.f32.mrf.mxu0
  %v1215 = vadd.f32 0.0, %v1214
  %v1216 = vpop.f32.mrf.mxu0
  %1217 = vmatprep.mubr.bf16.mxu0 0
  %1218 = vmatmul.mubr.bf16.gmra.mxu0 %v1164
  %v1219 = vpop.f32.mrf.mxu0
  %v1220 = vadd.f32 0.0, %v1219
  %v1221 = vpop.f32.mrf.mxu0
  %v1222 = vpop.f32.mrf.mxu0
  %v1223 = vadd.f32 0.0, %v1222
  %v1224 = vpop.f32.mrf.mxu0
  %1225 = vmatprep.mubr.bf16.mxu0 0
  %1226 = vmatmul.mubr.bf16.gmra.mxu0 %v1167
  %v1227 = vpop.f32.mrf.mxu0
  %v1228 = vadd.f32 0.0, %v1227
  %v1229 = vpop.f32.mrf.mxu0
  %v1230 = vpop.f32.mrf.mxu0
  %v1231 = vadd.f32 0.0, %v1230
  %v1232 = vpop.f32.mrf.mxu0
  %1233 = vdwg.mxu0
  %v1234 = vadd.f32 %v1114, %v1204
  %v1235 = vadd.f32 %v1115, %v1207
  %v1236 = vadd.f32 %v1116, %v1212
  %v1237 = vadd.f32 %v1117, %v1215
  %v1238 = vadd.f32 %v1118, %v1220
  %v1239 = vadd.f32 %v1119, %v1223
  %v1240 = vadd.f32 %v1120, %v1228
  %v1241 = vadd.f32 %v1121, %v1231
  %s1242 = scalar_lea.vmem %s1, 320
  %v1243 = vld [vmem:[%s1242] sm:$0xf]
  %v1244 = vld [vmem:[%s1242 + $0x4] sm:$0xf]
  %v1245 = vld [vmem:[%s1242 + $0x8] sm:$0xf]
  %v1246 = vld [vmem:[%s1242 + $0xc] sm:$0xf]
  %v1247 = vld [vmem:[%s1242 + $0x10] sm:$0xf]
  %v1248 = vld [vmem:[%s1242 + $0x14] sm:$0xf]
  %v1249 = vld [vmem:[%s1242 + $0x18] sm:$0xf]
  %v1250 = vld [vmem:[%s1242 + $0x1c] sm:$0xf]
  %v1259 = vunpack.c.l.b16 %v1243
  %v1260 = vunpack.c.l.b16 %v1244
  %v1261 = vunpack.c.l.b16 %v1245
  %v1262 = vunpack.c.l.b16 %v1246
  %v1263 = vunpack.c.l.b16 %v1247
  %v1264 = vunpack.c.l.b16 %v1248
  %v1265 = vunpack.c.l.b16 %v1249
  %v1266 = vunpack.c.l.b16 %v1250
  %v1267 = vpack.c.b16 %v1260, %v1259
  %v1268 = vpack.c.b16 %v1262, %v1261
  %v1269 = vpack.c.b16 %v1264, %v1263
  %v1270 = vpack.c.b16 %v1266, %v1265
  %1271 = vrot.lane.b32.xlu0 %v179, 122
  %v1272 = vpop.permute.xlu0 %1271
  %1273 = vrot.lane.b32.xlu0 %v180, 122
  %v1274 = vpop.permute.xlu0 %1273
  %v1278 = vsel %vm73, %v1267, 0
  %v1281 = vsel %vm73, %v1268, 0
  %v1284 = vsel %vm73, %v1269, 0
  %v1287 = vsel %vm73, %v1270, 0
  %1289 = vmatprep.subr.bf16.mxu0 0
  %1290 = vmatpush1.bf16.msra.mxu0 0
  %1291 = vmatprep.subr.bf16.mxu0 0
  %1292 = vmatpush1.bf16.msra.mxu0 0
  %1293 = vmatprep.subr.bf16.mxu0 0
  %1294 = vmatpush1.bf16.msra.mxu0 0
  %1295 = vmatprep.subr.bf16.mxu0 0
  %1296 = vmatpush1.bf16.msra.mxu0 0
  %1297 = vmatprep.subr.bf16.mxu0 0
  %1298 = vmatpush1.bf16.msra.mxu0 0
  %1299 = vmatprep.subr.bf16.mxu0 0
  %1300 = vmatpush1.bf16.msra.mxu0 0
  %1301 = vmatprep.subr.bf16.mxu0 0
  %1302 = vmatpush1.bf16.msra.mxu0 %v1274
  %1303 = vmatprep.subr.bf16.mxu0 0
  %1304 = vmatpush1.bf16.msra.mxu0 %v1272
  %1305 = vmatprep.subr.bf16.mxu0 0
  %1306 = vmatpush2.bf16.msra.mxu0 0
  %1307 = vmatprep.subr.bf16.mxu0 0
  %1308 = vmatpush2.bf16.msra.mxu0 0
  %1309 = vmatprep.subr.bf16.mxu0 0
  %1310 = vmatpush2.bf16.msra.mxu0 0
  %1311 = vmatprep.subr.bf16.mxu0 0
  %1312 = vmatpush2.bf16.msra.mxu0 0
  %1313 = vmatprep.subr.bf16.mxu0 0
  %1314 = vmatpush2.bf16.msra.mxu0 0
  %1315 = vmatprep.subr.bf16.mxu0 0
  %1316 = vmatpush2.bf16.msra.mxu0 0
  %1317 = vmatprep.subr.bf16.mxu0 0
  %1318 = vmatpush2.bf16.msra.mxu0 0
  %1319 = vmatprep.subr.bf16.mxu0 0
  %1320 = vmatpush2.bf16.msra.mxu0 0
  %1321 = vmatprep.mubr.bf16.mxu0 0
  %1322 = vmatmul.mubr.bf16.gmra.mxu0 %v1278
  %v1323 = vpop.f32.mrf.mxu0
  %v1324 = vadd.f32 0.0, %v1323
  %v1325 = vpop.f32.mrf.mxu0
  %v1326 = vpop.f32.mrf.mxu0
  %v1327 = vadd.f32 0.0, %v1326
  %v1328 = vpop.f32.mrf.mxu0
  %1329 = vmatprep.mubr.bf16.mxu0 0
  %1330 = vmatmul.mubr.bf16.gmra.mxu0 %v1281
  %v1331 = vpop.f32.mrf.mxu0
  %v1332 = vadd.f32 0.0, %v1331
  %v1333 = vpop.f32.mrf.mxu0
  %v1334 = vpop.f32.mrf.mxu0
  %v1335 = vadd.f32 0.0, %v1334
  %v1336 = vpop.f32.mrf.mxu0
  %1337 = vmatprep.mubr.bf16.mxu0 0
  %1338 = vmatmul.mubr.bf16.gmra.mxu0 %v1284
  %v1339 = vpop.f32.mrf.mxu0
  %v1340 = vadd.f32 0.0, %v1339
  %v1341 = vpop.f32.mrf.mxu0
  %v1342 = vpop.f32.mrf.mxu0
  %v1343 = vadd.f32 0.0, %v1342
  %v1344 = vpop.f32.mrf.mxu0
  %1345 = vmatprep.mubr.bf16.mxu0 0
  %1346 = vmatmul.mubr.bf16.gmra.mxu0 %v1287
  %v1347 = vpop.f32.mrf.mxu0
  %v1348 = vadd.f32 0.0, %v1347
  %v1349 = vpop.f32.mrf.mxu0
  %v1350 = vpop.f32.mrf.mxu0
  %v1351 = vadd.f32 0.0, %v1350
  %v1352 = vpop.f32.mrf.mxu0
  %1353 = vdwg.mxu0
  %v1354 = vadd.f32 %v1234, %v1324
  %v1355 = vadd.f32 %v1235, %v1327
  %v1356 = vadd.f32 %v1236, %v1332
  %v1357 = vadd.f32 %v1237, %v1335
  %v1358 = vadd.f32 %v1238, %v1340
  %v1359 = vadd.f32 %v1239, %v1343
  %v1360 = vadd.f32 %v1240, %v1348
  %v1361 = vadd.f32 %v1241, %v1351
  %s1362 = scalar_lea.vmem %s1, 352
  %v1363 = vld [vmem:[%s1362] sm:$0xf]
  %v1364 = vld [vmem:[%s1362 + $0x4] sm:$0xf]
  %v1365 = vld [vmem:[%s1362 + $0x8] sm:$0xf]
  %v1366 = vld [vmem:[%s1362 + $0xc] sm:$0xf]
  %v1367 = vld [vmem:[%s1362 + $0x10] sm:$0xf]
  %v1368 = vld [vmem:[%s1362 + $0x14] sm:$0xf]
  %v1369 = vld [vmem:[%s1362 + $0x18] sm:$0xf]
  %v1370 = vld [vmem:[%s1362 + $0x1c] sm:$0xf]
  %v1379 = vunpack.c.l.b16 %v1363
  %v1380 = vunpack.c.l.b16 %v1364
  %v1381 = vunpack.c.l.b16 %v1365
  %v1382 = vunpack.c.l.b16 %v1366
  %v1383 = vunpack.c.l.b16 %v1367
  %v1384 = vunpack.c.l.b16 %v1368
  %v1385 = vunpack.c.l.b16 %v1369
  %v1386 = vunpack.c.l.b16 %v1370
  %v1387 = vpack.c.b16 %v1380, %v1379
  %v1388 = vpack.c.b16 %v1382, %v1381
  %v1389 = vpack.c.b16 %v1384, %v1383
  %v1390 = vpack.c.b16 %v1386, %v1385
  %1391 = vrot.lane.b32.xlu0 %v69, 122
  %v1392 = vpop.permute.xlu0 %1391
  %1393 = vrot.lane.b32.xlu0 %v70, 122
  %v1394 = vpop.permute.xlu0 %1393
  %v1398 = vsel %vm73, %v1387, 0
  %v1401 = vsel %vm73, %v1388, 0
  %v1404 = vsel %vm73, %v1389, 0
  %v1407 = vsel %vm73, %v1390, 0
  %1409 = vmatprep.subr.bf16.mxu0 0
  %1410 = vmatpush1.bf16.msra.mxu0 0
  %1411 = vmatprep.subr.bf16.mxu0 0
  %1412 = vmatpush1.bf16.msra.mxu0 0
  %1413 = vmatprep.subr.bf16.mxu0 0
  %1414 = vmatpush1.bf16.msra.mxu0 0
  %1415 = vmatprep.subr.bf16.mxu0 0
  %1416 = vmatpush1.bf16.msra.mxu0 0
  %1417 = vmatprep.subr.bf16.mxu0 0
  %1418 = vmatpush1.bf16.msra.mxu0 0
  %1419 = vmatprep.subr.bf16.mxu0 0
  %1420 = vmatpush1.bf16.msra.mxu0 0
  %1421 = vmatprep.subr.bf16.mxu0 0
  %1422 = vmatpush1.bf16.msra.mxu0 %v1394
  %1423 = vmatprep.subr.bf16.mxu0 0
  %1424 = vmatpush1.bf16.msra.mxu0 %v1392
  %1425 = vmatprep.subr.bf16.mxu0 0
  %1426 = vmatpush2.bf16.msra.mxu0 0
  %1427 = vmatprep.subr.bf16.mxu0 0
  %1428 = vmatpush2.bf16.msra.mxu0 0
  %1429 = vmatprep.subr.bf16.mxu0 0
  %1430 = vmatpush2.bf16.msra.mxu0 0
  %1431 = vmatprep.subr.bf16.mxu0 0
  %1432 = vmatpush2.bf16.msra.mxu0 0
  %1433 = vmatprep.subr.bf16.mxu0 0
  %1434 = vmatpush2.bf16.msra.mxu0 0
  %1435 = vmatprep.subr.bf16.mxu0 0
  %1436 = vmatpush2.bf16.msra.mxu0 0
  %1437 = vmatprep.subr.bf16.mxu0 0
  %1438 = vmatpush2.bf16.msra.mxu0 0
  %1439 = vmatprep.subr.bf16.mxu0 0
  %1440 = vmatpush2.bf16.msra.mxu0 0
  %1441 = vmatprep.mubr.bf16.mxu0 0
  %1442 = vmatmul.mubr.bf16.gmra.mxu0 %v1398
  %v1443 = vpop.f32.mrf.mxu0
  %v1444 = vadd.f32 0.0, %v1443
  %v1445 = vpop.f32.mrf.mxu0
  %v1446 = vpop.f32.mrf.mxu0
  %v1447 = vadd.f32 0.0, %v1446
  %v1448 = vpop.f32.mrf.mxu0
  %1449 = vmatprep.mubr.bf16.mxu0 0
  %1450 = vmatmul.mubr.bf16.gmra.mxu0 %v1401
  %v1451 = vpop.f32.mrf.mxu0
  %v1452 = vadd.f32 0.0, %v1451
  %v1453 = vpop.f32.mrf.mxu0
  %v1454 = vpop.f32.mrf.mxu0
  %v1455 = vadd.f32 0.0, %v1454
  %v1456 = vpop.f32.mrf.mxu0
  %1457 = vmatprep.mubr.bf16.mxu0 0
  %1458 = vmatmul.mubr.bf16.gmra.mxu0 %v1404
  %v1459 = vpop.f32.mrf.mxu0
  %v1460 = vadd.f32 0.0, %v1459
  %v1461 = vpop.f32.mrf.mxu0
  %v1462 = vpop.f32.mrf.mxu0
  %v1463 = vadd.f32 0.0, %v1462
  %v1464 = vpop.f32.mrf.mxu0
  %1465 = vmatprep.mubr.bf16.mxu0 0
  %1466 = vmatmul.mubr.bf16.gmra.mxu0 %v1407
  %v1467 = vpop.f32.mrf.mxu0
  %v1468 = vadd.f32 0.0, %v1467
  %v1469 = vpop.f32.mrf.mxu0
  %v1470 = vpop.f32.mrf.mxu0
  %v1471 = vadd.f32 0.0, %v1470
  %v1472 = vpop.f32.mrf.mxu0
  %1473 = vdwg.mxu0
  %v1474 = vadd.f32 %v1354, %v1444
  %v1475 = vadd.f32 %v1355, %v1447
  %v1476 = vadd.f32 %v1356, %v1452
  %v1477 = vadd.f32 %v1357, %v1455
  %v1478 = vadd.f32 %v1358, %v1460
  %v1479 = vadd.f32 %v1359, %v1463
  %v1480 = vadd.f32 %v1360, %v1468
  %v1481 = vadd.f32 %v1361, %v1471
  %s1482 = scalar_lea.vmem %s1, 384
  %v1483 = vld [vmem:[%s1482] sm:$0xf]
  %v1484 = vld [vmem:[%s1482 + $0x4] sm:$0xf]
  %v1485 = vld [vmem:[%s1482 + $0x8] sm:$0xf]
  %v1486 = vld [vmem:[%s1482 + $0xc] sm:$0xf]
  %v1487 = vld [vmem:[%s1482 + $0x10] sm:$0xf]
  %v1488 = vld [vmem:[%s1482 + $0x14] sm:$0xf]
  %v1489 = vld [vmem:[%s1482 + $0x18] sm:$0xf]
  %v1490 = vld [vmem:[%s1482 + $0x1c] sm:$0xf]
  %v1499 = vunpack.c.l.b16 %v1483
  %v1500 = vunpack.c.l.b16 %v1484
  %v1501 = vunpack.c.l.b16 %v1485
  %v1502 = vunpack.c.l.b16 %v1486
  %v1503 = vunpack.c.l.b16 %v1487
  %v1504 = vunpack.c.l.b16 %v1488
  %v1505 = vunpack.c.l.b16 %v1489
  %v1506 = vunpack.c.l.b16 %v1490
  %v1507 = vpack.c.b16 %v1500, %v1499
  %v1508 = vpack.c.b16 %v1502, %v1501
  %v1509 = vpack.c.b16 %v1504, %v1503
  %v1510 = vpack.c.b16 %v1506, %v1505
  %1511 = vrot.lane.b32.xlu0 %v542, 123
  %v1512 = vpop.permute.xlu0 %1511
  %1513 = vrot.lane.b32.xlu0 %v543, 123
  %v1514 = vpop.permute.xlu0 %1513
  %v1518 = vsel %vm73, %v1507, 0
  %v1521 = vsel %vm73, %v1508, 0
  %v1524 = vsel %vm73, %v1509, 0
  %v1527 = vsel %vm73, %v1510, 0
  %1529 = vmatprep.subr.bf16.mxu0 0
  %1530 = vmatpush1.bf16.msra.mxu0 0
  %1531 = vmatprep.subr.bf16.mxu0 0
  %1532 = vmatpush1.bf16.msra.mxu0 0
  %1533 = vmatprep.subr.bf16.mxu0 0
  %1534 = vmatpush1.bf16.msra.mxu0 0
  %1535 = vmatprep.subr.bf16.mxu0 0
  %1536 = vmatpush1.bf16.msra.mxu0 0
  %1537 = vmatprep.subr.bf16.mxu0 0
  %1538 = vmatpush1.bf16.msra.mxu0 0
  %1539 = vmatprep.subr.bf16.mxu0 0
  %1540 = vmatpush1.bf16.msra.mxu0 0
  %1541 = vmatprep.subr.bf16.mxu0 0
  %1542 = vmatpush1.bf16.msra.mxu0 %v1514
  %1543 = vmatprep.subr.bf16.mxu0 0
  %1544 = vmatpush1.bf16.msra.mxu0 %v1512
  %1545 = vmatprep.subr.bf16.mxu0 0
  %1546 = vmatpush2.bf16.msra.mxu0 0
  %1547 = vmatprep.subr.bf16.mxu0 0
  %1548 = vmatpush2.bf16.msra.mxu0 0
  %1549 = vmatprep.subr.bf16.mxu0 0
  %1550 = vmatpush2.bf16.msra.mxu0 0
  %1551 = vmatprep.subr.bf16.mxu0 0
  %1552 = vmatpush2.bf16.msra.mxu0 0
  %1553 = vmatprep.subr.bf16.mxu0 0
  %1554 = vmatpush2.bf16.msra.mxu0 0
  %1555 = vmatprep.subr.bf16.mxu0 0
  %1556 = vmatpush2.bf16.msra.mxu0 0
  %1557 = vmatprep.subr.bf16.mxu0 0
  %1558 = vmatpush2.bf16.msra.mxu0 0
  %1559 = vmatprep.subr.bf16.mxu0 0
  %1560 = vmatpush2.bf16.msra.mxu0 0
  %1561 = vmatprep.mubr.bf16.mxu0 0
  %1562 = vmatmul.mubr.bf16.gmra.mxu0 %v1518
  %v1563 = vpop.f32.mrf.mxu0
  %v1564 = vadd.f32 0.0, %v1563
  %v1565 = vpop.f32.mrf.mxu0
  %v1566 = vpop.f32.mrf.mxu0
  %v1567 = vadd.f32 0.0, %v1566
  %v1568 = vpop.f32.mrf.mxu0
  %1569 = vmatprep.mubr.bf16.mxu0 0
  %1570 = vmatmul.mubr.bf16.gmra.mxu0 %v1521
  %v1571 = vpop.f32.mrf.mxu0
  %v1572 = vadd.f32 0.0, %v1571
  %v1573 = vpop.f32.mrf.mxu0
  %v1574 = vpop.f32.mrf.mxu0
  %v1575 = vadd.f32 0.0, %v1574
  %v1576 = vpop.f32.mrf.mxu0
  %1577 = vmatprep.mubr.bf16.mxu0 0
  %1578 = vmatmul.mubr.bf16.gmra.mxu0 %v1524
  %v1579 = vpop.f32.mrf.mxu0
  %v1580 = vadd.f32 0.0, %v1579
  %v1581 = vpop.f32.mrf.mxu0
  %v1582 = vpop.f32.mrf.mxu0
  %v1583 = vadd.f32 0.0, %v1582
  %v1584 = vpop.f32.mrf.mxu0
  %1585 = vmatprep.mubr.bf16.mxu0 0
  %1586 = vmatmul.mubr.bf16.gmra.mxu0 %v1527
  %v1587 = vpop.f32.mrf.mxu0
  %v1588 = vadd.f32 0.0, %v1587
  %v1589 = vpop.f32.mrf.mxu0
  %v1590 = vpop.f32.mrf.mxu0
  %v1591 = vadd.f32 0.0, %v1590
  %v1592 = vpop.f32.mrf.mxu0
  %1593 = vdwg.mxu0
  %v1594 = vadd.f32 %v1474, %v1564
  %v1595 = vadd.f32 %v1475, %v1567
  %v1596 = vadd.f32 %v1476, %v1572
  %v1597 = vadd.f32 %v1477, %v1575
  %v1598 = vadd.f32 %v1478, %v1580
  %v1599 = vadd.f32 %v1479, %v1583
  %v1600 = vadd.f32 %v1480, %v1588
  %v1601 = vadd.f32 %v1481, %v1591
  %s1602 = scalar_lea.vmem %s1, 416
  %v1603 = vld [vmem:[%s1602] sm:$0xf]
  %v1604 = vld [vmem:[%s1602 + $0x4] sm:$0xf]
  %v1605 = vld [vmem:[%s1602 + $0x8] sm:$0xf]
  %v1606 = vld [vmem:[%s1602 + $0xc] sm:$0xf]
  %v1607 = vld [vmem:[%s1602 + $0x10] sm:$0xf]
  %v1608 = vld [vmem:[%s1602 + $0x14] sm:$0xf]
  %v1609 = vld [vmem:[%s1602 + $0x18] sm:$0xf]
  %v1610 = vld [vmem:[%s1602 + $0x1c] sm:$0xf]
  %v1619 = vunpack.c.l.b16 %v1603
  %v1620 = vunpack.c.l.b16 %v1604
  %v1621 = vunpack.c.l.b16 %v1605
  %v1622 = vunpack.c.l.b16 %v1606
  %v1623 = vunpack.c.l.b16 %v1607
  %v1624 = vunpack.c.l.b16 %v1608
  %v1625 = vunpack.c.l.b16 %v1609
  %v1626 = vunpack.c.l.b16 %v1610
  %v1627 = vpack.c.b16 %v1620, %v1619
  %v1628 = vpack.c.b16 %v1622, %v1621
  %v1629 = vpack.c.b16 %v1624, %v1623
  %v1630 = vpack.c.b16 %v1626, %v1625
  %1631 = vrot.lane.b32.xlu0 %v673, 123
  %v1632 = vpop.permute.xlu0 %1631
  %1633 = vrot.lane.b32.xlu0 %v674, 123
  %v1634 = vpop.permute.xlu0 %1633
  %v1638 = vsel %vm73, %v1627, 0
  %v1641 = vsel %vm73, %v1628, 0
  %v1644 = vsel %vm73, %v1629, 0
  %v1647 = vsel %vm73, %v1630, 0
  %1649 = vmatprep.subr.bf16.mxu0 0
  %1650 = vmatpush1.bf16.msra.mxu0 0
  %1651 = vmatprep.subr.bf16.mxu0 0
  %1652 = vmatpush1.bf16.msra.mxu0 0
  %1653 = vmatprep.subr.bf16.mxu0 0
  %1654 = vmatpush1.bf16.msra.mxu0 0
  %1655 = vmatprep.subr.bf16.mxu0 0
  %1656 = vmatpush1.bf16.msra.mxu0 0
  %1657 = vmatprep.subr.bf16.mxu0 0
  %1658 = vmatpush1.bf16.msra.mxu0 0
  %1659 = vmatprep.subr.bf16.mxu0 0
  %1660 = vmatpush1.bf16.msra.mxu0 0
  %1661 = vmatprep.subr.bf16.mxu0 0
  %1662 = vmatpush1.bf16.msra.mxu0 %v1634
  %1663 = vmatprep.subr.bf16.mxu0 0
  %1664 = vmatpush1.bf16.msra.mxu0 %v1632
  %1665 = vmatprep.subr.bf16.mxu0 0
  %1666 = vmatpush2.bf16.msra.mxu0 0
  %1667 = vmatprep.subr.bf16.mxu0 0
  %1668 = vmatpush2.bf16.msra.mxu0 0
  %1669 = vmatprep.subr.bf16.mxu0 0
  %1670 = vmatpush2.bf16.msra.mxu0 0
  %1671 = vmatprep.subr.bf16.mxu0 0
  %1672 = vmatpush2.bf16.msra.mxu0 0
  %1673 = vmatprep.subr.bf16.mxu0 0
  %1674 = vmatpush2.bf16.msra.mxu0 0
  %1675 = vmatprep.subr.bf16.mxu0 0
  %1676 = vmatpush2.bf16.msra.mxu0 0
  %1677 = vmatprep.subr.bf16.mxu0 0
  %1678 = vmatpush2.bf16.msra.mxu0 0
  %1679 = vmatprep.subr.bf16.mxu0 0
  %1680 = vmatpush2.bf16.msra.mxu0 0
  %1681 = vmatprep.mubr.bf16.mxu0 0
  %1682 = vmatmul.mubr.bf16.gmra.mxu0 %v1638
  %v1683 = vpop.f32.mrf.mxu0
  %v1684 = vadd.f32 0.0, %v1683
  %v1685 = vpop.f32.mrf.mxu0
  %v1686 = vpop.f32.mrf.mxu0
  %v1687 = vadd.f32 0.0, %v1686
  %v1688 = vpop.f32.mrf.mxu0
  %1689 = vmatprep.mubr.bf16.mxu0 0
  %1690 = vmatmul.mubr.bf16.gmra.mxu0 %v1641
  %v1691 = vpop.f32.mrf.mxu0
  %v1692 = vadd.f32 0.0, %v1691
  %v1693 = vpop.f32.mrf.mxu0
  %v1694 = vpop.f32.mrf.mxu0
  %v1695 = vadd.f32 0.0, %v1694
  %v1696 = vpop.f32.mrf.mxu0
  %1697 = vmatprep.mubr.bf16.mxu0 0
  %1698 = vmatmul.mubr.bf16.gmra.mxu0 %v1644
  %v1699 = vpop.f32.mrf.mxu0
  %v1700 = vadd.f32 0.0, %v1699
  %v1701 = vpop.f32.mrf.mxu0
  %v1702 = vpop.f32.mrf.mxu0
  %v1703 = vadd.f32 0.0, %v1702
  %v1704 = vpop.f32.mrf.mxu0
  %1705 = vmatprep.mubr.bf16.mxu0 0
  %1706 = vmatmul.mubr.bf16.gmra.mxu0 %v1647
  %v1707 = vpop.f32.mrf.mxu0
  %v1708 = vadd.f32 0.0, %v1707
  %v1709 = vpop.f32.mrf.mxu0
  %v1710 = vpop.f32.mrf.mxu0
  %v1711 = vadd.f32 0.0, %v1710
  %v1712 = vpop.f32.mrf.mxu0
  %1713 = vdwg.mxu0
  %v1714 = vadd.f32 %v1594, %v1684
  %v1715 = vadd.f32 %v1595, %v1687
  %v1716 = vadd.f32 %v1596, %v1692
  %v1717 = vadd.f32 %v1597, %v1695
  %v1718 = vadd.f32 %v1598, %v1700
  %v1719 = vadd.f32 %v1599, %v1703
  %v1720 = vadd.f32 %v1600, %v1708
  %v1721 = vadd.f32 %v1601, %v1711
  %s1722 = scalar_lea.vmem %s1, 448
  %v1723 = vld [vmem:[%s1722] sm:$0xf]
  %v1724 = vld [vmem:[%s1722 + $0x4] sm:$0xf]
  %v1725 = vld [vmem:[%s1722 + $0x8] sm:$0xf]
  %v1726 = vld [vmem:[%s1722 + $0xc] sm:$0xf]
  %v1727 = vld [vmem:[%s1722 + $0x10] sm:$0xf]
  %v1728 = vld [vmem:[%s1722 + $0x14] sm:$0xf]
  %v1729 = vld [vmem:[%s1722 + $0x18] sm:$0xf]
  %v1730 = vld [vmem:[%s1722 + $0x1c] sm:$0xf]
  %v1739 = vunpack.c.l.b16 %v1723
  %v1740 = vunpack.c.l.b16 %v1724
  %v1741 = vunpack.c.l.b16 %v1725
  %v1742 = vunpack.c.l.b16 %v1726
  %v1743 = vunpack.c.l.b16 %v1727
  %v1744 = vunpack.c.l.b16 %v1728
  %v1745 = vunpack.c.l.b16 %v1729
  %v1746 = vunpack.c.l.b16 %v1730
  %v1747 = vpack.c.b16 %v1740, %v1739
  %v1748 = vpack.c.b16 %v1742, %v1741
  %v1749 = vpack.c.b16 %v1744, %v1743
  %v1750 = vpack.c.b16 %v1746, %v1745
  %1751 = vrot.lane.b32.xlu0 %v542, 122
  %v1752 = vpop.permute.xlu0 %1751
  %1753 = vrot.lane.b32.xlu0 %v543, 122
  %v1754 = vpop.permute.xlu0 %1753
  %v1758 = vsel %vm73, %v1747, 0
  %v1761 = vsel %vm73, %v1748, 0
  %v1764 = vsel %vm73, %v1749, 0
  %v1767 = vsel %vm73, %v1750, 0
  %1769 = vmatprep.subr.bf16.mxu0 0
  %1770 = vmatpush1.bf16.msra.mxu0 0
  %1771 = vmatprep.subr.bf16.mxu0 0
  %1772 = vmatpush1.bf16.msra.mxu0 0
  %1773 = vmatprep.subr.bf16.mxu0 0
  %1774 = vmatpush1.bf16.msra.mxu0 0
  %1775 = vmatprep.subr.bf16.mxu0 0
  %1776 = vmatpush1.bf16.msra.mxu0 0
  %1777 = vmatprep.subr.bf16.mxu0 0
  %1778 = vmatpush1.bf16.msra.mxu0 0
  %1779 = vmatprep.subr.bf16.mxu0 0
  %1780 = vmatpush1.bf16.msra.mxu0 0
  %1781 = vmatprep.subr.bf16.mxu0 0
  %1782 = vmatpush1.bf16.msra.mxu0 %v1754
  %1783 = vmatprep.subr.bf16.mxu0 0
  %1784 = vmatpush1.bf16.msra.mxu0 %v1752
  %1785 = vmatprep.subr.bf16.mxu0 0
  %1786 = vmatpush2.bf16.msra.mxu0 0
  %1787 = vmatprep.subr.bf16.mxu0 0
  %1788 = vmatpush2.bf16.msra.mxu0 0
  %1789 = vmatprep.subr.bf16.mxu0 0
  %1790 = vmatpush2.bf16.msra.mxu0 0
  %1791 = vmatprep.subr.bf16.mxu0 0
  %1792 = vmatpush2.bf16.msra.mxu0 0
  %1793 = vmatprep.subr.bf16.mxu0 0
  %1794 = vmatpush2.bf16.msra.mxu0 0
  %1795 = vmatprep.subr.bf16.mxu0 0
  %1796 = vmatpush2.bf16.msra.mxu0 0
  %1797 = vmatprep.subr.bf16.mxu0 0
  %1798 = vmatpush2.bf16.msra.mxu0 0
  %1799 = vmatprep.subr.bf16.mxu0 0
  %1800 = vmatpush2.bf16.msra.mxu0 0
  %1801 = vmatprep.mubr.bf16.mxu0 0
  %1802 = vmatmul.mubr.bf16.gmra.mxu0 %v1758
  %v1803 = vpop.f32.mrf.mxu0
  %v1804 = vadd.f32 0.0, %v1803
  %v1805 = vpop.f32.mrf.mxu0
  %v1806 = vpop.f32.mrf.mxu0
  %v1807 = vadd.f32 0.0, %v1806
  %v1808 = vpop.f32.mrf.mxu0
  %1809 = vmatprep.mubr.bf16.mxu0 0
  %1810 = vmatmul.mubr.bf16.gmra.mxu0 %v1761
  %v1811 = vpop.f32.mrf.mxu0
  %v1812 = vadd.f32 0.0, %v1811
  %v1813 = vpop.f32.mrf.mxu0
  %v1814 = vpop.f32.mrf.mxu0
  %v1815 = vadd.f32 0.0, %v1814
  %v1816 = vpop.f32.mrf.mxu0
  %1817 = vmatprep.mubr.bf16.mxu0 0
  %1818 = vmatmul.mubr.bf16.gmra.mxu0 %v1764
  %v1819 = vpop.f32.mrf.mxu0
  %v1820 = vadd.f32 0.0, %v1819
  %v1821 = vpop.f32.mrf.mxu0
  %v1822 = vpop.f32.mrf.mxu0
  %v1823 = vadd.f32 0.0, %v1822
  %v1824 = vpop.f32.mrf.mxu0
  %1825 = vmatprep.mubr.bf16.mxu0 0
  %1826 = vmatmul.mubr.bf16.gmra.mxu0 %v1767
  %v1827 = vpop.f32.mrf.mxu0
  %v1828 = vadd.f32 0.0, %v1827
  %v1829 = vpop.f32.mrf.mxu0
  %v1830 = vpop.f32.mrf.mxu0
  %v1831 = vadd.f32 0.0, %v1830
  %v1832 = vpop.f32.mrf.mxu0
  %1833 = vdwg.mxu0
  %v1834 = vadd.f32 %v1714, %v1804
  %v1835 = vadd.f32 %v1715, %v1807
  %v1836 = vadd.f32 %v1716, %v1812
  %v1837 = vadd.f32 %v1717, %v1815
  %v1838 = vadd.f32 %v1718, %v1820
  %v1839 = vadd.f32 %v1719, %v1823
  %v1840 = vadd.f32 %v1720, %v1828
  %v1841 = vadd.f32 %v1721, %v1831
  %s1842 = scalar_lea.vmem %s1, 480
  %v1843 = vld [vmem:[%s1842] sm:$0xf]
  %v1844 = vld [vmem:[%s1842 + $0x4] sm:$0xf]
  %v1845 = vld [vmem:[%s1842 + $0x8] sm:$0xf]
  %v1846 = vld [vmem:[%s1842 + $0xc] sm:$0xf]
  %v1847 = vld [vmem:[%s1842 + $0x10] sm:$0xf]
  %v1848 = vld [vmem:[%s1842 + $0x14] sm:$0xf]
  %v1849 = vld [vmem:[%s1842 + $0x18] sm:$0xf]
  %v1850 = vld [vmem:[%s1842 + $0x1c] sm:$0xf]
  %v1859 = vunpack.c.l.b16 %v1843
  %v1860 = vunpack.c.l.b16 %v1844
  %v1861 = vunpack.c.l.b16 %v1845
  %v1862 = vunpack.c.l.b16 %v1846
  %v1863 = vunpack.c.l.b16 %v1847
  %v1864 = vunpack.c.l.b16 %v1848
  %v1865 = vunpack.c.l.b16 %v1849
  %v1866 = vunpack.c.l.b16 %v1850
  %v1867 = vpack.c.b16 %v1860, %v1859
  %v1868 = vpack.c.b16 %v1862, %v1861
  %v1869 = vpack.c.b16 %v1864, %v1863
  %v1870 = vpack.c.b16 %v1866, %v1865
  %1871 = vrot.lane.b32.xlu0 %v673, 122
  %v1872 = vpop.permute.xlu0 %1871
  %1873 = vrot.lane.b32.xlu0 %v674, 122
  %v1874 = vpop.permute.xlu0 %1873
  %v1878 = vsel %vm73, %v1867, 0
  %v1881 = vsel %vm73, %v1868, 0
  %v1884 = vsel %vm73, %v1869, 0
  %v1887 = vsel %vm73, %v1870, 0
  %1889 = vmatprep.subr.bf16.mxu0 0
  %1890 = vmatpush1.bf16.msra.mxu0 0
  %1891 = vmatprep.subr.bf16.mxu0 0
  %1892 = vmatpush1.bf16.msra.mxu0 0
  %1893 = vmatprep.subr.bf16.mxu0 0
  %1894 = vmatpush1.bf16.msra.mxu0 0
  %1895 = vmatprep.subr.bf16.mxu0 0
  %1896 = vmatpush1.bf16.msra.mxu0 0
  %1897 = vmatprep.subr.bf16.mxu0 0
  %1898 = vmatpush1.bf16.msra.mxu0 0
  %1899 = vmatprep.subr.bf16.mxu0 0
  %1900 = vmatpush1.bf16.msra.mxu0 0
  %1901 = vmatprep.subr.bf16.mxu0 0
  %1902 = vmatpush1.bf16.msra.mxu0 %v1874
  %1903 = vmatprep.subr.bf16.mxu0 0
  %1904 = vmatpush1.bf16.msra.mxu0 %v1872
  %1905 = vmatprep.subr.bf16.mxu0 0
  %1906 = vmatpush2.bf16.msra.mxu0 0
  %1907 = vmatprep.subr.bf16.mxu0 0
  %1908 = vmatpush2.bf16.msra.mxu0 0
  %1909 = vmatprep.subr.bf16.mxu0 0
  %1910 = vmatpush2.bf16.msra.mxu0 0
  %1911 = vmatprep.subr.bf16.mxu0 0
  %1912 = vmatpush2.bf16.msra.mxu0 0
  %1913 = vmatprep.subr.bf16.mxu0 0
  %1914 = vmatpush2.bf16.msra.mxu0 0
  %1915 = vmatprep.subr.bf16.mxu0 0
  %1916 = vmatpush2.bf16.msra.mxu0 0
  %1917 = vmatprep.subr.bf16.mxu0 0
  %1918 = vmatpush2.bf16.msra.mxu0 0
  %1919 = vmatprep.subr.bf16.mxu0 0
  %1920 = vmatpush2.bf16.msra.mxu0 0
  %1921 = vmatprep.mubr.bf16.mxu0 0
  %1922 = vmatmul.mubr.bf16.gmra.mxu0 %v1878
  %v1923 = vpop.f32.mrf.mxu0
  %v1924 = vadd.f32 0.0, %v1923
  %v1925 = vpop.f32.mrf.mxu0
  %v1926 = vpop.f32.mrf.mxu0
  %v1927 = vadd.f32 0.0, %v1926
  %v1928 = vpop.f32.mrf.mxu0
  %1929 = vmatprep.mubr.bf16.mxu0 0
  %1930 = vmatmul.mubr.bf16.gmra.mxu0 %v1881
  %v1931 = vpop.f32.mrf.mxu0
  %v1932 = vadd.f32 0.0, %v1931
  %v1933 = vpop.f32.mrf.mxu0
  %v1934 = vpop.f32.mrf.mxu0
  %v1935 = vadd.f32 0.0, %v1934
  %v1936 = vpop.f32.mrf.mxu0
  %1937 = vmatprep.mubr.bf16.mxu0 0
  %1938 = vmatmul.mubr.bf16.gmra.mxu0 %v1884
  %v1939 = vpop.f32.mrf.mxu0
  %v1940 = vadd.f32 0.0, %v1939
  %v1941 = vpop.f32.mrf.mxu0
  %v1942 = vpop.f32.mrf.mxu0
  %v1943 = vadd.f32 0.0, %v1942
  %v1944 = vpop.f32.mrf.mxu0
  %1945 = vmatprep.mubr.bf16.mxu0 0
  %1946 = vmatmul.mubr.bf16.gmra.mxu0 %v1887
  %v1947 = vpop.f32.mrf.mxu0
  %v1948 = vadd.f32 0.0, %v1947
  %v1949 = vpop.f32.mrf.mxu0
  %v1950 = vpop.f32.mrf.mxu0
  %v1951 = vadd.f32 0.0, %v1950
  %v1952 = vpop.f32.mrf.mxu0
  %1953 = vdwg.mxu0
  %v1954 = vadd.f32 %v1834, %v1924
  %v1955 = vadd.f32 %v1835, %v1927
  %v1956 = vadd.f32 %v1836, %v1932
  %v1957 = vadd.f32 %v1837, %v1935
  %v1958 = vadd.f32 %v1838, %v1940
  %v1959 = vadd.f32 %v1839, %v1943
  %v1960 = vadd.f32 %v1840, %v1948
  %v1961 = vadd.f32 %v1841, %v1951
  %v1962 = vld [vmem:[%s2] sm:$0x1]
  %v1964 = vlaneseq
  %v1965 = vshrl.u32 %v1964, 7
  %v1966 = vsub.s32 0, %v1965
  %v1967 = vrot.slane %v1962, %v1966
  %v1969 = vmul.f32 %v1954, %v1967
  %v1970 = vmul.f32 %v1955, %v1967
  %v1971 = vmul.f32 %v1956, %v1967
  %v1972 = vmul.f32 %v1957, %v1967
  %v1973 = vmul.f32 %v1958, %v1967
  %v1974 = vmul.f32 %v1959, %v1967
  %v1975 = vmul.f32 %v1960, %v1967
  %v1976 = vmul.f32 %v1961, %v1967
  %vm1977 = vcmask 359424
  %v1978 = vsel %vm1977, %v1969, 0.0
  %1979 = vadd.xlane.f32.xlu0 %v1978
  %v1980 = vpop.xlane.xlu0 %1979
  %v1981 = vsel %vm1977, %v1970, 0.0
  %1982 = vadd.xlane.f32.xlu0 %v1981
  %v1983 = vpop.xlane.xlu0 %1982
  %v1984 = vsel %vm1977, %v1971, 0.0
  %1985 = vadd.xlane.f32.xlu0 %v1984
  %v1986 = vpop.xlane.xlu0 %1985
  %v1987 = vsel %vm1977, %v1972, 0.0
  %1988 = vadd.xlane.f32.xlu0 %v1987
  %v1989 = vpop.xlane.xlu0 %1988
  %v1990 = vsel %vm1977, %v1973, 0.0
  %1991 = vadd.xlane.f32.xlu0 %v1990
  %v1992 = vpop.xlane.xlu0 %1991
  %v1993 = vsel %vm1977, %v1974, 0.0
  %1994 = vadd.xlane.f32.xlu0 %v1993
  %v1995 = vpop.xlane.xlu0 %1994
  %v1996 = vsel %vm1977, %v1975, 0.0
  %1997 = vadd.xlane.f32.xlu0 %v1996
  %v1998 = vpop.xlane.xlu0 %1997
  %v1999 = vsel %vm1977, %v1976, 0.0
  %2000 = vadd.xlane.f32.xlu0 %v1999
  %v2001 = vpop.xlane.xlu0 %2000
  %v2002 = vmul.f32 %v1980, 0.03125
  %v2003 = vmul.f32 %v1983, 0.03125
  %v2004 = vmul.f32 %v1986, 0.03125
  %v2005 = vmul.f32 %v1989, 0.03125
  %v2006 = vmul.f32 %v1992, 0.03125
  %v2007 = vmul.f32 %v1995, 0.03125
  %v2008 = vmul.f32 %v1998, 0.03125
  %v2009 = vmul.f32 %v2001, 0.03125
  %v2010 = vsub.f32 %v1954, %v2002
  %v2011 = vsub.f32 %v1955, %v2003
  %v2012 = vsub.f32 %v1956, %v2004
  %v2013 = vsub.f32 %v1957, %v2005
  %v2014 = vsub.f32 %v1958, %v2006
  %v2015 = vsub.f32 %v1959, %v2007
  %v2016 = vsub.f32 %v1960, %v2008
  %v2017 = vsub.f32 %v1961, %v2009
  %v2018 = vmul.f32 %v2010, %v1967
  %v2019 = vmul.f32 %v2011, %v1967
  %v2020 = vmul.f32 %v2012, %v1967
  %v2021 = vmul.f32 %v2013, %v1967
  %v2022 = vmul.f32 %v2014, %v1967
  %v2023 = vmul.f32 %v2015, %v1967
  %v2024 = vmul.f32 %v2016, %v1967
  %v2025 = vmul.f32 %v2017, %v1967
  %v2026 = vmul.f32 %v2018, %v2018
  %v2027 = vmul.f32 %v2019, %v2019
  %v2028 = vmul.f32 %v2020, %v2020
  %v2029 = vmul.f32 %v2021, %v2021
  %v2030 = vmul.f32 %v2022, %v2022
  %v2031 = vmul.f32 %v2023, %v2023
  %v2032 = vmul.f32 %v2024, %v2024
  %v2033 = vmul.f32 %v2025, %v2025
  %v2034 = vsel %vm1977, %v2026, 0.0
  %2035 = vadd.xlane.f32.xlu0 %v2034
  %v2036 = vpop.xlane.xlu0 %2035
  %v2037 = vsel %vm1977, %v2027, 0.0
  %2038 = vadd.xlane.f32.xlu0 %v2037
  %v2039 = vpop.xlane.xlu0 %2038
  %v2040 = vsel %vm1977, %v2028, 0.0
  %2041 = vadd.xlane.f32.xlu0 %v2040
  %v2042 = vpop.xlane.xlu0 %2041
  %v2043 = vsel %vm1977, %v2029, 0.0
  %2044 = vadd.xlane.f32.xlu0 %v2043
  %v2045 = vpop.xlane.xlu0 %2044
  %v2046 = vsel %vm1977, %v2030, 0.0
  %2047 = vadd.xlane.f32.xlu0 %v2046
  %v2048 = vpop.xlane.xlu0 %2047
  %v2049 = vsel %vm1977, %v2031, 0.0
  %2050 = vadd.xlane.f32.xlu0 %v2049
  %v2051 = vpop.xlane.xlu0 %2050
  %v2052 = vsel %vm1977, %v2032, 0.0
  %2053 = vadd.xlane.f32.xlu0 %v2052
  %v2054 = vpop.xlane.xlu0 %2053
  %v2055 = vsel %vm1977, %v2033, 0.0
  %2056 = vadd.xlane.f32.xlu0 %v2055
  %v2057 = vpop.xlane.xlu0 %2056
  %v2058 = vmul.f32 %v2036, 0.03125
  %v2059 = vmul.f32 %v2039, 0.03125
  %v2060 = vmul.f32 %v2042, 0.03125
  %v2061 = vmul.f32 %v2045, 0.03125
  %v2062 = vmul.f32 %v2048, 0.03125
  %v2063 = vmul.f32 %v2051, 0.03125
  %v2064 = vmul.f32 %v2054, 0.03125
  %v2065 = vmul.f32 %v2057, 0.03125
  %v2066 = vadd.f32 %v2058, 1e-05
  %v2067 = vadd.f32 %v2059, 1e-05
  %v2068 = vadd.f32 %v2060, 1e-05
  %v2069 = vadd.f32 %v2061, 1e-05
  %v2070 = vadd.f32 %v2062, 1e-05
  %v2071 = vadd.f32 %v2063, 1e-05
  %v2072 = vadd.f32 %v2064, 1e-05
  %v2073 = vadd.f32 %v2065, 1e-05
  %v2074 = vrsqrt.pop %v2066
  %v2075 = vrsqrt.pop %v2067
  %v2076 = vrsqrt.pop %v2068
  %v2077 = vrsqrt.pop %v2069
  %v2078 = vrsqrt.pop %v2070
  %v2079 = vrsqrt.pop %v2071
  %v2080 = vrsqrt.pop %v2072
  %v2081 = vrsqrt.pop %v2073
  %v2082 = vmul.f32 %v2010, %v2074
  %v2083 = vmul.f32 %v2011, %v2075
  %v2084 = vmul.f32 %v2012, %v2076
  %v2085 = vmul.f32 %v2013, %v2077
  %v2086 = vmul.f32 %v2014, %v2078
  %v2087 = vmul.f32 %v2015, %v2079
  %v2088 = vmul.f32 %v2016, %v2080
  %v2089 = vmul.f32 %v2017, %v2081
  %v2090 = vmul.f32 %v2082, 0.2
  %v2091 = vmul.f32 %v2083, 0.2
  %v2092 = vmul.f32 %v2084, 0.2
  %v2093 = vmul.f32 %v2085, 0.2
  %v2094 = vmul.f32 %v2086, 0.2
  %v2095 = vmul.f32 %v2087, 0.2
  %v2096 = vmul.f32 %v2088, 0.2
  %v2097 = vmul.f32 %v2089, 0.2
  %v2098 = vmax.f32 %v2082, %v2090
  %v2099 = vmax.f32 %v2083, %v2091
  %v2100 = vmax.f32 %v2084, %v2092
  %v2101 = vmax.f32 %v2085, %v2093
  %v2102 = vmax.f32 %v2086, %v2094
  %v2103 = vmax.f32 %v2087, %v2095
  %v2104 = vmax.f32 %v2088, %v2096
  %v2105 = vmax.f32 %v2089, %v2097
  %v2106 = vpack.c.bf16 %v2099, %v2098
  %v2107 = vpack.c.bf16 %v2101, %v2100
  %v2108 = vpack.c.bf16 %v2103, %v2102
  %v2109 = vpack.c.bf16 %v2105, %v2104
  %v2114 = vunpack.c.l.b16 %v2106
  %v2115 = vunpack.c.h.b16 %v2106
  %v2116 = vunpack.c.l.b16 %v2107
  %v2117 = vunpack.c.h.b16 %v2107
  %v2118 = vunpack.c.l.b16 %v2108
  %v2119 = vunpack.c.h.b16 %v2108
  %v2120 = vunpack.c.l.b16 %v2109
  %v2121 = vunpack.c.h.b16 %v2109
  %v2122 = vpack.c.b16 %v2114, %v2114
  %v2123 = vpack.c.b16 %v2115, %v2115
  %v2124 = vpack.c.b16 %v2116, %v2116
  %v2125 = vpack.c.b16 %v2117, %v2117
  %v2126 = vpack.c.b16 %v2118, %v2118
  %v2127 = vpack.c.b16 %v2119, %v2119
  %v2128 = vpack.c.b16 %v2120, %v2120
  %v2129 = vpack.c.b16 %v2121, %v2121
  %vm2138 = vcmask 355328
  %2139 = vst.msk [vmem:[%s3] sm:$0xf] %vm2138, %v2122
  %2140 = vst.msk [vmem:[%s3 + $0x4] sm:$0xf] %vm2138, %v2123
  %2141 = vst.msk [vmem:[%s3 + $0x8] sm:$0xf] %vm2138, %v2124
  %2142 = vst.msk [vmem:[%s3 + $0xc] sm:$0xf] %vm2138, %v2125
  %2143 = vst.msk [vmem:[%s3 + $0x10] sm:$0xf] %vm2138, %v2126
  %2144 = vst.msk [vmem:[%s3 + $0x14] sm:$0xf] %vm2138, %v2127
  %2145 = vst.msk [vmem:[%s3 + $0x18] sm:$0xf] %vm2138, %v2128
  %2146 = vst.msk [vmem:[%s3 + $0x1c] sm:$0xf] %vm2138, %v2129
  // Predicated region
  $region14: #{discriminator_forward.7} parent=0 // pred_check
    _
  $region15: #{discriminator_forward.7} parent=0 // pred_check_branch
    %2148 = sbr.rel (0) target = $region17
  $region16: #{discriminator_forward.7} parent=0 // pred_region
    _
  $region17: #{discriminator_forward.7} parent=0 // pred_fallthru
    _
  // Predicated region
  $region18: #{discriminator_forward.7} parent=0 // pred_check
    _
  $region19: #{discriminator_forward.7} parent=0 // pred_check_branch
    %2150 = sbr.rel (0) target = $region21
  $region20: #{discriminator_forward.7} parent=0 // pred_region
    _
  $region21: #{discriminator_forward.7} parent=0 // pred_fallthru
    _

</llo_original>
